<compile_context>
chip_gen: v7x
topology: tpu7x:2x2x1
jax: 0.10.0
libtpu: 0.0.40
codegen_flags: <defaults>
</compile_context>

<pallas_src>
import jax
import jax.numpy as jnp
from jax.experimental import pallas as pl
from jax.experimental.pallas import tpu as pltpu

EPS = 1e-5  # nn.BatchNorm2d default eps


def _vmem_spec():
    return pl.BlockSpec(memory_space=pltpu.MemorySpace.VMEM)


# ----------------------------------------------------------------------------
# Kernel 1: conv1(3x3,p=1) -> ReLU -> BN1 -> + ReLU(Linear(t)) ->
#           conv2(3x3,p=1) -> ReLU -> BN2, fully fused.
# Layout: NHWC in VMEM.  Output is the zero-padded BN2 activation
# (N, H+2, W+2, Cout) so the stride-2 tap gather needs no extra pad.
# ----------------------------------------------------------------------------
def _fused_convbn_kernel(x_ref, t_ref, w1_ref, wl_ref, w2_ref, vec_ref,
                         out_ref, xpad_ref, hpad_ref):
    N, H, W, _ = x_ref.shape
    Cout = w1_ref.shape[1]
    M = N * H * W

    # packed per-channel vectors (rows of a (7, Cout) f32 array)
    b1, g1, be1 = vec_ref[0:1, :], vec_ref[1:2, :], vec_ref[2:3, :]
    lb = vec_ref[3:4, :]
    b2, g2, be2 = vec_ref[4:5, :], vec_ref[5:6, :], vec_ref[6:7, :]

    def conv3x3(pad_ref, w_ref_):
        # dense-K im2col: one (M, 9*cin) x (9*cin, Cout) matmul, bf16 operands,
        # f32 accumulation on the MXU.
        xp = pad_ref[...]
        cin = xp.shape[-1]
        taps = [xp[:, kh:kh + H, kw:kw + W, :].reshape(M, cin)
                for kh in range(3) for kw in range(3)]
        patches = jnp.concatenate(taps, axis=-1).astype(jnp.bfloat16)
        return jnp.dot(patches, w_ref_[...], preferred_element_type=jnp.float32)

    def batchnorm(y, g, be):
        # single-pass batch statistics: var = E[y^2] - E[y]^2 (biased), f32.
        mean = jnp.sum(y, axis=0, keepdims=True) * (1.0 / M)
        var = jnp.sum(y * y, axis=0, keepdims=True) * (1.0 / M) - mean * mean
        return (y - mean) * jax.lax.rsqrt(var + EPS) * g + be

    # ---- in-kernel halo padding of x into VMEM scratch ----
    xpad_ref[...] = jnp.zeros(xpad_ref.shape, xpad_ref.dtype)
    xpad_ref[:, 1:H + 1, 1:W + 1, :] = x_ref[...]

    # ---- stage 1: conv1 + ReLU + BN1 + time embedding ----
    y1 = jnp.maximum(conv3x3(xpad_ref, w1_ref) + b1, 0.0)
    h1 = batchnorm(y1, g1, be1)

    te = jnp.maximum(
        jnp.dot(t_ref[...].astype(jnp.bfloat16), wl_ref[...],
                preferred_element_type=jnp.float32) + lb, 0.0)          # (N, Cout)
    h1 = h1.reshape(N, H, W, Cout) + te[:, None, None, :]

    # ---- in-kernel halo padding of h into VMEM scratch (no HBM round trip) ----
    hpad_ref[...] = jnp.zeros(hpad_ref.shape, hpad_ref.dtype)
    hpad_ref[:, 1:H + 1, 1:W + 1, :] = h1

    # ---- stage 2: conv2 + ReLU + BN2 ----
    y2 = jnp.maximum(conv3x3(hpad_ref, w2_ref) + b2, 0.0)
    h2 = batchnorm(y2, g2, be2)

    # emit the already-padded activation for the stride-2 transform
    out_ref[...] = jnp.zeros(out_ref.shape, out_ref.dtype)
    out_ref[:, 1:H + 1, 1:W + 1, :] = h2.reshape(N, H, W, Cout)


# ----------------------------------------------------------------------------
# Kernel 2: transform = Conv2d(Cout, Cout, 4, stride=2, padding=1) as a single
# (Cout, 16*Cout) x (16*Cout, M_out) matmul.  K = 16*Cout = 128 (full MXU
# contraction) and the (Cout, M_out) output is lane-dense (M_out = 128 lanes).
# ----------------------------------------------------------------------------
def _transform_kernel(pat_ref, w_ref, b_ref, out_ref):
    out_ref[...] = jnp.dot(w_ref[...], pat_ref[...],
                           preferred_element_type=jnp.float32) + b_ref[...]


# ----------------------------------------------------------------------------
# One-time parameter packing (outside the hot path)
# ----------------------------------------------------------------------------
def prepare_params(params):
    Cout = params["conv1_b"].shape[0]

    def pack3x3(w_oihw):  # OIHW -> (9*I, O), rows ordered (kh, kw, i)
        o, i, kh, kw = w_oihw.shape
        return jnp.transpose(w_oihw, (2, 3, 1, 0)).reshape(kh * kw * i, o)

    vecs = jnp.stack([params["conv1_b"], params["gamma1"], params["beta1"],
                      params["lin_b"], params["conv2_b"], params["gamma2"],
                      params["beta2"]], axis=0).astype(jnp.float32)     # (7, Cout)

    return dict(
        w1=pack3x3(params["conv1_w"]).astype(jnp.bfloat16),             # (9*Cin, Cout)
        w2=pack3x3(params["conv2_w"]).astype(jnp.bfloat16),             # (9*Cout, Cout)
        wl=params["lin_w"].T.astype(jnp.bfloat16),                      # (Temb, Cout)
        vecs=vecs,
        # transform weight, transposed: (Cout, 16*Cout), cols ordered (kh, kw, i)
        wt_t=params["tr_w"].transpose(0, 2, 3, 1)
                            .reshape(Cout, -1).astype(jnp.bfloat16),
        tb=params["tr_b"].reshape(-1, 1).astype(jnp.float32),           # (Cout, 1)
    )


# ----------------------------------------------------------------------------
# Forward wrapper (jit this; only thin layout glue outside the kernels)
# ----------------------------------------------------------------------------
def block_forward(x_nchw, t, prep):
    N, _, H, W = x_nchw.shape
    Cout = prep["vecs"].shape[1]
    Cin = x_nchw.shape[1]
    Ho, Wo = H // 2, W // 2

    x = jnp.transpose(x_nchw, (0, 2, 3, 1)).astype(jnp.float32)          # NHWC

    # fused conv1+BN1+time+conv2+BN2; output is the padded BN2 activation
    h2pad = pl.pallas_call(
        _fused_convbn_kernel,
        out_shape=jax.ShapeDtypeStruct((N, H + 2, W + 2, Cout), jnp.float32),
        in_specs=[_vmem_spec()] * 6,
        out_specs=_vmem_spec(),
        scratch_shapes=[pltpu.VMEM((N, H + 2, W + 2, Cin), jnp.float32),
                        pltpu.VMEM((N, H + 2, W + 2, Cout), jnp.float32)],
    )(x, t.astype(jnp.float32), prep["w1"], prep["wl"], prep["w2"], prep["vecs"])

    # stride-2 4x4 tap gather -> transposed lane-dense patch matrix
    # (16*Cout, N*Ho*Wo); rows ordered (kh, kw, c), cols ordered (n, ho, wo).
    taps = []
    for kh in range(4):
        for kw in range(4):
            sl = jax.lax.slice(h2pad, (0, kh, kw, 0),
                               (N, kh + 2 * Ho - 1, kw + 2 * Wo - 1, Cout),
                               (1, 2, 2, 1))                              # (N,Ho,Wo,C)
            taps.append(jnp.transpose(sl, (3, 0, 1, 2)).reshape(Cout, N * Ho * Wo))
    pat_t = jnp.concatenate(taps, axis=0).astype(jnp.bfloat16)            # (128, M_out)

    out_t = pl.pallas_call(
        _transform_kernel,
        out_shape=jax.ShapeDtypeStruct((Cout, N * Ho * Wo), jnp.float32),
        in_specs=[_vmem_spec()] * 3,
        out_specs=_vmem_spec(),
    )(pat_t, prep["wt_t"], prep["tb"])

    return jnp.transpose(out_t.reshape(Cout, N, Ho, Wo), (1, 0, 2, 3))    # NCHW


# ----------------------------------------------------------------------------
# Pure-JAX f32 reference (mirrors the PyTorch module, NCHW)
# ----------------------------------------------------------------------------
def reference_forward(x, t, params):
    def conv(xx, w, b, stride, pad):
        y = jax.lax.conv_general_dilated(
            xx, w, (stride, stride), [(pad, pad), (pad, pad)],
            dimension_numbers=("NCHW", "OIHW", "NCHW"))
        return y + b[None, :, None, None]

    def bn(y, g, be):
        m = y.mean(axis=(0, 2, 3), keepdims=True)
        v = ((y - m) ** 2).mean(axis=(0, 2, 3), keepdims=True)
        return (y - m) / jnp.sqrt(v + EPS) * g[None, :, None, None] \
               + be[None, :, None, None]

    h = bn(jax.nn.relu(conv(x, params["conv1_w"], params["conv1_b"], 1, 1)),
           params["gamma1"], params["beta1"])
    te = jax.nn.relu(t @ params["lin_w"].T + params["lin_b"])
    h = h + te[:, :, None, None]
    h = bn(jax.nn.relu(conv(h, params["conv2_w"], params["conv2_b"], 1, 1)),
           params["gamma2"], params["beta2"])
    return conv(h, params["tr_w"], params["tr_b"], 2, 1)


if __name__ == "__main__":
    key = jax.random.PRNGKey(0)
    keys = jax.random.split(key, 12)

    # Block(in_ch=4, out_ch=8, time_emb_dim=32, up=False)
    N, Cin, H, W = 2, 4, 16, 16
    Cout, Temb = 8, 32

    x = jax.random.normal(keys[0], (N, Cin, H, W), jnp.float32)
    t = jax.random.normal(keys[1], (N, Temb), jnp.float32)

    params = dict(
        conv1_w=0.1 * jax.random.normal(keys[2], (Cout, Cin, 3, 3), jnp.float32),
        conv1_b=0.1 * jax.random.normal(keys[3], (Cout,), jnp.float32),
        conv2_w=0.1 * jax.random.normal(keys[4], (Cout, Cout, 3, 3), jnp.float32),
        conv2_b=0.1 * jax.random.normal(keys[5], (Cout,), jnp.float32),
        tr_w=0.1 * jax.random.normal(keys[6], (Cout, Cout, 4, 4), jnp.float32),
        tr_b=0.1 * jax.random.normal(keys[7], (Cout,), jnp.float32),
        lin_w=0.1 * jax.random.normal(keys[8], (Cout, Temb), jnp.float32),
        lin_b=0.1 * jax.random.normal(keys[9], (Cout,), jnp.float32),
        gamma1=1.0 + 0.1 * jax.random.normal(keys[10], (Cout,), jnp.float32),
        beta1=0.1 * jax.random.normal(keys[11], (Cout,), jnp.float32),
        gamma2=jnp.ones((Cout,), jnp.float32),
        beta2=jnp.zeros((Cout,), jnp.float32),
    )

    prep = prepare_params(params)                    # one-time weight packing
    fwd = jax.jit(block_forward)

    out = jax.block_until_ready(fwd(x, t, prep))
    ref = jax.block_until_ready(reference_forward(x, t, params))

    assert out.shape == (N, Cout, H // 2, W // 2), out.shape
    # Tolerances sized for bf16 MXU operands (f32 accumulation / BN math):
    # the error budget is ~sqrt(K)*|w|*eps_bf16 amplified through two BatchNorms;
    # any structural/indexing bug would show up as O(1) errors.
    diff = out - ref
    max_err = float(jnp.max(jnp.abs(diff)))
    rel_rms = float(jnp.sqrt(jnp.mean(diff ** 2) / jnp.mean(ref ** 2)))
    assert max_err < 1e-1, f"max abs err {max_err}"
    assert rel_rms < 3e-2, f"relative rms err {rel_rms}"
    print("KERNEL_OK")
</pallas_src>

<mosaic_0001>
module attributes {stable_mosaic.version = 11 : i64} {
  func.func @_fused_convbn_kernel(%arg0: memref<2x16x16x4xf32, #tpu.memory_space<vmem>>, %arg1: memref<2x32xf32, #tpu.memory_space<vmem>>, %arg2: memref<36x8xbf16, #tpu.memory_space<vmem>>, %arg3: memref<32x8xbf16, #tpu.memory_space<vmem>>, %arg4: memref<72x8xbf16, #tpu.memory_space<vmem>>, %arg5: memref<7x8xf32, #tpu.memory_space<vmem>>, %arg6: memref<2x18x18x8xf32, #tpu.memory_space<vmem>>, %arg7: memref<2x18x18x4xf32, #tpu.memory_space<vmem>>, %arg8: memref<2x18x18x8xf32, #tpu.memory_space<vmem>>) attributes {dimension_semantics = [], scalar_prefetch = 0 : i64, scratch_operands = 2 : i64, tpu.core_type = #tpu.core_type<tc>} {
    %c0 = arith.constant 0 : index
    %c0_0 = arith.constant 0 : index
    %0 = vector.load %arg5[%c0, %c0_0] : memref<7x8xf32, #tpu.memory_space<vmem>>, vector<1x8xf32>
    %c1 = arith.constant 1 : index
    %c0_1 = arith.constant 0 : index
    %1 = vector.load %arg5[%c1, %c0_1] : memref<7x8xf32, #tpu.memory_space<vmem>>, vector<1x8xf32>
    %c2 = arith.constant 2 : index
    %c0_2 = arith.constant 0 : index
    %2 = vector.load %arg5[%c2, %c0_2] : memref<7x8xf32, #tpu.memory_space<vmem>>, vector<1x8xf32>
    %c3 = arith.constant 3 : index
    %c0_3 = arith.constant 0 : index
    %3 = vector.load %arg5[%c3, %c0_3] : memref<7x8xf32, #tpu.memory_space<vmem>>, vector<1x8xf32>
    %c4 = arith.constant 4 : index
    %c0_4 = arith.constant 0 : index
    %4 = vector.load %arg5[%c4, %c0_4] : memref<7x8xf32, #tpu.memory_space<vmem>>, vector<1x8xf32>
    %c5 = arith.constant 5 : index
    %c0_5 = arith.constant 0 : index
    %5 = vector.load %arg5[%c5, %c0_5] : memref<7x8xf32, #tpu.memory_space<vmem>>, vector<1x8xf32>
    %c6 = arith.constant 6 : index
    %c0_6 = arith.constant 0 : index
    %6 = vector.load %arg5[%c6, %c0_6] : memref<7x8xf32, #tpu.memory_space<vmem>>, vector<1x8xf32>
    %cst = arith.constant 0.000000e+00 : f32
    %7 = vector.broadcast %cst : f32 to vector<2x18x18x4xf32>
    %c0_7 = arith.constant 0 : index
    %c0_8 = arith.constant 0 : index
    %c0_9 = arith.constant 0 : index
    %c0_10 = arith.constant 0 : index
    %8 = vector.load %arg7[%c0_7, %c0_8, %c0_9, %c0_10] : memref<2x18x18x4xf32, #tpu.memory_space<vmem>>, vector<2x18x18x4xf32>
    tpu.vector_store %arg7[%c0_7, %c0_8, %c0_9, %c0_10], %7 {strides = array<i32>} : memref<2x18x18x4xf32, #tpu.memory_space<vmem>>, vector<2x18x18x4xf32>,
    %c0_11 = arith.constant 0 : index
    %c0_12 = arith.constant 0 : index
    %c0_13 = arith.constant 0 : index
    %c0_14 = arith.constant 0 : index
    %9 = vector.load %arg0[%c0_11, %c0_12, %c0_13, %c0_14] : memref<2x16x16x4xf32, #tpu.memory_space<vmem>>, vector<2x16x16x4xf32>
    %c0_15 = arith.constant 0 : index
    %c1_16 = arith.constant 1 : index
    %c1_17 = arith.constant 1 : index
    %c0_18 = arith.constant 0 : index
    %10 = vector.load %arg7[%c0_15, %c1_16, %c1_17, %c0_18] : memref<2x18x18x4xf32, #tpu.memory_space<vmem>>, vector<2x16x16x4xf32>
    tpu.vector_store %arg7[%c0_15, %c1_16, %c1_17, %c0_18], %9 {strides = array<i32>} : memref<2x18x18x4xf32, #tpu.memory_space<vmem>>, vector<2x16x16x4xf32>,
    %c0_19 = arith.constant 0 : index
    %c0_20 = arith.constant 0 : index
    %c0_21 = arith.constant 0 : index
    %c0_22 = arith.constant 0 : index
    %11 = vector.load %arg7[%c0_19, %c0_20, %c0_21, %c0_22] : memref<2x18x18x4xf32, #tpu.memory_space<vmem>>, vector<2x18x18x4xf32>
    %12 = vector.extract_strided_slice %11 {offsets = [0, 0, 0, 0], sizes = [2, 16, 16, 4], strides = [1, 1, 1, 1]} : vector<2x18x18x4xf32> to vector<2x16x16x4xf32>
    %13 = vector.shape_cast %12 : vector<2x16x16x4xf32> to vector<512x4xf32>
    %14 = vector.extract_strided_slice %11 {offsets = [0, 0, 1, 0], sizes = [2, 16, 16, 4], strides = [1, 1, 1, 1]} : vector<2x18x18x4xf32> to vector<2x16x16x4xf32>
    %15 = vector.shape_cast %14 : vector<2x16x16x4xf32> to vector<512x4xf32>
    %16 = vector.extract_strided_slice %11 {offsets = [0, 0, 2, 0], sizes = [2, 16, 16, 4], strides = [1, 1, 1, 1]} : vector<2x18x18x4xf32> to vector<2x16x16x4xf32>
    %17 = vector.shape_cast %16 : vector<2x16x16x4xf32> to vector<512x4xf32>
    %18 = vector.extract_strided_slice %11 {offsets = [0, 1, 0, 0], sizes = [2, 16, 16, 4], strides = [1, 1, 1, 1]} : vector<2x18x18x4xf32> to vector<2x16x16x4xf32>
    %19 = vector.shape_cast %18 : vector<2x16x16x4xf32> to vector<512x4xf32>
    %20 = vector.extract_strided_slice %11 {offsets = [0, 1, 1, 0], sizes = [2, 16, 16, 4], strides = [1, 1, 1, 1]} : vector<2x18x18x4xf32> to vector<2x16x16x4xf32>
    %21 = vector.shape_cast %20 : vector<2x16x16x4xf32> to vector<512x4xf32>
    %22 = vector.extract_strided_slice %11 {offsets = [0, 1, 2, 0], sizes = [2, 16, 16, 4], strides = [1, 1, 1, 1]} : vector<2x18x18x4xf32> to vector<2x16x16x4xf32>
    %23 = vector.shape_cast %22 : vector<2x16x16x4xf32> to vector<512x4xf32>
    %24 = vector.extract_strided_slice %11 {offsets = [0, 2, 0, 0], sizes = [2, 16, 16, 4], strides = [1, 1, 1, 1]} : vector<2x18x18x4xf32> to vector<2x16x16x4xf32>
    %25 = vector.shape_cast %24 : vector<2x16x16x4xf32> to vector<512x4xf32>
    %26 = vector.extract_strided_slice %11 {offsets = [0, 2, 1, 0], sizes = [2, 16, 16, 4], strides = [1, 1, 1, 1]} : vector<2x18x18x4xf32> to vector<2x16x16x4xf32>
    %27 = vector.shape_cast %26 : vector<2x16x16x4xf32> to vector<512x4xf32>
    %28 = vector.extract_strided_slice %11 {offsets = [0, 2, 2, 0], sizes = [2, 16, 16, 4], strides = [1, 1, 1, 1]} : vector<2x18x18x4xf32> to vector<2x16x16x4xf32>
    %29 = vector.shape_cast %28 : vector<2x16x16x4xf32> to vector<512x4xf32>
    %30 = tpu.concatenate %13, %15, %17, %19, %21, %23, %25, %27, %29 in 1 : vector<512x4xf32>, vector<512x4xf32>, vector<512x4xf32>, vector<512x4xf32>, vector<512x4xf32>, vector<512x4xf32>, vector<512x4xf32>, vector<512x4xf32>, vector<512x4xf32> -> vector<512x36xf32>
    %31 = arith.truncf %30 : vector<512x36xf32> to vector<512x36xbf16>
    %c0_23 = arith.constant 0 : index
    %c0_24 = arith.constant 0 : index
    %32 = vector.load %arg2[%c0_23, %c0_24] : memref<36x8xbf16, #tpu.memory_space<vmem>>, vector<36x8xbf16>
    %cst_25 = arith.constant dense<0.000000e+00> : vector<512x8xf32>
    %33 = tpu.matmul %31, %32, %cst_25 {dimension_numbers = #tpu.dot_dimension_numbers<[1], [0], [0], [1], [0, 0, 1, 1], [], []>} : vector<512x36xbf16>, vector<36x8xbf16>, vector<512x8xf32> -> vector<512x8xf32>
    %34 = vector.broadcast %0 : vector<1x8xf32> to vector<512x8xf32>
    %35 = arith.addf %33, %34 : vector<512x8xf32>
    %cst_26 = arith.constant 0.000000e+00 : f32
    %36 = vector.broadcast %cst_26 : f32 to vector<512x8xf32>
    %37 = arith.maximumf %35, %36 : vector<512x8xf32>
    %cst_27 = arith.constant dense<0.000000e+00> : vector<8xf32>
    %38 = vector.multi_reduction <add>, %37, %cst_27 [0] : vector<512x8xf32> to vector<8xf32>
    %39 = vector.shape_cast %38 : vector<8xf32> to vector<1x8xf32>
    %cst_28 = arith.constant 0.001953125 : f32
    %40 = vector.broadcast %cst_28 : f32 to vector<1x8xf32>
    %41 = arith.mulf %39, %40 : vector<1x8xf32>
    %42 = arith.mulf %37, %37 : vector<512x8xf32>
    %cst_29 = arith.constant dense<0.000000e+00> : vector<8xf32>
    %43 = vector.multi_reduction <add>, %42, %cst_29 [0] : vector<512x8xf32> to vector<8xf32>
    %44 = vector.shape_cast %43 : vector<8xf32> to vector<1x8xf32>
    %cst_30 = arith.constant 0.001953125 : f32
    %45 = vector.broadcast %cst_30 : f32 to vector<1x8xf32>
    %46 = arith.mulf %44, %45 : vector<1x8xf32>
    %47 = arith.mulf %41, %41 : vector<1x8xf32>
    %48 = arith.subf %46, %47 : vector<1x8xf32>
    %49 = vector.broadcast %41 : vector<1x8xf32> to vector<512x8xf32>
    %50 = arith.subf %37, %49 : vector<512x8xf32>
    %cst_31 = arith.constant 9.99999974E-6 : f32
    %51 = vector.broadcast %cst_31 : f32 to vector<1x8xf32>
    %52 = arith.addf %48, %51 : vector<1x8xf32>
    %53 = math.rsqrt %52 : vector<1x8xf32>
    %54 = vector.broadcast %53 : vector<1x8xf32> to vector<512x8xf32>
    %55 = arith.mulf %50, %54 : vector<512x8xf32>
    %56 = vector.broadcast %1 : vector<1x8xf32> to vector<512x8xf32>
    %57 = arith.mulf %55, %56 : vector<512x8xf32>
    %58 = vector.broadcast %2 : vector<1x8xf32> to vector<512x8xf32>
    %59 = arith.addf %57, %58 : vector<512x8xf32>
    %c0_32 = arith.constant 0 : index
    %c0_33 = arith.constant 0 : index
    %60 = vector.load %arg1[%c0_32, %c0_33] : memref<2x32xf32, #tpu.memory_space<vmem>>, vector<2x32xf32>
    %61 = arith.truncf %60 : vector<2x32xf32> to vector<2x32xbf16>
    %c0_34 = arith.constant 0 : index
    %c0_35 = arith.constant 0 : index
    %62 = vector.load %arg3[%c0_34, %c0_35] : memref<32x8xbf16, #tpu.memory_space<vmem>>, vector<32x8xbf16>
    %cst_36 = arith.constant dense<0.000000e+00> : vector<2x8xf32>
    %63 = tpu.matmul %61, %62, %cst_36 {dimension_numbers = #tpu.dot_dimension_numbers<[1], [0], [0], [1], [0, 0, 1, 1], [], []>} : vector<2x32xbf16>, vector<32x8xbf16>, vector<2x8xf32> -> vector<2x8xf32>
    %64 = vector.broadcast %3 : vector<1x8xf32> to vector<2x8xf32>
    %65 = arith.addf %63, %64 : vector<2x8xf32>
    %cst_37 = arith.constant 0.000000e+00 : f32
    %66 = vector.broadcast %cst_37 : f32 to vector<2x8xf32>
    %67 = arith.maximumf %65, %66 : vector<2x8xf32>
    %68 = vector.shape_cast %59 : vector<512x8xf32> to vector<2x16x16x8xf32>
    %69 = vector.shape_cast %67 : vector<2x8xf32> to vector<2x1x1x8xf32>
    %70 = vector.broadcast %69 : vector<2x1x1x8xf32> to vector<2x16x16x8xf32>
    %71 = arith.addf %68, %70 : vector<2x16x16x8xf32>
    %cst_38 = arith.constant 0.000000e+00 : f32
    %72 = vector.broadcast %cst_38 : f32 to vector<2x18x18x8xf32>
    %c0_39 = arith.constant 0 : index
    %c0_40 = arith.constant 0 : index
    %c0_41 = arith.constant 0 : index
    %c0_42 = arith.constant 0 : index
    %73 = vector.load %arg8[%c0_39, %c0_40, %c0_41, %c0_42] : memref<2x18x18x8xf32, #tpu.memory_space<vmem>>, vector<2x18x18x8xf32>
    tpu.vector_store %arg8[%c0_39, %c0_40, %c0_41, %c0_42], %72 {strides = array<i32>} : memref<2x18x18x8xf32, #tpu.memory_space<vmem>>, vector<2x18x18x8xf32>,
    %c0_43 = arith.constant 0 : index
    %c1_44 = arith.constant 1 : index
    %c1_45 = arith.constant 1 : index
    %c0_46 = arith.constant 0 : index
    %74 = vector.load %arg8[%c0_43, %c1_44, %c1_45, %c0_46] : memref<2x18x18x8xf32, #tpu.memory_space<vmem>>, vector<2x16x16x8xf32>
    tpu.vector_store %arg8[%c0_43, %c1_44, %c1_45, %c0_46], %71 {strides = array<i32>} : memref<2x18x18x8xf32, #tpu.memory_space<vmem>>, vector<2x16x16x8xf32>,
    %c0_47 = arith.constant 0 : index
    %c0_48 = arith.constant 0 : index
    %c0_49 = arith.constant 0 : index
    %c0_50 = arith.constant 0 : index
    %75 = vector.load %arg8[%c0_47, %c0_48, %c0_49, %c0_50] : memref<2x18x18x8xf32, #tpu.memory_space<vmem>>, vector<2x18x18x8xf32>
    %76 = vector.extract_strided_slice %75 {offsets = [0, 0, 0, 0], sizes = [2, 16, 16, 8], strides = [1, 1, 1, 1]} : vector<2x18x18x8xf32> to vector<2x16x16x8xf32>
    %77 = vector.shape_cast %76 : vector<2x16x16x8xf32> to vector<512x8xf32>
    %78 = vector.extract_strided_slice %75 {offsets = [0, 0, 1, 0], sizes = [2, 16, 16, 8], strides = [1, 1, 1, 1]} : vector<2x18x18x8xf32> to vector<2x16x16x8xf32>
    %79 = vector.shape_cast %78 : vector<2x16x16x8xf32> to vector<512x8xf32>
    %80 = vector.extract_strided_slice %75 {offsets = [0, 0, 2, 0], sizes = [2, 16, 16, 8], strides = [1, 1, 1, 1]} : vector<2x18x18x8xf32> to vector<2x16x16x8xf32>
    %81 = vector.shape_cast %80 : vector<2x16x16x8xf32> to vector<512x8xf32>
    %82 = vector.extract_strided_slice %75 {offsets = [0, 1, 0, 0], sizes = [2, 16, 16, 8], strides = [1, 1, 1, 1]} : vector<2x18x18x8xf32> to vector<2x16x16x8xf32>
    %83 = vector.shape_cast %82 : vector<2x16x16x8xf32> to vector<512x8xf32>
    %84 = vector.extract_strided_slice %75 {offsets = [0, 1, 1, 0], sizes = [2, 16, 16, 8], strides = [1, 1, 1, 1]} : vector<2x18x18x8xf32> to vector<2x16x16x8xf32>
    %85 = vector.shape_cast %84 : vector<2x16x16x8xf32> to vector<512x8xf32>
    %86 = vector.extract_strided_slice %75 {offsets = [0, 1, 2, 0], sizes = [2, 16, 16, 8], strides = [1, 1, 1, 1]} : vector<2x18x18x8xf32> to vector<2x16x16x8xf32>
    %87 = vector.shape_cast %86 : vector<2x16x16x8xf32> to vector<512x8xf32>
    %88 = vector.extract_strided_slice %75 {offsets = [0, 2, 0, 0], sizes = [2, 16, 16, 8], strides = [1, 1, 1, 1]} : vector<2x18x18x8xf32> to vector<2x16x16x8xf32>
    %89 = vector.shape_cast %88 : vector<2x16x16x8xf32> to vector<512x8xf32>
    %90 = vector.extract_strided_slice %75 {offsets = [0, 2, 1, 0], sizes = [2, 16, 16, 8], strides = [1, 1, 1, 1]} : vector<2x18x18x8xf32> to vector<2x16x16x8xf32>
    %91 = vector.shape_cast %90 : vector<2x16x16x8xf32> to vector<512x8xf32>
    %92 = vector.extract_strided_slice %75 {offsets = [0, 2, 2, 0], sizes = [2, 16, 16, 8], strides = [1, 1, 1, 1]} : vector<2x18x18x8xf32> to vector<2x16x16x8xf32>
    %93 = vector.shape_cast %92 : vector<2x16x16x8xf32> to vector<512x8xf32>
    %94 = tpu.concatenate %77, %79, %81, %83, %85, %87, %89, %91, %93 in 1 : vector<512x8xf32>, vector<512x8xf32>, vector<512x8xf32>, vector<512x8xf32>, vector<512x8xf32>, vector<512x8xf32>, vector<512x8xf32>, vector<512x8xf32>, vector<512x8xf32> -> vector<512x72xf32>
    %95 = arith.truncf %94 : vector<512x72xf32> to vector<512x72xbf16>
    %c0_51 = arith.constant 0 : index
    %c0_52 = arith.constant 0 : index
    %96 = vector.load %arg4[%c0_51, %c0_52] : memref<72x8xbf16, #tpu.memory_space<vmem>>, vector<72x8xbf16>
    %cst_53 = arith.constant dense<0.000000e+00> : vector<512x8xf32>
    %97 = tpu.matmul %95, %96, %cst_53 {dimension_numbers = #tpu.dot_dimension_numbers<[1], [0], [0], [1], [0, 0, 1, 1], [], []>} : vector<512x72xbf16>, vector<72x8xbf16>, vector<512x8xf32> -> vector<512x8xf32>
    %98 = vector.broadcast %4 : vector<1x8xf32> to vector<512x8xf32>
    %99 = arith.addf %97, %98 : vector<512x8xf32>
    %cst_54 = arith.constant 0.000000e+00 : f32
    %100 = vector.broadcast %cst_54 : f32 to vector<512x8xf32>
    %101 = arith.maximumf %99, %100 : vector<512x8xf32>
    %cst_55 = arith.constant dense<0.000000e+00> : vector<8xf32>
    %102 = vector.multi_reduction <add>, %101, %cst_55 [0] : vector<512x8xf32> to vector<8xf32>
    %103 = vector.shape_cast %102 : vector<8xf32> to vector<1x8xf32>
    %cst_56 = arith.constant 0.001953125 : f32
    %104 = vector.broadcast %cst_56 : f32 to vector<1x8xf32>
    %105 = arith.mulf %103, %104 : vector<1x8xf32>
    %106 = arith.mulf %101, %101 : vector<512x8xf32>
    %cst_57 = arith.constant dense<0.000000e+00> : vector<8xf32>
    %107 = vector.multi_reduction <add>, %106, %cst_57 [0] : vector<512x8xf32> to vector<8xf32>
    %108 = vector.shape_cast %107 : vector<8xf32> to vector<1x8xf32>
    %cst_58 = arith.constant 0.001953125 : f32
    %109 = vector.broadcast %cst_58 : f32 to vector<1x8xf32>
    %110 = arith.mulf %108, %109 : vector<1x8xf32>
    %111 = arith.mulf %105, %105 : vector<1x8xf32>
    %112 = arith.subf %110, %111 : vector<1x8xf32>
    %113 = vector.broadcast %105 : vector<1x8xf32> to vector<512x8xf32>
    %114 = arith.subf %101, %113 : vector<512x8xf32>
    %cst_59 = arith.constant 9.99999974E-6 : f32
    %115 = vector.broadcast %cst_59 : f32 to vector<1x8xf32>
    %116 = arith.addf %112, %115 : vector<1x8xf32>
    %117 = math.rsqrt %116 : vector<1x8xf32>
    %118 = vector.broadcast %117 : vector<1x8xf32> to vector<512x8xf32>
    %119 = arith.mulf %114, %118 : vector<512x8xf32>
    %120 = vector.broadcast %5 : vector<1x8xf32> to vector<512x8xf32>
    %121 = arith.mulf %119, %120 : vector<512x8xf32>
    %122 = vector.broadcast %6 : vector<1x8xf32> to vector<512x8xf32>
    %123 = arith.addf %121, %122 : vector<512x8xf32>
    %cst_60 = arith.constant 0.000000e+00 : f32
    %124 = vector.broadcast %cst_60 : f32 to vector<2x18x18x8xf32>
    %c0_61 = arith.constant 0 : index
    %c0_62 = arith.constant 0 : index
    %c0_63 = arith.constant 0 : index
    %c0_64 = arith.constant 0 : index
    %125 = vector.load %arg6[%c0_61, %c0_62, %c0_63, %c0_64] : memref<2x18x18x8xf32, #tpu.memory_space<vmem>>, vector<2x18x18x8xf32>
    tpu.vector_store %arg6[%c0_61, %c0_62, %c0_63, %c0_64], %124 {strides = array<i32>} : memref<2x18x18x8xf32, #tpu.memory_space<vmem>>, vector<2x18x18x8xf32>,
    %126 = vector.shape_cast %123 : vector<512x8xf32> to vector<2x16x16x8xf32>
    %c0_65 = arith.constant 0 : index
    %c1_66 = arith.constant 1 : index
    %c1_67 = arith.constant 1 : index
    %c0_68 = arith.constant 0 : index
    %127 = vector.load %arg6[%c0_65, %c1_66, %c1_67, %c0_68] : memref<2x18x18x8xf32, #tpu.memory_space<vmem>>, vector<2x16x16x8xf32>
    tpu.vector_store %arg6[%c0_65, %c1_66, %c1_67, %c0_68], %126 {strides = array<i32>} : memref<2x18x18x8xf32, #tpu.memory_space<vmem>>, vector<2x16x16x8xf32>,
    return
  }
}

module attributes {stable_mosaic.version = 11 : i64} {
  func.func @_transform_kernel(%arg0: memref<128x128xbf16, #tpu.memory_space<vmem>>, %arg1: memref<8x128xbf16, #tpu.memory_space<vmem>>, %arg2: memref<8x1xf32, #tpu.memory_space<vmem>>, %arg3: memref<8x128xf32, #tpu.memory_space<vmem>>) attributes {dimension_semantics = [], scalar_prefetch = 0 : i64, scratch_operands = 0 : i64, tpu.core_type = #tpu.core_type<tc>} {
    %c0 = arith.constant 0 : index
    %c0_0 = arith.constant 0 : index
    %0 = vector.load %arg1[%c0, %c0_0] : memref<8x128xbf16, #tpu.memory_space<vmem>>, vector<8x128xbf16>
    %c0_1 = arith.constant 0 : index
    %c0_2 = arith.constant 0 : index
    %1 = vector.load %arg0[%c0_1, %c0_2] : memref<128x128xbf16, #tpu.memory_space<vmem>>, vector<128x128xbf16>
    %cst = arith.constant dense<0.000000e+00> : vector<8x128xf32>
    %2 = tpu.matmul %0, %1, %cst {dimension_numbers = #tpu.dot_dimension_numbers<[1], [0], [0], [1], [0, 0, 1, 1], [], []>} : vector<8x128xbf16>, vector<128x128xbf16>, vector<8x128xf32> -> vector<8x128xf32>
    %c0_3 = arith.constant 0 : index
    %c0_4 = arith.constant 0 : index
    %3 = vector.load %arg2[%c0_3, %c0_4] : memref<8x1xf32, #tpu.memory_space<vmem>>, vector<8x1xf32>
    %4 = vector.broadcast %3 : vector<8x1xf32> to vector<8x128xf32>
    %5 = arith.addf %2, %4 : vector<8x128xf32>
    %c0_5 = arith.constant 0 : index
    %c0_6 = arith.constant 0 : index
    %6 = vector.load %arg3[%c0_5, %c0_6] : memref<8x128xf32, #tpu.memory_space<vmem>>, vector<8x128xf32>
    tpu.vector_store %arg3[%c0_5, %c0_6], %5 {strides = array<i32>} : memref<8x128xf32, #tpu.memory_space<vmem>>, vector<8x128xf32>,
    return
  }
}

</mosaic_0001>

<llo_original>
// kernel: block_forward.3
$region0: #{block_forward.3}
  #allocation0 [shape = 'u32[]', space=smem, size = 0x4, offset = 0x4, fixed_abs, tag = 'smem constant byte address 0x4 - core index']
  #allocation1 [shape = 'u32[144,128]{1,0:T(1,128)}', space=vmem, size = 0x12000, scoped, tag = 'internal scratch']
  %s0 = inlined_call_operand.vmem [shape: bf16[128,128], index: 0, kind: input, shape index: {}]
  %s1 = inlined_call_operand.vmem [shape: bf16[8,128], index: 1, kind: input, shape index: {}]
  %s2 = inlined_call_operand.vmem [shape: f32[8,1], index: 2, kind: input, shape index: {}]
  %s3 = inlined_call_operand.vmem [shape: f32[8,128], index: 3, kind: output, shape index: {}]
  %s4 = sld [smem:[#allocation0]]
  $region22: #{block_forward.3} parent=0
    _
  %s6 = ssub.s32 1, %s4
  %s7 = scalar_select 0, %s6, %s4
  // Predicated region
  $region2: #{block_forward.3} parent=0 // pred_check
    _
  $region3: #{block_forward.3} parent=0 // pred_check_branch
    %9 = sbr.rel (0) target = $region5
  $region4: #{block_forward.3} parent=0 // pred_region
    _
  $region5: #{block_forward.3} parent=0 // pred_fallthru
    _
  // Predicated region
  $region6: #{block_forward.3} parent=0 // pred_check
    _
  $region7: #{block_forward.3} parent=0 // pred_check_branch
    %11 = sbr.rel (0) target = $region9
  $region8: #{block_forward.3} parent=0 // pred_region
    _
  $region9: #{block_forward.3} parent=0 // pred_fallthru
    _
  // Predicated region
  $region10: #{block_forward.3} parent=0 // pred_check
    _
  $region11: #{block_forward.3} parent=0 // pred_check_branch
    %13 = sbr.rel (0) target = $region13
  $region12: #{block_forward.3} parent=0 // pred_region
    _
  $region13: #{block_forward.3} parent=0 // pred_fallthru
    _
  %v15 = vld [vmem:[%s1] sm:$0xf]
  %v16 = vld [vmem:[%s0] sm:$0xf]
  %v17 = vld [vmem:[%s0 + $0x4] sm:$0xf]
  %v18 = vld [vmem:[%s0 + $0x8] sm:$0xf]
  %v19 = vld [vmem:[%s0 + $0xc] sm:$0xf]
  %v20 = vld [vmem:[%s0 + $0x10] sm:$0xf]
  %v21 = vld [vmem:[%s0 + $0x14] sm:$0xf]
  %v22 = vld [vmem:[%s0 + $0x18] sm:$0xf]
  %v23 = vld [vmem:[%s0 + $0x1c] sm:$0xf]
  %v24 = vld [vmem:[%s0 + $0x20] sm:$0xf]
  %v25 = vld [vmem:[%s0 + $0x24] sm:$0xf]
  %v26 = vld [vmem:[%s0 + $0x28] sm:$0xf]
  %v27 = vld [vmem:[%s0 + $0x2c] sm:$0xf]
  %v28 = vld [vmem:[%s0 + $0x30] sm:$0xf]
  %v29 = vld [vmem:[%s0 + $0x34] sm:$0xf]
  %v30 = vld [vmem:[%s0 + $0x38] sm:$0xf]
  %v31 = vld [vmem:[%s0 + $0x3c] sm:$0xf]
  %v32 = vld [vmem:[%s2] sm:$0xff]
  %34 = vset.pattern.permute.xlu0 0
  %35 = vperm.xlu0 %34, %v32
  %v36 = vpop.permute.xlu0 %35
  %v54 = vunpack.c.l.b16 %v16
  %v55 = vunpack.c.l.b16 %v17
  %v56 = vunpack.c.l.b16 %v18
  %v57 = vunpack.c.l.b16 %v19
  %v58 = vunpack.c.l.b16 %v20
  %v59 = vunpack.c.l.b16 %v21
  %v60 = vunpack.c.l.b16 %v22
  %v61 = vunpack.c.l.b16 %v23
  %v62 = vunpack.c.l.b16 %v24
  %v63 = vunpack.c.l.b16 %v25
  %v64 = vunpack.c.l.b16 %v26
  %v65 = vunpack.c.l.b16 %v27
  %v66 = vunpack.c.l.b16 %v28
  %v67 = vunpack.c.l.b16 %v29
  %v68 = vunpack.c.l.b16 %v30
  %v69 = vunpack.c.l.b16 %v31
  %v70 = vpack.c.b16 %v55, %v54
  %v71 = vpack.c.b16 %v57, %v56
  %v72 = vpack.c.b16 %v59, %v58
  %v73 = vpack.c.b16 %v61, %v60
  %v74 = vpack.c.b16 %v63, %v62
  %v75 = vpack.c.b16 %v65, %v64
  %v76 = vpack.c.b16 %v67, %v66
  %v77 = vpack.c.b16 %v69, %v68
  %86 = vmatprep.subr.bf16.mxu0 0
  %87 = vmatpush1.bf16.msra.mxu0 %v70
  %88 = vmatprep.subr.bf16.mxu0 0
  %89 = vmatpush1.bf16.msra.mxu0 %v71
  %90 = vmatprep.subr.bf16.mxu0 0
  %91 = vmatpush1.bf16.msra.mxu0 %v72
  %92 = vmatprep.subr.bf16.mxu0 0
  %93 = vmatpush1.bf16.msra.mxu0 %v73
  %94 = vmatprep.subr.bf16.mxu0 0
  %95 = vmatpush1.bf16.msra.mxu0 %v74
  %96 = vmatprep.subr.bf16.mxu0 0
  %97 = vmatpush1.bf16.msra.mxu0 %v75
  %98 = vmatprep.subr.bf16.mxu0 0
  %99 = vmatpush1.bf16.msra.mxu0 %v76
  %100 = vmatprep.subr.bf16.mxu0 0
  %101 = vmatpush1.bf16.msra.mxu0 %v77
  %102 = vmatprep.subr.bf16.mxu0 0
  %103 = vmatpush1.bf16.msra.mxu0 0
  %104 = vmatprep.subr.bf16.mxu0 0
  %105 = vmatpush1.bf16.msra.mxu0 0
  %106 = vmatprep.subr.bf16.mxu0 0
  %107 = vmatpush1.bf16.msra.mxu0 0
  %108 = vmatprep.subr.bf16.mxu0 0
  %109 = vmatpush1.bf16.msra.mxu0 0
  %110 = vmatprep.subr.bf16.mxu0 0
  %111 = vmatpush1.bf16.msra.mxu0 0
  %112 = vmatprep.subr.bf16.mxu0 0
  %113 = vmatpush1.bf16.msra.mxu0 0
  %114 = vmatprep.subr.bf16.mxu0 0
  %115 = vmatpush1.bf16.msra.mxu0 0
  %116 = vmatprep.subr.bf16.mxu0 0
  %117 = vmatpush1.bf16.msra.mxu0 0
  %118 = vmatprep.mubr.bf16.mxu0 0
  %119 = vmatmul.mubr.bf16.gmra.mrb[0].mxu0 %v15
  %v120 = vpop.f32.mrb[0].mxu0
  %v121 = vadd.f32 %v36, %v120
  %v122 = vpop.f32.mrb[0].mxu0
  %v123 = vpop.f32.mrb[0].mxu0
  %v124 = vpop.f32.mrb[0].mxu0
  %125 = vdwg.mxu0
  %126 = vst [vmem:[%s3] sm:$0xff] %v121
  // Predicated region
  $region14: #{block_forward.3} parent=0 // pred_check
    _
  $region15: #{block_forward.3} parent=0 // pred_check_branch
    %128 = sbr.rel (0) target = $region17
  $region16: #{block_forward.3} parent=0 // pred_region
    _
  $region17: #{block_forward.3} parent=0 // pred_fallthru
    _
  // Predicated region
  $region18: #{block_forward.3} parent=0 // pred_check
    _
  $region19: #{block_forward.3} parent=0 // pred_check_branch
    %130 = sbr.rel (0) target = $region21
  $region20: #{block_forward.3} parent=0 // pred_region
    _
  $region21: #{block_forward.3} parent=0 // pred_fallthru
    _

// kernel: block_forward.2
$region0: #{block_forward.2}
  #allocation0 [shape = 'u32[]', space=smem, size = 0x4, offset = 0x4, fixed_abs, tag = 'smem constant byte address 0x4 - core index']
  #allocation1 [shape = 'u32[144,128]{1,0:T(1,128)}', space=vmem, size = 0x12000, scoped, tag = 'internal scratch']
  #allocation2 [shape = 'f32[2,18,18,4]{3,2,1,0:T(8,128)}', space=vmem, size = 0x6c000, scoped, tag = 'scratch operand']
  #allocation3 [shape = 'f32[2,18,18,8]{3,2,1,0:T(8,128)}', space=vmem, size = 0x6c000, scoped, tag = 'scratch operand']
  %s0 = inlined_call_operand.vmem [shape: f32[2,16,16,4], index: 0, kind: input, shape index: {}]
  %s1 = inlined_call_operand.vmem [shape: f32[2,32], index: 1, kind: input, shape index: {}]
  %s2 = inlined_call_operand.vmem [shape: bf16[36,8], index: 2, kind: input, shape index: {}]
  %s3 = inlined_call_operand.vmem [shape: bf16[32,8], index: 3, kind: input, shape index: {}]
  %s4 = inlined_call_operand.vmem [shape: bf16[72,8], index: 4, kind: input, shape index: {}]
  %s5 = inlined_call_operand.vmem [shape: f32[7,8], index: 5, kind: input, shape index: {}]
  %s6 = inlined_call_operand.vmem [shape: f32[2,18,18,8], index: 6, kind: output, shape index: {}]
  %s7 = sld [smem:[#allocation0]]
  $region34: #{block_forward.2} parent=0
    _
  %s9 = ssub.s32 1, %s7
  %s10 = scalar_select 0, %s9, %s7
  // Predicated region
  $region2: #{block_forward.2} parent=0 // pred_check
    _
  $region3: #{block_forward.2} parent=0 // pred_check_branch
    %12 = sbr.rel (0) target = $region5
  $region4: #{block_forward.2} parent=0 // pred_region
    _
  $region5: #{block_forward.2} parent=0 // pred_fallthru
    _
  // Predicated region
  $region6: #{block_forward.2} parent=0 // pred_check
    _
  $region7: #{block_forward.2} parent=0 // pred_check_branch
    %14 = sbr.rel (0) target = $region9
  $region8: #{block_forward.2} parent=0 // pred_region
    _
  $region9: #{block_forward.2} parent=0 // pred_fallthru
    _
  // Predicated region
  $region10: #{block_forward.2} parent=0 // pred_check
    _
  $region11: #{block_forward.2} parent=0 // pred_check_branch
    %16 = sbr.rel (0) target = $region13
  $region12: #{block_forward.2} parent=0 // pred_region
    _
  $region13: #{block_forward.2} parent=0 // pred_fallthru
    _
  // Predicated region
  $region14: #{block_forward.2} parent=0 // pred_check
    _
  $region15: #{block_forward.2} parent=0 // pred_check_branch
    %18 = sbr.rel (0) target = $region17
  $region16: #{block_forward.2} parent=0 // pred_region
    _
  $region17: #{block_forward.2} parent=0 // pred_fallthru
    _
  // Predicated region
  $region18: #{block_forward.2} parent=0 // pred_check
    _
  $region19: #{block_forward.2} parent=0 // pred_check_branch
    %20 = sbr.rel (0) target = $region21
  $region20: #{block_forward.2} parent=0 // pred_region
    _
  $region21: #{block_forward.2} parent=0 // pred_fallthru
    _
  // Predicated region
  $region22: #{block_forward.2} parent=0 // pred_check
    _
  $region23: #{block_forward.2} parent=0 // pred_check_branch
    %22 = sbr.rel (0) target = $region25
  $region24: #{block_forward.2} parent=0 // pred_region
    _
  $region25: #{block_forward.2} parent=0 // pred_fallthru
    _
  %v24 = vld [vmem:[%s5] sm:$0x1]
  %v25 = vld [vmem:[%s5 + $0x1] sm:$0x1]
  %v26 = vld [vmem:[%s5 + $0x2] sm:$0x1]
  %v27 = vld [vmem:[%s5 + $0x3] sm:$0x1]
  %v28 = vld [vmem:[%s5 + $0x4] sm:$0x1]
  %v29 = vld [vmem:[%s5 + $0x5] sm:$0x1]
  %v30 = vld [vmem:[%s5 + $0x6] sm:$0x1]
  %vm31 = vcmask 31744
  %32 = vst.msk [vmem:[#allocation2] sm:$0xff] %vm31, 0.0
  %33 = vst.msk [vmem:[#allocation2 + $0x8] sm:$0xff] %vm31, 0.0
  %vm34 = vcmask 25600
  %35 = vst.msk [vmem:[#allocation2 + $0x10] sm:$0x3] %vm34, 0.0
  %36 = vst.msk [vmem:[#allocation2 + $0x18] sm:$0xff] %vm31, 0.0
  %37 = vst.msk [vmem:[#allocation2 + $0x20] sm:$0xff] %vm31, 0.0
  %38 = vst.msk [vmem:[#allocation2 + $0x28] sm:$0x3] %vm34, 0.0
  %39 = vst.msk [vmem:[#allocation2 + $0x30] sm:$0xff] %vm31, 0.0
  %40 = vst.msk [vmem:[#allocation2 + $0x38] sm:$0xff] %vm31, 0.0
  %41 = vst.msk [vmem:[#allocation2 + $0x40] sm:$0x3] %vm34, 0.0
  %42 = vst.msk [vmem:[#allocation2 + $0x48] sm:$0xff] %vm31, 0.0
  %43 = vst.msk [vmem:[#allocation2 + $0x50] sm:$0xff] %vm31, 0.0
  %44 = vst.msk [vmem:[#allocation2 + $0x58] sm:$0x3] %vm34, 0.0
  %45 = vst.msk [vmem:[#allocation2 + $0x60] sm:$0xff] %vm31, 0.0
  %46 = vst.msk [vmem:[#allocation2 + $0x68] sm:$0xff] %vm31, 0.0
  %47 = vst.msk [vmem:[#allocation2 + $0x70] sm:$0x3] %vm34, 0.0
  %48 = vst.msk [vmem:[#allocation2 + $0x78] sm:$0xff] %vm31, 0.0
  %49 = vst.msk [vmem:[#allocation2 + $0x80] sm:$0xff] %vm31, 0.0
  %50 = vst.msk [vmem:[#allocation2 + $0x88] sm:$0x3] %vm34, 0.0
  %51 = vst.msk [vmem:[#allocation2 + $0x90] sm:$0xff] %vm31, 0.0
  %52 = vst.msk [vmem:[#allocation2 + $0x98] sm:$0xff] %vm31, 0.0
  %53 = vst.msk [vmem:[#allocation2 + $0xa0] sm:$0x3] %vm34, 0.0
  %54 = vst.msk [vmem:[#allocation2 + $0xa8] sm:$0xff] %vm31, 0.0
  %55 = vst.msk [vmem:[#allocation2 + $0xb0] sm:$0xff] %vm31, 0.0
  %56 = vst.msk [vmem:[#allocation2 + $0xb8] sm:$0x3] %vm34, 0.0
  %57 = vst.msk [vmem:[#allocation2 + $0xc0] sm:$0xff] %vm31, 0.0
  %58 = vst.msk [vmem:[#allocation2 + $0xc8] sm:$0xff] %vm31, 0.0
  %59 = vst.msk [vmem:[#allocation2 + $0xd0] sm:$0x3] %vm34, 0.0
  %60 = vst.msk [vmem:[#allocation2 + $0xd8] sm:$0xff] %vm31, 0.0
  %61 = vst.msk [vmem:[#allocation2 + $0xe0] sm:$0xff] %vm31, 0.0
  %62 = vst.msk [vmem:[#allocation2 + $0xe8] sm:$0x3] %vm34, 0.0
  %63 = vst.msk [vmem:[#allocation2 + $0xf0] sm:$0xff] %vm31, 0.0
  %64 = vst.msk [vmem:[#allocation2 + $0xf8] sm:$0xff] %vm31, 0.0
  %65 = vst.msk [vmem:[#allocation2 + $0x100] sm:$0x3] %vm34, 0.0
  %66 = vst.msk [vmem:[#allocation2 + $0x108] sm:$0xff] %vm31, 0.0
  %67 = vst.msk [vmem:[#allocation2 + $0x110] sm:$0xff] %vm31, 0.0
  %68 = vst.msk [vmem:[#allocation2 + $0x118] sm:$0x3] %vm34, 0.0
  %69 = vst.msk [vmem:[#allocation2 + $0x120] sm:$0xff] %vm31, 0.0
  %70 = vst.msk [vmem:[#allocation2 + $0x128] sm:$0xff] %vm31, 0.0
  %71 = vst.msk [vmem:[#allocation2 + $0x130] sm:$0x3] %vm34, 0.0
  %72 = vst.msk [vmem:[#allocation2 + $0x138] sm:$0xff] %vm31, 0.0
  %73 = vst.msk [vmem:[#allocation2 + $0x140] sm:$0xff] %vm31, 0.0
  %74 = vst.msk [vmem:[#allocation2 + $0x148] sm:$0x3] %vm34, 0.0
  %75 = vst.msk [vmem:[#allocation2 + $0x150] sm:$0xff] %vm31, 0.0
  %76 = vst.msk [vmem:[#allocation2 + $0x158] sm:$0xff] %vm31, 0.0
  %77 = vst.msk [vmem:[#allocation2 + $0x160] sm:$0x3] %vm34, 0.0
  %78 = vst.msk [vmem:[#allocation2 + $0x168] sm:$0xff] %vm31, 0.0
  %79 = vst.msk [vmem:[#allocation2 + $0x170] sm:$0xff] %vm31, 0.0
  %80 = vst.msk [vmem:[#allocation2 + $0x178] sm:$0x3] %vm34, 0.0
  %81 = vst.msk [vmem:[#allocation2 + $0x180] sm:$0xff] %vm31, 0.0
  %82 = vst.msk [vmem:[#allocation2 + $0x188] sm:$0xff] %vm31, 0.0
  %83 = vst.msk [vmem:[#allocation2 + $0x190] sm:$0x3] %vm34, 0.0
  %84 = vst.msk [vmem:[#allocation2 + $0x198] sm:$0xff] %vm31, 0.0
  %85 = vst.msk [vmem:[#allocation2 + $0x1a0] sm:$0xff] %vm31, 0.0
  %86 = vst.msk [vmem:[#allocation2 + $0x1a8] sm:$0x3] %vm34, 0.0
  %87 = vst.msk [vmem:[#allocation2 + $0x1b0] sm:$0xff] %vm31, 0.0
  %88 = vst.msk [vmem:[#allocation2 + $0x1b8] sm:$0xff] %vm31, 0.0
  %89 = vst.msk [vmem:[#allocation2 + $0x1c0] sm:$0x3] %vm34, 0.0
  %90 = vst.msk [vmem:[#allocation2 + $0x1c8] sm:$0xff] %vm31, 0.0
  %91 = vst.msk [vmem:[#allocation2 + $0x1d0] sm:$0xff] %vm31, 0.0
  %92 = vst.msk [vmem:[#allocation2 + $0x1d8] sm:$0x3] %vm34, 0.0
  %93 = vst.msk [vmem:[#allocation2 + $0x1e0] sm:$0xff] %vm31, 0.0
  %94 = vst.msk [vmem:[#allocation2 + $0x1e8] sm:$0xff] %vm31, 0.0
  %95 = vst.msk [vmem:[#allocation2 + $0x1f0] sm:$0x3] %vm34, 0.0
  %96 = vst.msk [vmem:[#allocation2 + $0x1f8] sm:$0xff] %vm31, 0.0
  %97 = vst.msk [vmem:[#allocation2 + $0x200] sm:$0xff] %vm31, 0.0
  %98 = vst.msk [vmem:[#allocation2 + $0x208] sm:$0x3] %vm34, 0.0
  %99 = vst.msk [vmem:[#allocation2 + $0x210] sm:$0xff] %vm31, 0.0
  %100 = vst.msk [vmem:[#allocation2 + $0x218] sm:$0xff] %vm31, 0.0
  %101 = vst.msk [vmem:[#allocation2 + $0x220] sm:$0x3] %vm34, 0.0
  %102 = vst.msk [vmem:[#allocation2 + $0x228] sm:$0xff] %vm31, 0.0
  %103 = vst.msk [vmem:[#allocation2 + $0x230] sm:$0xff] %vm31, 0.0
  %104 = vst.msk [vmem:[#allocation2 + $0x238] sm:$0x3] %vm34, 0.0
  %105 = vst.msk [vmem:[#allocation2 + $0x240] sm:$0xff] %vm31, 0.0
  %106 = vst.msk [vmem:[#allocation2 + $0x248] sm:$0xff] %vm31, 0.0
  %107 = vst.msk [vmem:[#allocation2 + $0x250] sm:$0x3] %vm34, 0.0
  %108 = vst.msk [vmem:[#allocation2 + $0x258] sm:$0xff] %vm31, 0.0
  %109 = vst.msk [vmem:[#allocation2 + $0x260] sm:$0xff] %vm31, 0.0
  %110 = vst.msk [vmem:[#allocation2 + $0x268] sm:$0x3] %vm34, 0.0
  %111 = vst.msk [vmem:[#allocation2 + $0x270] sm:$0xff] %vm31, 0.0
  %112 = vst.msk [vmem:[#allocation2 + $0x278] sm:$0xff] %vm31, 0.0
  %113 = vst.msk [vmem:[#allocation2 + $0x280] sm:$0x3] %vm34, 0.0
  %114 = vst.msk [vmem:[#allocation2 + $0x288] sm:$0xff] %vm31, 0.0
  %115 = vst.msk [vmem:[#allocation2 + $0x290] sm:$0xff] %vm31, 0.0
  %116 = vst.msk [vmem:[#allocation2 + $0x298] sm:$0x3] %vm34, 0.0
  %117 = vst.msk [vmem:[#allocation2 + $0x2a0] sm:$0xff] %vm31, 0.0
  %118 = vst.msk [vmem:[#allocation2 + $0x2a8] sm:$0xff] %vm31, 0.0
  %119 = vst.msk [vmem:[#allocation2 + $0x2b0] sm:$0x3] %vm34, 0.0
  %120 = vst.msk [vmem:[#allocation2 + $0x2b8] sm:$0xff] %vm31, 0.0
  %121 = vst.msk [vmem:[#allocation2 + $0x2c0] sm:$0xff] %vm31, 0.0
  %122 = vst.msk [vmem:[#allocation2 + $0x2c8] sm:$0x3] %vm34, 0.0
  %123 = vst.msk [vmem:[#allocation2 + $0x2d0] sm:$0xff] %vm31, 0.0
  %124 = vst.msk [vmem:[#allocation2 + $0x2d8] sm:$0xff] %vm31, 0.0
  %125 = vst.msk [vmem:[#allocation2 + $0x2e0] sm:$0x3] %vm34, 0.0
  %126 = vst.msk [vmem:[#allocation2 + $0x2e8] sm:$0xff] %vm31, 0.0
  %127 = vst.msk [vmem:[#allocation2 + $0x2f0] sm:$0xff] %vm31, 0.0
  %128 = vst.msk [vmem:[#allocation2 + $0x2f8] sm:$0x3] %vm34, 0.0
  %129 = vst.msk [vmem:[#allocation2 + $0x300] sm:$0xff] %vm31, 0.0
  %130 = vst.msk [vmem:[#allocation2 + $0x308] sm:$0xff] %vm31, 0.0
  %131 = vst.msk [vmem:[#allocation2 + $0x310] sm:$0x3] %vm34, 0.0
  %132 = vst.msk [vmem:[#allocation2 + $0x318] sm:$0xff] %vm31, 0.0
  %133 = vst.msk [vmem:[#allocation2 + $0x320] sm:$0xff] %vm31, 0.0
  %134 = vst.msk [vmem:[#allocation2 + $0x328] sm:$0x3] %vm34, 0.0
  %135 = vst.msk [vmem:[#allocation2 + $0x330] sm:$0xff] %vm31, 0.0
  %136 = vst.msk [vmem:[#allocation2 + $0x338] sm:$0xff] %vm31, 0.0
  %137 = vst.msk [vmem:[#allocation2 + $0x340] sm:$0x3] %vm34, 0.0
  %138 = vst.msk [vmem:[#allocation2 + $0x348] sm:$0xff] %vm31, 0.0
  %139 = vst.msk [vmem:[#allocation2 + $0x350] sm:$0xff] %vm31, 0.0
  %140 = vst.msk [vmem:[#allocation2 + $0x358] sm:$0x3] %vm34, 0.0
  %v141 = vld [vmem:[%s0] sm:$0xff]
  %v142 = vld [vmem:[%s0 + $0x8] sm:$0xff]
  %v143 = vld [vmem:[%s0 + $0x10] sm:$0xff]
  %v144 = vld [vmem:[%s0 + $0x18] sm:$0xff]
  %v145 = vld [vmem:[%s0 + $0x20] sm:$0xff]
  %v146 = vld [vmem:[%s0 + $0x28] sm:$0xff]
  %v147 = vld [vmem:[%s0 + $0x30] sm:$0xff]
  %v148 = vld [vmem:[%s0 + $0x38] sm:$0xff]
  %v149 = vld [vmem:[%s0 + $0x40] sm:$0xff]
  %v150 = vld [vmem:[%s0 + $0x48] sm:$0xff]
  %v151 = vld [vmem:[%s0 + $0x50] sm:$0xff]
  %v152 = vld [vmem:[%s0 + $0x58] sm:$0xff]
  %v153 = vld [vmem:[%s0 + $0x60] sm:$0xff]
  %v154 = vld [vmem:[%s0 + $0x68] sm:$0xff]
  %v155 = vld [vmem:[%s0 + $0x70] sm:$0xff]
  %v156 = vld [vmem:[%s0 + $0x78] sm:$0xff]
  %v157 = vld [vmem:[%s0 + $0x80] sm:$0xff]
  %v158 = vld [vmem:[%s0 + $0x88] sm:$0xff]
  %v159 = vld [vmem:[%s0 + $0x90] sm:$0xff]
  %v160 = vld [vmem:[%s0 + $0x98] sm:$0xff]
  %v161 = vld [vmem:[%s0 + $0xa0] sm:$0xff]
  %v162 = vld [vmem:[%s0 + $0xa8] sm:$0xff]
  %v163 = vld [vmem:[%s0 + $0xb0] sm:$0xff]
  %v164 = vld [vmem:[%s0 + $0xb8] sm:$0xff]
  %v165 = vld [vmem:[%s0 + $0xc0] sm:$0xff]
  %v166 = vld [vmem:[%s0 + $0xc8] sm:$0xff]
  %v167 = vld [vmem:[%s0 + $0xd0] sm:$0xff]
  %v168 = vld [vmem:[%s0 + $0xd8] sm:$0xff]
  %v169 = vld [vmem:[%s0 + $0xe0] sm:$0xff]
  %v170 = vld [vmem:[%s0 + $0xe8] sm:$0xff]
  %v171 = vld [vmem:[%s0 + $0xf0] sm:$0xff]
  %v172 = vld [vmem:[%s0 + $0xf8] sm:$0xff]
  %v173 = vld [vmem:[%s0 + $0x100] sm:$0xff]
  %v174 = vld [vmem:[%s0 + $0x108] sm:$0xff]
  %v175 = vld [vmem:[%s0 + $0x110] sm:$0xff]
  %v176 = vld [vmem:[%s0 + $0x118] sm:$0xff]
  %v177 = vld [vmem:[%s0 + $0x120] sm:$0xff]
  %v178 = vld [vmem:[%s0 + $0x128] sm:$0xff]
  %v179 = vld [vmem:[%s0 + $0x130] sm:$0xff]
  %v180 = vld [vmem:[%s0 + $0x138] sm:$0xff]
  %v181 = vld [vmem:[%s0 + $0x140] sm:$0xff]
  %v182 = vld [vmem:[%s0 + $0x148] sm:$0xff]
  %v183 = vld [vmem:[%s0 + $0x150] sm:$0xff]
  %v184 = vld [vmem:[%s0 + $0x158] sm:$0xff]
  %v185 = vld [vmem:[%s0 + $0x160] sm:$0xff]
  %v186 = vld [vmem:[%s0 + $0x168] sm:$0xff]
  %v187 = vld [vmem:[%s0 + $0x170] sm:$0xff]
  %v188 = vld [vmem:[%s0 + $0x178] sm:$0xff]
  %v189 = vld [vmem:[%s0 + $0x180] sm:$0xff]
  %v190 = vld [vmem:[%s0 + $0x188] sm:$0xff]
  %v191 = vld [vmem:[%s0 + $0x190] sm:$0xff]
  %v192 = vld [vmem:[%s0 + $0x198] sm:$0xff]
  %v193 = vld [vmem:[%s0 + $0x1a0] sm:$0xff]
  %v194 = vld [vmem:[%s0 + $0x1a8] sm:$0xff]
  %v195 = vld [vmem:[%s0 + $0x1b0] sm:$0xff]
  %v196 = vld [vmem:[%s0 + $0x1b8] sm:$0xff]
  %v197 = vld [vmem:[%s0 + $0x1c0] sm:$0xff]
  %v198 = vld [vmem:[%s0 + $0x1c8] sm:$0xff]
  %v199 = vld [vmem:[%s0 + $0x1d0] sm:$0xff]
  %v200 = vld [vmem:[%s0 + $0x1d8] sm:$0xff]
  %v201 = vld [vmem:[%s0 + $0x1e0] sm:$0xff]
  %v202 = vld [vmem:[%s0 + $0x1e8] sm:$0xff]
  %v203 = vld [vmem:[%s0 + $0x1f0] sm:$0xff]
  %v204 = vld [vmem:[%s0 + $0x1f8] sm:$0xff]
  %s205 = scalar_lea.vmem [#allocation2], 24
  %206 = vst.msk [vmem:[%s205 + $0x1] sm:$0xff] %vm31, %v141
  %207 = vst.msk [vmem:[%s205 + $0x9] sm:$0xff] %vm31, %v142
  %208 = vst.msk [vmem:[%s205 + $0x19] sm:$0xff] %vm31, %v143
  %209 = vst.msk [vmem:[%s205 + $0x21] sm:$0xff] %vm31, %v144
  %210 = vst.msk [vmem:[%s205 + $0x31] sm:$0xff] %vm31, %v145
  %211 = vst.msk [vmem:[%s205 + $0x39] sm:$0xff] %vm31, %v146
  %212 = vst.msk [vmem:[%s205 + $0x49] sm:$0xff] %vm31, %v147
  %213 = vst.msk [vmem:[%s205 + $0x51] sm:$0xff] %vm31, %v148
  %214 = vst.msk [vmem:[%s205 + $0x61] sm:$0xff] %vm31, %v149
  %215 = vst.msk [vmem:[%s205 + $0x69] sm:$0xff] %vm31, %v150
  %216 = vst.msk [vmem:[%s205 + $0x79] sm:$0xff] %vm31, %v151
  %217 = vst.msk [vmem:[%s205 + $0x81] sm:$0xff] %vm31, %v152
  %218 = vst.msk [vmem:[%s205 + $0x91] sm:$0xff] %vm31, %v153
  %219 = vst.msk [vmem:[%s205 + $0x99] sm:$0xff] %vm31, %v154
  %220 = vst.msk [vmem:[%s205 + $0xa9] sm:$0xff] %vm31, %v155
  %221 = vst.msk [vmem:[%s205 + $0xb1] sm:$0xff] %vm31, %v156
  %222 = vst.msk [vmem:[%s205 + $0xc1] sm:$0xff] %vm31, %v157
  %223 = vst.msk [vmem:[%s205 + $0xc9] sm:$0xff] %vm31, %v158
  %224 = vst.msk [vmem:[%s205 + $0xd9] sm:$0xff] %vm31, %v159
  %225 = vst.msk [vmem:[%s205 + $0xe1] sm:$0xff] %vm31, %v160
  %226 = vst.msk [vmem:[%s205 + $0xf1] sm:$0xff] %vm31, %v161
  %227 = vst.msk [vmem:[%s205 + $0xf9] sm:$0xff] %vm31, %v162
  %228 = vst.msk [vmem:[%s205 + $0x109] sm:$0xff] %vm31, %v163
  %229 = vst.msk [vmem:[%s205 + $0x111] sm:$0xff] %vm31, %v164
  %230 = vst.msk [vmem:[%s205 + $0x121] sm:$0xff] %vm31, %v165
  %231 = vst.msk [vmem:[%s205 + $0x129] sm:$0xff] %vm31, %v166
  %232 = vst.msk [vmem:[%s205 + $0x139] sm:$0xff] %vm31, %v167
  %233 = vst.msk [vmem:[%s205 + $0x141] sm:$0xff] %vm31, %v168
  %234 = vst.msk [vmem:[%s205 + $0x151] sm:$0xff] %vm31, %v169
  %235 = vst.msk [vmem:[%s205 + $0x159] sm:$0xff] %vm31, %v170
  %236 = vst.msk [vmem:[%s205 + $0x169] sm:$0xff] %vm31, %v171
  %237 = vst.msk [vmem:[%s205 + $0x171] sm:$0xff] %vm31, %v172
  %238 = vst.msk [vmem:[%s205 + $0x1b1] sm:$0xff] %vm31, %v173
  %239 = vst.msk [vmem:[%s205 + $0x1b9] sm:$0xff] %vm31, %v174
  %240 = vst.msk [vmem:[%s205 + $0x1c9] sm:$0xff] %vm31, %v175
  %241 = vst.msk [vmem:[%s205 + $0x1d1] sm:$0xff] %vm31, %v176
  %242 = vst.msk [vmem:[%s205 + $0x1e1] sm:$0xff] %vm31, %v177
  %243 = vst.msk [vmem:[%s205 + $0x1e9] sm:$0xff] %vm31, %v178
  %244 = vst.msk [vmem:[%s205 + $0x1f9] sm:$0xff] %vm31, %v179
  %245 = vst.msk [vmem:[%s205 + $0x201] sm:$0xff] %vm31, %v180
  %246 = vst.msk [vmem:[%s205 + $0x211] sm:$0xff] %vm31, %v181
  %247 = vst.msk [vmem:[%s205 + $0x219] sm:$0xff] %vm31, %v182
  %248 = vst.msk [vmem:[%s205 + $0x229] sm:$0xff] %vm31, %v183
  %249 = vst.msk [vmem:[%s205 + $0x231] sm:$0xff] %vm31, %v184
  %250 = vst.msk [vmem:[%s205 + $0x241] sm:$0xff] %vm31, %v185
  %251 = vst.msk [vmem:[%s205 + $0x249] sm:$0xff] %vm31, %v186
  %252 = vst.msk [vmem:[%s205 + $0x259] sm:$0xff] %vm31, %v187
  %253 = vst.msk [vmem:[%s205 + $0x261] sm:$0xff] %vm31, %v188
  %254 = vst.msk [vmem:[%s205 + $0x271] sm:$0xff] %vm31, %v189
  %255 = vst.msk [vmem:[%s205 + $0x279] sm:$0xff] %vm31, %v190
  %256 = vst.msk [vmem:[%s205 + $0x289] sm:$0xff] %vm31, %v191
  %257 = vst.msk [vmem:[%s205 + $0x291] sm:$0xff] %vm31, %v192
  %258 = vst.msk [vmem:[%s205 + $0x2a1] sm:$0xff] %vm31, %v193
  %259 = vst.msk [vmem:[%s205 + $0x2a9] sm:$0xff] %vm31, %v194
  %260 = vst.msk [vmem:[%s205 + $0x2b9] sm:$0xff] %vm31, %v195
  %261 = vst.msk [vmem:[%s205 + $0x2c1] sm:$0xff] %vm31, %v196
  %262 = vst.msk [vmem:[%s205 + $0x2d1] sm:$0xff] %vm31, %v197
  %263 = vst.msk [vmem:[%s205 + $0x2d9] sm:$0xff] %vm31, %v198
  %264 = vst.msk [vmem:[%s205 + $0x2e9] sm:$0xff] %vm31, %v199
  %265 = vst.msk [vmem:[%s205 + $0x2f1] sm:$0xff] %vm31, %v200
  %266 = vst.msk [vmem:[%s205 + $0x301] sm:$0xff] %vm31, %v201
  %267 = vst.msk [vmem:[%s205 + $0x309] sm:$0xff] %vm31, %v202
  %268 = vst.msk [vmem:[%s205 + $0x319] sm:$0xff] %vm31, %v203
  %269 = vst.msk [vmem:[%s205 + $0x321] sm:$0xff] %vm31, %v204
  %v270 = vld [vmem:[#allocation2] sm:$0xff]
  %v271 = vld [vmem:[#allocation2 + $0x8] sm:$0xff]
  %v272 = vld [vmem:[#allocation2 + $0x10] sm:$0x3]
  %v273 = vld [vmem:[#allocation2 + $0x18] sm:$0xff]
  %v274 = vld [vmem:[#allocation2 + $0x20] sm:$0xff]
  %v275 = vld [vmem:[#allocation2 + $0x28] sm:$0x3]
  %v276 = vld [vmem:[#allocation2 + $0x30] sm:$0xff]
  %v277 = vld [vmem:[#allocation2 + $0x38] sm:$0xff]
  %v278 = vld [vmem:[#allocation2 + $0x40] sm:$0x3]
  %v279 = vld [vmem:[#allocation2 + $0x48] sm:$0xff]
  %v280 = vld [vmem:[#allocation2 + $0x50] sm:$0xff]
  %v281 = vld [vmem:[#allocation2 + $0x58] sm:$0x3]
  %v282 = vld [vmem:[#allocation2 + $0x60] sm:$0xff]
  %v283 = vld [vmem:[#allocation2 + $0x68] sm:$0xff]
  %v284 = vld [vmem:[#allocation2 + $0x70] sm:$0x3]
  %v285 = vld [vmem:[#allocation2 + $0x78] sm:$0xff]
  %v286 = vld [vmem:[#allocation2 + $0x80] sm:$0xff]
  %v287 = vld [vmem:[#allocation2 + $0x88] sm:$0x3]
  %v288 = vld [vmem:[#allocation2 + $0x90] sm:$0xff]
  %v289 = vld [vmem:[#allocation2 + $0x98] sm:$0xff]
  %v290 = vld [vmem:[#allocation2 + $0xa0] sm:$0x3]
  %v291 = vld [vmem:[#allocation2 + $0xa8] sm:$0xff]
  %v292 = vld [vmem:[#allocation2 + $0xb0] sm:$0xff]
  %v293 = vld [vmem:[#allocation2 + $0xb8] sm:$0x3]
  %v294 = vld [vmem:[#allocation2 + $0xc0] sm:$0xff]
  %v295 = vld [vmem:[#allocation2 + $0xc8] sm:$0xff]
  %v296 = vld [vmem:[#allocation2 + $0xd0] sm:$0x3]
  %v297 = vld [vmem:[#allocation2 + $0xd8] sm:$0xff]
  %v298 = vld [vmem:[#allocation2 + $0xe0] sm:$0xff]
  %v299 = vld [vmem:[#allocation2 + $0xe8] sm:$0x3]
  %v300 = vld [vmem:[#allocation2 + $0xf0] sm:$0xff]
  %v301 = vld [vmem:[#allocation2 + $0xf8] sm:$0xff]
  %v302 = vld [vmem:[#allocation2 + $0x100] sm:$0x3]
  %v303 = vld [vmem:[#allocation2 + $0x108] sm:$0xff]
  %v304 = vld [vmem:[#allocation2 + $0x110] sm:$0xff]
  %v305 = vld [vmem:[#allocation2 + $0x118] sm:$0x3]
  %v306 = vld [vmem:[#allocation2 + $0x120] sm:$0xff]
  %v307 = vld [vmem:[#allocation2 + $0x128] sm:$0xff]
  %v308 = vld [vmem:[#allocation2 + $0x130] sm:$0x3]
  %v309 = vld [vmem:[#allocation2 + $0x138] sm:$0xff]
  %v310 = vld [vmem:[#allocation2 + $0x140] sm:$0xff]
  %v311 = vld [vmem:[#allocation2 + $0x148] sm:$0x3]
  %v312 = vld [vmem:[#allocation2 + $0x150] sm:$0xff]
  %v313 = vld [vmem:[#allocation2 + $0x158] sm:$0xff]
  %v314 = vld [vmem:[#allocation2 + $0x160] sm:$0x3]
  %v315 = vld [vmem:[#allocation2 + $0x168] sm:$0xff]
  %v316 = vld [vmem:[#allocation2 + $0x170] sm:$0xff]
  %v317 = vld [vmem:[#allocation2 + $0x178] sm:$0x3]
  %v318 = vld [vmem:[#allocation2 + $0x180] sm:$0xff]
  %v319 = vld [vmem:[#allocation2 + $0x188] sm:$0xff]
  %v320 = vld [vmem:[#allocation2 + $0x190] sm:$0x3]
  %v321 = vld [vmem:[#allocation2 + $0x198] sm:$0xff]
  %v322 = vld [vmem:[#allocation2 + $0x1a0] sm:$0xff]
  %v323 = vld [vmem:[#allocation2 + $0x1a8] sm:$0x3]
  %v324 = vld [vmem:[#allocation2 + $0x1b0] sm:$0xff]
  %v325 = vld [vmem:[#allocation2 + $0x1b8] sm:$0xff]
  %v326 = vld [vmem:[#allocation2 + $0x1c0] sm:$0x3]
  %v327 = vld [vmem:[#allocation2 + $0x1c8] sm:$0xff]
  %v328 = vld [vmem:[#allocation2 + $0x1d0] sm:$0xff]
  %v329 = vld [vmem:[#allocation2 + $0x1d8] sm:$0x3]
  %v330 = vld [vmem:[#allocation2 + $0x1e0] sm:$0xff]
  %v331 = vld [vmem:[#allocation2 + $0x1e8] sm:$0xff]
  %v332 = vld [vmem:[#allocation2 + $0x1f0] sm:$0x3]
  %v333 = vld [vmem:[#allocation2 + $0x1f8] sm:$0xff]
  %v334 = vld [vmem:[#allocation2 + $0x200] sm:$0xff]
  %v335 = vld [vmem:[#allocation2 + $0x208] sm:$0x3]
  %v336 = vld [vmem:[#allocation2 + $0x210] sm:$0xff]
  %v337 = vld [vmem:[#allocation2 + $0x218] sm:$0xff]
  %v338 = vld [vmem:[#allocation2 + $0x220] sm:$0x3]
  %v339 = vld [vmem:[#allocation2 + $0x228] sm:$0xff]
  %v340 = vld [vmem:[#allocation2 + $0x230] sm:$0xff]
  %v341 = vld [vmem:[#allocation2 + $0x238] sm:$0x3]
  %v342 = vld [vmem:[#allocation2 + $0x240] sm:$0xff]
  %v343 = vld [vmem:[#allocation2 + $0x248] sm:$0xff]
  %v344 = vld [vmem:[#allocation2 + $0x250] sm:$0x3]
  %v345 = vld [vmem:[#allocation2 + $0x258] sm:$0xff]
  %v346 = vld [vmem:[#allocation2 + $0x260] sm:$0xff]
  %v347 = vld [vmem:[#allocation2 + $0x268] sm:$0x3]
  %v348 = vld [vmem:[#allocation2 + $0x270] sm:$0xff]
  %v349 = vld [vmem:[#allocation2 + $0x278] sm:$0xff]
  %v350 = vld [vmem:[#allocation2 + $0x280] sm:$0x3]
  %v351 = vld [vmem:[#allocation2 + $0x288] sm:$0xff]
  %v352 = vld [vmem:[#allocation2 + $0x290] sm:$0xff]
  %v353 = vld [vmem:[#allocation2 + $0x298] sm:$0x3]
  %v354 = vld [vmem:[#allocation2 + $0x2a0] sm:$0xff]
  %v355 = vld [vmem:[#allocation2 + $0x2a8] sm:$0xff]
  %v356 = vld [vmem:[#allocation2 + $0x2b0] sm:$0x3]
  %v357 = vld [vmem:[#allocation2 + $0x2b8] sm:$0xff]
  %v358 = vld [vmem:[#allocation2 + $0x2c0] sm:$0xff]
  %v359 = vld [vmem:[#allocation2 + $0x2c8] sm:$0x3]
  %v360 = vld [vmem:[#allocation2 + $0x2d0] sm:$0xff]
  %v361 = vld [vmem:[#allocation2 + $0x2d8] sm:$0xff]
  %v362 = vld [vmem:[#allocation2 + $0x2e0] sm:$0x3]
  %v363 = vld [vmem:[#allocation2 + $0x2e8] sm:$0xff]
  %v364 = vld [vmem:[#allocation2 + $0x2f0] sm:$0xff]
  %v365 = vld [vmem:[#allocation2 + $0x2f8] sm:$0x3]
  %v366 = vld [vmem:[#allocation2 + $0x300] sm:$0xff]
  %v367 = vld [vmem:[#allocation2 + $0x308] sm:$0xff]
  %v368 = vld [vmem:[#allocation2 + $0x310] sm:$0x3]
  %v369 = vld [vmem:[#allocation2 + $0x318] sm:$0xff]
  %v370 = vld [vmem:[#allocation2 + $0x320] sm:$0xff]
  %v371 = vld [vmem:[#allocation2 + $0x328] sm:$0x3]
  %v372 = vld [vmem:[#allocation2 + $0x330] sm:$0xff]
  %v373 = vld [vmem:[#allocation2 + $0x338] sm:$0xff]
  %v374 = vld [vmem:[#allocation2 + $0x340] sm:$0x3]
  %v375 = vld [vmem:[#allocation2 + $0x348] sm:$0xff]
  %v376 = vld [vmem:[#allocation2 + $0x350] sm:$0xff]
  %v377 = vld [vmem:[#allocation2 + $0x358] sm:$0x3]
  %vm474 = vcmask 1046528
  %v475 = vrot.slane %v270, 1
  %v476 = vrot.slane %v271, 1
  %v477 = vsel %vm474, %v475, %v476
  %v478 = vrot.slane %v272, 1
  %v479 = vsel %vm474, %v476, %v478
  %v480 = vrot.slane %v273, 1
  %v481 = vrot.slane %v274, 1
  %v482 = vsel %vm474, %v480, %v481
  %v483 = vrot.slane %v275, 1
  %v484 = vsel %vm474, %v481, %v483
  %v485 = vrot.slane %v276, 1
  %v486 = vrot.slane %v277, 1
  %v487 = vsel %vm474, %v485, %v486
  %v488 = vrot.slane %v278, 1
  %v489 = vsel %vm474, %v486, %v488
  %v490 = vrot.slane %v279, 1
  %v491 = vrot.slane %v280, 1
  %v492 = vsel %vm474, %v490, %v491
  %v493 = vrot.slane %v281, 1
  %v494 = vsel %vm474, %v491, %v493
  %v495 = vrot.slane %v282, 1
  %v496 = vrot.slane %v283, 1
  %v497 = vsel %vm474, %v495, %v496
  %v498 = vrot.slane %v284, 1
  %v499 = vsel %vm474, %v496, %v498
  %v500 = vrot.slane %v285, 1
  %v501 = vrot.slane %v286, 1
  %v502 = vsel %vm474, %v500, %v501
  %v503 = vrot.slane %v287, 1
  %v504 = vsel %vm474, %v501, %v503
  %v505 = vrot.slane %v288, 1
  %v506 = vrot.slane %v289, 1
  %v507 = vsel %vm474, %v505, %v506
  %v508 = vrot.slane %v290, 1
  %v509 = vsel %vm474, %v506, %v508
  %v510 = vrot.slane %v291, 1
  %v511 = vrot.slane %v292, 1
  %v512 = vsel %vm474, %v510, %v511
  %v513 = vrot.slane %v293, 1
  %v514 = vsel %vm474, %v511, %v513
  %v515 = vrot.slane %v294, 1
  %v516 = vrot.slane %v295, 1
  %v517 = vsel %vm474, %v515, %v516
  %v518 = vrot.slane %v296, 1
  %v519 = vsel %vm474, %v516, %v518
  %v520 = vrot.slane %v297, 1
  %v521 = vrot.slane %v298, 1
  %v522 = vsel %vm474, %v520, %v521
  %v523 = vrot.slane %v299, 1
  %v524 = vsel %vm474, %v521, %v523
  %v525 = vrot.slane %v300, 1
  %v526 = vrot.slane %v301, 1
  %v527 = vsel %vm474, %v525, %v526
  %v528 = vrot.slane %v302, 1
  %v529 = vsel %vm474, %v526, %v528
  %v530 = vrot.slane %v303, 1
  %v531 = vrot.slane %v304, 1
  %v532 = vsel %vm474, %v530, %v531
  %v533 = vrot.slane %v305, 1
  %v534 = vsel %vm474, %v531, %v533
  %v535 = vrot.slane %v306, 1
  %v536 = vrot.slane %v307, 1
  %v537 = vsel %vm474, %v535, %v536
  %v538 = vrot.slane %v308, 1
  %v539 = vsel %vm474, %v536, %v538
  %v540 = vrot.slane %v309, 1
  %v541 = vrot.slane %v310, 1
  %v542 = vsel %vm474, %v540, %v541
  %v543 = vrot.slane %v311, 1
  %v544 = vsel %vm474, %v541, %v543
  %v545 = vrot.slane %v312, 1
  %v546 = vrot.slane %v313, 1
  %v547 = vsel %vm474, %v545, %v546
  %v548 = vrot.slane %v314, 1
  %v549 = vsel %vm474, %v546, %v548
  %v550 = vrot.slane %v315, 1
  %v551 = vrot.slane %v316, 1
  %v552 = vsel %vm474, %v550, %v551
  %v553 = vrot.slane %v317, 1
  %v554 = vsel %vm474, %v551, %v553
  %v555 = vrot.slane %v324, 1
  %v556 = vrot.slane %v325, 1
  %v557 = vsel %vm474, %v555, %v556
  %v558 = vrot.slane %v326, 1
  %v559 = vsel %vm474, %v556, %v558
  %v560 = vrot.slane %v327, 1
  %v561 = vrot.slane %v328, 1
  %v562 = vsel %vm474, %v560, %v561
  %v563 = vrot.slane %v329, 1
  %v564 = vsel %vm474, %v561, %v563
  %v565 = vrot.slane %v330, 1
  %v566 = vrot.slane %v331, 1
  %v567 = vsel %vm474, %v565, %v566
  %v568 = vrot.slane %v332, 1
  %v569 = vsel %vm474, %v566, %v568
  %v570 = vrot.slane %v333, 1
  %v571 = vrot.slane %v334, 1
  %v572 = vsel %vm474, %v570, %v571
  %v573 = vrot.slane %v335, 1
  %v574 = vsel %vm474, %v571, %v573
  %v575 = vrot.slane %v336, 1
  %v576 = vrot.slane %v337, 1
  %v577 = vsel %vm474, %v575, %v576
  %v578 = vrot.slane %v338, 1
  %v579 = vsel %vm474, %v576, %v578
  %v580 = vrot.slane %v339, 1
  %v581 = vrot.slane %v340, 1
  %v582 = vsel %vm474, %v580, %v581
  %v583 = vrot.slane %v341, 1
  %v584 = vsel %vm474, %v581, %v583
  %v585 = vrot.slane %v342, 1
  %v586 = vrot.slane %v343, 1
  %v587 = vsel %vm474, %v585, %v586
  %v588 = vrot.slane %v344, 1
  %v589 = vsel %vm474, %v586, %v588
  %v590 = vrot.slane %v345, 1
  %v591 = vrot.slane %v346, 1
  %v592 = vsel %vm474, %v590, %v591
  %v593 = vrot.slane %v347, 1
  %v594 = vsel %vm474, %v591, %v593
  %v595 = vrot.slane %v348, 1
  %v596 = vrot.slane %v349, 1
  %v597 = vsel %vm474, %v595, %v596
  %v598 = vrot.slane %v350, 1
  %v599 = vsel %vm474, %v596, %v598
  %v600 = vrot.slane %v351, 1
  %v601 = vrot.slane %v352, 1
  %v602 = vsel %vm474, %v600, %v601
  %v603 = vrot.slane %v353, 1
  %v604 = vsel %vm474, %v601, %v603
  %v605 = vrot.slane %v354, 1
  %v606 = vrot.slane %v355, 1
  %v607 = vsel %vm474, %v605, %v606
  %v608 = vrot.slane %v356, 1
  %v609 = vsel %vm474, %v606, %v608
  %v610 = vrot.slane %v357, 1
  %v611 = vrot.slane %v358, 1
  %v612 = vsel %vm474, %v610, %v611
  %v613 = vrot.slane %v359, 1
  %v614 = vsel %vm474, %v611, %v613
  %v615 = vrot.slane %v360, 1
  %v616 = vrot.slane %v361, 1
  %v617 = vsel %vm474, %v615, %v616
  %v618 = vrot.slane %v362, 1
  %v619 = vsel %vm474, %v616, %v618
  %v620 = vrot.slane %v363, 1
  %v621 = vrot.slane %v364, 1
  %v622 = vsel %vm474, %v620, %v621
  %v623 = vrot.slane %v365, 1
  %v624 = vsel %vm474, %v621, %v623
  %v625 = vrot.slane %v366, 1
  %v626 = vrot.slane %v367, 1
  %v627 = vsel %vm474, %v625, %v626
  %v628 = vrot.slane %v368, 1
  %v629 = vsel %vm474, %v626, %v628
  %v630 = vrot.slane %v369, 1
  %v631 = vrot.slane %v370, 1
  %v632 = vsel %vm474, %v630, %v631
  %v633 = vrot.slane %v371, 1
  %v634 = vsel %vm474, %v631, %v633
  %vm635 = vcmask 1045504
  %v636 = vrot.slane %v270, 2
  %v637 = vrot.slane %v271, 2
  %v638 = vsel %vm635, %v636, %v637
  %v639 = vrot.slane %v272, 2
  %v640 = vsel %vm635, %v637, %v639
  %v641 = vrot.slane %v273, 2
  %v642 = vrot.slane %v274, 2
  %v643 = vsel %vm635, %v641, %v642
  %v644 = vrot.slane %v275, 2
  %v645 = vsel %vm635, %v642, %v644
  %v646 = vrot.slane %v276, 2
  %v647 = vrot.slane %v277, 2
  %v648 = vsel %vm635, %v646, %v647
  %v649 = vrot.slane %v278, 2
  %v650 = vsel %vm635, %v647, %v649
  %v651 = vrot.slane %v279, 2
  %v652 = vrot.slane %v280, 2
  %v653 = vsel %vm635, %v651, %v652
  %v654 = vrot.slane %v281, 2
  %v655 = vsel %vm635, %v652, %v654
  %v656 = vrot.slane %v282, 2
  %v657 = vrot.slane %v283, 2
  %v658 = vsel %vm635, %v656, %v657
  %v659 = vrot.slane %v284, 2
  %v660 = vsel %vm635, %v657, %v659
  %v661 = vrot.slane %v285, 2
  %v662 = vrot.slane %v286, 2
  %v663 = vsel %vm635, %v661, %v662
  %v664 = vrot.slane %v287, 2
  %v665 = vsel %vm635, %v662, %v664
  %v666 = vrot.slane %v288, 2
  %v667 = vrot.slane %v289, 2
  %v668 = vsel %vm635, %v666, %v667
  %v669 = vrot.slane %v290, 2
  %v670 = vsel %vm635, %v667, %v669
  %v671 = vrot.slane %v291, 2
  %v672 = vrot.slane %v292, 2
  %v673 = vsel %vm635, %v671, %v672
  %v674 = vrot.slane %v293, 2
  %v675 = vsel %vm635, %v672, %v674
  %v676 = vrot.slane %v294, 2
  %v677 = vrot.slane %v295, 2
  %v678 = vsel %vm635, %v676, %v677
  %v679 = vrot.slane %v296, 2
  %v680 = vsel %vm635, %v677, %v679
  %v681 = vrot.slane %v297, 2
  %v682 = vrot.slane %v298, 2
  %v683 = vsel %vm635, %v681, %v682
  %v684 = vrot.slane %v299, 2
  %v685 = vsel %vm635, %v682, %v684
  %v686 = vrot.slane %v300, 2
  %v687 = vrot.slane %v301, 2
  %v688 = vsel %vm635, %v686, %v687
  %v689 = vrot.slane %v302, 2
  %v690 = vsel %vm635, %v687, %v689
  %v691 = vrot.slane %v303, 2
  %v692 = vrot.slane %v304, 2
  %v693 = vsel %vm635, %v691, %v692
  %v694 = vrot.slane %v305, 2
  %v695 = vsel %vm635, %v692, %v694
  %v696 = vrot.slane %v306, 2
  %v697 = vrot.slane %v307, 2
  %v698 = vsel %vm635, %v696, %v697
  %v699 = vrot.slane %v308, 2
  %v700 = vsel %vm635, %v697, %v699
  %v701 = vrot.slane %v309, 2
  %v702 = vrot.slane %v310, 2
  %v703 = vsel %vm635, %v701, %v702
  %v704 = vrot.slane %v311, 2
  %v705 = vsel %vm635, %v702, %v704
  %v706 = vrot.slane %v312, 2
  %v707 = vrot.slane %v313, 2
  %v708 = vsel %vm635, %v706, %v707
  %v709 = vrot.slane %v314, 2
  %v710 = vsel %vm635, %v707, %v709
  %v711 = vrot.slane %v315, 2
  %v712 = vrot.slane %v316, 2
  %v713 = vsel %vm635, %v711, %v712
  %v714 = vrot.slane %v317, 2
  %v715 = vsel %vm635, %v712, %v714
  %v716 = vrot.slane %v324, 2
  %v717 = vrot.slane %v325, 2
  %v718 = vsel %vm635, %v716, %v717
  %v719 = vrot.slane %v326, 2
  %v720 = vsel %vm635, %v717, %v719
  %v721 = vrot.slane %v327, 2
  %v722 = vrot.slane %v328, 2
  %v723 = vsel %vm635, %v721, %v722
  %v724 = vrot.slane %v329, 2
  %v725 = vsel %vm635, %v722, %v724
  %v726 = vrot.slane %v330, 2
  %v727 = vrot.slane %v331, 2
  %v728 = vsel %vm635, %v726, %v727
  %v729 = vrot.slane %v332, 2
  %v730 = vsel %vm635, %v727, %v729
  %v731 = vrot.slane %v333, 2
  %v732 = vrot.slane %v334, 2
  %v733 = vsel %vm635, %v731, %v732
  %v734 = vrot.slane %v335, 2
  %v735 = vsel %vm635, %v732, %v734
  %v736 = vrot.slane %v336, 2
  %v737 = vrot.slane %v337, 2
  %v738 = vsel %vm635, %v736, %v737
  %v739 = vrot.slane %v338, 2
  %v740 = vsel %vm635, %v737, %v739
  %v741 = vrot.slane %v339, 2
  %v742 = vrot.slane %v340, 2
  %v743 = vsel %vm635, %v741, %v742
  %v744 = vrot.slane %v341, 2
  %v745 = vsel %vm635, %v742, %v744
  %v746 = vrot.slane %v342, 2
  %v747 = vrot.slane %v343, 2
  %v748 = vsel %vm635, %v746, %v747
  %v749 = vrot.slane %v344, 2
  %v750 = vsel %vm635, %v747, %v749
  %v751 = vrot.slane %v345, 2
  %v752 = vrot.slane %v346, 2
  %v753 = vsel %vm635, %v751, %v752
  %v754 = vrot.slane %v347, 2
  %v755 = vsel %vm635, %v752, %v754
  %v756 = vrot.slane %v348, 2
  %v757 = vrot.slane %v349, 2
  %v758 = vsel %vm635, %v756, %v757
  %v759 = vrot.slane %v350, 2
  %v760 = vsel %vm635, %v757, %v759
  %v761 = vrot.slane %v351, 2
  %v762 = vrot.slane %v352, 2
  %v763 = vsel %vm635, %v761, %v762
  %v764 = vrot.slane %v353, 2
  %v765 = vsel %vm635, %v762, %v764
  %v766 = vrot.slane %v354, 2
  %v767 = vrot.slane %v355, 2
  %v768 = vsel %vm635, %v766, %v767
  %v769 = vrot.slane %v356, 2
  %v770 = vsel %vm635, %v767, %v769
  %v771 = vrot.slane %v357, 2
  %v772 = vrot.slane %v358, 2
  %v773 = vsel %vm635, %v771, %v772
  %v774 = vrot.slane %v359, 2
  %v775 = vsel %vm635, %v772, %v774
  %v776 = vrot.slane %v360, 2
  %v777 = vrot.slane %v361, 2
  %v778 = vsel %vm635, %v776, %v777
  %v779 = vrot.slane %v362, 2
  %v780 = vsel %vm635, %v777, %v779
  %v781 = vrot.slane %v363, 2
  %v782 = vrot.slane %v364, 2
  %v783 = vsel %vm635, %v781, %v782
  %v784 = vrot.slane %v365, 2
  %v785 = vsel %vm635, %v782, %v784
  %v786 = vrot.slane %v366, 2
  %v787 = vrot.slane %v367, 2
  %v788 = vsel %vm635, %v786, %v787
  %v789 = vrot.slane %v368, 2
  %v790 = vsel %vm635, %v787, %v789
  %v791 = vrot.slane %v369, 2
  %v792 = vrot.slane %v370, 2
  %v793 = vsel %vm635, %v791, %v792
  %v794 = vrot.slane %v371, 2
  %v795 = vsel %vm635, %v792, %v794
  %v802 = vrot.slane %v318, 1
  %v803 = vrot.slane %v319, 1
  %v804 = vsel %vm474, %v802, %v803
  %v805 = vrot.slane %v320, 1
  %v806 = vsel %vm474, %v803, %v805
  %v807 = vrot.slane %v372, 1
  %v808 = vrot.slane %v373, 1
  %v809 = vsel %vm474, %v807, %v808
  %v810 = vrot.slane %v374, 1
  %v811 = vsel %vm474, %v808, %v810
  %v812 = vrot.slane %v318, 2
  %v813 = vrot.slane %v319, 2
  %v814 = vsel %vm635, %v812, %v813
  %v815 = vrot.slane %v320, 2
  %v816 = vsel %vm635, %v813, %v815
  %v817 = vrot.slane %v372, 2
  %v818 = vrot.slane %v373, 2
  %v819 = vsel %vm635, %v817, %v818
  %v820 = vrot.slane %v374, 2
  %v821 = vsel %vm635, %v818, %v820
  %v828 = vrot.slane %v321, 1
  %v829 = vrot.slane %v322, 1
  %v830 = vsel %vm474, %v828, %v829
  %v831 = vrot.slane %v323, 1
  %v832 = vsel %vm474, %v829, %v831
  %v833 = vrot.slane %v375, 1
  %v834 = vrot.slane %v376, 1
  %v835 = vsel %vm474, %v833, %v834
  %v836 = vrot.slane %v377, 1
  %v837 = vsel %vm474, %v834, %v836
  %v838 = vrot.slane %v321, 2
  %v839 = vrot.slane %v322, 2
  %v840 = vsel %vm635, %v838, %v839
  %v841 = vrot.slane %v323, 2
  %v842 = vsel %vm635, %v839, %v841
  %v843 = vrot.slane %v375, 2
  %v844 = vrot.slane %v376, 2
  %v845 = vsel %vm635, %v843, %v844
  %v846 = vrot.slane %v377, 2
  %v847 = vsel %vm635, %v844, %v846
  %848 = vrot.lane.b32.xlu0 %v477, 4
  %v849 = vpop.permute.xlu0 %848
  %850 = vrot.lane.b32.xlu0 %v479, 4
  %v851 = vpop.permute.xlu0 %850
  %852 = vrot.lane.b32.xlu0 %v482, 4
  %v853 = vpop.permute.xlu0 %852
  %854 = vrot.lane.b32.xlu0 %v484, 4
  %v855 = vpop.permute.xlu0 %854
  %856 = vrot.lane.b32.xlu0 %v487, 4
  %v857 = vpop.permute.xlu0 %856
  %858 = vrot.lane.b32.xlu0 %v489, 4
  %v859 = vpop.permute.xlu0 %858
  %860 = vrot.lane.b32.xlu0 %v492, 4
  %v861 = vpop.permute.xlu0 %860
  %862 = vrot.lane.b32.xlu0 %v494, 4
  %v863 = vpop.permute.xlu0 %862
  %864 = vrot.lane.b32.xlu0 %v497, 4
  %v865 = vpop.permute.xlu0 %864
  %866 = vrot.lane.b32.xlu0 %v499, 4
  %v867 = vpop.permute.xlu0 %866
  %868 = vrot.lane.b32.xlu0 %v502, 4
  %v869 = vpop.permute.xlu0 %868
  %870 = vrot.lane.b32.xlu0 %v504, 4
  %v871 = vpop.permute.xlu0 %870
  %872 = vrot.lane.b32.xlu0 %v507, 4
  %v873 = vpop.permute.xlu0 %872
  %874 = vrot.lane.b32.xlu0 %v509, 4
  %v875 = vpop.permute.xlu0 %874
  %876 = vrot.lane.b32.xlu0 %v512, 4
  %v877 = vpop.permute.xlu0 %876
  %878 = vrot.lane.b32.xlu0 %v514, 4
  %v879 = vpop.permute.xlu0 %878
  %880 = vrot.lane.b32.xlu0 %v517, 4
  %v881 = vpop.permute.xlu0 %880
  %882 = vrot.lane.b32.xlu0 %v519, 4
  %v883 = vpop.permute.xlu0 %882
  %884 = vrot.lane.b32.xlu0 %v522, 4
  %v885 = vpop.permute.xlu0 %884
  %886 = vrot.lane.b32.xlu0 %v524, 4
  %v887 = vpop.permute.xlu0 %886
  %888 = vrot.lane.b32.xlu0 %v527, 4
  %v889 = vpop.permute.xlu0 %888
  %890 = vrot.lane.b32.xlu0 %v529, 4
  %v891 = vpop.permute.xlu0 %890
  %892 = vrot.lane.b32.xlu0 %v532, 4
  %v893 = vpop.permute.xlu0 %892
  %894 = vrot.lane.b32.xlu0 %v534, 4
  %v895 = vpop.permute.xlu0 %894
  %896 = vrot.lane.b32.xlu0 %v537, 4
  %v897 = vpop.permute.xlu0 %896
  %898 = vrot.lane.b32.xlu0 %v539, 4
  %v899 = vpop.permute.xlu0 %898
  %900 = vrot.lane.b32.xlu0 %v542, 4
  %v901 = vpop.permute.xlu0 %900
  %902 = vrot.lane.b32.xlu0 %v544, 4
  %v903 = vpop.permute.xlu0 %902
  %904 = vrot.lane.b32.xlu0 %v547, 4
  %v905 = vpop.permute.xlu0 %904
  %906 = vrot.lane.b32.xlu0 %v549, 4
  %v907 = vpop.permute.xlu0 %906
  %908 = vrot.lane.b32.xlu0 %v552, 4
  %v909 = vpop.permute.xlu0 %908
  %910 = vrot.lane.b32.xlu0 %v554, 4
  %v911 = vpop.permute.xlu0 %910
  %912 = vrot.lane.b32.xlu0 %v557, 4
  %v913 = vpop.permute.xlu0 %912
  %914 = vrot.lane.b32.xlu0 %v559, 4
  %v915 = vpop.permute.xlu0 %914
  %916 = vrot.lane.b32.xlu0 %v562, 4
  %v917 = vpop.permute.xlu0 %916
  %918 = vrot.lane.b32.xlu0 %v564, 4
  %v919 = vpop.permute.xlu0 %918
  %920 = vrot.lane.b32.xlu0 %v567, 4
  %v921 = vpop.permute.xlu0 %920
  %922 = vrot.lane.b32.xlu0 %v569, 4
  %v923 = vpop.permute.xlu0 %922
  %924 = vrot.lane.b32.xlu0 %v572, 4
  %v925 = vpop.permute.xlu0 %924
  %926 = vrot.lane.b32.xlu0 %v574, 4
  %v927 = vpop.permute.xlu0 %926
  %928 = vrot.lane.b32.xlu0 %v577, 4
  %v929 = vpop.permute.xlu0 %928
  %930 = vrot.lane.b32.xlu0 %v579, 4
  %v931 = vpop.permute.xlu0 %930
  %932 = vrot.lane.b32.xlu0 %v582, 4
  %v933 = vpop.permute.xlu0 %932
  %934 = vrot.lane.b32.xlu0 %v584, 4
  %v935 = vpop.permute.xlu0 %934
  %936 = vrot.lane.b32.xlu0 %v587, 4
  %v937 = vpop.permute.xlu0 %936
  %938 = vrot.lane.b32.xlu0 %v589, 4
  %v939 = vpop.permute.xlu0 %938
  %940 = vrot.lane.b32.xlu0 %v592, 4
  %v941 = vpop.permute.xlu0 %940
  %942 = vrot.lane.b32.xlu0 %v594, 4
  %v943 = vpop.permute.xlu0 %942
  %944 = vrot.lane.b32.xlu0 %v597, 4
  %v945 = vpop.permute.xlu0 %944
  %946 = vrot.lane.b32.xlu0 %v599, 4
  %v947 = vpop.permute.xlu0 %946
  %948 = vrot.lane.b32.xlu0 %v602, 4
  %v949 = vpop.permute.xlu0 %948
  %950 = vrot.lane.b32.xlu0 %v604, 4
  %v951 = vpop.permute.xlu0 %950
  %952 = vrot.lane.b32.xlu0 %v607, 4
  %v953 = vpop.permute.xlu0 %952
  %954 = vrot.lane.b32.xlu0 %v609, 4
  %v955 = vpop.permute.xlu0 %954
  %956 = vrot.lane.b32.xlu0 %v612, 4
  %v957 = vpop.permute.xlu0 %956
  %958 = vrot.lane.b32.xlu0 %v614, 4
  %v959 = vpop.permute.xlu0 %958
  %960 = vrot.lane.b32.xlu0 %v617, 4
  %v961 = vpop.permute.xlu0 %960
  %962 = vrot.lane.b32.xlu0 %v619, 4
  %v963 = vpop.permute.xlu0 %962
  %964 = vrot.lane.b32.xlu0 %v622, 4
  %v965 = vpop.permute.xlu0 %964
  %966 = vrot.lane.b32.xlu0 %v624, 4
  %v967 = vpop.permute.xlu0 %966
  %968 = vrot.lane.b32.xlu0 %v627, 4
  %v969 = vpop.permute.xlu0 %968
  %970 = vrot.lane.b32.xlu0 %v629, 4
  %v971 = vpop.permute.xlu0 %970
  %972 = vrot.lane.b32.xlu0 %v632, 4
  %v973 = vpop.permute.xlu0 %972
  %974 = vrot.lane.b32.xlu0 %v634, 4
  %v975 = vpop.permute.xlu0 %974
  %1040 = vrot.lane.b32.xlu0 %v638, 8
  %v1041 = vpop.permute.xlu0 %1040
  %1042 = vrot.lane.b32.xlu0 %v640, 8
  %v1043 = vpop.permute.xlu0 %1042
  %1044 = vrot.lane.b32.xlu0 %v643, 8
  %v1045 = vpop.permute.xlu0 %1044
  %1046 = vrot.lane.b32.xlu0 %v645, 8
  %v1047 = vpop.permute.xlu0 %1046
  %1048 = vrot.lane.b32.xlu0 %v648, 8
  %v1049 = vpop.permute.xlu0 %1048
  %1050 = vrot.lane.b32.xlu0 %v650, 8
  %v1051 = vpop.permute.xlu0 %1050
  %1052 = vrot.lane.b32.xlu0 %v653, 8
  %v1053 = vpop.permute.xlu0 %1052
  %1054 = vrot.lane.b32.xlu0 %v655, 8
  %v1055 = vpop.permute.xlu0 %1054
  %1056 = vrot.lane.b32.xlu0 %v658, 8
  %v1057 = vpop.permute.xlu0 %1056
  %1058 = vrot.lane.b32.xlu0 %v660, 8
  %v1059 = vpop.permute.xlu0 %1058
  %1060 = vrot.lane.b32.xlu0 %v663, 8
  %v1061 = vpop.permute.xlu0 %1060
  %1062 = vrot.lane.b32.xlu0 %v665, 8
  %v1063 = vpop.permute.xlu0 %1062
  %1064 = vrot.lane.b32.xlu0 %v668, 8
  %v1065 = vpop.permute.xlu0 %1064
  %1066 = vrot.lane.b32.xlu0 %v670, 8
  %v1067 = vpop.permute.xlu0 %1066
  %1068 = vrot.lane.b32.xlu0 %v673, 8
  %v1069 = vpop.permute.xlu0 %1068
  %1070 = vrot.lane.b32.xlu0 %v675, 8
  %v1071 = vpop.permute.xlu0 %1070
  %1072 = vrot.lane.b32.xlu0 %v678, 8
  %v1073 = vpop.permute.xlu0 %1072
  %1074 = vrot.lane.b32.xlu0 %v680, 8
  %v1075 = vpop.permute.xlu0 %1074
  %1076 = vrot.lane.b32.xlu0 %v683, 8
  %v1077 = vpop.permute.xlu0 %1076
  %1078 = vrot.lane.b32.xlu0 %v685, 8
  %v1079 = vpop.permute.xlu0 %1078
  %1080 = vrot.lane.b32.xlu0 %v688, 8
  %v1081 = vpop.permute.xlu0 %1080
  %1082 = vrot.lane.b32.xlu0 %v690, 8
  %v1083 = vpop.permute.xlu0 %1082
  %1084 = vrot.lane.b32.xlu0 %v693, 8
  %v1085 = vpop.permute.xlu0 %1084
  %1086 = vrot.lane.b32.xlu0 %v695, 8
  %v1087 = vpop.permute.xlu0 %1086
  %1088 = vrot.lane.b32.xlu0 %v698, 8
  %v1089 = vpop.permute.xlu0 %1088
  %1090 = vrot.lane.b32.xlu0 %v700, 8
  %v1091 = vpop.permute.xlu0 %1090
  %1092 = vrot.lane.b32.xlu0 %v703, 8
  %v1093 = vpop.permute.xlu0 %1092
  %1094 = vrot.lane.b32.xlu0 %v705, 8
  %v1095 = vpop.permute.xlu0 %1094
  %1096 = vrot.lane.b32.xlu0 %v708, 8
  %v1097 = vpop.permute.xlu0 %1096
  %1098 = vrot.lane.b32.xlu0 %v710, 8
  %v1099 = vpop.permute.xlu0 %1098
  %1100 = vrot.lane.b32.xlu0 %v713, 8
  %v1101 = vpop.permute.xlu0 %1100
  %1102 = vrot.lane.b32.xlu0 %v715, 8
  %v1103 = vpop.permute.xlu0 %1102
  %1104 = vrot.lane.b32.xlu0 %v718, 8
  %v1105 = vpop.permute.xlu0 %1104
  %1106 = vrot.lane.b32.xlu0 %v720, 8
  %v1107 = vpop.permute.xlu0 %1106
  %1108 = vrot.lane.b32.xlu0 %v723, 8
  %v1109 = vpop.permute.xlu0 %1108
  %1110 = vrot.lane.b32.xlu0 %v725, 8
  %v1111 = vpop.permute.xlu0 %1110
  %1112 = vrot.lane.b32.xlu0 %v728, 8
  %v1113 = vpop.permute.xlu0 %1112
  %1114 = vrot.lane.b32.xlu0 %v730, 8
  %v1115 = vpop.permute.xlu0 %1114
  %1116 = vrot.lane.b32.xlu0 %v733, 8
  %v1117 = vpop.permute.xlu0 %1116
  %1118 = vrot.lane.b32.xlu0 %v735, 8
  %v1119 = vpop.permute.xlu0 %1118
  %1120 = vrot.lane.b32.xlu0 %v738, 8
  %v1121 = vpop.permute.xlu0 %1120
  %1122 = vrot.lane.b32.xlu0 %v740, 8
  %v1123 = vpop.permute.xlu0 %1122
  %1124 = vrot.lane.b32.xlu0 %v743, 8
  %v1125 = vpop.permute.xlu0 %1124
  %1126 = vrot.lane.b32.xlu0 %v745, 8
  %v1127 = vpop.permute.xlu0 %1126
  %1128 = vrot.lane.b32.xlu0 %v748, 8
  %v1129 = vpop.permute.xlu0 %1128
  %1130 = vrot.lane.b32.xlu0 %v750, 8
  %v1131 = vpop.permute.xlu0 %1130
  %1132 = vrot.lane.b32.xlu0 %v753, 8
  %v1133 = vpop.permute.xlu0 %1132
  %1134 = vrot.lane.b32.xlu0 %v755, 8
  %v1135 = vpop.permute.xlu0 %1134
  %1136 = vrot.lane.b32.xlu0 %v758, 8
  %v1137 = vpop.permute.xlu0 %1136
  %1138 = vrot.lane.b32.xlu0 %v760, 8
  %v1139 = vpop.permute.xlu0 %1138
  %1140 = vrot.lane.b32.xlu0 %v763, 8
  %v1141 = vpop.permute.xlu0 %1140
  %1142 = vrot.lane.b32.xlu0 %v765, 8
  %v1143 = vpop.permute.xlu0 %1142
  %1144 = vrot.lane.b32.xlu0 %v768, 8
  %v1145 = vpop.permute.xlu0 %1144
  %1146 = vrot.lane.b32.xlu0 %v770, 8
  %v1147 = vpop.permute.xlu0 %1146
  %1148 = vrot.lane.b32.xlu0 %v773, 8
  %v1149 = vpop.permute.xlu0 %1148
  %1150 = vrot.lane.b32.xlu0 %v775, 8
  %v1151 = vpop.permute.xlu0 %1150
  %1152 = vrot.lane.b32.xlu0 %v778, 8
  %v1153 = vpop.permute.xlu0 %1152
  %1154 = vrot.lane.b32.xlu0 %v780, 8
  %v1155 = vpop.permute.xlu0 %1154
  %1156 = vrot.lane.b32.xlu0 %v783, 8
  %v1157 = vpop.permute.xlu0 %1156
  %1158 = vrot.lane.b32.xlu0 %v785, 8
  %v1159 = vpop.permute.xlu0 %1158
  %1160 = vrot.lane.b32.xlu0 %v788, 8
  %v1161 = vpop.permute.xlu0 %1160
  %1162 = vrot.lane.b32.xlu0 %v790, 8
  %v1163 = vpop.permute.xlu0 %1162
  %1164 = vrot.lane.b32.xlu0 %v793, 8
  %v1165 = vpop.permute.xlu0 %1164
  %1166 = vrot.lane.b32.xlu0 %v795, 8
  %v1167 = vpop.permute.xlu0 %1166
  %1232 = vrot.lane.b32.xlu0 %v273, 12
  %v1233 = vpop.permute.xlu0 %1232
  %1234 = vrot.lane.b32.xlu0 %v274, 12
  %v1235 = vpop.permute.xlu0 %1234
  %1236 = vrot.lane.b32.xlu0 %v276, 12
  %v1237 = vpop.permute.xlu0 %1236
  %1238 = vrot.lane.b32.xlu0 %v277, 12
  %v1239 = vpop.permute.xlu0 %1238
  %1240 = vrot.lane.b32.xlu0 %v279, 12
  %v1241 = vpop.permute.xlu0 %1240
  %1242 = vrot.lane.b32.xlu0 %v280, 12
  %v1243 = vpop.permute.xlu0 %1242
  %1244 = vrot.lane.b32.xlu0 %v282, 12
  %v1245 = vpop.permute.xlu0 %1244
  %1246 = vrot.lane.b32.xlu0 %v283, 12
  %v1247 = vpop.permute.xlu0 %1246
  %1248 = vrot.lane.b32.xlu0 %v285, 12
  %v1249 = vpop.permute.xlu0 %1248
  %1250 = vrot.lane.b32.xlu0 %v286, 12
  %v1251 = vpop.permute.xlu0 %1250
  %1252 = vrot.lane.b32.xlu0 %v288, 12
  %v1253 = vpop.permute.xlu0 %1252
  %1254 = vrot.lane.b32.xlu0 %v289, 12
  %v1255 = vpop.permute.xlu0 %1254
  %1256 = vrot.lane.b32.xlu0 %v291, 12
  %v1257 = vpop.permute.xlu0 %1256
  %1258 = vrot.lane.b32.xlu0 %v292, 12
  %v1259 = vpop.permute.xlu0 %1258
  %1260 = vrot.lane.b32.xlu0 %v294, 12
  %v1261 = vpop.permute.xlu0 %1260
  %1262 = vrot.lane.b32.xlu0 %v295, 12
  %v1263 = vpop.permute.xlu0 %1262
  %1264 = vrot.lane.b32.xlu0 %v297, 12
  %v1265 = vpop.permute.xlu0 %1264
  %1266 = vrot.lane.b32.xlu0 %v298, 12
  %v1267 = vpop.permute.xlu0 %1266
  %1268 = vrot.lane.b32.xlu0 %v300, 12
  %v1269 = vpop.permute.xlu0 %1268
  %1270 = vrot.lane.b32.xlu0 %v301, 12
  %v1271 = vpop.permute.xlu0 %1270
  %1272 = vrot.lane.b32.xlu0 %v303, 12
  %v1273 = vpop.permute.xlu0 %1272
  %1274 = vrot.lane.b32.xlu0 %v304, 12
  %v1275 = vpop.permute.xlu0 %1274
  %1276 = vrot.lane.b32.xlu0 %v306, 12
  %v1277 = vpop.permute.xlu0 %1276
  %1278 = vrot.lane.b32.xlu0 %v307, 12
  %v1279 = vpop.permute.xlu0 %1278
  %1280 = vrot.lane.b32.xlu0 %v309, 12
  %v1281 = vpop.permute.xlu0 %1280
  %1282 = vrot.lane.b32.xlu0 %v310, 12
  %v1283 = vpop.permute.xlu0 %1282
  %1284 = vrot.lane.b32.xlu0 %v312, 12
  %v1285 = vpop.permute.xlu0 %1284
  %1286 = vrot.lane.b32.xlu0 %v313, 12
  %v1287 = vpop.permute.xlu0 %1286
  %1288 = vrot.lane.b32.xlu0 %v315, 12
  %v1289 = vpop.permute.xlu0 %1288
  %1290 = vrot.lane.b32.xlu0 %v316, 12
  %v1291 = vpop.permute.xlu0 %1290
  %1292 = vrot.lane.b32.xlu0 %v318, 12
  %v1293 = vpop.permute.xlu0 %1292
  %1294 = vrot.lane.b32.xlu0 %v319, 12
  %v1295 = vpop.permute.xlu0 %1294
  %1296 = vrot.lane.b32.xlu0 %v327, 12
  %v1297 = vpop.permute.xlu0 %1296
  %1298 = vrot.lane.b32.xlu0 %v328, 12
  %v1299 = vpop.permute.xlu0 %1298
  %1300 = vrot.lane.b32.xlu0 %v330, 12
  %v1301 = vpop.permute.xlu0 %1300
  %1302 = vrot.lane.b32.xlu0 %v331, 12
  %v1303 = vpop.permute.xlu0 %1302
  %1304 = vrot.lane.b32.xlu0 %v333, 12
  %v1305 = vpop.permute.xlu0 %1304
  %1306 = vrot.lane.b32.xlu0 %v334, 12
  %v1307 = vpop.permute.xlu0 %1306
  %1308 = vrot.lane.b32.xlu0 %v336, 12
  %v1309 = vpop.permute.xlu0 %1308
  %1310 = vrot.lane.b32.xlu0 %v337, 12
  %v1311 = vpop.permute.xlu0 %1310
  %1312 = vrot.lane.b32.xlu0 %v339, 12
  %v1313 = vpop.permute.xlu0 %1312
  %1314 = vrot.lane.b32.xlu0 %v340, 12
  %v1315 = vpop.permute.xlu0 %1314
  %1316 = vrot.lane.b32.xlu0 %v342, 12
  %v1317 = vpop.permute.xlu0 %1316
  %1318 = vrot.lane.b32.xlu0 %v343, 12
  %v1319 = vpop.permute.xlu0 %1318
  %1320 = vrot.lane.b32.xlu0 %v345, 12
  %v1321 = vpop.permute.xlu0 %1320
  %1322 = vrot.lane.b32.xlu0 %v346, 12
  %v1323 = vpop.permute.xlu0 %1322
  %1324 = vrot.lane.b32.xlu0 %v348, 12
  %v1325 = vpop.permute.xlu0 %1324
  %1326 = vrot.lane.b32.xlu0 %v349, 12
  %v1327 = vpop.permute.xlu0 %1326
  %1328 = vrot.lane.b32.xlu0 %v351, 12
  %v1329 = vpop.permute.xlu0 %1328
  %1330 = vrot.lane.b32.xlu0 %v352, 12
  %v1331 = vpop.permute.xlu0 %1330
  %1332 = vrot.lane.b32.xlu0 %v354, 12
  %v1333 = vpop.permute.xlu0 %1332
  %1334 = vrot.lane.b32.xlu0 %v355, 12
  %v1335 = vpop.permute.xlu0 %1334
  %1336 = vrot.lane.b32.xlu0 %v357, 12
  %v1337 = vpop.permute.xlu0 %1336
  %1338 = vrot.lane.b32.xlu0 %v358, 12
  %v1339 = vpop.permute.xlu0 %1338
  %1340 = vrot.lane.b32.xlu0 %v360, 12
  %v1341 = vpop.permute.xlu0 %1340
  %1342 = vrot.lane.b32.xlu0 %v361, 12
  %v1343 = vpop.permute.xlu0 %1342
  %1344 = vrot.lane.b32.xlu0 %v363, 12
  %v1345 = vpop.permute.xlu0 %1344
  %1346 = vrot.lane.b32.xlu0 %v364, 12
  %v1347 = vpop.permute.xlu0 %1346
  %1348 = vrot.lane.b32.xlu0 %v366, 12
  %v1349 = vpop.permute.xlu0 %1348
  %1350 = vrot.lane.b32.xlu0 %v367, 12
  %v1351 = vpop.permute.xlu0 %1350
  %1352 = vrot.lane.b32.xlu0 %v369, 12
  %v1353 = vpop.permute.xlu0 %1352
  %1354 = vrot.lane.b32.xlu0 %v370, 12
  %v1355 = vpop.permute.xlu0 %1354
  %1356 = vrot.lane.b32.xlu0 %v372, 12
  %v1357 = vpop.permute.xlu0 %1356
  %1358 = vrot.lane.b32.xlu0 %v373, 12
  %v1359 = vpop.permute.xlu0 %1358
  %1424 = vrot.lane.b32.xlu0 %v482, 16
  %v1425 = vpop.permute.xlu0 %1424
  %1426 = vrot.lane.b32.xlu0 %v484, 16
  %v1427 = vpop.permute.xlu0 %1426
  %1428 = vrot.lane.b32.xlu0 %v487, 16
  %v1429 = vpop.permute.xlu0 %1428
  %1430 = vrot.lane.b32.xlu0 %v489, 16
  %v1431 = vpop.permute.xlu0 %1430
  %1432 = vrot.lane.b32.xlu0 %v492, 16
  %v1433 = vpop.permute.xlu0 %1432
  %1434 = vrot.lane.b32.xlu0 %v494, 16
  %v1435 = vpop.permute.xlu0 %1434
  %1436 = vrot.lane.b32.xlu0 %v497, 16
  %v1437 = vpop.permute.xlu0 %1436
  %1438 = vrot.lane.b32.xlu0 %v499, 16
  %v1439 = vpop.permute.xlu0 %1438
  %1440 = vrot.lane.b32.xlu0 %v502, 16
  %v1441 = vpop.permute.xlu0 %1440
  %1442 = vrot.lane.b32.xlu0 %v504, 16
  %v1443 = vpop.permute.xlu0 %1442
  %1444 = vrot.lane.b32.xlu0 %v507, 16
  %v1445 = vpop.permute.xlu0 %1444
  %1446 = vrot.lane.b32.xlu0 %v509, 16
  %v1447 = vpop.permute.xlu0 %1446
  %1448 = vrot.lane.b32.xlu0 %v512, 16
  %v1449 = vpop.permute.xlu0 %1448
  %1450 = vrot.lane.b32.xlu0 %v514, 16
  %v1451 = vpop.permute.xlu0 %1450
  %1452 = vrot.lane.b32.xlu0 %v517, 16
  %v1453 = vpop.permute.xlu0 %1452
  %1454 = vrot.lane.b32.xlu0 %v519, 16
  %v1455 = vpop.permute.xlu0 %1454
  %1456 = vrot.lane.b32.xlu0 %v522, 16
  %v1457 = vpop.permute.xlu0 %1456
  %1458 = vrot.lane.b32.xlu0 %v524, 16
  %v1459 = vpop.permute.xlu0 %1458
  %1460 = vrot.lane.b32.xlu0 %v527, 16
  %v1461 = vpop.permute.xlu0 %1460
  %1462 = vrot.lane.b32.xlu0 %v529, 16
  %v1463 = vpop.permute.xlu0 %1462
  %1464 = vrot.lane.b32.xlu0 %v532, 16
  %v1465 = vpop.permute.xlu0 %1464
  %1466 = vrot.lane.b32.xlu0 %v534, 16
  %v1467 = vpop.permute.xlu0 %1466
  %1468 = vrot.lane.b32.xlu0 %v537, 16
  %v1469 = vpop.permute.xlu0 %1468
  %1470 = vrot.lane.b32.xlu0 %v539, 16
  %v1471 = vpop.permute.xlu0 %1470
  %1472 = vrot.lane.b32.xlu0 %v542, 16
  %v1473 = vpop.permute.xlu0 %1472
  %1474 = vrot.lane.b32.xlu0 %v544, 16
  %v1475 = vpop.permute.xlu0 %1474
  %1476 = vrot.lane.b32.xlu0 %v547, 16
  %v1477 = vpop.permute.xlu0 %1476
  %1478 = vrot.lane.b32.xlu0 %v549, 16
  %v1479 = vpop.permute.xlu0 %1478
  %1480 = vrot.lane.b32.xlu0 %v552, 16
  %v1481 = vpop.permute.xlu0 %1480
  %1482 = vrot.lane.b32.xlu0 %v554, 16
  %v1483 = vpop.permute.xlu0 %1482
  %1484 = vrot.lane.b32.xlu0 %v804, 16
  %v1485 = vpop.permute.xlu0 %1484
  %1486 = vrot.lane.b32.xlu0 %v806, 16
  %v1487 = vpop.permute.xlu0 %1486
  %1488 = vrot.lane.b32.xlu0 %v562, 16
  %v1489 = vpop.permute.xlu0 %1488
  %1490 = vrot.lane.b32.xlu0 %v564, 16
  %v1491 = vpop.permute.xlu0 %1490
  %1492 = vrot.lane.b32.xlu0 %v567, 16
  %v1493 = vpop.permute.xlu0 %1492
  %1494 = vrot.lane.b32.xlu0 %v569, 16
  %v1495 = vpop.permute.xlu0 %1494
  %1496 = vrot.lane.b32.xlu0 %v572, 16
  %v1497 = vpop.permute.xlu0 %1496
  %1498 = vrot.lane.b32.xlu0 %v574, 16
  %v1499 = vpop.permute.xlu0 %1498
  %1500 = vrot.lane.b32.xlu0 %v577, 16
  %v1501 = vpop.permute.xlu0 %1500
  %1502 = vrot.lane.b32.xlu0 %v579, 16
  %v1503 = vpop.permute.xlu0 %1502
  %1504 = vrot.lane.b32.xlu0 %v582, 16
  %v1505 = vpop.permute.xlu0 %1504
  %1506 = vrot.lane.b32.xlu0 %v584, 16
  %v1507 = vpop.permute.xlu0 %1506
  %1508 = vrot.lane.b32.xlu0 %v587, 16
  %v1509 = vpop.permute.xlu0 %1508
  %1510 = vrot.lane.b32.xlu0 %v589, 16
  %v1511 = vpop.permute.xlu0 %1510
  %1512 = vrot.lane.b32.xlu0 %v592, 16
  %v1513 = vpop.permute.xlu0 %1512
  %1514 = vrot.lane.b32.xlu0 %v594, 16
  %v1515 = vpop.permute.xlu0 %1514
  %1516 = vrot.lane.b32.xlu0 %v597, 16
  %v1517 = vpop.permute.xlu0 %1516
  %1518 = vrot.lane.b32.xlu0 %v599, 16
  %v1519 = vpop.permute.xlu0 %1518
  %1520 = vrot.lane.b32.xlu0 %v602, 16
  %v1521 = vpop.permute.xlu0 %1520
  %1522 = vrot.lane.b32.xlu0 %v604, 16
  %v1523 = vpop.permute.xlu0 %1522
  %1524 = vrot.lane.b32.xlu0 %v607, 16
  %v1525 = vpop.permute.xlu0 %1524
  %1526 = vrot.lane.b32.xlu0 %v609, 16
  %v1527 = vpop.permute.xlu0 %1526
  %1528 = vrot.lane.b32.xlu0 %v612, 16
  %v1529 = vpop.permute.xlu0 %1528
  %1530 = vrot.lane.b32.xlu0 %v614, 16
  %v1531 = vpop.permute.xlu0 %1530
  %1532 = vrot.lane.b32.xlu0 %v617, 16
  %v1533 = vpop.permute.xlu0 %1532
  %1534 = vrot.lane.b32.xlu0 %v619, 16
  %v1535 = vpop.permute.xlu0 %1534
  %1536 = vrot.lane.b32.xlu0 %v622, 16
  %v1537 = vpop.permute.xlu0 %1536
  %1538 = vrot.lane.b32.xlu0 %v624, 16
  %v1539 = vpop.permute.xlu0 %1538
  %1540 = vrot.lane.b32.xlu0 %v627, 16
  %v1541 = vpop.permute.xlu0 %1540
  %1542 = vrot.lane.b32.xlu0 %v629, 16
  %v1543 = vpop.permute.xlu0 %1542
  %1544 = vrot.lane.b32.xlu0 %v632, 16
  %v1545 = vpop.permute.xlu0 %1544
  %1546 = vrot.lane.b32.xlu0 %v634, 16
  %v1547 = vpop.permute.xlu0 %1546
  %1548 = vrot.lane.b32.xlu0 %v809, 16
  %v1549 = vpop.permute.xlu0 %1548
  %1550 = vrot.lane.b32.xlu0 %v811, 16
  %v1551 = vpop.permute.xlu0 %1550
  %1616 = vrot.lane.b32.xlu0 %v643, 20
  %v1617 = vpop.permute.xlu0 %1616
  %1618 = vrot.lane.b32.xlu0 %v645, 20
  %v1619 = vpop.permute.xlu0 %1618
  %1620 = vrot.lane.b32.xlu0 %v648, 20
  %v1621 = vpop.permute.xlu0 %1620
  %1622 = vrot.lane.b32.xlu0 %v650, 20
  %v1623 = vpop.permute.xlu0 %1622
  %1624 = vrot.lane.b32.xlu0 %v653, 20
  %v1625 = vpop.permute.xlu0 %1624
  %1626 = vrot.lane.b32.xlu0 %v655, 20
  %v1627 = vpop.permute.xlu0 %1626
  %1628 = vrot.lane.b32.xlu0 %v658, 20
  %v1629 = vpop.permute.xlu0 %1628
  %1630 = vrot.lane.b32.xlu0 %v660, 20
  %v1631 = vpop.permute.xlu0 %1630
  %1632 = vrot.lane.b32.xlu0 %v663, 20
  %v1633 = vpop.permute.xlu0 %1632
  %1634 = vrot.lane.b32.xlu0 %v665, 20
  %v1635 = vpop.permute.xlu0 %1634
  %1636 = vrot.lane.b32.xlu0 %v668, 20
  %v1637 = vpop.permute.xlu0 %1636
  %1638 = vrot.lane.b32.xlu0 %v670, 20
  %v1639 = vpop.permute.xlu0 %1638
  %1640 = vrot.lane.b32.xlu0 %v673, 20
  %v1641 = vpop.permute.xlu0 %1640
  %1642 = vrot.lane.b32.xlu0 %v675, 20
  %v1643 = vpop.permute.xlu0 %1642
  %1644 = vrot.lane.b32.xlu0 %v678, 20
  %v1645 = vpop.permute.xlu0 %1644
  %1646 = vrot.lane.b32.xlu0 %v680, 20
  %v1647 = vpop.permute.xlu0 %1646
  %1648 = vrot.lane.b32.xlu0 %v683, 20
  %v1649 = vpop.permute.xlu0 %1648
  %1650 = vrot.lane.b32.xlu0 %v685, 20
  %v1651 = vpop.permute.xlu0 %1650
  %1652 = vrot.lane.b32.xlu0 %v688, 20
  %v1653 = vpop.permute.xlu0 %1652
  %1654 = vrot.lane.b32.xlu0 %v690, 20
  %v1655 = vpop.permute.xlu0 %1654
  %1656 = vrot.lane.b32.xlu0 %v693, 20
  %v1657 = vpop.permute.xlu0 %1656
  %1658 = vrot.lane.b32.xlu0 %v695, 20
  %v1659 = vpop.permute.xlu0 %1658
  %1660 = vrot.lane.b32.xlu0 %v698, 20
  %v1661 = vpop.permute.xlu0 %1660
  %1662 = vrot.lane.b32.xlu0 %v700, 20
  %v1663 = vpop.permute.xlu0 %1662
  %1664 = vrot.lane.b32.xlu0 %v703, 20
  %v1665 = vpop.permute.xlu0 %1664
  %1666 = vrot.lane.b32.xlu0 %v705, 20
  %v1667 = vpop.permute.xlu0 %1666
  %1668 = vrot.lane.b32.xlu0 %v708, 20
  %v1669 = vpop.permute.xlu0 %1668
  %1670 = vrot.lane.b32.xlu0 %v710, 20
  %v1671 = vpop.permute.xlu0 %1670
  %1672 = vrot.lane.b32.xlu0 %v713, 20
  %v1673 = vpop.permute.xlu0 %1672
  %1674 = vrot.lane.b32.xlu0 %v715, 20
  %v1675 = vpop.permute.xlu0 %1674
  %1676 = vrot.lane.b32.xlu0 %v814, 20
  %v1677 = vpop.permute.xlu0 %1676
  %1678 = vrot.lane.b32.xlu0 %v816, 20
  %v1679 = vpop.permute.xlu0 %1678
  %1680 = vrot.lane.b32.xlu0 %v723, 20
  %v1681 = vpop.permute.xlu0 %1680
  %1682 = vrot.lane.b32.xlu0 %v725, 20
  %v1683 = vpop.permute.xlu0 %1682
  %1684 = vrot.lane.b32.xlu0 %v728, 20
  %v1685 = vpop.permute.xlu0 %1684
  %1686 = vrot.lane.b32.xlu0 %v730, 20
  %v1687 = vpop.permute.xlu0 %1686
  %1688 = vrot.lane.b32.xlu0 %v733, 20
  %v1689 = vpop.permute.xlu0 %1688
  %1690 = vrot.lane.b32.xlu0 %v735, 20
  %v1691 = vpop.permute.xlu0 %1690
  %1692 = vrot.lane.b32.xlu0 %v738, 20
  %v1693 = vpop.permute.xlu0 %1692
  %1694 = vrot.lane.b32.xlu0 %v740, 20
  %v1695 = vpop.permute.xlu0 %1694
  %1696 = vrot.lane.b32.xlu0 %v743, 20
  %v1697 = vpop.permute.xlu0 %1696
  %1698 = vrot.lane.b32.xlu0 %v745, 20
  %v1699 = vpop.permute.xlu0 %1698
  %1700 = vrot.lane.b32.xlu0 %v748, 20
  %v1701 = vpop.permute.xlu0 %1700
  %1702 = vrot.lane.b32.xlu0 %v750, 20
  %v1703 = vpop.permute.xlu0 %1702
  %1704 = vrot.lane.b32.xlu0 %v753, 20
  %v1705 = vpop.permute.xlu0 %1704
  %1706 = vrot.lane.b32.xlu0 %v755, 20
  %v1707 = vpop.permute.xlu0 %1706
  %1708 = vrot.lane.b32.xlu0 %v758, 20
  %v1709 = vpop.permute.xlu0 %1708
  %1710 = vrot.lane.b32.xlu0 %v760, 20
  %v1711 = vpop.permute.xlu0 %1710
  %1712 = vrot.lane.b32.xlu0 %v763, 20
  %v1713 = vpop.permute.xlu0 %1712
  %1714 = vrot.lane.b32.xlu0 %v765, 20
  %v1715 = vpop.permute.xlu0 %1714
  %1716 = vrot.lane.b32.xlu0 %v768, 20
  %v1717 = vpop.permute.xlu0 %1716
  %1718 = vrot.lane.b32.xlu0 %v770, 20
  %v1719 = vpop.permute.xlu0 %1718
  %1720 = vrot.lane.b32.xlu0 %v773, 20
  %v1721 = vpop.permute.xlu0 %1720
  %1722 = vrot.lane.b32.xlu0 %v775, 20
  %v1723 = vpop.permute.xlu0 %1722
  %1724 = vrot.lane.b32.xlu0 %v778, 20
  %v1725 = vpop.permute.xlu0 %1724
  %1726 = vrot.lane.b32.xlu0 %v780, 20
  %v1727 = vpop.permute.xlu0 %1726
  %1728 = vrot.lane.b32.xlu0 %v783, 20
  %v1729 = vpop.permute.xlu0 %1728
  %1730 = vrot.lane.b32.xlu0 %v785, 20
  %v1731 = vpop.permute.xlu0 %1730
  %1732 = vrot.lane.b32.xlu0 %v788, 20
  %v1733 = vpop.permute.xlu0 %1732
  %1734 = vrot.lane.b32.xlu0 %v790, 20
  %v1735 = vpop.permute.xlu0 %1734
  %1736 = vrot.lane.b32.xlu0 %v793, 20
  %v1737 = vpop.permute.xlu0 %1736
  %1738 = vrot.lane.b32.xlu0 %v795, 20
  %v1739 = vpop.permute.xlu0 %1738
  %1740 = vrot.lane.b32.xlu0 %v819, 20
  %v1741 = vpop.permute.xlu0 %1740
  %1742 = vrot.lane.b32.xlu0 %v821, 20
  %v1743 = vpop.permute.xlu0 %1742
  %1808 = vrot.lane.b32.xlu0 %v276, 24
  %v1809 = vpop.permute.xlu0 %1808
  %1810 = vrot.lane.b32.xlu0 %v277, 24
  %v1811 = vpop.permute.xlu0 %1810
  %1812 = vrot.lane.b32.xlu0 %v279, 24
  %v1813 = vpop.permute.xlu0 %1812
  %1814 = vrot.lane.b32.xlu0 %v280, 24
  %v1815 = vpop.permute.xlu0 %1814
  %1816 = vrot.lane.b32.xlu0 %v282, 24
  %v1817 = vpop.permute.xlu0 %1816
  %1818 = vrot.lane.b32.xlu0 %v283, 24
  %v1819 = vpop.permute.xlu0 %1818
  %1820 = vrot.lane.b32.xlu0 %v285, 24
  %v1821 = vpop.permute.xlu0 %1820
  %1822 = vrot.lane.b32.xlu0 %v286, 24
  %v1823 = vpop.permute.xlu0 %1822
  %1824 = vrot.lane.b32.xlu0 %v288, 24
  %v1825 = vpop.permute.xlu0 %1824
  %1826 = vrot.lane.b32.xlu0 %v289, 24
  %v1827 = vpop.permute.xlu0 %1826
  %1828 = vrot.lane.b32.xlu0 %v291, 24
  %v1829 = vpop.permute.xlu0 %1828
  %1830 = vrot.lane.b32.xlu0 %v292, 24
  %v1831 = vpop.permute.xlu0 %1830
  %1832 = vrot.lane.b32.xlu0 %v294, 24
  %v1833 = vpop.permute.xlu0 %1832
  %1834 = vrot.lane.b32.xlu0 %v295, 24
  %v1835 = vpop.permute.xlu0 %1834
  %1836 = vrot.lane.b32.xlu0 %v297, 24
  %v1837 = vpop.permute.xlu0 %1836
  %1838 = vrot.lane.b32.xlu0 %v298, 24
  %v1839 = vpop.permute.xlu0 %1838
  %1840 = vrot.lane.b32.xlu0 %v300, 24
  %v1841 = vpop.permute.xlu0 %1840
  %1842 = vrot.lane.b32.xlu0 %v301, 24
  %v1843 = vpop.permute.xlu0 %1842
  %1844 = vrot.lane.b32.xlu0 %v303, 24
  %v1845 = vpop.permute.xlu0 %1844
  %1846 = vrot.lane.b32.xlu0 %v304, 24
  %v1847 = vpop.permute.xlu0 %1846
  %1848 = vrot.lane.b32.xlu0 %v306, 24
  %v1849 = vpop.permute.xlu0 %1848
  %1850 = vrot.lane.b32.xlu0 %v307, 24
  %v1851 = vpop.permute.xlu0 %1850
  %1852 = vrot.lane.b32.xlu0 %v309, 24
  %v1853 = vpop.permute.xlu0 %1852
  %1854 = vrot.lane.b32.xlu0 %v310, 24
  %v1855 = vpop.permute.xlu0 %1854
  %1856 = vrot.lane.b32.xlu0 %v312, 24
  %v1857 = vpop.permute.xlu0 %1856
  %1858 = vrot.lane.b32.xlu0 %v313, 24
  %v1859 = vpop.permute.xlu0 %1858
  %1860 = vrot.lane.b32.xlu0 %v315, 24
  %v1861 = vpop.permute.xlu0 %1860
  %1862 = vrot.lane.b32.xlu0 %v316, 24
  %v1863 = vpop.permute.xlu0 %1862
  %1864 = vrot.lane.b32.xlu0 %v318, 24
  %v1865 = vpop.permute.xlu0 %1864
  %1866 = vrot.lane.b32.xlu0 %v319, 24
  %v1867 = vpop.permute.xlu0 %1866
  %1868 = vrot.lane.b32.xlu0 %v321, 24
  %v1869 = vpop.permute.xlu0 %1868
  %1870 = vrot.lane.b32.xlu0 %v322, 24
  %v1871 = vpop.permute.xlu0 %1870
  %1872 = vrot.lane.b32.xlu0 %v330, 24
  %v1873 = vpop.permute.xlu0 %1872
  %1874 = vrot.lane.b32.xlu0 %v331, 24
  %v1875 = vpop.permute.xlu0 %1874
  %1876 = vrot.lane.b32.xlu0 %v333, 24
  %v1877 = vpop.permute.xlu0 %1876
  %1878 = vrot.lane.b32.xlu0 %v334, 24
  %v1879 = vpop.permute.xlu0 %1878
  %1880 = vrot.lane.b32.xlu0 %v336, 24
  %v1881 = vpop.permute.xlu0 %1880
  %1882 = vrot.lane.b32.xlu0 %v337, 24
  %v1883 = vpop.permute.xlu0 %1882
  %1884 = vrot.lane.b32.xlu0 %v339, 24
  %v1885 = vpop.permute.xlu0 %1884
  %1886 = vrot.lane.b32.xlu0 %v340, 24
  %v1887 = vpop.permute.xlu0 %1886
  %1888 = vrot.lane.b32.xlu0 %v342, 24
  %v1889 = vpop.permute.xlu0 %1888
  %1890 = vrot.lane.b32.xlu0 %v343, 24
  %v1891 = vpop.permute.xlu0 %1890
  %1892 = vrot.lane.b32.xlu0 %v345, 24
  %v1893 = vpop.permute.xlu0 %1892
  %1894 = vrot.lane.b32.xlu0 %v346, 24
  %v1895 = vpop.permute.xlu0 %1894
  %1896 = vrot.lane.b32.xlu0 %v348, 24
  %v1897 = vpop.permute.xlu0 %1896
  %1898 = vrot.lane.b32.xlu0 %v349, 24
  %v1899 = vpop.permute.xlu0 %1898
  %1900 = vrot.lane.b32.xlu0 %v351, 24
  %v1901 = vpop.permute.xlu0 %1900
  %1902 = vrot.lane.b32.xlu0 %v352, 24
  %v1903 = vpop.permute.xlu0 %1902
  %1904 = vrot.lane.b32.xlu0 %v354, 24
  %v1905 = vpop.permute.xlu0 %1904
  %1906 = vrot.lane.b32.xlu0 %v355, 24
  %v1907 = vpop.permute.xlu0 %1906
  %1908 = vrot.lane.b32.xlu0 %v357, 24
  %v1909 = vpop.permute.xlu0 %1908
  %1910 = vrot.lane.b32.xlu0 %v358, 24
  %v1911 = vpop.permute.xlu0 %1910
  %1912 = vrot.lane.b32.xlu0 %v360, 24
  %v1913 = vpop.permute.xlu0 %1912
  %1914 = vrot.lane.b32.xlu0 %v361, 24
  %v1915 = vpop.permute.xlu0 %1914
  %1916 = vrot.lane.b32.xlu0 %v363, 24
  %v1917 = vpop.permute.xlu0 %1916
  %1918 = vrot.lane.b32.xlu0 %v364, 24
  %v1919 = vpop.permute.xlu0 %1918
  %1920 = vrot.lane.b32.xlu0 %v366, 24
  %v1921 = vpop.permute.xlu0 %1920
  %1922 = vrot.lane.b32.xlu0 %v367, 24
  %v1923 = vpop.permute.xlu0 %1922
  %1924 = vrot.lane.b32.xlu0 %v369, 24
  %v1925 = vpop.permute.xlu0 %1924
  %1926 = vrot.lane.b32.xlu0 %v370, 24
  %v1927 = vpop.permute.xlu0 %1926
  %1928 = vrot.lane.b32.xlu0 %v372, 24
  %v1929 = vpop.permute.xlu0 %1928
  %1930 = vrot.lane.b32.xlu0 %v373, 24
  %v1931 = vpop.permute.xlu0 %1930
  %1932 = vrot.lane.b32.xlu0 %v375, 24
  %v1933 = vpop.permute.xlu0 %1932
  %1934 = vrot.lane.b32.xlu0 %v376, 24
  %v1935 = vpop.permute.xlu0 %1934
  %2000 = vrot.lane.b32.xlu0 %v487, 28
  %v2001 = vpop.permute.xlu0 %2000
  %2002 = vrot.lane.b32.xlu0 %v489, 28
  %v2003 = vpop.permute.xlu0 %2002
  %2004 = vrot.lane.b32.xlu0 %v492, 28
  %v2005 = vpop.permute.xlu0 %2004
  %2006 = vrot.lane.b32.xlu0 %v494, 28
  %v2007 = vpop.permute.xlu0 %2006
  %2008 = vrot.lane.b32.xlu0 %v497, 28
  %v2009 = vpop.permute.xlu0 %2008
  %2010 = vrot.lane.b32.xlu0 %v499, 28
  %v2011 = vpop.permute.xlu0 %2010
  %2012 = vrot.lane.b32.xlu0 %v502, 28
  %v2013 = vpop.permute.xlu0 %2012
  %2014 = vrot.lane.b32.xlu0 %v504, 28
  %v2015 = vpop.permute.xlu0 %2014
  %2016 = vrot.lane.b32.xlu0 %v507, 28
  %v2017 = vpop.permute.xlu0 %2016
  %2018 = vrot.lane.b32.xlu0 %v509, 28
  %v2019 = vpop.permute.xlu0 %2018
  %2020 = vrot.lane.b32.xlu0 %v512, 28
  %v2021 = vpop.permute.xlu0 %2020
  %2022 = vrot.lane.b32.xlu0 %v514, 28
  %v2023 = vpop.permute.xlu0 %2022
  %2024 = vrot.lane.b32.xlu0 %v517, 28
  %v2025 = vpop.permute.xlu0 %2024
  %2026 = vrot.lane.b32.xlu0 %v519, 28
  %v2027 = vpop.permute.xlu0 %2026
  %2028 = vrot.lane.b32.xlu0 %v522, 28
  %v2029 = vpop.permute.xlu0 %2028
  %2030 = vrot.lane.b32.xlu0 %v524, 28
  %v2031 = vpop.permute.xlu0 %2030
  %2032 = vrot.lane.b32.xlu0 %v527, 28
  %v2033 = vpop.permute.xlu0 %2032
  %2034 = vrot.lane.b32.xlu0 %v529, 28
  %v2035 = vpop.permute.xlu0 %2034
  %2036 = vrot.lane.b32.xlu0 %v532, 28
  %v2037 = vpop.permute.xlu0 %2036
  %2038 = vrot.lane.b32.xlu0 %v534, 28
  %v2039 = vpop.permute.xlu0 %2038
  %2040 = vrot.lane.b32.xlu0 %v537, 28
  %v2041 = vpop.permute.xlu0 %2040
  %2042 = vrot.lane.b32.xlu0 %v539, 28
  %v2043 = vpop.permute.xlu0 %2042
  %2044 = vrot.lane.b32.xlu0 %v542, 28
  %v2045 = vpop.permute.xlu0 %2044
  %2046 = vrot.lane.b32.xlu0 %v544, 28
  %v2047 = vpop.permute.xlu0 %2046
  %2048 = vrot.lane.b32.xlu0 %v547, 28
  %v2049 = vpop.permute.xlu0 %2048
  %2050 = vrot.lane.b32.xlu0 %v549, 28
  %v2051 = vpop.permute.xlu0 %2050
  %2052 = vrot.lane.b32.xlu0 %v552, 28
  %v2053 = vpop.permute.xlu0 %2052
  %2054 = vrot.lane.b32.xlu0 %v554, 28
  %v2055 = vpop.permute.xlu0 %2054
  %2056 = vrot.lane.b32.xlu0 %v804, 28
  %v2057 = vpop.permute.xlu0 %2056
  %2058 = vrot.lane.b32.xlu0 %v806, 28
  %v2059 = vpop.permute.xlu0 %2058
  %2060 = vrot.lane.b32.xlu0 %v830, 28
  %v2061 = vpop.permute.xlu0 %2060
  %2062 = vrot.lane.b32.xlu0 %v832, 28
  %v2063 = vpop.permute.xlu0 %2062
  %2064 = vrot.lane.b32.xlu0 %v567, 28
  %v2065 = vpop.permute.xlu0 %2064
  %2066 = vrot.lane.b32.xlu0 %v569, 28
  %v2067 = vpop.permute.xlu0 %2066
  %2068 = vrot.lane.b32.xlu0 %v572, 28
  %v2069 = vpop.permute.xlu0 %2068
  %2070 = vrot.lane.b32.xlu0 %v574, 28
  %v2071 = vpop.permute.xlu0 %2070
  %2072 = vrot.lane.b32.xlu0 %v577, 28
  %v2073 = vpop.permute.xlu0 %2072
  %2074 = vrot.lane.b32.xlu0 %v579, 28
  %v2075 = vpop.permute.xlu0 %2074
  %2076 = vrot.lane.b32.xlu0 %v582, 28
  %v2077 = vpop.permute.xlu0 %2076
  %2078 = vrot.lane.b32.xlu0 %v584, 28
  %v2079 = vpop.permute.xlu0 %2078
  %2080 = vrot.lane.b32.xlu0 %v587, 28
  %v2081 = vpop.permute.xlu0 %2080
  %2082 = vrot.lane.b32.xlu0 %v589, 28
  %v2083 = vpop.permute.xlu0 %2082
  %2084 = vrot.lane.b32.xlu0 %v592, 28
  %v2085 = vpop.permute.xlu0 %2084
  %2086 = vrot.lane.b32.xlu0 %v594, 28
  %v2087 = vpop.permute.xlu0 %2086
  %2088 = vrot.lane.b32.xlu0 %v597, 28
  %v2089 = vpop.permute.xlu0 %2088
  %2090 = vrot.lane.b32.xlu0 %v599, 28
  %v2091 = vpop.permute.xlu0 %2090
  %2092 = vrot.lane.b32.xlu0 %v602, 28
  %v2093 = vpop.permute.xlu0 %2092
  %2094 = vrot.lane.b32.xlu0 %v604, 28
  %v2095 = vpop.permute.xlu0 %2094
  %2096 = vrot.lane.b32.xlu0 %v607, 28
  %v2097 = vpop.permute.xlu0 %2096
  %2098 = vrot.lane.b32.xlu0 %v609, 28
  %v2099 = vpop.permute.xlu0 %2098
  %2100 = vrot.lane.b32.xlu0 %v612, 28
  %v2101 = vpop.permute.xlu0 %2100
  %2102 = vrot.lane.b32.xlu0 %v614, 28
  %v2103 = vpop.permute.xlu0 %2102
  %2104 = vrot.lane.b32.xlu0 %v617, 28
  %v2105 = vpop.permute.xlu0 %2104
  %2106 = vrot.lane.b32.xlu0 %v619, 28
  %v2107 = vpop.permute.xlu0 %2106
  %2108 = vrot.lane.b32.xlu0 %v622, 28
  %v2109 = vpop.permute.xlu0 %2108
  %2110 = vrot.lane.b32.xlu0 %v624, 28
  %v2111 = vpop.permute.xlu0 %2110
  %2112 = vrot.lane.b32.xlu0 %v627, 28
  %v2113 = vpop.permute.xlu0 %2112
  %2114 = vrot.lane.b32.xlu0 %v629, 28
  %v2115 = vpop.permute.xlu0 %2114
  %2116 = vrot.lane.b32.xlu0 %v632, 28
  %v2117 = vpop.permute.xlu0 %2116
  %2118 = vrot.lane.b32.xlu0 %v634, 28
  %v2119 = vpop.permute.xlu0 %2118
  %2120 = vrot.lane.b32.xlu0 %v809, 28
  %v2121 = vpop.permute.xlu0 %2120
  %2122 = vrot.lane.b32.xlu0 %v811, 28
  %v2123 = vpop.permute.xlu0 %2122
  %2124 = vrot.lane.b32.xlu0 %v835, 28
  %v2125 = vpop.permute.xlu0 %2124
  %2126 = vrot.lane.b32.xlu0 %v837, 28
  %v2127 = vpop.permute.xlu0 %2126
  %2192 = vrot.lane.b32.xlu0 %v648, 32
  %v2193 = vpop.permute.xlu0 %2192
  %2194 = vrot.lane.b32.xlu0 %v650, 32
  %v2195 = vpop.permute.xlu0 %2194
  %2196 = vrot.lane.b32.xlu0 %v653, 32
  %v2197 = vpop.permute.xlu0 %2196
  %2198 = vrot.lane.b32.xlu0 %v655, 32
  %v2199 = vpop.permute.xlu0 %2198
  %2200 = vrot.lane.b32.xlu0 %v658, 32
  %v2201 = vpop.permute.xlu0 %2200
  %2202 = vrot.lane.b32.xlu0 %v660, 32
  %v2203 = vpop.permute.xlu0 %2202
  %2204 = vrot.lane.b32.xlu0 %v663, 32
  %v2205 = vpop.permute.xlu0 %2204
  %2206 = vrot.lane.b32.xlu0 %v665, 32
  %v2207 = vpop.permute.xlu0 %2206
  %2208 = vrot.lane.b32.xlu0 %v668, 32
  %v2209 = vpop.permute.xlu0 %2208
  %2210 = vrot.lane.b32.xlu0 %v670, 32
  %v2211 = vpop.permute.xlu0 %2210
  %2212 = vrot.lane.b32.xlu0 %v673, 32
  %v2213 = vpop.permute.xlu0 %2212
  %2214 = vrot.lane.b32.xlu0 %v675, 32
  %v2215 = vpop.permute.xlu0 %2214
  %2216 = vrot.lane.b32.xlu0 %v678, 32
  %v2217 = vpop.permute.xlu0 %2216
  %2218 = vrot.lane.b32.xlu0 %v680, 32
  %v2219 = vpop.permute.xlu0 %2218
  %2220 = vrot.lane.b32.xlu0 %v683, 32
  %v2221 = vpop.permute.xlu0 %2220
  %2222 = vrot.lane.b32.xlu0 %v685, 32
  %v2223 = vpop.permute.xlu0 %2222
  %2224 = vrot.lane.b32.xlu0 %v688, 32
  %v2225 = vpop.permute.xlu0 %2224
  %2226 = vrot.lane.b32.xlu0 %v690, 32
  %v2227 = vpop.permute.xlu0 %2226
  %2228 = vrot.lane.b32.xlu0 %v693, 32
  %v2229 = vpop.permute.xlu0 %2228
  %2230 = vrot.lane.b32.xlu0 %v695, 32
  %v2231 = vpop.permute.xlu0 %2230
  %2232 = vrot.lane.b32.xlu0 %v698, 32
  %v2233 = vpop.permute.xlu0 %2232
  %2234 = vrot.lane.b32.xlu0 %v700, 32
  %v2235 = vpop.permute.xlu0 %2234
  %2236 = vrot.lane.b32.xlu0 %v703, 32
  %v2237 = vpop.permute.xlu0 %2236
  %2238 = vrot.lane.b32.xlu0 %v705, 32
  %v2239 = vpop.permute.xlu0 %2238
  %2240 = vrot.lane.b32.xlu0 %v708, 32
  %v2241 = vpop.permute.xlu0 %2240
  %2242 = vrot.lane.b32.xlu0 %v710, 32
  %v2243 = vpop.permute.xlu0 %2242
  %2244 = vrot.lane.b32.xlu0 %v713, 32
  %v2245 = vpop.permute.xlu0 %2244
  %2246 = vrot.lane.b32.xlu0 %v715, 32
  %v2247 = vpop.permute.xlu0 %2246
  %2248 = vrot.lane.b32.xlu0 %v814, 32
  %v2249 = vpop.permute.xlu0 %2248
  %2250 = vrot.lane.b32.xlu0 %v816, 32
  %v2251 = vpop.permute.xlu0 %2250
  %2252 = vrot.lane.b32.xlu0 %v840, 32
  %v2253 = vpop.permute.xlu0 %2252
  %2254 = vrot.lane.b32.xlu0 %v842, 32
  %v2255 = vpop.permute.xlu0 %2254
  %2256 = vrot.lane.b32.xlu0 %v728, 32
  %v2257 = vpop.permute.xlu0 %2256
  %2258 = vrot.lane.b32.xlu0 %v730, 32
  %v2259 = vpop.permute.xlu0 %2258
  %2260 = vrot.lane.b32.xlu0 %v733, 32
  %v2261 = vpop.permute.xlu0 %2260
  %2262 = vrot.lane.b32.xlu0 %v735, 32
  %v2263 = vpop.permute.xlu0 %2262
  %2264 = vrot.lane.b32.xlu0 %v738, 32
  %v2265 = vpop.permute.xlu0 %2264
  %2266 = vrot.lane.b32.xlu0 %v740, 32
  %v2267 = vpop.permute.xlu0 %2266
  %2268 = vrot.lane.b32.xlu0 %v743, 32
  %v2269 = vpop.permute.xlu0 %2268
  %2270 = vrot.lane.b32.xlu0 %v745, 32
  %v2271 = vpop.permute.xlu0 %2270
  %2272 = vrot.lane.b32.xlu0 %v748, 32
  %v2273 = vpop.permute.xlu0 %2272
  %2274 = vrot.lane.b32.xlu0 %v750, 32
  %v2275 = vpop.permute.xlu0 %2274
  %2276 = vrot.lane.b32.xlu0 %v753, 32
  %v2277 = vpop.permute.xlu0 %2276
  %2278 = vrot.lane.b32.xlu0 %v755, 32
  %v2279 = vpop.permute.xlu0 %2278
  %2280 = vrot.lane.b32.xlu0 %v758, 32
  %v2281 = vpop.permute.xlu0 %2280
  %2282 = vrot.lane.b32.xlu0 %v760, 32
  %v2283 = vpop.permute.xlu0 %2282
  %2284 = vrot.lane.b32.xlu0 %v763, 32
  %v2285 = vpop.permute.xlu0 %2284
  %2286 = vrot.lane.b32.xlu0 %v765, 32
  %v2287 = vpop.permute.xlu0 %2286
  %2288 = vrot.lane.b32.xlu0 %v768, 32
  %v2289 = vpop.permute.xlu0 %2288
  %2290 = vrot.lane.b32.xlu0 %v770, 32
  %v2291 = vpop.permute.xlu0 %2290
  %2292 = vrot.lane.b32.xlu0 %v773, 32
  %v2293 = vpop.permute.xlu0 %2292
  %2294 = vrot.lane.b32.xlu0 %v775, 32
  %v2295 = vpop.permute.xlu0 %2294
  %2296 = vrot.lane.b32.xlu0 %v778, 32
  %v2297 = vpop.permute.xlu0 %2296
  %2298 = vrot.lane.b32.xlu0 %v780, 32
  %v2299 = vpop.permute.xlu0 %2298
  %2300 = vrot.lane.b32.xlu0 %v783, 32
  %v2301 = vpop.permute.xlu0 %2300
  %2302 = vrot.lane.b32.xlu0 %v785, 32
  %v2303 = vpop.permute.xlu0 %2302
  %2304 = vrot.lane.b32.xlu0 %v788, 32
  %v2305 = vpop.permute.xlu0 %2304
  %2306 = vrot.lane.b32.xlu0 %v790, 32
  %v2307 = vpop.permute.xlu0 %2306
  %2308 = vrot.lane.b32.xlu0 %v793, 32
  %v2309 = vpop.permute.xlu0 %2308
  %2310 = vrot.lane.b32.xlu0 %v795, 32
  %v2311 = vpop.permute.xlu0 %2310
  %2312 = vrot.lane.b32.xlu0 %v819, 32
  %v2313 = vpop.permute.xlu0 %2312
  %2314 = vrot.lane.b32.xlu0 %v821, 32
  %v2315 = vpop.permute.xlu0 %2314
  %2316 = vrot.lane.b32.xlu0 %v845, 32
  %v2317 = vpop.permute.xlu0 %2316
  %2318 = vrot.lane.b32.xlu0 %v847, 32
  %v2319 = vpop.permute.xlu0 %2318
  %v2384 = vsel %vm31, %v270, %v849
  %v2385 = vsel %vm31, %v271, %v851
  %v2386 = vsel %vm31, %v273, %v853
  %v2387 = vsel %vm31, %v274, %v855
  %v2388 = vsel %vm31, %v276, %v857
  %v2389 = vsel %vm31, %v277, %v859
  %v2390 = vsel %vm31, %v279, %v861
  %v2391 = vsel %vm31, %v280, %v863
  %v2392 = vsel %vm31, %v282, %v865
  %v2393 = vsel %vm31, %v283, %v867
  %v2394 = vsel %vm31, %v285, %v869
  %v2395 = vsel %vm31, %v286, %v871
  %v2396 = vsel %vm31, %v288, %v873
  %v2397 = vsel %vm31, %v289, %v875
  %v2398 = vsel %vm31, %v291, %v877
  %v2399 = vsel %vm31, %v292, %v879
  %v2400 = vsel %vm31, %v294, %v881
  %v2401 = vsel %vm31, %v295, %v883
  %v2402 = vsel %vm31, %v297, %v885
  %v2403 = vsel %vm31, %v298, %v887
  %v2404 = vsel %vm31, %v300, %v889
  %v2405 = vsel %vm31, %v301, %v891
  %v2406 = vsel %vm31, %v303, %v893
  %v2407 = vsel %vm31, %v304, %v895
  %v2408 = vsel %vm31, %v306, %v897
  %v2409 = vsel %vm31, %v307, %v899
  %v2410 = vsel %vm31, %v309, %v901
  %v2411 = vsel %vm31, %v310, %v903
  %v2412 = vsel %vm31, %v312, %v905
  %v2413 = vsel %vm31, %v313, %v907
  %v2414 = vsel %vm31, %v315, %v909
  %v2415 = vsel %vm31, %v316, %v911
  %v2416 = vsel %vm31, %v324, %v913
  %v2417 = vsel %vm31, %v325, %v915
  %v2418 = vsel %vm31, %v327, %v917
  %v2419 = vsel %vm31, %v328, %v919
  %v2420 = vsel %vm31, %v330, %v921
  %v2421 = vsel %vm31, %v331, %v923
  %v2422 = vsel %vm31, %v333, %v925
  %v2423 = vsel %vm31, %v334, %v927
  %v2424 = vsel %vm31, %v336, %v929
  %v2425 = vsel %vm31, %v337, %v931
  %v2426 = vsel %vm31, %v339, %v933
  %v2427 = vsel %vm31, %v340, %v935
  %v2428 = vsel %vm31, %v342, %v937
  %v2429 = vsel %vm31, %v343, %v939
  %v2430 = vsel %vm31, %v345, %v941
  %v2431 = vsel %vm31, %v346, %v943
  %v2432 = vsel %vm31, %v348, %v945
  %v2433 = vsel %vm31, %v349, %v947
  %v2434 = vsel %vm31, %v351, %v949
  %v2435 = vsel %vm31, %v352, %v951
  %v2436 = vsel %vm31, %v354, %v953
  %v2437 = vsel %vm31, %v355, %v955
  %v2438 = vsel %vm31, %v357, %v957
  %v2439 = vsel %vm31, %v358, %v959
  %v2440 = vsel %vm31, %v360, %v961
  %v2441 = vsel %vm31, %v361, %v963
  %v2442 = vsel %vm31, %v363, %v965
  %v2443 = vsel %vm31, %v364, %v967
  %v2444 = vsel %vm31, %v366, %v969
  %v2445 = vsel %vm31, %v367, %v971
  %v2446 = vsel %vm31, %v369, %v973
  %v2447 = vsel %vm31, %v370, %v975
  %vm2448 = vcmask 64512
  %v2449 = vsel %vm2448, %v2384, %v1041
  %v2450 = vsel %vm2448, %v2385, %v1043
  %v2451 = vsel %vm2448, %v2386, %v1045
  %v2452 = vsel %vm2448, %v2387, %v1047
  %v2453 = vsel %vm2448, %v2388, %v1049
  %v2454 = vsel %vm2448, %v2389, %v1051
  %v2455 = vsel %vm2448, %v2390, %v1053
  %v2456 = vsel %vm2448, %v2391, %v1055
  %v2457 = vsel %vm2448, %v2392, %v1057
  %v2458 = vsel %vm2448, %v2393, %v1059
  %v2459 = vsel %vm2448, %v2394, %v1061
  %v2460 = vsel %vm2448, %v2395, %v1063
  %v2461 = vsel %vm2448, %v2396, %v1065
  %v2462 = vsel %vm2448, %v2397, %v1067
  %v2463 = vsel %vm2448, %v2398, %v1069
  %v2464 = vsel %vm2448, %v2399, %v1071
  %v2465 = vsel %vm2448, %v2400, %v1073
  %v2466 = vsel %vm2448, %v2401, %v1075
  %v2467 = vsel %vm2448, %v2402, %v1077
  %v2468 = vsel %vm2448, %v2403, %v1079
  %v2469 = vsel %vm2448, %v2404, %v1081
  %v2470 = vsel %vm2448, %v2405, %v1083
  %v2471 = vsel %vm2448, %v2406, %v1085
  %v2472 = vsel %vm2448, %v2407, %v1087
  %v2473 = vsel %vm2448, %v2408, %v1089
  %v2474 = vsel %vm2448, %v2409, %v1091
  %v2475 = vsel %vm2448, %v2410, %v1093
  %v2476 = vsel %vm2448, %v2411, %v1095
  %v2477 = vsel %vm2448, %v2412, %v1097
  %v2478 = vsel %vm2448, %v2413, %v1099
  %v2479 = vsel %vm2448, %v2414, %v1101
  %v2480 = vsel %vm2448, %v2415, %v1103
  %v2481 = vsel %vm2448, %v2416, %v1105
  %v2482 = vsel %vm2448, %v2417, %v1107
  %v2483 = vsel %vm2448, %v2418, %v1109
  %v2484 = vsel %vm2448, %v2419, %v1111
  %v2485 = vsel %vm2448, %v2420, %v1113
  %v2486 = vsel %vm2448, %v2421, %v1115
  %v2487 = vsel %vm2448, %v2422, %v1117
  %v2488 = vsel %vm2448, %v2423, %v1119
  %v2489 = vsel %vm2448, %v2424, %v1121
  %v2490 = vsel %vm2448, %v2425, %v1123
  %v2491 = vsel %vm2448, %v2426, %v1125
  %v2492 = vsel %vm2448, %v2427, %v1127
  %v2493 = vsel %vm2448, %v2428, %v1129
  %v2494 = vsel %vm2448, %v2429, %v1131
  %v2495 = vsel %vm2448, %v2430, %v1133
  %v2496 = vsel %vm2448, %v2431, %v1135
  %v2497 = vsel %vm2448, %v2432, %v1137
  %v2498 = vsel %vm2448, %v2433, %v1139
  %v2499 = vsel %vm2448, %v2434, %v1141
  %v2500 = vsel %vm2448, %v2435, %v1143
  %v2501 = vsel %vm2448, %v2436, %v1145
  %v2502 = vsel %vm2448, %v2437, %v1147
  %v2503 = vsel %vm2448, %v2438, %v1149
  %v2504 = vsel %vm2448, %v2439, %v1151
  %v2505 = vsel %vm2448, %v2440, %v1153
  %v2506 = vsel %vm2448, %v2441, %v1155
  %v2507 = vsel %vm2448, %v2442, %v1157
  %v2508 = vsel %vm2448, %v2443, %v1159
  %v2509 = vsel %vm2448, %v2444, %v1161
  %v2510 = vsel %vm2448, %v2445, %v1163
  %v2511 = vsel %vm2448, %v2446, %v1165
  %v2512 = vsel %vm2448, %v2447, %v1167
  %vm2513 = vcmask 97280
  %v2514 = vsel %vm2513, %v2449, %v1233
  %v2515 = vsel %vm2513, %v2450, %v1235
  %v2516 = vsel %vm2513, %v2451, %v1237
  %v2517 = vsel %vm2513, %v2452, %v1239
  %v2518 = vsel %vm2513, %v2453, %v1241
  %v2519 = vsel %vm2513, %v2454, %v1243
  %v2520 = vsel %vm2513, %v2455, %v1245
  %v2521 = vsel %vm2513, %v2456, %v1247
  %v2522 = vsel %vm2513, %v2457, %v1249
  %v2523 = vsel %vm2513, %v2458, %v1251
  %v2524 = vsel %vm2513, %v2459, %v1253
  %v2525 = vsel %vm2513, %v2460, %v1255
  %v2526 = vsel %vm2513, %v2461, %v1257
  %v2527 = vsel %vm2513, %v2462, %v1259
  %v2528 = vsel %vm2513, %v2463, %v1261
  %v2529 = vsel %vm2513, %v2464, %v1263
  %v2530 = vsel %vm2513, %v2465, %v1265
  %v2531 = vsel %vm2513, %v2466, %v1267
  %v2532 = vsel %vm2513, %v2467, %v1269
  %v2533 = vsel %vm2513, %v2468, %v1271
  %v2534 = vsel %vm2513, %v2469, %v1273
  %v2535 = vsel %vm2513, %v2470, %v1275
  %v2536 = vsel %vm2513, %v2471, %v1277
  %v2537 = vsel %vm2513, %v2472, %v1279
  %v2538 = vsel %vm2513, %v2473, %v1281
  %v2539 = vsel %vm2513, %v2474, %v1283
  %v2540 = vsel %vm2513, %v2475, %v1285
  %v2541 = vsel %vm2513, %v2476, %v1287
  %v2542 = vsel %vm2513, %v2477, %v1289
  %v2543 = vsel %vm2513, %v2478, %v1291
  %v2544 = vsel %vm2513, %v2479, %v1293
  %v2545 = vsel %vm2513, %v2480, %v1295
  %v2546 = vsel %vm2513, %v2481, %v1297
  %v2547 = vsel %vm2513, %v2482, %v1299
  %v2548 = vsel %vm2513, %v2483, %v1301
  %v2549 = vsel %vm2513, %v2484, %v1303
  %v2550 = vsel %vm2513, %v2485, %v1305
  %v2551 = vsel %vm2513, %v2486, %v1307
  %v2552 = vsel %vm2513, %v2487, %v1309
  %v2553 = vsel %vm2513, %v2488, %v1311
  %v2554 = vsel %vm2513, %v2489, %v1313
  %v2555 = vsel %vm2513, %v2490, %v1315
  %v2556 = vsel %vm2513, %v2491, %v1317
  %v2557 = vsel %vm2513, %v2492, %v1319
  %v2558 = vsel %vm2513, %v2493, %v1321
  %v2559 = vsel %vm2513, %v2494, %v1323
  %v2560 = vsel %vm2513, %v2495, %v1325
  %v2561 = vsel %vm2513, %v2496, %v1327
  %v2562 = vsel %vm2513, %v2497, %v1329
  %v2563 = vsel %vm2513, %v2498, %v1331
  %v2564 = vsel %vm2513, %v2499, %v1333
  %v2565 = vsel %vm2513, %v2500, %v1335
  %v2566 = vsel %vm2513, %v2501, %v1337
  %v2567 = vsel %vm2513, %v2502, %v1339
  %v2568 = vsel %vm2513, %v2503, %v1341
  %v2569 = vsel %vm2513, %v2504, %v1343
  %v2570 = vsel %vm2513, %v2505, %v1345
  %v2571 = vsel %vm2513, %v2506, %v1347
  %v2572 = vsel %vm2513, %v2507, %v1349
  %v2573 = vsel %vm2513, %v2508, %v1351
  %v2574 = vsel %vm2513, %v2509, %v1353
  %v2575 = vsel %vm2513, %v2510, %v1355
  %v2576 = vsel %vm2513, %v2511, %v1357
  %v2577 = vsel %vm2513, %v2512, %v1359
  %vm2578 = vcmask 130048
  %v2579 = vsel %vm2578, %v2514, %v1425
  %v2580 = vsel %vm2578, %v2515, %v1427
  %v2581 = vsel %vm2578, %v2516, %v1429
  %v2582 = vsel %vm2578, %v2517, %v1431
  %v2583 = vsel %vm2578, %v2518, %v1433
  %v2584 = vsel %vm2578, %v2519, %v1435
  %v2585 = vsel %vm2578, %v2520, %v1437
  %v2586 = vsel %vm2578, %v2521, %v1439
  %v2587 = vsel %vm2578, %v2522, %v1441
  %v2588 = vsel %vm2578, %v2523, %v1443
  %v2589 = vsel %vm2578, %v2524, %v1445
  %v2590 = vsel %vm2578, %v2525, %v1447
  %v2591 = vsel %vm2578, %v2526, %v1449
  %v2592 = vsel %vm2578, %v2527, %v1451
  %v2593 = vsel %vm2578, %v2528, %v1453
  %v2594 = vsel %vm2578, %v2529, %v1455
  %v2595 = vsel %vm2578, %v2530, %v1457
  %v2596 = vsel %vm2578, %v2531, %v1459
  %v2597 = vsel %vm2578, %v2532, %v1461
  %v2598 = vsel %vm2578, %v2533, %v1463
  %v2599 = vsel %vm2578, %v2534, %v1465
  %v2600 = vsel %vm2578, %v2535, %v1467
  %v2601 = vsel %vm2578, %v2536, %v1469
  %v2602 = vsel %vm2578, %v2537, %v1471
  %v2603 = vsel %vm2578, %v2538, %v1473
  %v2604 = vsel %vm2578, %v2539, %v1475
  %v2605 = vsel %vm2578, %v2540, %v1477
  %v2606 = vsel %vm2578, %v2541, %v1479
  %v2607 = vsel %vm2578, %v2542, %v1481
  %v2608 = vsel %vm2578, %v2543, %v1483
  %v2609 = vsel %vm2578, %v2544, %v1485
  %v2610 = vsel %vm2578, %v2545, %v1487
  %v2611 = vsel %vm2578, %v2546, %v1489
  %v2612 = vsel %vm2578, %v2547, %v1491
  %v2613 = vsel %vm2578, %v2548, %v1493
  %v2614 = vsel %vm2578, %v2549, %v1495
  %v2615 = vsel %vm2578, %v2550, %v1497
  %v2616 = vsel %vm2578, %v2551, %v1499
  %v2617 = vsel %vm2578, %v2552, %v1501
  %v2618 = vsel %vm2578, %v2553, %v1503
  %v2619 = vsel %vm2578, %v2554, %v1505
  %v2620 = vsel %vm2578, %v2555, %v1507
  %v2621 = vsel %vm2578, %v2556, %v1509
  %v2622 = vsel %vm2578, %v2557, %v1511
  %v2623 = vsel %vm2578, %v2558, %v1513
  %v2624 = vsel %vm2578, %v2559, %v1515
  %v2625 = vsel %vm2578, %v2560, %v1517
  %v2626 = vsel %vm2578, %v2561, %v1519
  %v2627 = vsel %vm2578, %v2562, %v1521
  %v2628 = vsel %vm2578, %v2563, %v1523
  %v2629 = vsel %vm2578, %v2564, %v1525
  %v2630 = vsel %vm2578, %v2565, %v1527
  %v2631 = vsel %vm2578, %v2566, %v1529
  %v2632 = vsel %vm2578, %v2567, %v1531
  %v2633 = vsel %vm2578, %v2568, %v1533
  %v2634 = vsel %vm2578, %v2569, %v1535
  %v2635 = vsel %vm2578, %v2570, %v1537
  %v2636 = vsel %vm2578, %v2571, %v1539
  %v2637 = vsel %vm2578, %v2572, %v1541
  %v2638 = vsel %vm2578, %v2573, %v1543
  %v2639 = vsel %vm2578, %v2574, %v1545
  %v2640 = vsel %vm2578, %v2575, %v1547
  %v2641 = vsel %vm2578, %v2576, %v1549
  %v2642 = vsel %vm2578, %v2577, %v1551
  %vm2643 = vcmask 162816
  %v2644 = vsel %vm2643, %v2579, %v1617
  %v2645 = vsel %vm2643, %v2580, %v1619
  %v2646 = vsel %vm2643, %v2581, %v1621
  %v2647 = vsel %vm2643, %v2582, %v1623
  %v2648 = vsel %vm2643, %v2583, %v1625
  %v2649 = vsel %vm2643, %v2584, %v1627
  %v2650 = vsel %vm2643, %v2585, %v1629
  %v2651 = vsel %vm2643, %v2586, %v1631
  %v2652 = vsel %vm2643, %v2587, %v1633
  %v2653 = vsel %vm2643, %v2588, %v1635
  %v2654 = vsel %vm2643, %v2589, %v1637
  %v2655 = vsel %vm2643, %v2590, %v1639
  %v2656 = vsel %vm2643, %v2591, %v1641
  %v2657 = vsel %vm2643, %v2592, %v1643
  %v2658 = vsel %vm2643, %v2593, %v1645
  %v2659 = vsel %vm2643, %v2594, %v1647
  %v2660 = vsel %vm2643, %v2595, %v1649
  %v2661 = vsel %vm2643, %v2596, %v1651
  %v2662 = vsel %vm2643, %v2597, %v1653
  %v2663 = vsel %vm2643, %v2598, %v1655
  %v2664 = vsel %vm2643, %v2599, %v1657
  %v2665 = vsel %vm2643, %v2600, %v1659
  %v2666 = vsel %vm2643, %v2601, %v1661
  %v2667 = vsel %vm2643, %v2602, %v1663
  %v2668 = vsel %vm2643, %v2603, %v1665
  %v2669 = vsel %vm2643, %v2604, %v1667
  %v2670 = vsel %vm2643, %v2605, %v1669
  %v2671 = vsel %vm2643, %v2606, %v1671
  %v2672 = vsel %vm2643, %v2607, %v1673
  %v2673 = vsel %vm2643, %v2608, %v1675
  %v2674 = vsel %vm2643, %v2609, %v1677
  %v2675 = vsel %vm2643, %v2610, %v1679
  %v2676 = vsel %vm2643, %v2611, %v1681
  %v2677 = vsel %vm2643, %v2612, %v1683
  %v2678 = vsel %vm2643, %v2613, %v1685
  %v2679 = vsel %vm2643, %v2614, %v1687
  %v2680 = vsel %vm2643, %v2615, %v1689
  %v2681 = vsel %vm2643, %v2616, %v1691
  %v2682 = vsel %vm2643, %v2617, %v1693
  %v2683 = vsel %vm2643, %v2618, %v1695
  %v2684 = vsel %vm2643, %v2619, %v1697
  %v2685 = vsel %vm2643, %v2620, %v1699
  %v2686 = vsel %vm2643, %v2621, %v1701
  %v2687 = vsel %vm2643, %v2622, %v1703
  %v2688 = vsel %vm2643, %v2623, %v1705
  %v2689 = vsel %vm2643, %v2624, %v1707
  %v2690 = vsel %vm2643, %v2625, %v1709
  %v2691 = vsel %vm2643, %v2626, %v1711
  %v2692 = vsel %vm2643, %v2627, %v1713
  %v2693 = vsel %vm2643, %v2628, %v1715
  %v2694 = vsel %vm2643, %v2629, %v1717
  %v2695 = vsel %vm2643, %v2630, %v1719
  %v2696 = vsel %vm2643, %v2631, %v1721
  %v2697 = vsel %vm2643, %v2632, %v1723
  %v2698 = vsel %vm2643, %v2633, %v1725
  %v2699 = vsel %vm2643, %v2634, %v1727
  %v2700 = vsel %vm2643, %v2635, %v1729
  %v2701 = vsel %vm2643, %v2636, %v1731
  %v2702 = vsel %vm2643, %v2637, %v1733
  %v2703 = vsel %vm2643, %v2638, %v1735
  %v2704 = vsel %vm2643, %v2639, %v1737
  %v2705 = vsel %vm2643, %v2640, %v1739
  %v2706 = vsel %vm2643, %v2641, %v1741
  %v2707 = vsel %vm2643, %v2642, %v1743
  %vm2708 = vcmask 195584
  %v2709 = vsel %vm2708, %v2644, %v1809
  %v2710 = vsel %vm2708, %v2645, %v1811
  %v2711 = vsel %vm2708, %v2646, %v1813
  %v2712 = vsel %vm2708, %v2647, %v1815
  %v2713 = vsel %vm2708, %v2648, %v1817
  %v2714 = vsel %vm2708, %v2649, %v1819
  %v2715 = vsel %vm2708, %v2650, %v1821
  %v2716 = vsel %vm2708, %v2651, %v1823
  %v2717 = vsel %vm2708, %v2652, %v1825
  %v2718 = vsel %vm2708, %v2653, %v1827
  %v2719 = vsel %vm2708, %v2654, %v1829
  %v2720 = vsel %vm2708, %v2655, %v1831
  %v2721 = vsel %vm2708, %v2656, %v1833
  %v2722 = vsel %vm2708, %v2657, %v1835
  %v2723 = vsel %vm2708, %v2658, %v1837
  %v2724 = vsel %vm2708, %v2659, %v1839
  %v2725 = vsel %vm2708, %v2660, %v1841
  %v2726 = vsel %vm2708, %v2661, %v1843
  %v2727 = vsel %vm2708, %v2662, %v1845
  %v2728 = vsel %vm2708, %v2663, %v1847
  %v2729 = vsel %vm2708, %v2664, %v1849
  %v2730 = vsel %vm2708, %v2665, %v1851
  %v2731 = vsel %vm2708, %v2666, %v1853
  %v2732 = vsel %vm2708, %v2667, %v1855
  %v2733 = vsel %vm2708, %v2668, %v1857
  %v2734 = vsel %vm2708, %v2669, %v1859
  %v2735 = vsel %vm2708, %v2670, %v1861
  %v2736 = vsel %vm2708, %v2671, %v1863
  %v2737 = vsel %vm2708, %v2672, %v1865
  %v2738 = vsel %vm2708, %v2673, %v1867
  %v2739 = vsel %vm2708, %v2674, %v1869
  %v2740 = vsel %vm2708, %v2675, %v1871
  %v2741 = vsel %vm2708, %v2676, %v1873
  %v2742 = vsel %vm2708, %v2677, %v1875
  %v2743 = vsel %vm2708, %v2678, %v1877
  %v2744 = vsel %vm2708, %v2679, %v1879
  %v2745 = vsel %vm2708, %v2680, %v1881
  %v2746 = vsel %vm2708, %v2681, %v1883
  %v2747 = vsel %vm2708, %v2682, %v1885
  %v2748 = vsel %vm2708, %v2683, %v1887
  %v2749 = vsel %vm2708, %v2684, %v1889
  %v2750 = vsel %vm2708, %v2685, %v1891
  %v2751 = vsel %vm2708, %v2686, %v1893
  %v2752 = vsel %vm2708, %v2687, %v1895
  %v2753 = vsel %vm2708, %v2688, %v1897
  %v2754 = vsel %vm2708, %v2689, %v1899
  %v2755 = vsel %vm2708, %v2690, %v1901
  %v2756 = vsel %vm2708, %v2691, %v1903
  %v2757 = vsel %vm2708, %v2692, %v1905
  %v2758 = vsel %vm2708, %v2693, %v1907
  %v2759 = vsel %vm2708, %v2694, %v1909
  %v2760 = vsel %vm2708, %v2695, %v1911
  %v2761 = vsel %vm2708, %v2696, %v1913
  %v2762 = vsel %vm2708, %v2697, %v1915
  %v2763 = vsel %vm2708, %v2698, %v1917
  %v2764 = vsel %vm2708, %v2699, %v1919
  %v2765 = vsel %vm2708, %v2700, %v1921
  %v2766 = vsel %vm2708, %v2701, %v1923
  %v2767 = vsel %vm2708, %v2702, %v1925
  %v2768 = vsel %vm2708, %v2703, %v1927
  %v2769 = vsel %vm2708, %v2704, %v1929
  %v2770 = vsel %vm2708, %v2705, %v1931
  %v2771 = vsel %vm2708, %v2706, %v1933
  %v2772 = vsel %vm2708, %v2707, %v1935
  %vm2773 = vcmask 228352
  %v2774 = vsel %vm2773, %v2709, %v2001
  %v2775 = vsel %vm2773, %v2710, %v2003
  %v2776 = vsel %vm2773, %v2711, %v2005
  %v2777 = vsel %vm2773, %v2712, %v2007
  %v2778 = vsel %vm2773, %v2713, %v2009
  %v2779 = vsel %vm2773, %v2714, %v2011
  %v2780 = vsel %vm2773, %v2715, %v2013
  %v2781 = vsel %vm2773, %v2716, %v2015
  %v2782 = vsel %vm2773, %v2717, %v2017
  %v2783 = vsel %vm2773, %v2718, %v2019
  %v2784 = vsel %vm2773, %v2719, %v2021
  %v2785 = vsel %vm2773, %v2720, %v2023
  %v2786 = vsel %vm2773, %v2721, %v2025
  %v2787 = vsel %vm2773, %v2722, %v2027
  %v2788 = vsel %vm2773, %v2723, %v2029
  %v2789 = vsel %vm2773, %v2724, %v2031
  %v2790 = vsel %vm2773, %v2725, %v2033
  %v2791 = vsel %vm2773, %v2726, %v2035
  %v2792 = vsel %vm2773, %v2727, %v2037
  %v2793 = vsel %vm2773, %v2728, %v2039
  %v2794 = vsel %vm2773, %v2729, %v2041
  %v2795 = vsel %vm2773, %v2730, %v2043
  %v2796 = vsel %vm2773, %v2731, %v2045
  %v2797 = vsel %vm2773, %v2732, %v2047
  %v2798 = vsel %vm2773, %v2733, %v2049
  %v2799 = vsel %vm2773, %v2734, %v2051
  %v2800 = vsel %vm2773, %v2735, %v2053
  %v2801 = vsel %vm2773, %v2736, %v2055
  %v2802 = vsel %vm2773, %v2737, %v2057
  %v2803 = vsel %vm2773, %v2738, %v2059
  %v2804 = vsel %vm2773, %v2739, %v2061
  %v2805 = vsel %vm2773, %v2740, %v2063
  %v2806 = vsel %vm2773, %v2741, %v2065
  %v2807 = vsel %vm2773, %v2742, %v2067
  %v2808 = vsel %vm2773, %v2743, %v2069
  %v2809 = vsel %vm2773, %v2744, %v2071
  %v2810 = vsel %vm2773, %v2745, %v2073
  %v2811 = vsel %vm2773, %v2746, %v2075
  %v2812 = vsel %vm2773, %v2747, %v2077
  %v2813 = vsel %vm2773, %v2748, %v2079
  %v2814 = vsel %vm2773, %v2749, %v2081
  %v2815 = vsel %vm2773, %v2750, %v2083
  %v2816 = vsel %vm2773, %v2751, %v2085
  %v2817 = vsel %vm2773, %v2752, %v2087
  %v2818 = vsel %vm2773, %v2753, %v2089
  %v2819 = vsel %vm2773, %v2754, %v2091
  %v2820 = vsel %vm2773, %v2755, %v2093
  %v2821 = vsel %vm2773, %v2756, %v2095
  %v2822 = vsel %vm2773, %v2757, %v2097
  %v2823 = vsel %vm2773, %v2758, %v2099
  %v2824 = vsel %vm2773, %v2759, %v2101
  %v2825 = vsel %vm2773, %v2760, %v2103
  %v2826 = vsel %vm2773, %v2761, %v2105
  %v2827 = vsel %vm2773, %v2762, %v2107
  %v2828 = vsel %vm2773, %v2763, %v2109
  %v2829 = vsel %vm2773, %v2764, %v2111
  %v2830 = vsel %vm2773, %v2765, %v2113
  %v2831 = vsel %vm2773, %v2766, %v2115
  %v2832 = vsel %vm2773, %v2767, %v2117
  %v2833 = vsel %vm2773, %v2768, %v2119
  %v2834 = vsel %vm2773, %v2769, %v2121
  %v2835 = vsel %vm2773, %v2770, %v2123
  %v2836 = vsel %vm2773, %v2771, %v2125
  %v2837 = vsel %vm2773, %v2772, %v2127
  %vm2838 = vcmask 261120
  %v2839 = vsel %vm2838, %v2774, %v2193
  %v2840 = vsel %vm2838, %v2775, %v2195
  %v2841 = vsel %vm2838, %v2776, %v2197
  %v2842 = vsel %vm2838, %v2777, %v2199
  %v2843 = vsel %vm2838, %v2778, %v2201
  %v2844 = vsel %vm2838, %v2779, %v2203
  %v2845 = vsel %vm2838, %v2780, %v2205
  %v2846 = vsel %vm2838, %v2781, %v2207
  %v2847 = vsel %vm2838, %v2782, %v2209
  %v2848 = vsel %vm2838, %v2783, %v2211
  %v2849 = vsel %vm2838, %v2784, %v2213
  %v2850 = vsel %vm2838, %v2785, %v2215
  %v2851 = vsel %vm2838, %v2786, %v2217
  %v2852 = vsel %vm2838, %v2787, %v2219
  %v2853 = vsel %vm2838, %v2788, %v2221
  %v2854 = vsel %vm2838, %v2789, %v2223
  %v2855 = vsel %vm2838, %v2790, %v2225
  %v2856 = vsel %vm2838, %v2791, %v2227
  %v2857 = vsel %vm2838, %v2792, %v2229
  %v2858 = vsel %vm2838, %v2793, %v2231
  %v2859 = vsel %vm2838, %v2794, %v2233
  %v2860 = vsel %vm2838, %v2795, %v2235
  %v2861 = vsel %vm2838, %v2796, %v2237
  %v2862 = vsel %vm2838, %v2797, %v2239
  %v2863 = vsel %vm2838, %v2798, %v2241
  %v2864 = vsel %vm2838, %v2799, %v2243
  %v2865 = vsel %vm2838, %v2800, %v2245
  %v2866 = vsel %vm2838, %v2801, %v2247
  %v2867 = vsel %vm2838, %v2802, %v2249
  %v2868 = vsel %vm2838, %v2803, %v2251
  %v2869 = vsel %vm2838, %v2804, %v2253
  %v2870 = vsel %vm2838, %v2805, %v2255
  %v2871 = vsel %vm2838, %v2806, %v2257
  %v2872 = vsel %vm2838, %v2807, %v2259
  %v2873 = vsel %vm2838, %v2808, %v2261
  %v2874 = vsel %vm2838, %v2809, %v2263
  %v2875 = vsel %vm2838, %v2810, %v2265
  %v2876 = vsel %vm2838, %v2811, %v2267
  %v2877 = vsel %vm2838, %v2812, %v2269
  %v2878 = vsel %vm2838, %v2813, %v2271
  %v2879 = vsel %vm2838, %v2814, %v2273
  %v2880 = vsel %vm2838, %v2815, %v2275
  %v2881 = vsel %vm2838, %v2816, %v2277
  %v2882 = vsel %vm2838, %v2817, %v2279
  %v2883 = vsel %vm2838, %v2818, %v2281
  %v2884 = vsel %vm2838, %v2819, %v2283
  %v2885 = vsel %vm2838, %v2820, %v2285
  %v2886 = vsel %vm2838, %v2821, %v2287
  %v2887 = vsel %vm2838, %v2822, %v2289
  %v2888 = vsel %vm2838, %v2823, %v2291
  %v2889 = vsel %vm2838, %v2824, %v2293
  %v2890 = vsel %vm2838, %v2825, %v2295
  %v2891 = vsel %vm2838, %v2826, %v2297
  %v2892 = vsel %vm2838, %v2827, %v2299
  %v2893 = vsel %vm2838, %v2828, %v2301
  %v2894 = vsel %vm2838, %v2829, %v2303
  %v2895 = vsel %vm2838, %v2830, %v2305
  %v2896 = vsel %vm2838, %v2831, %v2307
  %v2897 = vsel %vm2838, %v2832, %v2309
  %v2898 = vsel %vm2838, %v2833, %v2311
  %v2899 = vsel %vm2838, %v2834, %v2313
  %v2900 = vsel %vm2838, %v2835, %v2315
  %v2901 = vsel %vm2838, %v2836, %v2317
  %v2902 = vsel %vm2838, %v2837, %v2319
  %v2903 = vpack.c.bf16 %v2840, %v2839
  %v2904 = vpack.c.bf16 %v2842, %v2841
  %v2905 = vpack.c.bf16 %v2844, %v2843
  %v2906 = vpack.c.bf16 %v2846, %v2845
  %v2907 = vpack.c.bf16 %v2848, %v2847
  %v2908 = vpack.c.bf16 %v2850, %v2849
  %v2909 = vpack.c.bf16 %v2852, %v2851
  %v2910 = vpack.c.bf16 %v2854, %v2853
  %v2911 = vpack.c.bf16 %v2856, %v2855
  %v2912 = vpack.c.bf16 %v2858, %v2857
  %v2913 = vpack.c.bf16 %v2860, %v2859
  %v2914 = vpack.c.bf16 %v2862, %v2861
  %v2915 = vpack.c.bf16 %v2864, %v2863
  %v2916 = vpack.c.bf16 %v2866, %v2865
  %v2917 = vpack.c.bf16 %v2868, %v2867
  %v2918 = vpack.c.bf16 %v2870, %v2869
  %v2919 = vpack.c.bf16 %v2872, %v2871
  %v2920 = vpack.c.bf16 %v2874, %v2873
  %v2921 = vpack.c.bf16 %v2876, %v2875
  %v2922 = vpack.c.bf16 %v2878, %v2877
  %v2923 = vpack.c.bf16 %v2880, %v2879
  %v2924 = vpack.c.bf16 %v2882, %v2881
  %v2925 = vpack.c.bf16 %v2884, %v2883
  %v2926 = vpack.c.bf16 %v2886, %v2885
  %v2927 = vpack.c.bf16 %v2888, %v2887
  %v2928 = vpack.c.bf16 %v2890, %v2889
  %v2929 = vpack.c.bf16 %v2892, %v2891
  %v2930 = vpack.c.bf16 %v2894, %v2893
  %v2931 = vpack.c.bf16 %v2896, %v2895
  %v2932 = vpack.c.bf16 %v2898, %v2897
  %v2933 = vpack.c.bf16 %v2900, %v2899
  %v2934 = vpack.c.bf16 %v2902, %v2901
  %v2935 = vld [vmem:[%s2] sm:$0xf]
  %v2936 = vld [vmem:[%s2 + $0x4] sm:$0xf]
  %v2937 = vld [vmem:[%s2 + $0x8] sm:$0xf]
  %v2938 = vld [vmem:[%s2 + $0xc] sm:$0xf]
  %v2939 = vld [vmem:[%s2 + $0x10] sm:$0x3]
  %v2940 = vlaneseq
  %v2941 = vshrl.u32 %v2940, 7
  %v2942 = vsub.s32 0, %v2941
  %v2943 = vrot.slane %v24, %v2942
  %v2949 = vunpack.c.l.b16 %v2935
  %v2950 = vunpack.c.l.b16 %v2936
  %v2951 = vunpack.c.l.b16 %v2937
  %v2952 = vunpack.c.l.b16 %v2938
  %v2953 = vunpack.c.l.b16 %v2939
  %v2954 = vpack.c.b16 %v2950, %v2949
  %v2955 = vpack.c.b16 %v2952, %v2951
  %v2956 = vpack.c.b16 %v2953, %v2953
  %vm2959 = vcmask 293888
  %v2961 = vsel %vm2959, %v2903, 0
  %v2964 = vsel %vm2959, %v2904, 0
  %v2967 = vsel %vm2959, %v2905, 0
  %v2970 = vsel %vm2959, %v2906, 0
  %v2973 = vsel %vm2959, %v2907, 0
  %v2976 = vsel %vm2959, %v2908, 0
  %v2979 = vsel %vm2959, %v2909, 0
  %v2982 = vsel %vm2959, %v2910, 0
  %v2985 = vsel %vm2959, %v2911, 0
  %v2988 = vsel %vm2959, %v2912, 0
  %v2991 = vsel %vm2959, %v2913, 0
  %v2994 = vsel %vm2959, %v2914, 0
  %v2997 = vsel %vm2959, %v2915, 0
  %v3000 = vsel %vm2959, %v2916, 0
  %v3003 = vsel %vm2959, %v2917, 0
  %v3006 = vsel %vm2959, %v2918, 0
  %v3009 = vsel %vm2959, %v2919, 0
  %v3012 = vsel %vm2959, %v2920, 0
  %v3015 = vsel %vm2959, %v2921, 0
  %v3018 = vsel %vm2959, %v2922, 0
  %v3021 = vsel %vm2959, %v2923, 0
  %v3024 = vsel %vm2959, %v2924, 0
  %v3027 = vsel %vm2959, %v2925, 0
  %v3030 = vsel %vm2959, %v2926, 0
  %v3033 = vsel %vm2959, %v2927, 0
  %v3036 = vsel %vm2959, %v2928, 0
  %v3039 = vsel %vm2959, %v2929, 0
  %v3042 = vsel %vm2959, %v2930, 0
  %v3045 = vsel %vm2959, %v2931, 0
  %v3048 = vsel %vm2959, %v2932, 0
  %v3051 = vsel %vm2959, %v2933, 0
  %v3054 = vsel %vm2959, %v2934, 0
  %vm3056 = vcmask 1041408
  %v3058 = vsel %vm3056, %v2956, 0
  %3060 = vmatprep.subr.bf16.mxu0 0
  %3061 = vmatpush1.bf16.msra.mxu0 %v2954
  %3062 = vmatprep.subr.bf16.mxu0 0
  %3063 = vmatpush1.bf16.msra.mxu0 %v2955
  %3064 = vmatprep.subr.bf16.mxu0 0
  %3065 = vmatpush1.bf16.msra.mxu0 %v3058
  %3066 = vmatprep.subr.bf16.mxu0 0
  %3067 = vmatpush1.bf16.msra.mxu0 0
  %3068 = vmatprep.subr.bf16.mxu0 0
  %3069 = vmatpush1.bf16.msra.mxu0 0
  %3070 = vmatprep.subr.bf16.mxu0 0
  %3071 = vmatpush1.bf16.msra.mxu0 0
  %3072 = vmatprep.subr.bf16.mxu0 0
  %3073 = vmatpush1.bf16.msra.mxu0 0
  %3074 = vmatprep.subr.bf16.mxu0 0
  %3075 = vmatpush1.bf16.msra.mxu0 0
  %3076 = vmatprep.subr.bf16.mxu0 0
  %3077 = vmatpush1.bf16.msra.mxu0 0
  %3078 = vmatprep.subr.bf16.mxu0 0
  %3079 = vmatpush1.bf16.msra.mxu0 0
  %3080 = vmatprep.subr.bf16.mxu0 0
  %3081 = vmatpush1.bf16.msra.mxu0 0
  %3082 = vmatprep.subr.bf16.mxu0 0
  %3083 = vmatpush1.bf16.msra.mxu0 0
  %3084 = vmatprep.subr.bf16.mxu0 0
  %3085 = vmatpush1.bf16.msra.mxu0 0
  %3086 = vmatprep.subr.bf16.mxu0 0
  %3087 = vmatpush1.bf16.msra.mxu0 0
  %3088 = vmatprep.subr.bf16.mxu0 0
  %3089 = vmatpush1.bf16.msra.mxu0 0
  %3090 = vmatprep.subr.bf16.mxu0 0
  %3091 = vmatpush1.bf16.msra.mxu0 0
  %3092 = vmatprep.mubr.bf16.mxu0 0
  %3093 = vmatmul.mubr.bf16.gmra.mrb[0].mxu0 %v2961
  %v3094 = vpop.f32.mrb[0].mxu0
  %v3095 = vadd.f32 %v2943, %v3094
  %v3096 = vpop.f32.mrb[0].mxu0
  %v3097 = vpop.f32.mrb[0].mxu0
  %v3098 = vadd.f32 %v2943, %v3097
  %v3099 = vpop.f32.mrb[0].mxu0
  %3100 = vmatprep.mubr.bf16.mxu0 0
  %3101 = vmatmul.mubr.bf16.gmra.mrb[0].mxu0 %v2964
  %v3102 = vpop.f32.mrb[0].mxu0
  %v3103 = vadd.f32 %v2943, %v3102
  %v3104 = vpop.f32.mrb[0].mxu0
  %v3105 = vpop.f32.mrb[0].mxu0
  %v3106 = vadd.f32 %v2943, %v3105
  %v3107 = vpop.f32.mrb[0].mxu0
  %3108 = vmatprep.mubr.bf16.mxu0 0
  %3109 = vmatmul.mubr.bf16.gmra.mrb[0].mxu0 %v2967
  %v3110 = vpop.f32.mrb[0].mxu0
  %v3111 = vadd.f32 %v2943, %v3110
  %v3112 = vpop.f32.mrb[0].mxu0
  %v3113 = vpop.f32.mrb[0].mxu0
  %v3114 = vadd.f32 %v2943, %v3113
  %v3115 = vpop.f32.mrb[0].mxu0
  %3116 = vmatprep.mubr.bf16.mxu0 0
  %3117 = vmatmul.mubr.bf16.gmra.mrb[0].mxu0 %v2970
  %v3118 = vpop.f32.mrb[0].mxu0
  %v3119 = vadd.f32 %v2943, %v3118
  %v3120 = vpop.f32.mrb[0].mxu0
  %v3121 = vpop.f32.mrb[0].mxu0
  %v3122 = vadd.f32 %v2943, %v3121
  %v3123 = vpop.f32.mrb[0].mxu0
  %3124 = vmatprep.mubr.bf16.mxu0 0
  %3125 = vmatmul.mubr.bf16.gmra.mrb[0].mxu0 %v2973
  %v3126 = vpop.f32.mrb[0].mxu0
  %v3127 = vadd.f32 %v2943, %v3126
  %v3128 = vpop.f32.mrb[0].mxu0
  %v3129 = vpop.f32.mrb[0].mxu0
  %v3130 = vadd.f32 %v2943, %v3129
  %v3131 = vpop.f32.mrb[0].mxu0
  %3132 = vmatprep.mubr.bf16.mxu0 0
  %3133 = vmatmul.mubr.bf16.gmra.mrb[0].mxu0 %v2976
  %v3134 = vpop.f32.mrb[0].mxu0
  %v3135 = vadd.f32 %v2943, %v3134
  %v3136 = vpop.f32.mrb[0].mxu0
  %v3137 = vpop.f32.mrb[0].mxu0
  %v3138 = vadd.f32 %v2943, %v3137
  %v3139 = vpop.f32.mrb[0].mxu0
  %3140 = vmatprep.mubr.bf16.mxu0 0
  %3141 = vmatmul.mubr.bf16.gmra.mrb[0].mxu0 %v2979
  %v3142 = vpop.f32.mrb[0].mxu0
  %v3143 = vadd.f32 %v2943, %v3142
  %v3144 = vpop.f32.mrb[0].mxu0
  %v3145 = vpop.f32.mrb[0].mxu0
  %v3146 = vadd.f32 %v2943, %v3145
  %v3147 = vpop.f32.mrb[0].mxu0
  %3148 = vmatprep.mubr.bf16.mxu0 0
  %3149 = vmatmul.mubr.bf16.gmra.mrb[0].mxu0 %v2982
  %v3150 = vpop.f32.mrb[0].mxu0
  %v3151 = vadd.f32 %v2943, %v3150
  %v3152 = vpop.f32.mrb[0].mxu0
  %v3153 = vpop.f32.mrb[0].mxu0
  %v3154 = vadd.f32 %v2943, %v3153
  %v3155 = vpop.f32.mrb[0].mxu0
  %3156 = vmatprep.mubr.bf16.mxu0 0
  %3157 = vmatmul.mubr.bf16.gmra.mrb[0].mxu0 %v2985
  %v3158 = vpop.f32.mrb[0].mxu0
  %v3159 = vadd.f32 %v2943, %v3158
  %v3160 = vpop.f32.mrb[0].mxu0
  %v3161 = vpop.f32.mrb[0].mxu0
  %v3162 = vadd.f32 %v2943, %v3161
  %v3163 = vpop.f32.mrb[0].mxu0
  %3164 = vmatprep.mubr.bf16.mxu0 0
  %3165 = vmatmul.mubr.bf16.gmra.mrb[0].mxu0 %v2988
  %v3166 = vpop.f32.mrb[0].mxu0
  %v3167 = vadd.f32 %v2943, %v3166
  %v3168 = vpop.f32.mrb[0].mxu0
  %v3169 = vpop.f32.mrb[0].mxu0
  %v3170 = vadd.f32 %v2943, %v3169
  %v3171 = vpop.f32.mrb[0].mxu0
  %3172 = vmatprep.mubr.bf16.mxu0 0
  %3173 = vmatmul.mubr.bf16.gmra.mrb[0].mxu0 %v2991
  %v3174 = vpop.f32.mrb[0].mxu0
  %v3175 = vadd.f32 %v2943, %v3174
  %v3176 = vpop.f32.mrb[0].mxu0
  %v3177 = vpop.f32.mrb[0].mxu0
  %v3178 = vadd.f32 %v2943, %v3177
  %v3179 = vpop.f32.mrb[0].mxu0
  %3180 = vmatprep.mubr.bf16.mxu0 0
  %3181 = vmatmul.mubr.bf16.gmra.mrb[0].mxu0 %v2994
  %v3182 = vpop.f32.mrb[0].mxu0
  %v3183 = vadd.f32 %v2943, %v3182
  %v3184 = vpop.f32.mrb[0].mxu0
  %v3185 = vpop.f32.mrb[0].mxu0
  %v3186 = vadd.f32 %v2943, %v3185
  %v3187 = vpop.f32.mrb[0].mxu0
  %3188 = vmatprep.mubr.bf16.mxu0 0
  %3189 = vmatmul.mubr.bf16.gmra.mrb[0].mxu0 %v2997
  %v3190 = vpop.f32.mrb[0].mxu0
  %v3191 = vadd.f32 %v2943, %v3190
  %v3192 = vpop.f32.mrb[0].mxu0
  %v3193 = vpop.f32.mrb[0].mxu0
  %v3194 = vadd.f32 %v2943, %v3193
  %v3195 = vpop.f32.mrb[0].mxu0
  %3196 = vmatprep.mubr.bf16.mxu0 0
  %3197 = vmatmul.mubr.bf16.gmra.mrb[0].mxu0 %v3000
  %v3198 = vpop.f32.mrb[0].mxu0
  %v3199 = vadd.f32 %v2943, %v3198
  %v3200 = vpop.f32.mrb[0].mxu0
  %v3201 = vpop.f32.mrb[0].mxu0
  %v3202 = vadd.f32 %v2943, %v3201
  %v3203 = vpop.f32.mrb[0].mxu0
  %3204 = vmatprep.mubr.bf16.mxu0 0
  %3205 = vmatmul.mubr.bf16.gmra.mrb[0].mxu0 %v3003
  %v3206 = vpop.f32.mrb[0].mxu0
  %v3207 = vadd.f32 %v2943, %v3206
  %v3208 = vpop.f32.mrb[0].mxu0
  %v3209 = vpop.f32.mrb[0].mxu0
  %v3210 = vadd.f32 %v2943, %v3209
  %v3211 = vpop.f32.mrb[0].mxu0
  %3212 = vmatprep.mubr.bf16.mxu0 0
  %3213 = vmatmul.mubr.bf16.gmra.mrb[0].mxu0 %v3006
  %v3214 = vpop.f32.mrb[0].mxu0
  %v3215 = vadd.f32 %v2943, %v3214
  %v3216 = vpop.f32.mrb[0].mxu0
  %v3217 = vpop.f32.mrb[0].mxu0
  %v3218 = vadd.f32 %v2943, %v3217
  %v3219 = vpop.f32.mrb[0].mxu0
  %3220 = vmatprep.mubr.bf16.mxu0 0
  %3221 = vmatmul.mubr.bf16.gmra.mrb[0].mxu0 %v3009
  %v3222 = vpop.f32.mrb[0].mxu0
  %v3223 = vadd.f32 %v2943, %v3222
  %v3224 = vpop.f32.mrb[0].mxu0
  %v3225 = vpop.f32.mrb[0].mxu0
  %v3226 = vadd.f32 %v2943, %v3225
  %v3227 = vpop.f32.mrb[0].mxu0
  %3228 = vmatprep.mubr.bf16.mxu0 0
  %3229 = vmatmul.mubr.bf16.gmra.mrb[0].mxu0 %v3012
  %v3230 = vpop.f32.mrb[0].mxu0
  %v3231 = vadd.f32 %v2943, %v3230
  %v3232 = vpop.f32.mrb[0].mxu0
  %v3233 = vpop.f32.mrb[0].mxu0
  %v3234 = vadd.f32 %v2943, %v3233
  %v3235 = vpop.f32.mrb[0].mxu0
  %3236 = vmatprep.mubr.bf16.mxu0 0
  %3237 = vmatmul.mubr.bf16.gmra.mrb[0].mxu0 %v3015
  %v3238 = vpop.f32.mrb[0].mxu0
  %v3239 = vadd.f32 %v2943, %v3238
  %v3240 = vpop.f32.mrb[0].mxu0
  %v3241 = vpop.f32.mrb[0].mxu0
  %v3242 = vadd.f32 %v2943, %v3241
  %v3243 = vpop.f32.mrb[0].mxu0
  %3244 = vmatprep.mubr.bf16.mxu0 0
  %3245 = vmatmul.mubr.bf16.gmra.mrb[0].mxu0 %v3018
  %v3246 = vpop.f32.mrb[0].mxu0
  %v3247 = vadd.f32 %v2943, %v3246
  %v3248 = vpop.f32.mrb[0].mxu0
  %v3249 = vpop.f32.mrb[0].mxu0
  %v3250 = vadd.f32 %v2943, %v3249
  %v3251 = vpop.f32.mrb[0].mxu0
  %3252 = vmatprep.mubr.bf16.mxu0 0
  %3253 = vmatmul.mubr.bf16.gmra.mrb[0].mxu0 %v3021
  %v3254 = vpop.f32.mrb[0].mxu0
  %v3255 = vadd.f32 %v2943, %v3254
  %v3256 = vpop.f32.mrb[0].mxu0
  %v3257 = vpop.f32.mrb[0].mxu0
  %v3258 = vadd.f32 %v2943, %v3257
  %v3259 = vpop.f32.mrb[0].mxu0
  %3260 = vmatprep.mubr.bf16.mxu0 0
  %3261 = vmatmul.mubr.bf16.gmra.mrb[0].mxu0 %v3024
  %v3262 = vpop.f32.mrb[0].mxu0
  %v3263 = vadd.f32 %v2943, %v3262
  %v3264 = vpop.f32.mrb[0].mxu0
  %v3265 = vpop.f32.mrb[0].mxu0
  %v3266 = vadd.f32 %v2943, %v3265
  %v3267 = vpop.f32.mrb[0].mxu0
  %3268 = vmatprep.mubr.bf16.mxu0 0
  %3269 = vmatmul.mubr.bf16.gmra.mrb[0].mxu0 %v3027
  %v3270 = vpop.f32.mrb[0].mxu0
  %v3271 = vadd.f32 %v2943, %v3270
  %v3272 = vpop.f32.mrb[0].mxu0
  %v3273 = vpop.f32.mrb[0].mxu0
  %v3274 = vadd.f32 %v2943, %v3273
  %v3275 = vpop.f32.mrb[0].mxu0
  %3276 = vmatprep.mubr.bf16.mxu0 0
  %3277 = vmatmul.mubr.bf16.gmra.mrb[0].mxu0 %v3030
  %v3278 = vpop.f32.mrb[0].mxu0
  %v3279 = vadd.f32 %v2943, %v3278
  %v3280 = vpop.f32.mrb[0].mxu0
  %v3281 = vpop.f32.mrb[0].mxu0
  %v3282 = vadd.f32 %v2943, %v3281
  %v3283 = vpop.f32.mrb[0].mxu0
  %3284 = vmatprep.mubr.bf16.mxu0 0
  %3285 = vmatmul.mubr.bf16.gmra.mrb[0].mxu0 %v3033
  %v3286 = vpop.f32.mrb[0].mxu0
  %v3287 = vadd.f32 %v2943, %v3286
  %v3288 = vpop.f32.mrb[0].mxu0
  %v3289 = vpop.f32.mrb[0].mxu0
  %v3290 = vadd.f32 %v2943, %v3289
  %v3291 = vpop.f32.mrb[0].mxu0
  %3292 = vmatprep.mubr.bf16.mxu0 0
  %3293 = vmatmul.mubr.bf16.gmra.mrb[0].mxu0 %v3036
  %v3294 = vpop.f32.mrb[0].mxu0
  %v3295 = vadd.f32 %v2943, %v3294
  %v3296 = vpop.f32.mrb[0].mxu0
  %v3297 = vpop.f32.mrb[0].mxu0
  %v3298 = vadd.f32 %v2943, %v3297
  %v3299 = vpop.f32.mrb[0].mxu0
  %3300 = vmatprep.mubr.bf16.mxu0 0
  %3301 = vmatmul.mubr.bf16.gmra.mrb[0].mxu0 %v3039
  %v3302 = vpop.f32.mrb[0].mxu0
  %v3303 = vadd.f32 %v2943, %v3302
  %v3304 = vpop.f32.mrb[0].mxu0
  %v3305 = vpop.f32.mrb[0].mxu0
  %v3306 = vadd.f32 %v2943, %v3305
  %v3307 = vpop.f32.mrb[0].mxu0
  %3308 = vmatprep.mubr.bf16.mxu0 0
  %3309 = vmatmul.mubr.bf16.gmra.mrb[0].mxu0 %v3042
  %v3310 = vpop.f32.mrb[0].mxu0
  %v3311 = vadd.f32 %v2943, %v3310
  %v3312 = vpop.f32.mrb[0].mxu0
  %v3313 = vpop.f32.mrb[0].mxu0
  %v3314 = vadd.f32 %v2943, %v3313
  %v3315 = vpop.f32.mrb[0].mxu0
  %3316 = vmatprep.mubr.bf16.mxu0 0
  %3317 = vmatmul.mubr.bf16.gmra.mrb[0].mxu0 %v3045
  %v3318 = vpop.f32.mrb[0].mxu0
  %v3319 = vadd.f32 %v2943, %v3318
  %v3320 = vpop.f32.mrb[0].mxu0
  %v3321 = vpop.f32.mrb[0].mxu0
  %v3322 = vadd.f32 %v2943, %v3321
  %v3323 = vpop.f32.mrb[0].mxu0
  %3324 = vmatprep.mubr.bf16.mxu0 0
  %3325 = vmatmul.mubr.bf16.gmra.mrb[0].mxu0 %v3048
  %v3326 = vpop.f32.mrb[0].mxu0
  %v3327 = vadd.f32 %v2943, %v3326
  %v3328 = vpop.f32.mrb[0].mxu0
  %v3329 = vpop.f32.mrb[0].mxu0
  %v3330 = vadd.f32 %v2943, %v3329
  %v3331 = vpop.f32.mrb[0].mxu0
  %3332 = vmatprep.mubr.bf16.mxu0 0
  %3333 = vmatmul.mubr.bf16.gmra.mrb[0].mxu0 %v3051
  %v3334 = vpop.f32.mrb[0].mxu0
  %v3335 = vadd.f32 %v2943, %v3334
  %v3336 = vpop.f32.mrb[0].mxu0
  %v3337 = vpop.f32.mrb[0].mxu0
  %v3338 = vadd.f32 %v2943, %v3337
  %v3339 = vpop.f32.mrb[0].mxu0
  %3340 = vmatprep.mubr.bf16.mxu0 0
  %3341 = vmatmul.mubr.bf16.gmra.mrb[0].mxu0 %v3054
  %v3342 = vpop.f32.mrb[0].mxu0
  %v3343 = vadd.f32 %v2943, %v3342
  %v3344 = vpop.f32.mrb[0].mxu0
  %v3345 = vpop.f32.mrb[0].mxu0
  %v3346 = vadd.f32 %v2943, %v3345
  %v3347 = vpop.f32.mrb[0].mxu0
  %3348 = vdwg.mxu0
  %v3349 = vmax.f32 %v3095, 0.0
  %v3350 = vmax.f32 %v3098, 0.0
  %v3351 = vmax.f32 %v3103, 0.0
  %v3352 = vmax.f32 %v3106, 0.0
  %v3353 = vmax.f32 %v3111, 0.0
  %v3354 = vmax.f32 %v3114, 0.0
  %v3355 = vmax.f32 %v3119, 0.0
  %v3356 = vmax.f32 %v3122, 0.0
  %v3357 = vmax.f32 %v3127, 0.0
  %v3358 = vmax.f32 %v3130, 0.0
  %v3359 = vmax.f32 %v3135, 0.0
  %v3360 = vmax.f32 %v3138, 0.0
  %v3361 = vmax.f32 %v3143, 0.0
  %v3362 = vmax.f32 %v3146, 0.0
  %v3363 = vmax.f32 %v3151, 0.0
  %v3364 = vmax.f32 %v3154, 0.0
  %v3365 = vmax.f32 %v3159, 0.0
  %v3366 = vmax.f32 %v3162, 0.0
  %v3367 = vmax.f32 %v3167, 0.0
  %v3368 = vmax.f32 %v3170, 0.0
  %v3369 = vmax.f32 %v3175, 0.0
  %v3370 = vmax.f32 %v3178, 0.0
  %v3371 = vmax.f32 %v3183, 0.0
  %v3372 = vmax.f32 %v3186, 0.0
  %v3373 = vmax.f32 %v3191, 0.0
  %v3374 = vmax.f32 %v3194, 0.0
  %v3375 = vmax.f32 %v3199, 0.0
  %v3376 = vmax.f32 %v3202, 0.0
  %v3377 = vmax.f32 %v3207, 0.0
  %v3378 = vmax.f32 %v3210, 0.0
  %v3379 = vmax.f32 %v3215, 0.0
  %v3380 = vmax.f32 %v3218, 0.0
  %v3381 = vmax.f32 %v3223, 0.0
  %v3382 = vmax.f32 %v3226, 0.0
  %v3383 = vmax.f32 %v3231, 0.0
  %v3384 = vmax.f32 %v3234, 0.0
  %v3385 = vmax.f32 %v3239, 0.0
  %v3386 = vmax.f32 %v3242, 0.0
  %v3387 = vmax.f32 %v3247, 0.0
  %v3388 = vmax.f32 %v3250, 0.0
  %v3389 = vmax.f32 %v3255, 0.0
  %v3390 = vmax.f32 %v3258, 0.0
  %v3391 = vmax.f32 %v3263, 0.0
  %v3392 = vmax.f32 %v3266, 0.0
  %v3393 = vmax.f32 %v3271, 0.0
  %v3394 = vmax.f32 %v3274, 0.0
  %v3395 = vmax.f32 %v3279, 0.0
  %v3396 = vmax.f32 %v3282, 0.0
  %v3397 = vmax.f32 %v3287, 0.0
  %v3398 = vmax.f32 %v3290, 0.0
  %v3399 = vmax.f32 %v3295, 0.0
  %v3400 = vmax.f32 %v3298, 0.0
  %v3401 = vmax.f32 %v3303, 0.0
  %v3402 = vmax.f32 %v3306, 0.0
  %v3403 = vmax.f32 %v3311, 0.0
  %v3404 = vmax.f32 %v3314, 0.0
  %v3405 = vmax.f32 %v3319, 0.0
  %v3406 = vmax.f32 %v3322, 0.0
  %v3407 = vmax.f32 %v3327, 0.0
  %v3408 = vmax.f32 %v3330, 0.0
  %v3409 = vmax.f32 %v3335, 0.0
  %v3410 = vmax.f32 %v3338, 0.0
  %v3411 = vmax.f32 %v3343, 0.0
  %v3412 = vmax.f32 %v3346, 0.0
  %v3413 = vsel %vm2448, %v3349, 0.0
  %v3414 = vsel %vm2448, %v3350, 0.0
  %v3415 = vadd.f32 %v3413, %v3414
  %v3416 = vsel %vm2448, %v3351, 0.0
  %v3417 = vadd.f32 %v3415, %v3416
  %v3418 = vsel %vm2448, %v3352, 0.0
  %v3419 = vadd.f32 %v3417, %v3418
  %v3420 = vsel %vm2448, %v3353, 0.0
  %v3421 = vadd.f32 %v3419, %v3420
  %v3422 = vsel %vm2448, %v3354, 0.0
  %v3423 = vadd.f32 %v3421, %v3422
  %v3424 = vsel %vm2448, %v3355, 0.0
  %v3425 = vadd.f32 %v3423, %v3424
  %v3426 = vsel %vm2448, %v3356, 0.0
  %v3427 = vadd.f32 %v3425, %v3426
  %v3428 = vsel %vm2448, %v3357, 0.0
  %v3429 = vadd.f32 %v3427, %v3428
  %v3430 = vsel %vm2448, %v3358, 0.0
  %v3431 = vadd.f32 %v3429, %v3430
  %v3432 = vsel %vm2448, %v3359, 0.0
  %v3433 = vadd.f32 %v3431, %v3432
  %v3434 = vsel %vm2448, %v3360, 0.0
  %v3435 = vadd.f32 %v3433, %v3434
  %v3436 = vsel %vm2448, %v3361, 0.0
  %v3437 = vadd.f32 %v3435, %v3436
  %v3438 = vsel %vm2448, %v3362, 0.0
  %v3439 = vadd.f32 %v3437, %v3438
  %v3440 = vsel %vm2448, %v3363, 0.0
  %v3441 = vadd.f32 %v3439, %v3440
  %v3442 = vsel %vm2448, %v3364, 0.0
  %v3443 = vadd.f32 %v3441, %v3442
  %v3444 = vsel %vm2448, %v3365, 0.0
  %v3445 = vadd.f32 %v3443, %v3444
  %v3446 = vsel %vm2448, %v3366, 0.0
  %v3447 = vadd.f32 %v3445, %v3446
  %v3448 = vsel %vm2448, %v3367, 0.0
  %v3449 = vadd.f32 %v3447, %v3448
  %v3450 = vsel %vm2448, %v3368, 0.0
  %v3451 = vadd.f32 %v3449, %v3450
  %v3452 = vsel %vm2448, %v3369, 0.0
  %v3453 = vadd.f32 %v3451, %v3452
  %v3454 = vsel %vm2448, %v3370, 0.0
  %v3455 = vadd.f32 %v3453, %v3454
  %v3456 = vsel %vm2448, %v3371, 0.0
  %v3457 = vadd.f32 %v3455, %v3456
  %v3458 = vsel %vm2448, %v3372, 0.0
  %v3459 = vadd.f32 %v3457, %v3458
  %v3460 = vsel %vm2448, %v3373, 0.0
  %v3461 = vadd.f32 %v3459, %v3460
  %v3462 = vsel %vm2448, %v3374, 0.0
  %v3463 = vadd.f32 %v3461, %v3462
  %v3464 = vsel %vm2448, %v3375, 0.0
  %v3465 = vadd.f32 %v3463, %v3464
  %v3466 = vsel %vm2448, %v3376, 0.0
  %v3467 = vadd.f32 %v3465, %v3466
  %v3468 = vsel %vm2448, %v3377, 0.0
  %v3469 = vadd.f32 %v3467, %v3468
  %v3470 = vsel %vm2448, %v3378, 0.0
  %v3471 = vadd.f32 %v3469, %v3470
  %v3472 = vsel %vm2448, %v3379, 0.0
  %v3473 = vadd.f32 %v3471, %v3472
  %v3474 = vsel %vm2448, %v3380, 0.0
  %v3475 = vadd.f32 %v3473, %v3474
  %v3476 = vsel %vm2448, %v3381, 0.0
  %v3477 = vadd.f32 %v3475, %v3476
  %v3478 = vsel %vm2448, %v3382, 0.0
  %v3479 = vadd.f32 %v3477, %v3478
  %v3480 = vsel %vm2448, %v3383, 0.0
  %v3481 = vadd.f32 %v3479, %v3480
  %v3482 = vsel %vm2448, %v3384, 0.0
  %v3483 = vadd.f32 %v3481, %v3482
  %v3484 = vsel %vm2448, %v3385, 0.0
  %v3485 = vadd.f32 %v3483, %v3484
  %v3486 = vsel %vm2448, %v3386, 0.0
  %v3487 = vadd.f32 %v3485, %v3486
  %v3488 = vsel %vm2448, %v3387, 0.0
  %v3489 = vadd.f32 %v3487, %v3488
  %v3490 = vsel %vm2448, %v3388, 0.0
  %v3491 = vadd.f32 %v3489, %v3490
  %v3492 = vsel %vm2448, %v3389, 0.0
  %v3493 = vadd.f32 %v3491, %v3492
  %v3494 = vsel %vm2448, %v3390, 0.0
  %v3495 = vadd.f32 %v3493, %v3494
  %v3496 = vsel %vm2448, %v3391, 0.0
  %v3497 = vadd.f32 %v3495, %v3496
  %v3498 = vsel %vm2448, %v3392, 0.0
  %v3499 = vadd.f32 %v3497, %v3498
  %v3500 = vsel %vm2448, %v3393, 0.0
  %v3501 = vadd.f32 %v3499, %v3500
  %v3502 = vsel %vm2448, %v3394, 0.0
  %v3503 = vadd.f32 %v3501, %v3502
  %v3504 = vsel %vm2448, %v3395, 0.0
  %v3505 = vadd.f32 %v3503, %v3504
  %v3506 = vsel %vm2448, %v3396, 0.0
  %v3507 = vadd.f32 %v3505, %v3506
  %v3508 = vsel %vm2448, %v3397, 0.0
  %v3509 = vadd.f32 %v3507, %v3508
  %v3510 = vsel %vm2448, %v3398, 0.0
  %v3511 = vadd.f32 %v3509, %v3510
  %v3512 = vsel %vm2448, %v3399, 0.0
  %v3513 = vadd.f32 %v3511, %v3512
  %v3514 = vsel %vm2448, %v3400, 0.0
  %v3515 = vadd.f32 %v3513, %v3514
  %v3516 = vsel %vm2448, %v3401, 0.0
  %v3517 = vadd.f32 %v3515, %v3516
  %v3518 = vsel %vm2448, %v3402, 0.0
  %v3519 = vadd.f32 %v3517, %v3518
  %v3520 = vsel %vm2448, %v3403, 0.0
  %v3521 = vadd.f32 %v3519, %v3520
  %v3522 = vsel %vm2448, %v3404, 0.0
  %v3523 = vadd.f32 %v3521, %v3522
  %v3524 = vsel %vm2448, %v3405, 0.0
  %v3525 = vadd.f32 %v3523, %v3524
  %v3526 = vsel %vm2448, %v3406, 0.0
  %v3527 = vadd.f32 %v3525, %v3526
  %v3528 = vsel %vm2448, %v3407, 0.0
  %v3529 = vadd.f32 %v3527, %v3528
  %v3530 = vsel %vm2448, %v3408, 0.0
  %v3531 = vadd.f32 %v3529, %v3530
  %v3532 = vsel %vm2448, %v3409, 0.0
  %v3533 = vadd.f32 %v3531, %v3532
  %v3534 = vsel %vm2448, %v3410, 0.0
  %v3535 = vadd.f32 %v3533, %v3534
  %v3536 = vsel %vm2448, %v3411, 0.0
  %v3537 = vadd.f32 %v3535, %v3536
  %v3538 = vsel %vm2448, %v3412, 0.0
  %v3539 = vadd.f32 %v3537, %v3538
  %v3540 = vrot.slane %v3539, 4
  %v3541 = vadd.f32 %v3539, %v3540
  %v3542 = vrot.slane %v3541, 2
  %v3543 = vadd.f32 %v3541, %v3542
  %v3544 = vrot.slane %v3543, 1
  %v3545 = vadd.f32 %v3543, %v3544
  %v3546 = vmul.f32 %v3545, 0.001953125
  %v3547 = vmul.f32 %v3349, %v3349
  %v3548 = vmul.f32 %v3350, %v3350
  %v3549 = vmul.f32 %v3351, %v3351
  %v3550 = vmul.f32 %v3352, %v3352
  %v3551 = vmul.f32 %v3353, %v3353
  %v3552 = vmul.f32 %v3354, %v3354
  %v3553 = vmul.f32 %v3355, %v3355
  %v3554 = vmul.f32 %v3356, %v3356
  %v3555 = vmul.f32 %v3357, %v3357
  %v3556 = vmul.f32 %v3358, %v3358
  %v3557 = vmul.f32 %v3359, %v3359
  %v3558 = vmul.f32 %v3360, %v3360
  %v3559 = vmul.f32 %v3361, %v3361
  %v3560 = vmul.f32 %v3362, %v3362
  %v3561 = vmul.f32 %v3363, %v3363
  %v3562 = vmul.f32 %v3364, %v3364
  %v3563 = vmul.f32 %v3365, %v3365
  %v3564 = vmul.f32 %v3366, %v3366
  %v3565 = vmul.f32 %v3367, %v3367
  %v3566 = vmul.f32 %v3368, %v3368
  %v3567 = vmul.f32 %v3369, %v3369
  %v3568 = vmul.f32 %v3370, %v3370
  %v3569 = vmul.f32 %v3371, %v3371
  %v3570 = vmul.f32 %v3372, %v3372
  %v3571 = vmul.f32 %v3373, %v3373
  %v3572 = vmul.f32 %v3374, %v3374
  %v3573 = vmul.f32 %v3375, %v3375
  %v3574 = vmul.f32 %v3376, %v3376
  %v3575 = vmul.f32 %v3377, %v3377
  %v3576 = vmul.f32 %v3378, %v3378
  %v3577 = vmul.f32 %v3379, %v3379
  %v3578 = vmul.f32 %v3380, %v3380
  %v3579 = vmul.f32 %v3381, %v3381
  %v3580 = vmul.f32 %v3382, %v3382
  %v3581 = vmul.f32 %v3383, %v3383
  %v3582 = vmul.f32 %v3384, %v3384
  %v3583 = vmul.f32 %v3385, %v3385
  %v3584 = vmul.f32 %v3386, %v3386
  %v3585 = vmul.f32 %v3387, %v3387
  %v3586 = vmul.f32 %v3388, %v3388
  %v3587 = vmul.f32 %v3389, %v3389
  %v3588 = vmul.f32 %v3390, %v3390
  %v3589 = vmul.f32 %v3391, %v3391
  %v3590 = vmul.f32 %v3392, %v3392
  %v3591 = vmul.f32 %v3393, %v3393
  %v3592 = vmul.f32 %v3394, %v3394
  %v3593 = vmul.f32 %v3395, %v3395
  %v3594 = vmul.f32 %v3396, %v3396
  %v3595 = vmul.f32 %v3397, %v3397
  %v3596 = vmul.f32 %v3398, %v3398
  %v3597 = vmul.f32 %v3399, %v3399
  %v3598 = vmul.f32 %v3400, %v3400
  %v3599 = vmul.f32 %v3401, %v3401
  %v3600 = vmul.f32 %v3402, %v3402
  %v3601 = vmul.f32 %v3403, %v3403
  %v3602 = vmul.f32 %v3404, %v3404
  %v3603 = vmul.f32 %v3405, %v3405
  %v3604 = vmul.f32 %v3406, %v3406
  %v3605 = vmul.f32 %v3407, %v3407
  %v3606 = vmul.f32 %v3408, %v3408
  %v3607 = vmul.f32 %v3409, %v3409
  %v3608 = vmul.f32 %v3410, %v3410
  %v3609 = vmul.f32 %v3411, %v3411
  %v3610 = vmul.f32 %v3412, %v3412
  %v3611 = vsel %vm2448, %v3547, 0.0
  %v3612 = vsel %vm2448, %v3548, 0.0
  %v3613 = vadd.f32 %v3611, %v3612
  %v3614 = vsel %vm2448, %v3549, 0.0
  %v3615 = vadd.f32 %v3613, %v3614
  %v3616 = vsel %vm2448, %v3550, 0.0
  %v3617 = vadd.f32 %v3615, %v3616
  %v3618 = vsel %vm2448, %v3551, 0.0
  %v3619 = vadd.f32 %v3617, %v3618
  %v3620 = vsel %vm2448, %v3552, 0.0
  %v3621 = vadd.f32 %v3619, %v3620
  %v3622 = vsel %vm2448, %v3553, 0.0
  %v3623 = vadd.f32 %v3621, %v3622
  %v3624 = vsel %vm2448, %v3554, 0.0
  %v3625 = vadd.f32 %v3623, %v3624
  %v3626 = vsel %vm2448, %v3555, 0.0
  %v3627 = vadd.f32 %v3625, %v3626
  %v3628 = vsel %vm2448, %v3556, 0.0
  %v3629 = vadd.f32 %v3627, %v3628
  %v3630 = vsel %vm2448, %v3557, 0.0
  %v3631 = vadd.f32 %v3629, %v3630
  %v3632 = vsel %vm2448, %v3558, 0.0
  %v3633 = vadd.f32 %v3631, %v3632
  %v3634 = vsel %vm2448, %v3559, 0.0
  %v3635 = vadd.f32 %v3633, %v3634
  %v3636 = vsel %vm2448, %v3560, 0.0
  %v3637 = vadd.f32 %v3635, %v3636
  %v3638 = vsel %vm2448, %v3561, 0.0
  %v3639 = vadd.f32 %v3637, %v3638
  %v3640 = vsel %vm2448, %v3562, 0.0
  %v3641 = vadd.f32 %v3639, %v3640
  %v3642 = vsel %vm2448, %v3563, 0.0
  %v3643 = vadd.f32 %v3641, %v3642
  %v3644 = vsel %vm2448, %v3564, 0.0
  %v3645 = vadd.f32 %v3643, %v3644
  %v3646 = vsel %vm2448, %v3565, 0.0
  %v3647 = vadd.f32 %v3645, %v3646
  %v3648 = vsel %vm2448, %v3566, 0.0
  %v3649 = vadd.f32 %v3647, %v3648
  %v3650 = vsel %vm2448, %v3567, 0.0
  %v3651 = vadd.f32 %v3649, %v3650
  %v3652 = vsel %vm2448, %v3568, 0.0
  %v3653 = vadd.f32 %v3651, %v3652
  %v3654 = vsel %vm2448, %v3569, 0.0
  %v3655 = vadd.f32 %v3653, %v3654
  %v3656 = vsel %vm2448, %v3570, 0.0
  %v3657 = vadd.f32 %v3655, %v3656
  %v3658 = vsel %vm2448, %v3571, 0.0
  %v3659 = vadd.f32 %v3657, %v3658
  %v3660 = vsel %vm2448, %v3572, 0.0
  %v3661 = vadd.f32 %v3659, %v3660
  %v3662 = vsel %vm2448, %v3573, 0.0
  %v3663 = vadd.f32 %v3661, %v3662
  %v3664 = vsel %vm2448, %v3574, 0.0
  %v3665 = vadd.f32 %v3663, %v3664
  %v3666 = vsel %vm2448, %v3575, 0.0
  %v3667 = vadd.f32 %v3665, %v3666
  %v3668 = vsel %vm2448, %v3576, 0.0
  %v3669 = vadd.f32 %v3667, %v3668
  %v3670 = vsel %vm2448, %v3577, 0.0
  %v3671 = vadd.f32 %v3669, %v3670
  %v3672 = vsel %vm2448, %v3578, 0.0
  %v3673 = vadd.f32 %v3671, %v3672
  %v3674 = vsel %vm2448, %v3579, 0.0
  %v3675 = vadd.f32 %v3673, %v3674
  %v3676 = vsel %vm2448, %v3580, 0.0
  %v3677 = vadd.f32 %v3675, %v3676
  %v3678 = vsel %vm2448, %v3581, 0.0
  %v3679 = vadd.f32 %v3677, %v3678
  %v3680 = vsel %vm2448, %v3582, 0.0
  %v3681 = vadd.f32 %v3679, %v3680
  %v3682 = vsel %vm2448, %v3583, 0.0
  %v3683 = vadd.f32 %v3681, %v3682
  %v3684 = vsel %vm2448, %v3584, 0.0
  %v3685 = vadd.f32 %v3683, %v3684
  %v3686 = vsel %vm2448, %v3585, 0.0
  %v3687 = vadd.f32 %v3685, %v3686
  %v3688 = vsel %vm2448, %v3586, 0.0
  %v3689 = vadd.f32 %v3687, %v3688
  %v3690 = vsel %vm2448, %v3587, 0.0
  %v3691 = vadd.f32 %v3689, %v3690
  %v3692 = vsel %vm2448, %v3588, 0.0
  %v3693 = vadd.f32 %v3691, %v3692
  %v3694 = vsel %vm2448, %v3589, 0.0
  %v3695 = vadd.f32 %v3693, %v3694
  %v3696 = vsel %vm2448, %v3590, 0.0
  %v3697 = vadd.f32 %v3695, %v3696
  %v3698 = vsel %vm2448, %v3591, 0.0
  %v3699 = vadd.f32 %v3697, %v3698
  %v3700 = vsel %vm2448, %v3592, 0.0
  %v3701 = vadd.f32 %v3699, %v3700
  %v3702 = vsel %vm2448, %v3593, 0.0
  %v3703 = vadd.f32 %v3701, %v3702
  %v3704 = vsel %vm2448, %v3594, 0.0
  %v3705 = vadd.f32 %v3703, %v3704
  %v3706 = vsel %vm2448, %v3595, 0.0
  %v3707 = vadd.f32 %v3705, %v3706
  %v3708 = vsel %vm2448, %v3596, 0.0
  %v3709 = vadd.f32 %v3707, %v3708
  %v3710 = vsel %vm2448, %v3597, 0.0
  %v3711 = vadd.f32 %v3709, %v3710
  %v3712 = vsel %vm2448, %v3598, 0.0
  %v3713 = vadd.f32 %v3711, %v3712
  %v3714 = vsel %vm2448, %v3599, 0.0
  %v3715 = vadd.f32 %v3713, %v3714
  %v3716 = vsel %vm2448, %v3600, 0.0
  %v3717 = vadd.f32 %v3715, %v3716
  %v3718 = vsel %vm2448, %v3601, 0.0
  %v3719 = vadd.f32 %v3717, %v3718
  %v3720 = vsel %vm2448, %v3602, 0.0
  %v3721 = vadd.f32 %v3719, %v3720
  %v3722 = vsel %vm2448, %v3603, 0.0
  %v3723 = vadd.f32 %v3721, %v3722
  %v3724 = vsel %vm2448, %v3604, 0.0
  %v3725 = vadd.f32 %v3723, %v3724
  %v3726 = vsel %vm2448, %v3605, 0.0
  %v3727 = vadd.f32 %v3725, %v3726
  %v3728 = vsel %vm2448, %v3606, 0.0
  %v3729 = vadd.f32 %v3727, %v3728
  %v3730 = vsel %vm2448, %v3607, 0.0
  %v3731 = vadd.f32 %v3729, %v3730
  %v3732 = vsel %vm2448, %v3608, 0.0
  %v3733 = vadd.f32 %v3731, %v3732
  %v3734 = vsel %vm2448, %v3609, 0.0
  %v3735 = vadd.f32 %v3733, %v3734
  %v3736 = vsel %vm2448, %v3610, 0.0
  %v3737 = vadd.f32 %v3735, %v3736
  %v3738 = vrot.slane %v3737, 4
  %v3739 = vadd.f32 %v3737, %v3738
  %v3740 = vrot.slane %v3739, 2
  %v3741 = vadd.f32 %v3739, %v3740
  %v3742 = vrot.slane %v3741, 1
  %v3743 = vadd.f32 %v3741, %v3742
  %v3744 = vmul.f32 %v3743, 0.001953125
  %v3745 = vmul.f32 %v3546, %v3546
  %v3746 = vsub.f32 %v3744, %v3745
  %v3747 = vsub.f32 %v3349, %v3546
  %v3748 = vsub.f32 %v3350, %v3546
  %v3749 = vsub.f32 %v3351, %v3546
  %v3750 = vsub.f32 %v3352, %v3546
  %v3751 = vsub.f32 %v3353, %v3546
  %v3752 = vsub.f32 %v3354, %v3546
  %v3753 = vsub.f32 %v3355, %v3546
  %v3754 = vsub.f32 %v3356, %v3546
  %v3755 = vsub.f32 %v3357, %v3546
  %v3756 = vsub.f32 %v3358, %v3546
  %v3757 = vsub.f32 %v3359, %v3546
  %v3758 = vsub.f32 %v3360, %v3546
  %v3759 = vsub.f32 %v3361, %v3546
  %v3760 = vsub.f32 %v3362, %v3546
  %v3761 = vsub.f32 %v3363, %v3546
  %v3762 = vsub.f32 %v3364, %v3546
  %v3763 = vsub.f32 %v3365, %v3546
  %v3764 = vsub.f32 %v3366, %v3546
  %v3765 = vsub.f32 %v3367, %v3546
  %v3766 = vsub.f32 %v3368, %v3546
  %v3767 = vsub.f32 %v3369, %v3546
  %v3768 = vsub.f32 %v3370, %v3546
  %v3769 = vsub.f32 %v3371, %v3546
  %v3770 = vsub.f32 %v3372, %v3546
  %v3771 = vsub.f32 %v3373, %v3546
  %v3772 = vsub.f32 %v3374, %v3546
  %v3773 = vsub.f32 %v3375, %v3546
  %v3774 = vsub.f32 %v3376, %v3546
  %v3775 = vsub.f32 %v3377, %v3546
  %v3776 = vsub.f32 %v3378, %v3546
  %v3777 = vsub.f32 %v3379, %v3546
  %v3778 = vsub.f32 %v3380, %v3546
  %v3779 = vsub.f32 %v3381, %v3546
  %v3780 = vsub.f32 %v3382, %v3546
  %v3781 = vsub.f32 %v3383, %v3546
  %v3782 = vsub.f32 %v3384, %v3546
  %v3783 = vsub.f32 %v3385, %v3546
  %v3784 = vsub.f32 %v3386, %v3546
  %v3785 = vsub.f32 %v3387, %v3546
  %v3786 = vsub.f32 %v3388, %v3546
  %v3787 = vsub.f32 %v3389, %v3546
  %v3788 = vsub.f32 %v3390, %v3546
  %v3789 = vsub.f32 %v3391, %v3546
  %v3790 = vsub.f32 %v3392, %v3546
  %v3791 = vsub.f32 %v3393, %v3546
  %v3792 = vsub.f32 %v3394, %v3546
  %v3793 = vsub.f32 %v3395, %v3546
  %v3794 = vsub.f32 %v3396, %v3546
  %v3795 = vsub.f32 %v3397, %v3546
  %v3796 = vsub.f32 %v3398, %v3546
  %v3797 = vsub.f32 %v3399, %v3546
  %v3798 = vsub.f32 %v3400, %v3546
  %v3799 = vsub.f32 %v3401, %v3546
  %v3800 = vsub.f32 %v3402, %v3546
  %v3801 = vsub.f32 %v3403, %v3546
  %v3802 = vsub.f32 %v3404, %v3546
  %v3803 = vsub.f32 %v3405, %v3546
  %v3804 = vsub.f32 %v3406, %v3546
  %v3805 = vsub.f32 %v3407, %v3546
  %v3806 = vsub.f32 %v3408, %v3546
  %v3807 = vsub.f32 %v3409, %v3546
  %v3808 = vsub.f32 %v3410, %v3546
  %v3809 = vsub.f32 %v3411, %v3546
  %v3810 = vsub.f32 %v3412, %v3546
  %v3811 = vadd.f32 %v3746, 1e-05
  %v3812 = vrsqrt.pop %v3811
  %v3813 = vmul.f32 %v3747, %v3812
  %v3814 = vmul.f32 %v3748, %v3812
  %v3815 = vmul.f32 %v3749, %v3812
  %v3816 = vmul.f32 %v3750, %v3812
  %v3817 = vmul.f32 %v3751, %v3812
  %v3818 = vmul.f32 %v3752, %v3812
  %v3819 = vmul.f32 %v3753, %v3812
  %v3820 = vmul.f32 %v3754, %v3812
  %v3821 = vmul.f32 %v3755, %v3812
  %v3822 = vmul.f32 %v3756, %v3812
  %v3823 = vmul.f32 %v3757, %v3812
  %v3824 = vmul.f32 %v3758, %v3812
  %v3825 = vmul.f32 %v3759, %v3812
  %v3826 = vmul.f32 %v3760, %v3812
  %v3827 = vmul.f32 %v3761, %v3812
  %v3828 = vmul.f32 %v3762, %v3812
  %v3829 = vmul.f32 %v3763, %v3812
  %v3830 = vmul.f32 %v3764, %v3812
  %v3831 = vmul.f32 %v3765, %v3812
  %v3832 = vmul.f32 %v3766, %v3812
  %v3833 = vmul.f32 %v3767, %v3812
  %v3834 = vmul.f32 %v3768, %v3812
  %v3835 = vmul.f32 %v3769, %v3812
  %v3836 = vmul.f32 %v3770, %v3812
  %v3837 = vmul.f32 %v3771, %v3812
  %v3838 = vmul.f32 %v3772, %v3812
  %v3839 = vmul.f32 %v3773, %v3812
  %v3840 = vmul.f32 %v3774, %v3812
  %v3841 = vmul.f32 %v3775, %v3812
  %v3842 = vmul.f32 %v3776, %v3812
  %v3843 = vmul.f32 %v3777, %v3812
  %v3844 = vmul.f32 %v3778, %v3812
  %v3845 = vmul.f32 %v3779, %v3812
  %v3846 = vmul.f32 %v3780, %v3812
  %v3847 = vmul.f32 %v3781, %v3812
  %v3848 = vmul.f32 %v3782, %v3812
  %v3849 = vmul.f32 %v3783, %v3812
  %v3850 = vmul.f32 %v3784, %v3812
  %v3851 = vmul.f32 %v3785, %v3812
  %v3852 = vmul.f32 %v3786, %v3812
  %v3853 = vmul.f32 %v3787, %v3812
  %v3854 = vmul.f32 %v3788, %v3812
  %v3855 = vmul.f32 %v3789, %v3812
  %v3856 = vmul.f32 %v3790, %v3812
  %v3857 = vmul.f32 %v3791, %v3812
  %v3858 = vmul.f32 %v3792, %v3812
  %v3859 = vmul.f32 %v3793, %v3812
  %v3860 = vmul.f32 %v3794, %v3812
  %v3861 = vmul.f32 %v3795, %v3812
  %v3862 = vmul.f32 %v3796, %v3812
  %v3863 = vmul.f32 %v3797, %v3812
  %v3864 = vmul.f32 %v3798, %v3812
  %v3865 = vmul.f32 %v3799, %v3812
  %v3866 = vmul.f32 %v3800, %v3812
  %v3867 = vmul.f32 %v3801, %v3812
  %v3868 = vmul.f32 %v3802, %v3812
  %v3869 = vmul.f32 %v3803, %v3812
  %v3870 = vmul.f32 %v3804, %v3812
  %v3871 = vmul.f32 %v3805, %v3812
  %v3872 = vmul.f32 %v3806, %v3812
  %v3873 = vmul.f32 %v3807, %v3812
  %v3874 = vmul.f32 %v3808, %v3812
  %v3875 = vmul.f32 %v3809, %v3812
  %v3876 = vmul.f32 %v3810, %v3812
  %v3877 = vlaneseq
  %v3878 = vshrl.u32 %v3877, 7
  %v3879 = vsub.s32 0, %v3878
  %v3880 = vrot.slane %v25, %v3879
  %v3881 = vmul.f32 %v3813, %v3880
  %v3882 = vmul.f32 %v3814, %v3880
  %v3883 = vmul.f32 %v3815, %v3880
  %v3884 = vmul.f32 %v3816, %v3880
  %v3885 = vmul.f32 %v3817, %v3880
  %v3886 = vmul.f32 %v3818, %v3880
  %v3887 = vmul.f32 %v3819, %v3880
  %v3888 = vmul.f32 %v3820, %v3880
  %v3889 = vmul.f32 %v3821, %v3880
  %v3890 = vmul.f32 %v3822, %v3880
  %v3891 = vmul.f32 %v3823, %v3880
  %v3892 = vmul.f32 %v3824, %v3880
  %v3893 = vmul.f32 %v3825, %v3880
  %v3894 = vmul.f32 %v3826, %v3880
  %v3895 = vmul.f32 %v3827, %v3880
  %v3896 = vmul.f32 %v3828, %v3880
  %v3897 = vmul.f32 %v3829, %v3880
  %v3898 = vmul.f32 %v3830, %v3880
  %v3899 = vmul.f32 %v3831, %v3880
  %v3900 = vmul.f32 %v3832, %v3880
  %v3901 = vmul.f32 %v3833, %v3880
  %v3902 = vmul.f32 %v3834, %v3880
  %v3903 = vmul.f32 %v3835, %v3880
  %v3904 = vmul.f32 %v3836, %v3880
  %v3905 = vmul.f32 %v3837, %v3880
  %v3906 = vmul.f32 %v3838, %v3880
  %v3907 = vmul.f32 %v3839, %v3880
  %v3908 = vmul.f32 %v3840, %v3880
  %v3909 = vmul.f32 %v3841, %v3880
  %v3910 = vmul.f32 %v3842, %v3880
  %v3911 = vmul.f32 %v3843, %v3880
  %v3912 = vmul.f32 %v3844, %v3880
  %v3913 = vmul.f32 %v3845, %v3880
  %v3914 = vmul.f32 %v3846, %v3880
  %v3915 = vmul.f32 %v3847, %v3880
  %v3916 = vmul.f32 %v3848, %v3880
  %v3917 = vmul.f32 %v3849, %v3880
  %v3918 = vmul.f32 %v3850, %v3880
  %v3919 = vmul.f32 %v3851, %v3880
  %v3920 = vmul.f32 %v3852, %v3880
  %v3921 = vmul.f32 %v3853, %v3880
  %v3922 = vmul.f32 %v3854, %v3880
  %v3923 = vmul.f32 %v3855, %v3880
  %v3924 = vmul.f32 %v3856, %v3880
  %v3925 = vmul.f32 %v3857, %v3880
  %v3926 = vmul.f32 %v3858, %v3880
  %v3927 = vmul.f32 %v3859, %v3880
  %v3928 = vmul.f32 %v3860, %v3880
  %v3929 = vmul.f32 %v3861, %v3880
  %v3930 = vmul.f32 %v3862, %v3880
  %v3931 = vmul.f32 %v3863, %v3880
  %v3932 = vmul.f32 %v3864, %v3880
  %v3933 = vmul.f32 %v3865, %v3880
  %v3934 = vmul.f32 %v3866, %v3880
  %v3935 = vmul.f32 %v3867, %v3880
  %v3936 = vmul.f32 %v3868, %v3880
  %v3937 = vmul.f32 %v3869, %v3880
  %v3938 = vmul.f32 %v3870, %v3880
  %v3939 = vmul.f32 %v3871, %v3880
  %v3940 = vmul.f32 %v3872, %v3880
  %v3941 = vmul.f32 %v3873, %v3880
  %v3942 = vmul.f32 %v3874, %v3880
  %v3943 = vmul.f32 %v3875, %v3880
  %v3944 = vmul.f32 %v3876, %v3880
  %v3945 = vlaneseq
  %v3946 = vshrl.u32 %v3945, 7
  %v3947 = vsub.s32 0, %v3946
  %v3948 = vrot.slane %v26, %v3947
  %v3949 = vadd.f32 %v3881, %v3948
  %v3950 = vadd.f32 %v3882, %v3948
  %v3951 = vadd.f32 %v3883, %v3948
  %v3952 = vadd.f32 %v3884, %v3948
  %v3953 = vadd.f32 %v3885, %v3948
  %v3954 = vadd.f32 %v3886, %v3948
  %v3955 = vadd.f32 %v3887, %v3948
  %v3956 = vadd.f32 %v3888, %v3948
  %v3957 = vadd.f32 %v3889, %v3948
  %v3958 = vadd.f32 %v3890, %v3948
  %v3959 = vadd.f32 %v3891, %v3948
  %v3960 = vadd.f32 %v3892, %v3948
  %v3961 = vadd.f32 %v3893, %v3948
  %v3962 = vadd.f32 %v3894, %v3948
  %v3963 = vadd.f32 %v3895, %v3948
  %v3964 = vadd.f32 %v3896, %v3948
  %v3965 = vadd.f32 %v3897, %v3948
  %v3966 = vadd.f32 %v3898, %v3948
  %v3967 = vadd.f32 %v3899, %v3948
  %v3968 = vadd.f32 %v3900, %v3948
  %v3969 = vadd.f32 %v3901, %v3948
  %v3970 = vadd.f32 %v3902, %v3948
  %v3971 = vadd.f32 %v3903, %v3948
  %v3972 = vadd.f32 %v3904, %v3948
  %v3973 = vadd.f32 %v3905, %v3948
  %v3974 = vadd.f32 %v3906, %v3948
  %v3975 = vadd.f32 %v3907, %v3948
  %v3976 = vadd.f32 %v3908, %v3948
  %v3977 = vadd.f32 %v3909, %v3948
  %v3978 = vadd.f32 %v3910, %v3948
  %v3979 = vadd.f32 %v3911, %v3948
  %v3980 = vadd.f32 %v3912, %v3948
  %v3981 = vadd.f32 %v3913, %v3948
  %v3982 = vadd.f32 %v3914, %v3948
  %v3983 = vadd.f32 %v3915, %v3948
  %v3984 = vadd.f32 %v3916, %v3948
  %v3985 = vadd.f32 %v3917, %v3948
  %v3986 = vadd.f32 %v3918, %v3948
  %v3987 = vadd.f32 %v3919, %v3948
  %v3988 = vadd.f32 %v3920, %v3948
  %v3989 = vadd.f32 %v3921, %v3948
  %v3990 = vadd.f32 %v3922, %v3948
  %v3991 = vadd.f32 %v3923, %v3948
  %v3992 = vadd.f32 %v3924, %v3948
  %v3993 = vadd.f32 %v3925, %v3948
  %v3994 = vadd.f32 %v3926, %v3948
  %v3995 = vadd.f32 %v3927, %v3948
  %v3996 = vadd.f32 %v3928, %v3948
  %v3997 = vadd.f32 %v3929, %v3948
  %v3998 = vadd.f32 %v3930, %v3948
  %v3999 = vadd.f32 %v3931, %v3948
  %v4000 = vadd.f32 %v3932, %v3948
  %v4001 = vadd.f32 %v3933, %v3948
  %v4002 = vadd.f32 %v3934, %v3948
  %v4003 = vadd.f32 %v3935, %v3948
  %v4004 = vadd.f32 %v3936, %v3948
  %v4005 = vadd.f32 %v3937, %v3948
  %v4006 = vadd.f32 %v3938, %v3948
  %v4007 = vadd.f32 %v3939, %v3948
  %v4008 = vadd.f32 %v3940, %v3948
  %v4009 = vadd.f32 %v3941, %v3948
  %v4010 = vadd.f32 %v3942, %v3948
  %v4011 = vadd.f32 %v3943, %v3948
  %v4012 = vadd.f32 %v3944, %v3948
  %v4013 = vld [vmem:[%s1] sm:$0x3]
  %v4014 = vpack.c.bf16 %v4013, %v4013
  %v4015 = vld [vmem:[%s3] sm:$0xf]
  %v4016 = vld [vmem:[%s3 + $0x4] sm:$0xf]
  %v4017 = vld [vmem:[%s3 + $0x8] sm:$0xf]
  %v4018 = vld [vmem:[%s3 + $0xc] sm:$0xf]
  %v4019 = vlaneseq
  %v4020 = vshrl.u32 %v4019, 7
  %v4021 = vsub.s32 0, %v4020
  %v4022 = vrot.slane %v27, %v4021
  %v4027 = vunpack.c.l.b16 %v4015
  %v4028 = vunpack.c.l.b16 %v4016
  %v4029 = vunpack.c.l.b16 %v4017
  %v4030 = vunpack.c.l.b16 %v4018
  %v4031 = vpack.c.b16 %v4028, %v4027
  %v4032 = vpack.c.b16 %v4030, %v4029
  %v4036 = vsel %vm2838, %v4014, 0
  %4038 = vmatprep.subr.bf16.mxu0 0
  %4039 = vmatpush1.bf16.msra.mxu0 %v4031
  %4040 = vmatprep.subr.bf16.mxu0 0
  %4041 = vmatpush1.bf16.msra.mxu0 %v4032
  %4042 = vmatprep.subr.bf16.mxu0 0
  %4043 = vmatpush1.bf16.msra.mxu0 0
  %4044 = vmatprep.subr.bf16.mxu0 0
  %4045 = vmatpush1.bf16.msra.mxu0 0
  %4046 = vmatprep.subr.bf16.mxu0 0
  %4047 = vmatpush1.bf16.msra.mxu0 0
  %4048 = vmatprep.subr.bf16.mxu0 0
  %4049 = vmatpush1.bf16.msra.mxu0 0
  %4050 = vmatprep.subr.bf16.mxu0 0
  %4051 = vmatpush1.bf16.msra.mxu0 0
  %4052 = vmatprep.subr.bf16.mxu0 0
  %4053 = vmatpush1.bf16.msra.mxu0 0
  %4054 = vmatprep.subr.bf16.mxu0 0
  %4055 = vmatpush1.bf16.msra.mxu0 0
  %4056 = vmatprep.subr.bf16.mxu0 0
  %4057 = vmatpush1.bf16.msra.mxu0 0
  %4058 = vmatprep.subr.bf16.mxu0 0
  %4059 = vmatpush1.bf16.msra.mxu0 0
  %4060 = vmatprep.subr.bf16.mxu0 0
  %4061 = vmatpush1.bf16.msra.mxu0 0
  %4062 = vmatprep.subr.bf16.mxu0 0
  %4063 = vmatpush1.bf16.msra.mxu0 0
  %4064 = vmatprep.subr.bf16.mxu0 0
  %4065 = vmatpush1.bf16.msra.mxu0 0
  %4066 = vmatprep.subr.bf16.mxu0 0
  %4067 = vmatpush1.bf16.msra.mxu0 0
  %4068 = vmatprep.subr.bf16.mxu0 0
  %4069 = vmatpush1.bf16.msra.mxu0 0
  %4070 = vmatprep.mubr.bf16.mxu0 0
  %4071 = vmatmul.mubr.bf16.gmra.mrb[0].mxu0 %v4036
  %v4072 = vpop.f32.mrb[0].mxu0
  %v4073 = vadd.f32 %v4022, %v4072
  %v4074 = vpop.f32.mrb[0].mxu0
  %v4075 = vpop.f32.mrb[0].mxu0
  %v4076 = vpop.f32.mrb[0].mxu0
  %4077 = vdwg.mxu0
  %v4078 = vmax.f32 %v4073, 0.0
  %v4081 = vunpack.c.l.s4 1966171168
  %v4082 = vunpack.c.0.s8 %v4081
  %v4083 = vlaneseq
  %v4084 = vshrl.u32 %v4083, 7
  %v4085 = vsub.s32 %v4082, %v4084
  %v4086 = vrot.slane %v4078, %v4085
  %v4087 = vcombine.high %v4086, %v4086
  %v4089 = vunpack.c.l.s4 1966171168
  %v4090 = vunpack.c.0.s8 %v4089
  %v4091 = vlaneseq
  %v4092 = vshrl.u32 %v4091, 7
  %v4093 = vsub.s32 %v4090, %v4092
  %v4094 = vrot.slane %v4086, %v4093
  %v4096 = vunpack.c.l.s4 1966171168
  %v4097 = vunpack.c.0.s8 %v4096
  %v4098 = vlaneseq
  %v4099 = vshrl.u32 %v4098, 7
  %v4100 = vsub.s32 %v4097, %v4099
  %v4101 = vrot.slane %v4087, %v4100
  %v4102 = vlaneseq
  %v4103 = vshrl.u32 %v4102, 7
  %v4104 = vsub.s32 0, %v4103
  %v4105 = vrot.slane %v4094, %v4104
  %v4106 = vlaneseq
  %v4107 = vshrl.u32 %v4106, 7
  %v4108 = vsub.s32 0, %v4107
  %v4109 = vrot.slane %v4101, %v4108
  %v4112 = vadd.f32 %v3949, %v4105
  %v4113 = vadd.f32 %v3950, %v4105
  %v4114 = vadd.f32 %v3951, %v4105
  %v4115 = vadd.f32 %v3952, %v4105
  %v4116 = vadd.f32 %v3953, %v4105
  %v4117 = vadd.f32 %v3954, %v4105
  %v4118 = vadd.f32 %v3955, %v4105
  %v4119 = vadd.f32 %v3956, %v4105
  %v4120 = vadd.f32 %v3957, %v4105
  %v4121 = vadd.f32 %v3958, %v4105
  %v4122 = vadd.f32 %v3959, %v4105
  %v4123 = vadd.f32 %v3960, %v4105
  %v4124 = vadd.f32 %v3961, %v4105
  %v4125 = vadd.f32 %v3962, %v4105
  %v4126 = vadd.f32 %v3963, %v4105
  %v4127 = vadd.f32 %v3964, %v4105
  %v4128 = vadd.f32 %v3965, %v4105
  %v4129 = vadd.f32 %v3966, %v4105
  %v4130 = vadd.f32 %v3967, %v4105
  %v4131 = vadd.f32 %v3968, %v4105
  %v4132 = vadd.f32 %v3969, %v4105
  %v4133 = vadd.f32 %v3970, %v4105
  %v4134 = vadd.f32 %v3971, %v4105
  %v4135 = vadd.f32 %v3972, %v4105
  %v4136 = vadd.f32 %v3973, %v4105
  %v4137 = vadd.f32 %v3974, %v4105
  %v4138 = vadd.f32 %v3975, %v4105
  %v4139 = vadd.f32 %v3976, %v4105
  %v4140 = vadd.f32 %v3977, %v4105
  %v4141 = vadd.f32 %v3978, %v4105
  %v4142 = vadd.f32 %v3979, %v4105
  %v4143 = vadd.f32 %v3980, %v4105
  %v4144 = vadd.f32 %v3981, %v4109
  %v4145 = vadd.f32 %v3982, %v4109
  %v4146 = vadd.f32 %v3983, %v4109
  %v4147 = vadd.f32 %v3984, %v4109
  %v4148 = vadd.f32 %v3985, %v4109
  %v4149 = vadd.f32 %v3986, %v4109
  %v4150 = vadd.f32 %v3987, %v4109
  %v4151 = vadd.f32 %v3988, %v4109
  %v4152 = vadd.f32 %v3989, %v4109
  %v4153 = vadd.f32 %v3990, %v4109
  %v4154 = vadd.f32 %v3991, %v4109
  %v4155 = vadd.f32 %v3992, %v4109
  %v4156 = vadd.f32 %v3993, %v4109
  %v4157 = vadd.f32 %v3994, %v4109
  %v4158 = vadd.f32 %v3995, %v4109
  %v4159 = vadd.f32 %v3996, %v4109
  %v4160 = vadd.f32 %v3997, %v4109
  %v4161 = vadd.f32 %v3998, %v4109
  %v4162 = vadd.f32 %v3999, %v4109
  %v4163 = vadd.f32 %v4000, %v4109
  %v4164 = vadd.f32 %v4001, %v4109
  %v4165 = vadd.f32 %v4002, %v4109
  %v4166 = vadd.f32 %v4003, %v4109
  %v4167 = vadd.f32 %v4004, %v4109
  %v4168 = vadd.f32 %v4005, %v4109
  %v4169 = vadd.f32 %v4006, %v4109
  %v4170 = vadd.f32 %v4007, %v4109
  %v4171 = vadd.f32 %v4008, %v4109
  %v4172 = vadd.f32 %v4009, %v4109
  %v4173 = vadd.f32 %v4010, %v4109
  %v4174 = vadd.f32 %v4011, %v4109
  %v4175 = vadd.f32 %v4012, %v4109
  %4176 = vst.msk [vmem:[#allocation3] sm:$0xff] %vm2448, 0.0
  %4177 = vst.msk [vmem:[#allocation3 + $0x8] sm:$0xff] %vm2448, 0.0
  %vm4178 = vcmask 58368
  %4179 = vst.msk [vmem:[#allocation3 + $0x10] sm:$0x3] %vm4178, 0.0
  %4180 = vst.msk [vmem:[#allocation3 + $0x18] sm:$0xff] %vm2448, 0.0
  %4181 = vst.msk [vmem:[#allocation3 + $0x20] sm:$0xff] %vm2448, 0.0
  %4182 = vst.msk [vmem:[#allocation3 + $0x28] sm:$0x3] %vm4178, 0.0
  %4183 = vst.msk [vmem:[#allocation3 + $0x30] sm:$0xff] %vm2448, 0.0
  %4184 = vst.msk [vmem:[#allocation3 + $0x38] sm:$0xff] %vm2448, 0.0
  %4185 = vst.msk [vmem:[#allocation3 + $0x40] sm:$0x3] %vm4178, 0.0
  %4186 = vst.msk [vmem:[#allocation3 + $0x48] sm:$0xff] %vm2448, 0.0
  %4187 = vst.msk [vmem:[#allocation3 + $0x50] sm:$0xff] %vm2448, 0.0
  %4188 = vst.msk [vmem:[#allocation3 + $0x58] sm:$0x3] %vm4178, 0.0
  %4189 = vst.msk [vmem:[#allocation3 + $0x60] sm:$0xff] %vm2448, 0.0
  %4190 = vst.msk [vmem:[#allocation3 + $0x68] sm:$0xff] %vm2448, 0.0
  %4191 = vst.msk [vmem:[#allocation3 + $0x70] sm:$0x3] %vm4178, 0.0
  %4192 = vst.msk [vmem:[#allocation3 + $0x78] sm:$0xff] %vm2448, 0.0
  %4193 = vst.msk [vmem:[#allocation3 + $0x80] sm:$0xff] %vm2448, 0.0
  %4194 = vst.msk [vmem:[#allocation3 + $0x88] sm:$0x3] %vm4178, 0.0
  %4195 = vst.msk [vmem:[#allocation3 + $0x90] sm:$0xff] %vm2448, 0.0
  %4196 = vst.msk [vmem:[#allocation3 + $0x98] sm:$0xff] %vm2448, 0.0
  %4197 = vst.msk [vmem:[#allocation3 + $0xa0] sm:$0x3] %vm4178, 0.0
  %4198 = vst.msk [vmem:[#allocation3 + $0xa8] sm:$0xff] %vm2448, 0.0
  %4199 = vst.msk [vmem:[#allocation3 + $0xb0] sm:$0xff] %vm2448, 0.0
  %4200 = vst.msk [vmem:[#allocation3 + $0xb8] sm:$0x3] %vm4178, 0.0
  %4201 = vst.msk [vmem:[#allocation3 + $0xc0] sm:$0xff] %vm2448, 0.0
  %4202 = vst.msk [vmem:[#allocation3 + $0xc8] sm:$0xff] %vm2448, 0.0
  %4203 = vst.msk [vmem:[#allocation3 + $0xd0] sm:$0x3] %vm4178, 0.0
  %4204 = vst.msk [vmem:[#allocation3 + $0xd8] sm:$0xff] %vm2448, 0.0
  %4205 = vst.msk [vmem:[#allocation3 + $0xe0] sm:$0xff] %vm2448, 0.0
  %4206 = vst.msk [vmem:[#allocation3 + $0xe8] sm:$0x3] %vm4178, 0.0
  %4207 = vst.msk [vmem:[#allocation3 + $0xf0] sm:$0xff] %vm2448, 0.0
  %4208 = vst.msk [vmem:[#allocation3 + $0xf8] sm:$0xff] %vm2448, 0.0
  %4209 = vst.msk [vmem:[#allocation3 + $0x100] sm:$0x3] %vm4178, 0.0
  %4210 = vst.msk [vmem:[#allocation3 + $0x108] sm:$0xff] %vm2448, 0.0
  %4211 = vst.msk [vmem:[#allocation3 + $0x110] sm:$0xff] %vm2448, 0.0
  %4212 = vst.msk [vmem:[#allocation3 + $0x118] sm:$0x3] %vm4178, 0.0
  %4213 = vst.msk [vmem:[#allocation3 + $0x120] sm:$0xff] %vm2448, 0.0
  %4214 = vst.msk [vmem:[#allocation3 + $0x128] sm:$0xff] %vm2448, 0.0
  %4215 = vst.msk [vmem:[#allocation3 + $0x130] sm:$0x3] %vm4178, 0.0
  %4216 = vst.msk [vmem:[#allocation3 + $0x138] sm:$0xff] %vm2448, 0.0
  %4217 = vst.msk [vmem:[#allocation3 + $0x140] sm:$0xff] %vm2448, 0.0
  %4218 = vst.msk [vmem:[#allocation3 + $0x148] sm:$0x3] %vm4178, 0.0
  %4219 = vst.msk [vmem:[#allocation3 + $0x150] sm:$0xff] %vm2448, 0.0
  %4220 = vst.msk [vmem:[#allocation3 + $0x158] sm:$0xff] %vm2448, 0.0
  %4221 = vst.msk [vmem:[#allocation3 + $0x160] sm:$0x3] %vm4178, 0.0
  %4222 = vst.msk [vmem:[#allocation3 + $0x168] sm:$0xff] %vm2448, 0.0
  %4223 = vst.msk [vmem:[#allocation3 + $0x170] sm:$0xff] %vm2448, 0.0
  %4224 = vst.msk [vmem:[#allocation3 + $0x178] sm:$0x3] %vm4178, 0.0
  %4225 = vst.msk [vmem:[#allocation3 + $0x180] sm:$0xff] %vm2448, 0.0
  %4226 = vst.msk [vmem:[#allocation3 + $0x188] sm:$0xff] %vm2448, 0.0
  %4227 = vst.msk [vmem:[#allocation3 + $0x190] sm:$0x3] %vm4178, 0.0
  %4228 = vst.msk [vmem:[#allocation3 + $0x198] sm:$0xff] %vm2448, 0.0
  %4229 = vst.msk [vmem:[#allocation3 + $0x1a0] sm:$0xff] %vm2448, 0.0
  %4230 = vst.msk [vmem:[#allocation3 + $0x1a8] sm:$0x3] %vm4178, 0.0
  %4231 = vst.msk [vmem:[#allocation3 + $0x1b0] sm:$0xff] %vm2448, 0.0
  %4232 = vst.msk [vmem:[#allocation3 + $0x1b8] sm:$0xff] %vm2448, 0.0
  %4233 = vst.msk [vmem:[#allocation3 + $0x1c0] sm:$0x3] %vm4178, 0.0
  %4234 = vst.msk [vmem:[#allocation3 + $0x1c8] sm:$0xff] %vm2448, 0.0
  %4235 = vst.msk [vmem:[#allocation3 + $0x1d0] sm:$0xff] %vm2448, 0.0
  %4236 = vst.msk [vmem:[#allocation3 + $0x1d8] sm:$0x3] %vm4178, 0.0
  %4237 = vst.msk [vmem:[#allocation3 + $0x1e0] sm:$0xff] %vm2448, 0.0
  %4238 = vst.msk [vmem:[#allocation3 + $0x1e8] sm:$0xff] %vm2448, 0.0
  %4239 = vst.msk [vmem:[#allocation3 + $0x1f0] sm:$0x3] %vm4178, 0.0
  %4240 = vst.msk [vmem:[#allocation3 + $0x1f8] sm:$0xff] %vm2448, 0.0
  %4241 = vst.msk [vmem:[#allocation3 + $0x200] sm:$0xff] %vm2448, 0.0
  %4242 = vst.msk [vmem:[#allocation3 + $0x208] sm:$0x3] %vm4178, 0.0
  %4243 = vst.msk [vmem:[#allocation3 + $0x210] sm:$0xff] %vm2448, 0.0
  %4244 = vst.msk [vmem:[#allocation3 + $0x218] sm:$0xff] %vm2448, 0.0
  %4245 = vst.msk [vmem:[#allocation3 + $0x220] sm:$0x3] %vm4178, 0.0
  %4246 = vst.msk [vmem:[#allocation3 + $0x228] sm:$0xff] %vm2448, 0.0
  %4247 = vst.msk [vmem:[#allocation3 + $0x230] sm:$0xff] %vm2448, 0.0
  %4248 = vst.msk [vmem:[#allocation3 + $0x238] sm:$0x3] %vm4178, 0.0
  %4249 = vst.msk [vmem:[#allocation3 + $0x240] sm:$0xff] %vm2448, 0.0
  %4250 = vst.msk [vmem:[#allocation3 + $0x248] sm:$0xff] %vm2448, 0.0
  %4251 = vst.msk [vmem:[#allocation3 + $0x250] sm:$0x3] %vm4178, 0.0
  %4252 = vst.msk [vmem:[#allocation3 + $0x258] sm:$0xff] %vm2448, 0.0
  %4253 = vst.msk [vmem:[#allocation3 + $0x260] sm:$0xff] %vm2448, 0.0
  %4254 = vst.msk [vmem:[#allocation3 + $0x268] sm:$0x3] %vm4178, 0.0
  %4255 = vst.msk [vmem:[#allocation3 + $0x270] sm:$0xff] %vm2448, 0.0
  %4256 = vst.msk [vmem:[#allocation3 + $0x278] sm:$0xff] %vm2448, 0.0
  %4257 = vst.msk [vmem:[#allocation3 + $0x280] sm:$0x3] %vm4178, 0.0
  %4258 = vst.msk [vmem:[#allocation3 + $0x288] sm:$0xff] %vm2448, 0.0
  %4259 = vst.msk [vmem:[#allocation3 + $0x290] sm:$0xff] %vm2448, 0.0
  %4260 = vst.msk [vmem:[#allocation3 + $0x298] sm:$0x3] %vm4178, 0.0
  %4261 = vst.msk [vmem:[#allocation3 + $0x2a0] sm:$0xff] %vm2448, 0.0
  %4262 = vst.msk [vmem:[#allocation3 + $0x2a8] sm:$0xff] %vm2448, 0.0
  %4263 = vst.msk [vmem:[#allocation3 + $0x2b0] sm:$0x3] %vm4178, 0.0
  %4264 = vst.msk [vmem:[#allocation3 + $0x2b8] sm:$0xff] %vm2448, 0.0
  %4265 = vst.msk [vmem:[#allocation3 + $0x2c0] sm:$0xff] %vm2448, 0.0
  %4266 = vst.msk [vmem:[#allocation3 + $0x2c8] sm:$0x3] %vm4178, 0.0
  %4267 = vst.msk [vmem:[#allocation3 + $0x2d0] sm:$0xff] %vm2448, 0.0
  %4268 = vst.msk [vmem:[#allocation3 + $0x2d8] sm:$0xff] %vm2448, 0.0
  %4269 = vst.msk [vmem:[#allocation3 + $0x2e0] sm:$0x3] %vm4178, 0.0
  %4270 = vst.msk [vmem:[#allocation3 + $0x2e8] sm:$0xff] %vm2448, 0.0
  %4271 = vst.msk [vmem:[#allocation3 + $0x2f0] sm:$0xff] %vm2448, 0.0
  %4272 = vst.msk [vmem:[#allocation3 + $0x2f8] sm:$0x3] %vm4178, 0.0
  %4273 = vst.msk [vmem:[#allocation3 + $0x300] sm:$0xff] %vm2448, 0.0
  %4274 = vst.msk [vmem:[#allocation3 + $0x308] sm:$0xff] %vm2448, 0.0
  %4275 = vst.msk [vmem:[#allocation3 + $0x310] sm:$0x3] %vm4178, 0.0
  %4276 = vst.msk [vmem:[#allocation3 + $0x318] sm:$0xff] %vm2448, 0.0
  %4277 = vst.msk [vmem:[#allocation3 + $0x320] sm:$0xff] %vm2448, 0.0
  %4278 = vst.msk [vmem:[#allocation3 + $0x328] sm:$0x3] %vm4178, 0.0
  %4279 = vst.msk [vmem:[#allocation3 + $0x330] sm:$0xff] %vm2448, 0.0
  %4280 = vst.msk [vmem:[#allocation3 + $0x338] sm:$0xff] %vm2448, 0.0
  %4281 = vst.msk [vmem:[#allocation3 + $0x340] sm:$0x3] %vm4178, 0.0
  %4282 = vst.msk [vmem:[#allocation3 + $0x348] sm:$0xff] %vm2448, 0.0
  %4283 = vst.msk [vmem:[#allocation3 + $0x350] sm:$0xff] %vm2448, 0.0
  %4284 = vst.msk [vmem:[#allocation3 + $0x358] sm:$0x3] %vm4178, 0.0
  %s4285 = scalar_lea.vmem [#allocation3], 24
  %4286 = vst.msk [vmem:[%s4285 + $0x1] sm:$0xff] %vm2448, %v4112
  %4287 = vst.msk [vmem:[%s4285 + $0x9] sm:$0xff] %vm2448, %v4113
  %4288 = vst.msk [vmem:[%s4285 + $0x19] sm:$0xff] %vm2448, %v4114
  %4289 = vst.msk [vmem:[%s4285 + $0x21] sm:$0xff] %vm2448, %v4115
  %4290 = vst.msk [vmem:[%s4285 + $0x31] sm:$0xff] %vm2448, %v4116
  %4291 = vst.msk [vmem:[%s4285 + $0x39] sm:$0xff] %vm2448, %v4117
  %4292 = vst.msk [vmem:[%s4285 + $0x49] sm:$0xff] %vm2448, %v4118
  %4293 = vst.msk [vmem:[%s4285 + $0x51] sm:$0xff] %vm2448, %v4119
  %4294 = vst.msk [vmem:[%s4285 + $0x61] sm:$0xff] %vm2448, %v4120
  %4295 = vst.msk [vmem:[%s4285 + $0x69] sm:$0xff] %vm2448, %v4121
  %4296 = vst.msk [vmem:[%s4285 + $0x79] sm:$0xff] %vm2448, %v4122
  %4297 = vst.msk [vmem:[%s4285 + $0x81] sm:$0xff] %vm2448, %v4123
  %4298 = vst.msk [vmem:[%s4285 + $0x91] sm:$0xff] %vm2448, %v4124
  %4299 = vst.msk [vmem:[%s4285 + $0x99] sm:$0xff] %vm2448, %v4125
  %4300 = vst.msk [vmem:[%s4285 + $0xa9] sm:$0xff] %vm2448, %v4126
  %4301 = vst.msk [vmem:[%s4285 + $0xb1] sm:$0xff] %vm2448, %v4127
  %4302 = vst.msk [vmem:[%s4285 + $0xc1] sm:$0xff] %vm2448, %v4128
  %4303 = vst.msk [vmem:[%s4285 + $0xc9] sm:$0xff] %vm2448, %v4129
  %4304 = vst.msk [vmem:[%s4285 + $0xd9] sm:$0xff] %vm2448, %v4130
  %4305 = vst.msk [vmem:[%s4285 + $0xe1] sm:$0xff] %vm2448, %v4131
  %4306 = vst.msk [vmem:[%s4285 + $0xf1] sm:$0xff] %vm2448, %v4132
  %4307 = vst.msk [vmem:[%s4285 + $0xf9] sm:$0xff] %vm2448, %v4133
  %4308 = vst.msk [vmem:[%s4285 + $0x109] sm:$0xff] %vm2448, %v4134
  %4309 = vst.msk [vmem:[%s4285 + $0x111] sm:$0xff] %vm2448, %v4135
  %4310 = vst.msk [vmem:[%s4285 + $0x121] sm:$0xff] %vm2448, %v4136
  %4311 = vst.msk [vmem:[%s4285 + $0x129] sm:$0xff] %vm2448, %v4137
  %4312 = vst.msk [vmem:[%s4285 + $0x139] sm:$0xff] %vm2448, %v4138
  %4313 = vst.msk [vmem:[%s4285 + $0x141] sm:$0xff] %vm2448, %v4139
  %4314 = vst.msk [vmem:[%s4285 + $0x151] sm:$0xff] %vm2448, %v4140
  %4315 = vst.msk [vmem:[%s4285 + $0x159] sm:$0xff] %vm2448, %v4141
  %4316 = vst.msk [vmem:[%s4285 + $0x169] sm:$0xff] %vm2448, %v4142
  %4317 = vst.msk [vmem:[%s4285 + $0x171] sm:$0xff] %vm2448, %v4143
  %4318 = vst.msk [vmem:[%s4285 + $0x1b1] sm:$0xff] %vm2448, %v4144
  %4319 = vst.msk [vmem:[%s4285 + $0x1b9] sm:$0xff] %vm2448, %v4145
  %4320 = vst.msk [vmem:[%s4285 + $0x1c9] sm:$0xff] %vm2448, %v4146
  %4321 = vst.msk [vmem:[%s4285 + $0x1d1] sm:$0xff] %vm2448, %v4147
  %4322 = vst.msk [vmem:[%s4285 + $0x1e1] sm:$0xff] %vm2448, %v4148
  %4323 = vst.msk [vmem:[%s4285 + $0x1e9] sm:$0xff] %vm2448, %v4149
  %4324 = vst.msk [vmem:[%s4285 + $0x1f9] sm:$0xff] %vm2448, %v4150
  %4325 = vst.msk [vmem:[%s4285 + $0x201] sm:$0xff] %vm2448, %v4151
  %4326 = vst.msk [vmem:[%s4285 + $0x211] sm:$0xff] %vm2448, %v4152
  %4327 = vst.msk [vmem:[%s4285 + $0x219] sm:$0xff] %vm2448, %v4153
  %4328 = vst.msk [vmem:[%s4285 + $0x229] sm:$0xff] %vm2448, %v4154
  %4329 = vst.msk [vmem:[%s4285 + $0x231] sm:$0xff] %vm2448, %v4155
  %4330 = vst.msk [vmem:[%s4285 + $0x241] sm:$0xff] %vm2448, %v4156
  %4331 = vst.msk [vmem:[%s4285 + $0x249] sm:$0xff] %vm2448, %v4157
  %4332 = vst.msk [vmem:[%s4285 + $0x259] sm:$0xff] %vm2448, %v4158
  %4333 = vst.msk [vmem:[%s4285 + $0x261] sm:$0xff] %vm2448, %v4159
  %4334 = vst.msk [vmem:[%s4285 + $0x271] sm:$0xff] %vm2448, %v4160
  %4335 = vst.msk [vmem:[%s4285 + $0x279] sm:$0xff] %vm2448, %v4161
  %4336 = vst.msk [vmem:[%s4285 + $0x289] sm:$0xff] %vm2448, %v4162
  %4337 = vst.msk [vmem:[%s4285 + $0x291] sm:$0xff] %vm2448, %v4163
  %4338 = vst.msk [vmem:[%s4285 + $0x2a1] sm:$0xff] %vm2448, %v4164
  %4339 = vst.msk [vmem:[%s4285 + $0x2a9] sm:$0xff] %vm2448, %v4165
  %4340 = vst.msk [vmem:[%s4285 + $0x2b9] sm:$0xff] %vm2448, %v4166
  %4341 = vst.msk [vmem:[%s4285 + $0x2c1] sm:$0xff] %vm2448, %v4167
  %4342 = vst.msk [vmem:[%s4285 + $0x2d1] sm:$0xff] %vm2448, %v4168
  %4343 = vst.msk [vmem:[%s4285 + $0x2d9] sm:$0xff] %vm2448, %v4169
  %4344 = vst.msk [vmem:[%s4285 + $0x2e9] sm:$0xff] %vm2448, %v4170
  %4345 = vst.msk [vmem:[%s4285 + $0x2f1] sm:$0xff] %vm2448, %v4171
  %4346 = vst.msk [vmem:[%s4285 + $0x301] sm:$0xff] %vm2448, %v4172
  %4347 = vst.msk [vmem:[%s4285 + $0x309] sm:$0xff] %vm2448, %v4173
  %4348 = vst.msk [vmem:[%s4285 + $0x319] sm:$0xff] %vm2448, %v4174
  %4349 = vst.msk [vmem:[%s4285 + $0x321] sm:$0xff] %vm2448, %v4175
  %v4350 = vld [vmem:[#allocation3] sm:$0xff]
  %v4351 = vld [vmem:[#allocation3 + $0x8] sm:$0xff]
  %v4352 = vld [vmem:[#allocation3 + $0x10] sm:$0x3]
  %v4353 = vld [vmem:[#allocation3 + $0x18] sm:$0xff]
  %v4354 = vld [vmem:[#allocation3 + $0x20] sm:$0xff]
  %v4355 = vld [vmem:[#allocation3 + $0x28] sm:$0x3]
  %v4356 = vld [vmem:[#allocation3 + $0x30] sm:$0xff]
  %v4357 = vld [vmem:[#allocation3 + $0x38] sm:$0xff]
  %v4358 = vld [vmem:[#allocation3 + $0x40] sm:$0x3]
  %v4359 = vld [vmem:[#allocation3 + $0x48] sm:$0xff]
  %v4360 = vld [vmem:[#allocation3 + $0x50] sm:$0xff]
  %v4361 = vld [vmem:[#allocation3 + $0x58] sm:$0x3]
  %v4362 = vld [vmem:[#allocation3 + $0x60] sm:$0xff]
  %v4363 = vld [vmem:[#allocation3 + $0x68] sm:$0xff]
  %v4364 = vld [vmem:[#allocation3 + $0x70] sm:$0x3]
  %v4365 = vld [vmem:[#allocation3 + $0x78] sm:$0xff]
  %v4366 = vld [vmem:[#allocation3 + $0x80] sm:$0xff]
  %v4367 = vld [vmem:[#allocation3 + $0x88] sm:$0x3]
  %v4368 = vld [vmem:[#allocation3 + $0x90] sm:$0xff]
  %v4369 = vld [vmem:[#allocation3 + $0x98] sm:$0xff]
  %v4370 = vld [vmem:[#allocation3 + $0xa0] sm:$0x3]
  %v4371 = vld [vmem:[#allocation3 + $0xa8] sm:$0xff]
  %v4372 = vld [vmem:[#allocation3 + $0xb0] sm:$0xff]
  %v4373 = vld [vmem:[#allocation3 + $0xb8] sm:$0x3]
  %v4374 = vld [vmem:[#allocation3 + $0xc0] sm:$0xff]
  %v4375 = vld [vmem:[#allocation3 + $0xc8] sm:$0xff]
  %v4376 = vld [vmem:[#allocation3 + $0xd0] sm:$0x3]
  %v4377 = vld [vmem:[#allocation3 + $0xd8] sm:$0xff]
  %v4378 = vld [vmem:[#allocation3 + $0xe0] sm:$0xff]
  %v4379 = vld [vmem:[#allocation3 + $0xe8] sm:$0x3]
  %v4380 = vld [vmem:[#allocation3 + $0xf0] sm:$0xff]
  %v4381 = vld [vmem:[#allocation3 + $0xf8] sm:$0xff]
  %v4382 = vld [vmem:[#allocation3 + $0x100] sm:$0x3]
  %v4383 = vld [vmem:[#allocation3 + $0x108] sm:$0xff]
  %v4384 = vld [vmem:[#allocation3 + $0x110] sm:$0xff]
  %v4385 = vld [vmem:[#allocation3 + $0x118] sm:$0x3]
  %v4386 = vld [vmem:[#allocation3 + $0x120] sm:$0xff]
  %v4387 = vld [vmem:[#allocation3 + $0x128] sm:$0xff]
  %v4388 = vld [vmem:[#allocation3 + $0x130] sm:$0x3]
  %v4389 = vld [vmem:[#allocation3 + $0x138] sm:$0xff]
  %v4390 = vld [vmem:[#allocation3 + $0x140] sm:$0xff]
  %v4391 = vld [vmem:[#allocation3 + $0x148] sm:$0x3]
  %v4392 = vld [vmem:[#allocation3 + $0x150] sm:$0xff]
  %v4393 = vld [vmem:[#allocation3 + $0x158] sm:$0xff]
  %v4394 = vld [vmem:[#allocation3 + $0x160] sm:$0x3]
  %v4395 = vld [vmem:[#allocation3 + $0x168] sm:$0xff]
  %v4396 = vld [vmem:[#allocation3 + $0x170] sm:$0xff]
  %v4397 = vld [vmem:[#allocation3 + $0x178] sm:$0x3]
  %v4398 = vld [vmem:[#allocation3 + $0x180] sm:$0xff]
  %v4399 = vld [vmem:[#allocation3 + $0x188] sm:$0xff]
  %v4400 = vld [vmem:[#allocation3 + $0x190] sm:$0x3]
  %v4401 = vld [vmem:[#allocation3 + $0x198] sm:$0xff]
  %v4402 = vld [vmem:[#allocation3 + $0x1a0] sm:$0xff]
  %v4403 = vld [vmem:[#allocation3 + $0x1a8] sm:$0x3]
  %v4404 = vld [vmem:[#allocation3 + $0x1b0] sm:$0xff]
  %v4405 = vld [vmem:[#allocation3 + $0x1b8] sm:$0xff]
  %v4406 = vld [vmem:[#allocation3 + $0x1c0] sm:$0x3]
  %v4407 = vld [vmem:[#allocation3 + $0x1c8] sm:$0xff]
  %v4408 = vld [vmem:[#allocation3 + $0x1d0] sm:$0xff]
  %v4409 = vld [vmem:[#allocation3 + $0x1d8] sm:$0x3]
  %v4410 = vld [vmem:[#allocation3 + $0x1e0] sm:$0xff]
  %v4411 = vld [vmem:[#allocation3 + $0x1e8] sm:$0xff]
  %v4412 = vld [vmem:[#allocation3 + $0x1f0] sm:$0x3]
  %v4413 = vld [vmem:[#allocation3 + $0x1f8] sm:$0xff]
  %v4414 = vld [vmem:[#allocation3 + $0x200] sm:$0xff]
  %v4415 = vld [vmem:[#allocation3 + $0x208] sm:$0x3]
  %v4416 = vld [vmem:[#allocation3 + $0x210] sm:$0xff]
  %v4417 = vld [vmem:[#allocation3 + $0x218] sm:$0xff]
  %v4418 = vld [vmem:[#allocation3 + $0x220] sm:$0x3]
  %v4419 = vld [vmem:[#allocation3 + $0x228] sm:$0xff]
  %v4420 = vld [vmem:[#allocation3 + $0x230] sm:$0xff]
  %v4421 = vld [vmem:[#allocation3 + $0x238] sm:$0x3]
  %v4422 = vld [vmem:[#allocation3 + $0x240] sm:$0xff]
  %v4423 = vld [vmem:[#allocation3 + $0x248] sm:$0xff]
  %v4424 = vld [vmem:[#allocation3 + $0x250] sm:$0x3]
  %v4425 = vld [vmem:[#allocation3 + $0x258] sm:$0xff]
  %v4426 = vld [vmem:[#allocation3 + $0x260] sm:$0xff]
  %v4427 = vld [vmem:[#allocation3 + $0x268] sm:$0x3]
  %v4428 = vld [vmem:[#allocation3 + $0x270] sm:$0xff]
  %v4429 = vld [vmem:[#allocation3 + $0x278] sm:$0xff]
  %v4430 = vld [vmem:[#allocation3 + $0x280] sm:$0x3]
  %v4431 = vld [vmem:[#allocation3 + $0x288] sm:$0xff]
  %v4432 = vld [vmem:[#allocation3 + $0x290] sm:$0xff]
  %v4433 = vld [vmem:[#allocation3 + $0x298] sm:$0x3]
  %v4434 = vld [vmem:[#allocation3 + $0x2a0] sm:$0xff]
  %v4435 = vld [vmem:[#allocation3 + $0x2a8] sm:$0xff]
  %v4436 = vld [vmem:[#allocation3 + $0x2b0] sm:$0x3]
  %v4437 = vld [vmem:[#allocation3 + $0x2b8] sm:$0xff]
  %v4438 = vld [vmem:[#allocation3 + $0x2c0] sm:$0xff]
  %v4439 = vld [vmem:[#allocation3 + $0x2c8] sm:$0x3]
  %v4440 = vld [vmem:[#allocation3 + $0x2d0] sm:$0xff]
  %v4441 = vld [vmem:[#allocation3 + $0x2d8] sm:$0xff]
  %v4442 = vld [vmem:[#allocation3 + $0x2e0] sm:$0x3]
  %v4443 = vld [vmem:[#allocation3 + $0x2e8] sm:$0xff]
  %v4444 = vld [vmem:[#allocation3 + $0x2f0] sm:$0xff]
  %v4445 = vld [vmem:[#allocation3 + $0x2f8] sm:$0x3]
  %v4446 = vld [vmem:[#allocation3 + $0x300] sm:$0xff]
  %v4447 = vld [vmem:[#allocation3 + $0x308] sm:$0xff]
  %v4448 = vld [vmem:[#allocation3 + $0x310] sm:$0x3]
  %v4449 = vld [vmem:[#allocation3 + $0x318] sm:$0xff]
  %v4450 = vld [vmem:[#allocation3 + $0x320] sm:$0xff]
  %v4451 = vld [vmem:[#allocation3 + $0x328] sm:$0x3]
  %v4452 = vld [vmem:[#allocation3 + $0x330] sm:$0xff]
  %v4453 = vld [vmem:[#allocation3 + $0x338] sm:$0xff]
  %v4454 = vld [vmem:[#allocation3 + $0x340] sm:$0x3]
  %v4455 = vld [vmem:[#allocation3 + $0x348] sm:$0xff]
  %v4456 = vld [vmem:[#allocation3 + $0x350] sm:$0xff]
  %v4457 = vld [vmem:[#allocation3 + $0x358] sm:$0x3]
  %v4554 = vrot.slane %v4350, 1
  %v4555 = vrot.slane %v4351, 1
  %v4556 = vsel %vm474, %v4554, %v4555
  %v4557 = vrot.slane %v4352, 1
  %v4558 = vsel %vm474, %v4555, %v4557
  %v4559 = vrot.slane %v4353, 1
  %v4560 = vrot.slane %v4354, 1
  %v4561 = vsel %vm474, %v4559, %v4560
  %v4562 = vrot.slane %v4355, 1
  %v4563 = vsel %vm474, %v4560, %v4562
  %v4564 = vrot.slane %v4356, 1
  %v4565 = vrot.slane %v4357, 1
  %v4566 = vsel %vm474, %v4564, %v4565
  %v4567 = vrot.slane %v4358, 1
  %v4568 = vsel %vm474, %v4565, %v4567
  %v4569 = vrot.slane %v4359, 1
  %v4570 = vrot.slane %v4360, 1
  %v4571 = vsel %vm474, %v4569, %v4570
  %v4572 = vrot.slane %v4361, 1
  %v4573 = vsel %vm474, %v4570, %v4572
  %v4574 = vrot.slane %v4362, 1
  %v4575 = vrot.slane %v4363, 1
  %v4576 = vsel %vm474, %v4574, %v4575
  %v4577 = vrot.slane %v4364, 1
  %v4578 = vsel %vm474, %v4575, %v4577
  %v4579 = vrot.slane %v4365, 1
  %v4580 = vrot.slane %v4366, 1
  %v4581 = vsel %vm474, %v4579, %v4580
  %v4582 = vrot.slane %v4367, 1
  %v4583 = vsel %vm474, %v4580, %v4582
  %v4584 = vrot.slane %v4368, 1
  %v4585 = vrot.slane %v4369, 1
  %v4586 = vsel %vm474, %v4584, %v4585
  %v4587 = vrot.slane %v4370, 1
  %v4588 = vsel %vm474, %v4585, %v4587
  %v4589 = vrot.slane %v4371, 1
  %v4590 = vrot.slane %v4372, 1
  %v4591 = vsel %vm474, %v4589, %v4590
  %v4592 = vrot.slane %v4373, 1
  %v4593 = vsel %vm474, %v4590, %v4592
  %v4594 = vrot.slane %v4374, 1
  %v4595 = vrot.slane %v4375, 1
  %v4596 = vsel %vm474, %v4594, %v4595
  %v4597 = vrot.slane %v4376, 1
  %v4598 = vsel %vm474, %v4595, %v4597
  %v4599 = vrot.slane %v4377, 1
  %v4600 = vrot.slane %v4378, 1
  %v4601 = vsel %vm474, %v4599, %v4600
  %v4602 = vrot.slane %v4379, 1
  %v4603 = vsel %vm474, %v4600, %v4602
  %v4604 = vrot.slane %v4380, 1
  %v4605 = vrot.slane %v4381, 1
  %v4606 = vsel %vm474, %v4604, %v4605
  %v4607 = vrot.slane %v4382, 1
  %v4608 = vsel %vm474, %v4605, %v4607
  %v4609 = vrot.slane %v4383, 1
  %v4610 = vrot.slane %v4384, 1
  %v4611 = vsel %vm474, %v4609, %v4610
  %v4612 = vrot.slane %v4385, 1
  %v4613 = vsel %vm474, %v4610, %v4612
  %v4614 = vrot.slane %v4386, 1
  %v4615 = vrot.slane %v4387, 1
  %v4616 = vsel %vm474, %v4614, %v4615
  %v4617 = vrot.slane %v4388, 1
  %v4618 = vsel %vm474, %v4615, %v4617
  %v4619 = vrot.slane %v4389, 1
  %v4620 = vrot.slane %v4390, 1
  %v4621 = vsel %vm474, %v4619, %v4620
  %v4622 = vrot.slane %v4391, 1
  %v4623 = vsel %vm474, %v4620, %v4622
  %v4624 = vrot.slane %v4392, 1
  %v4625 = vrot.slane %v4393, 1
  %v4626 = vsel %vm474, %v4624, %v4625
  %v4627 = vrot.slane %v4394, 1
  %v4628 = vsel %vm474, %v4625, %v4627
  %v4629 = vrot.slane %v4395, 1
  %v4630 = vrot.slane %v4396, 1
  %v4631 = vsel %vm474, %v4629, %v4630
  %v4632 = vrot.slane %v4397, 1
  %v4633 = vsel %vm474, %v4630, %v4632
  %v4634 = vrot.slane %v4404, 1
  %v4635 = vrot.slane %v4405, 1
  %v4636 = vsel %vm474, %v4634, %v4635
  %v4637 = vrot.slane %v4406, 1
  %v4638 = vsel %vm474, %v4635, %v4637
  %v4639 = vrot.slane %v4407, 1
  %v4640 = vrot.slane %v4408, 1
  %v4641 = vsel %vm474, %v4639, %v4640
  %v4642 = vrot.slane %v4409, 1
  %v4643 = vsel %vm474, %v4640, %v4642
  %v4644 = vrot.slane %v4410, 1
  %v4645 = vrot.slane %v4411, 1
  %v4646 = vsel %vm474, %v4644, %v4645
  %v4647 = vrot.slane %v4412, 1
  %v4648 = vsel %vm474, %v4645, %v4647
  %v4649 = vrot.slane %v4413, 1
  %v4650 = vrot.slane %v4414, 1
  %v4651 = vsel %vm474, %v4649, %v4650
  %v4652 = vrot.slane %v4415, 1
  %v4653 = vsel %vm474, %v4650, %v4652
  %v4654 = vrot.slane %v4416, 1
  %v4655 = vrot.slane %v4417, 1
  %v4656 = vsel %vm474, %v4654, %v4655
  %v4657 = vrot.slane %v4418, 1
  %v4658 = vsel %vm474, %v4655, %v4657
  %v4659 = vrot.slane %v4419, 1
  %v4660 = vrot.slane %v4420, 1
  %v4661 = vsel %vm474, %v4659, %v4660
  %v4662 = vrot.slane %v4421, 1
  %v4663 = vsel %vm474, %v4660, %v4662
  %v4664 = vrot.slane %v4422, 1
  %v4665 = vrot.slane %v4423, 1
  %v4666 = vsel %vm474, %v4664, %v4665
  %v4667 = vrot.slane %v4424, 1
  %v4668 = vsel %vm474, %v4665, %v4667
  %v4669 = vrot.slane %v4425, 1
  %v4670 = vrot.slane %v4426, 1
  %v4671 = vsel %vm474, %v4669, %v4670
  %v4672 = vrot.slane %v4427, 1
  %v4673 = vsel %vm474, %v4670, %v4672
  %v4674 = vrot.slane %v4428, 1
  %v4675 = vrot.slane %v4429, 1
  %v4676 = vsel %vm474, %v4674, %v4675
  %v4677 = vrot.slane %v4430, 1
  %v4678 = vsel %vm474, %v4675, %v4677
  %v4679 = vrot.slane %v4431, 1
  %v4680 = vrot.slane %v4432, 1
  %v4681 = vsel %vm474, %v4679, %v4680
  %v4682 = vrot.slane %v4433, 1
  %v4683 = vsel %vm474, %v4680, %v4682
  %v4684 = vrot.slane %v4434, 1
  %v4685 = vrot.slane %v4435, 1
  %v4686 = vsel %vm474, %v4684, %v4685
  %v4687 = vrot.slane %v4436, 1
  %v4688 = vsel %vm474, %v4685, %v4687
  %v4689 = vrot.slane %v4437, 1
  %v4690 = vrot.slane %v4438, 1
  %v4691 = vsel %vm474, %v4689, %v4690
  %v4692 = vrot.slane %v4439, 1
  %v4693 = vsel %vm474, %v4690, %v4692
  %v4694 = vrot.slane %v4440, 1
  %v4695 = vrot.slane %v4441, 1
  %v4696 = vsel %vm474, %v4694, %v4695
  %v4697 = vrot.slane %v4442, 1
  %v4698 = vsel %vm474, %v4695, %v4697
  %v4699 = vrot.slane %v4443, 1
  %v4700 = vrot.slane %v4444, 1
  %v4701 = vsel %vm474, %v4699, %v4700
  %v4702 = vrot.slane %v4445, 1
  %v4703 = vsel %vm474, %v4700, %v4702
  %v4704 = vrot.slane %v4446, 1
  %v4705 = vrot.slane %v4447, 1
  %v4706 = vsel %vm474, %v4704, %v4705
  %v4707 = vrot.slane %v4448, 1
  %v4708 = vsel %vm474, %v4705, %v4707
  %v4709 = vrot.slane %v4449, 1
  %v4710 = vrot.slane %v4450, 1
  %v4711 = vsel %vm474, %v4709, %v4710
  %v4712 = vrot.slane %v4451, 1
  %v4713 = vsel %vm474, %v4710, %v4712
  %v4714 = vrot.slane %v4350, 2
  %v4715 = vrot.slane %v4351, 2
  %v4716 = vsel %vm635, %v4714, %v4715
  %v4717 = vrot.slane %v4352, 2
  %v4718 = vsel %vm635, %v4715, %v4717
  %v4719 = vrot.slane %v4353, 2
  %v4720 = vrot.slane %v4354, 2
  %v4721 = vsel %vm635, %v4719, %v4720
  %v4722 = vrot.slane %v4355, 2
  %v4723 = vsel %vm635, %v4720, %v4722
  %v4724 = vrot.slane %v4356, 2
  %v4725 = vrot.slane %v4357, 2
  %v4726 = vsel %vm635, %v4724, %v4725
  %v4727 = vrot.slane %v4358, 2
  %v4728 = vsel %vm635, %v4725, %v4727
  %v4729 = vrot.slane %v4359, 2
  %v4730 = vrot.slane %v4360, 2
  %v4731 = vsel %vm635, %v4729, %v4730
  %v4732 = vrot.slane %v4361, 2
  %v4733 = vsel %vm635, %v4730, %v4732
  %v4734 = vrot.slane %v4362, 2
  %v4735 = vrot.slane %v4363, 2
  %v4736 = vsel %vm635, %v4734, %v4735
  %v4737 = vrot.slane %v4364, 2
  %v4738 = vsel %vm635, %v4735, %v4737
  %v4739 = vrot.slane %v4365, 2
  %v4740 = vrot.slane %v4366, 2
  %v4741 = vsel %vm635, %v4739, %v4740
  %v4742 = vrot.slane %v4367, 2
  %v4743 = vsel %vm635, %v4740, %v4742
  %v4744 = vrot.slane %v4368, 2
  %v4745 = vrot.slane %v4369, 2
  %v4746 = vsel %vm635, %v4744, %v4745
  %v4747 = vrot.slane %v4370, 2
  %v4748 = vsel %vm635, %v4745, %v4747
  %v4749 = vrot.slane %v4371, 2
  %v4750 = vrot.slane %v4372, 2
  %v4751 = vsel %vm635, %v4749, %v4750
  %v4752 = vrot.slane %v4373, 2
  %v4753 = vsel %vm635, %v4750, %v4752
  %v4754 = vrot.slane %v4374, 2
  %v4755 = vrot.slane %v4375, 2
  %v4756 = vsel %vm635, %v4754, %v4755
  %v4757 = vrot.slane %v4376, 2
  %v4758 = vsel %vm635, %v4755, %v4757
  %v4759 = vrot.slane %v4377, 2
  %v4760 = vrot.slane %v4378, 2
  %v4761 = vsel %vm635, %v4759, %v4760
  %v4762 = vrot.slane %v4379, 2
  %v4763 = vsel %vm635, %v4760, %v4762
  %v4764 = vrot.slane %v4380, 2
  %v4765 = vrot.slane %v4381, 2
  %v4766 = vsel %vm635, %v4764, %v4765
  %v4767 = vrot.slane %v4382, 2
  %v4768 = vsel %vm635, %v4765, %v4767
  %v4769 = vrot.slane %v4383, 2
  %v4770 = vrot.slane %v4384, 2
  %v4771 = vsel %vm635, %v4769, %v4770
  %v4772 = vrot.slane %v4385, 2
  %v4773 = vsel %vm635, %v4770, %v4772
  %v4774 = vrot.slane %v4386, 2
  %v4775 = vrot.slane %v4387, 2
  %v4776 = vsel %vm635, %v4774, %v4775
  %v4777 = vrot.slane %v4388, 2
  %v4778 = vsel %vm635, %v4775, %v4777
  %v4779 = vrot.slane %v4389, 2
  %v4780 = vrot.slane %v4390, 2
  %v4781 = vsel %vm635, %v4779, %v4780
  %v4782 = vrot.slane %v4391, 2
  %v4783 = vsel %vm635, %v4780, %v4782
  %v4784 = vrot.slane %v4392, 2
  %v4785 = vrot.slane %v4393, 2
  %v4786 = vsel %vm635, %v4784, %v4785
  %v4787 = vrot.slane %v4394, 2
  %v4788 = vsel %vm635, %v4785, %v4787
  %v4789 = vrot.slane %v4395, 2
  %v4790 = vrot.slane %v4396, 2
  %v4791 = vsel %vm635, %v4789, %v4790
  %v4792 = vrot.slane %v4397, 2
  %v4793 = vsel %vm635, %v4790, %v4792
  %v4794 = vrot.slane %v4404, 2
  %v4795 = vrot.slane %v4405, 2
  %v4796 = vsel %vm635, %v4794, %v4795
  %v4797 = vrot.slane %v4406, 2
  %v4798 = vsel %vm635, %v4795, %v4797
  %v4799 = vrot.slane %v4407, 2
  %v4800 = vrot.slane %v4408, 2
  %v4801 = vsel %vm635, %v4799, %v4800
  %v4802 = vrot.slane %v4409, 2
  %v4803 = vsel %vm635, %v4800, %v4802
  %v4804 = vrot.slane %v4410, 2
  %v4805 = vrot.slane %v4411, 2
  %v4806 = vsel %vm635, %v4804, %v4805
  %v4807 = vrot.slane %v4412, 2
  %v4808 = vsel %vm635, %v4805, %v4807
  %v4809 = vrot.slane %v4413, 2
  %v4810 = vrot.slane %v4414, 2
  %v4811 = vsel %vm635, %v4809, %v4810
  %v4812 = vrot.slane %v4415, 2
  %v4813 = vsel %vm635, %v4810, %v4812
  %v4814 = vrot.slane %v4416, 2
  %v4815 = vrot.slane %v4417, 2
  %v4816 = vsel %vm635, %v4814, %v4815
  %v4817 = vrot.slane %v4418, 2
  %v4818 = vsel %vm635, %v4815, %v4817
  %v4819 = vrot.slane %v4419, 2
  %v4820 = vrot.slane %v4420, 2
  %v4821 = vsel %vm635, %v4819, %v4820
  %v4822 = vrot.slane %v4421, 2
  %v4823 = vsel %vm635, %v4820, %v4822
  %v4824 = vrot.slane %v4422, 2
  %v4825 = vrot.slane %v4423, 2
  %v4826 = vsel %vm635, %v4824, %v4825
  %v4827 = vrot.slane %v4424, 2
  %v4828 = vsel %vm635, %v4825, %v4827
  %v4829 = vrot.slane %v4425, 2
  %v4830 = vrot.slane %v4426, 2
  %v4831 = vsel %vm635, %v4829, %v4830
  %v4832 = vrot.slane %v4427, 2
  %v4833 = vsel %vm635, %v4830, %v4832
  %v4834 = vrot.slane %v4428, 2
  %v4835 = vrot.slane %v4429, 2
  %v4836 = vsel %vm635, %v4834, %v4835
  %v4837 = vrot.slane %v4430, 2
  %v4838 = vsel %vm635, %v4835, %v4837
  %v4839 = vrot.slane %v4431, 2
  %v4840 = vrot.slane %v4432, 2
  %v4841 = vsel %vm635, %v4839, %v4840
  %v4842 = vrot.slane %v4433, 2
  %v4843 = vsel %vm635, %v4840, %v4842
  %v4844 = vrot.slane %v4434, 2
  %v4845 = vrot.slane %v4435, 2
  %v4846 = vsel %vm635, %v4844, %v4845
  %v4847 = vrot.slane %v4436, 2
  %v4848 = vsel %vm635, %v4845, %v4847
  %v4849 = vrot.slane %v4437, 2
  %v4850 = vrot.slane %v4438, 2
  %v4851 = vsel %vm635, %v4849, %v4850
  %v4852 = vrot.slane %v4439, 2
  %v4853 = vsel %vm635, %v4850, %v4852
  %v4854 = vrot.slane %v4440, 2
  %v4855 = vrot.slane %v4441, 2
  %v4856 = vsel %vm635, %v4854, %v4855
  %v4857 = vrot.slane %v4442, 2
  %v4858 = vsel %vm635, %v4855, %v4857
  %v4859 = vrot.slane %v4443, 2
  %v4860 = vrot.slane %v4444, 2
  %v4861 = vsel %vm635, %v4859, %v4860
  %v4862 = vrot.slane %v4445, 2
  %v4863 = vsel %vm635, %v4860, %v4862
  %v4864 = vrot.slane %v4446, 2
  %v4865 = vrot.slane %v4447, 2
  %v4866 = vsel %vm635, %v4864, %v4865
  %v4867 = vrot.slane %v4448, 2
  %v4868 = vsel %vm635, %v4865, %v4867
  %v4869 = vrot.slane %v4449, 2
  %v4870 = vrot.slane %v4450, 2
  %v4871 = vsel %vm635, %v4869, %v4870
  %v4872 = vrot.slane %v4451, 2
  %v4873 = vsel %vm635, %v4870, %v4872
  %v4880 = vrot.slane %v4398, 1
  %v4881 = vrot.slane %v4399, 1
  %v4882 = vsel %vm474, %v4880, %v4881
  %v4883 = vrot.slane %v4400, 1
  %v4884 = vsel %vm474, %v4881, %v4883
  %v4885 = vrot.slane %v4452, 1
  %v4886 = vrot.slane %v4453, 1
  %v4887 = vsel %vm474, %v4885, %v4886
  %v4888 = vrot.slane %v4454, 1
  %v4889 = vsel %vm474, %v4886, %v4888
  %v4890 = vrot.slane %v4398, 2
  %v4891 = vrot.slane %v4399, 2
  %v4892 = vsel %vm635, %v4890, %v4891
  %v4893 = vrot.slane %v4400, 2
  %v4894 = vsel %vm635, %v4891, %v4893
  %v4895 = vrot.slane %v4452, 2
  %v4896 = vrot.slane %v4453, 2
  %v4897 = vsel %vm635, %v4895, %v4896
  %v4898 = vrot.slane %v4454, 2
  %v4899 = vsel %vm635, %v4896, %v4898
  %v4906 = vrot.slane %v4401, 1
  %v4907 = vrot.slane %v4402, 1
  %v4908 = vsel %vm474, %v4906, %v4907
  %v4909 = vrot.slane %v4403, 1
  %v4910 = vsel %vm474, %v4907, %v4909
  %v4911 = vrot.slane %v4455, 1
  %v4912 = vrot.slane %v4456, 1
  %v4913 = vsel %vm474, %v4911, %v4912
  %v4914 = vrot.slane %v4457, 1
  %v4915 = vsel %vm474, %v4912, %v4914
  %v4916 = vrot.slane %v4401, 2
  %v4917 = vrot.slane %v4402, 2
  %v4918 = vsel %vm635, %v4916, %v4917
  %v4919 = vrot.slane %v4403, 2
  %v4920 = vsel %vm635, %v4917, %v4919
  %v4921 = vrot.slane %v4455, 2
  %v4922 = vrot.slane %v4456, 2
  %v4923 = vsel %vm635, %v4921, %v4922
  %v4924 = vrot.slane %v4457, 2
  %v4925 = vsel %vm635, %v4922, %v4924
  %4926 = vrot.lane.b32.xlu0 %v4556, 8
  %v4927 = vpop.permute.xlu0 %4926
  %4928 = vrot.lane.b32.xlu0 %v4558, 8
  %v4929 = vpop.permute.xlu0 %4928
  %4930 = vrot.lane.b32.xlu0 %v4561, 8
  %v4931 = vpop.permute.xlu0 %4930
  %4932 = vrot.lane.b32.xlu0 %v4563, 8
  %v4933 = vpop.permute.xlu0 %4932
  %4934 = vrot.lane.b32.xlu0 %v4566, 8
  %v4935 = vpop.permute.xlu0 %4934
  %4936 = vrot.lane.b32.xlu0 %v4568, 8
  %v4937 = vpop.permute.xlu0 %4936
  %4938 = vrot.lane.b32.xlu0 %v4571, 8
  %v4939 = vpop.permute.xlu0 %4938
  %4940 = vrot.lane.b32.xlu0 %v4573, 8
  %v4941 = vpop.permute.xlu0 %4940
  %4942 = vrot.lane.b32.xlu0 %v4576, 8
  %v4943 = vpop.permute.xlu0 %4942
  %4944 = vrot.lane.b32.xlu0 %v4578, 8
  %v4945 = vpop.permute.xlu0 %4944
  %4946 = vrot.lane.b32.xlu0 %v4581, 8
  %v4947 = vpop.permute.xlu0 %4946
  %4948 = vrot.lane.b32.xlu0 %v4583, 8
  %v4949 = vpop.permute.xlu0 %4948
  %4950 = vrot.lane.b32.xlu0 %v4586, 8
  %v4951 = vpop.permute.xlu0 %4950
  %4952 = vrot.lane.b32.xlu0 %v4588, 8
  %v4953 = vpop.permute.xlu0 %4952
  %4954 = vrot.lane.b32.xlu0 %v4591, 8
  %v4955 = vpop.permute.xlu0 %4954
  %4956 = vrot.lane.b32.xlu0 %v4593, 8
  %v4957 = vpop.permute.xlu0 %4956
  %4958 = vrot.lane.b32.xlu0 %v4596, 8
  %v4959 = vpop.permute.xlu0 %4958
  %4960 = vrot.lane.b32.xlu0 %v4598, 8
  %v4961 = vpop.permute.xlu0 %4960
  %4962 = vrot.lane.b32.xlu0 %v4601, 8
  %v4963 = vpop.permute.xlu0 %4962
  %4964 = vrot.lane.b32.xlu0 %v4603, 8
  %v4965 = vpop.permute.xlu0 %4964
  %4966 = vrot.lane.b32.xlu0 %v4606, 8
  %v4967 = vpop.permute.xlu0 %4966
  %4968 = vrot.lane.b32.xlu0 %v4608, 8
  %v4969 = vpop.permute.xlu0 %4968
  %4970 = vrot.lane.b32.xlu0 %v4611, 8
  %v4971 = vpop.permute.xlu0 %4970
  %4972 = vrot.lane.b32.xlu0 %v4613, 8
  %v4973 = vpop.permute.xlu0 %4972
  %4974 = vrot.lane.b32.xlu0 %v4616, 8
  %v4975 = vpop.permute.xlu0 %4974
  %4976 = vrot.lane.b32.xlu0 %v4618, 8
  %v4977 = vpop.permute.xlu0 %4976
  %4978 = vrot.lane.b32.xlu0 %v4621, 8
  %v4979 = vpop.permute.xlu0 %4978
  %4980 = vrot.lane.b32.xlu0 %v4623, 8
  %v4981 = vpop.permute.xlu0 %4980
  %4982 = vrot.lane.b32.xlu0 %v4626, 8
  %v4983 = vpop.permute.xlu0 %4982
  %4984 = vrot.lane.b32.xlu0 %v4628, 8
  %v4985 = vpop.permute.xlu0 %4984
  %4986 = vrot.lane.b32.xlu0 %v4631, 8
  %v4987 = vpop.permute.xlu0 %4986
  %4988 = vrot.lane.b32.xlu0 %v4633, 8
  %v4989 = vpop.permute.xlu0 %4988
  %4990 = vrot.lane.b32.xlu0 %v4636, 8
  %v4991 = vpop.permute.xlu0 %4990
  %4992 = vrot.lane.b32.xlu0 %v4638, 8
  %v4993 = vpop.permute.xlu0 %4992
  %4994 = vrot.lane.b32.xlu0 %v4641, 8
  %v4995 = vpop.permute.xlu0 %4994
  %4996 = vrot.lane.b32.xlu0 %v4643, 8
  %v4997 = vpop.permute.xlu0 %4996
  %4998 = vrot.lane.b32.xlu0 %v4646, 8
  %v4999 = vpop.permute.xlu0 %4998
  %5000 = vrot.lane.b32.xlu0 %v4648, 8
  %v5001 = vpop.permute.xlu0 %5000
  %5002 = vrot.lane.b32.xlu0 %v4651, 8
  %v5003 = vpop.permute.xlu0 %5002
  %5004 = vrot.lane.b32.xlu0 %v4653, 8
  %v5005 = vpop.permute.xlu0 %5004
  %5006 = vrot.lane.b32.xlu0 %v4656, 8
  %v5007 = vpop.permute.xlu0 %5006
  %5008 = vrot.lane.b32.xlu0 %v4658, 8
  %v5009 = vpop.permute.xlu0 %5008
  %5010 = vrot.lane.b32.xlu0 %v4661, 8
  %v5011 = vpop.permute.xlu0 %5010
  %5012 = vrot.lane.b32.xlu0 %v4663, 8
  %v5013 = vpop.permute.xlu0 %5012
  %5014 = vrot.lane.b32.xlu0 %v4666, 8
  %v5015 = vpop.permute.xlu0 %5014
  %5016 = vrot.lane.b32.xlu0 %v4668, 8
  %v5017 = vpop.permute.xlu0 %5016
  %5018 = vrot.lane.b32.xlu0 %v4671, 8
  %v5019 = vpop.permute.xlu0 %5018
  %5020 = vrot.lane.b32.xlu0 %v4673, 8
  %v5021 = vpop.permute.xlu0 %5020
  %5022 = vrot.lane.b32.xlu0 %v4676, 8
  %v5023 = vpop.permute.xlu0 %5022
  %5024 = vrot.lane.b32.xlu0 %v4678, 8
  %v5025 = vpop.permute.xlu0 %5024
  %5026 = vrot.lane.b32.xlu0 %v4681, 8
  %v5027 = vpop.permute.xlu0 %5026
  %5028 = vrot.lane.b32.xlu0 %v4683, 8
  %v5029 = vpop.permute.xlu0 %5028
  %5030 = vrot.lane.b32.xlu0 %v4686, 8
  %v5031 = vpop.permute.xlu0 %5030
  %5032 = vrot.lane.b32.xlu0 %v4688, 8
  %v5033 = vpop.permute.xlu0 %5032
  %5034 = vrot.lane.b32.xlu0 %v4691, 8
  %v5035 = vpop.permute.xlu0 %5034
  %5036 = vrot.lane.b32.xlu0 %v4693, 8
  %v5037 = vpop.permute.xlu0 %5036
  %5038 = vrot.lane.b32.xlu0 %v4696, 8
  %v5039 = vpop.permute.xlu0 %5038
  %5040 = vrot.lane.b32.xlu0 %v4698, 8
  %v5041 = vpop.permute.xlu0 %5040
  %5042 = vrot.lane.b32.xlu0 %v4701, 8
  %v5043 = vpop.permute.xlu0 %5042
  %5044 = vrot.lane.b32.xlu0 %v4703, 8
  %v5045 = vpop.permute.xlu0 %5044
  %5046 = vrot.lane.b32.xlu0 %v4706, 8
  %v5047 = vpop.permute.xlu0 %5046
  %5048 = vrot.lane.b32.xlu0 %v4708, 8
  %v5049 = vpop.permute.xlu0 %5048
  %5050 = vrot.lane.b32.xlu0 %v4711, 8
  %v5051 = vpop.permute.xlu0 %5050
  %5052 = vrot.lane.b32.xlu0 %v4713, 8
  %v5053 = vpop.permute.xlu0 %5052
  %5118 = vrot.lane.b32.xlu0 %v4716, 16
  %v5119 = vpop.permute.xlu0 %5118
  %5120 = vrot.lane.b32.xlu0 %v4718, 16
  %v5121 = vpop.permute.xlu0 %5120
  %5122 = vrot.lane.b32.xlu0 %v4721, 16
  %v5123 = vpop.permute.xlu0 %5122
  %5124 = vrot.lane.b32.xlu0 %v4723, 16
  %v5125 = vpop.permute.xlu0 %5124
  %5126 = vrot.lane.b32.xlu0 %v4726, 16
  %v5127 = vpop.permute.xlu0 %5126
  %5128 = vrot.lane.b32.xlu0 %v4728, 16
  %v5129 = vpop.permute.xlu0 %5128
  %5130 = vrot.lane.b32.xlu0 %v4731, 16
  %v5131 = vpop.permute.xlu0 %5130
  %5132 = vrot.lane.b32.xlu0 %v4733, 16
  %v5133 = vpop.permute.xlu0 %5132
  %5134 = vrot.lane.b32.xlu0 %v4736, 16
  %v5135 = vpop.permute.xlu0 %5134
  %5136 = vrot.lane.b32.xlu0 %v4738, 16
  %v5137 = vpop.permute.xlu0 %5136
  %5138 = vrot.lane.b32.xlu0 %v4741, 16
  %v5139 = vpop.permute.xlu0 %5138
  %5140 = vrot.lane.b32.xlu0 %v4743, 16
  %v5141 = vpop.permute.xlu0 %5140
  %5142 = vrot.lane.b32.xlu0 %v4746, 16
  %v5143 = vpop.permute.xlu0 %5142
  %5144 = vrot.lane.b32.xlu0 %v4748, 16
  %v5145 = vpop.permute.xlu0 %5144
  %5146 = vrot.lane.b32.xlu0 %v4751, 16
  %v5147 = vpop.permute.xlu0 %5146
  %5148 = vrot.lane.b32.xlu0 %v4753, 16
  %v5149 = vpop.permute.xlu0 %5148
  %5150 = vrot.lane.b32.xlu0 %v4756, 16
  %v5151 = vpop.permute.xlu0 %5150
  %5152 = vrot.lane.b32.xlu0 %v4758, 16
  %v5153 = vpop.permute.xlu0 %5152
  %5154 = vrot.lane.b32.xlu0 %v4761, 16
  %v5155 = vpop.permute.xlu0 %5154
  %5156 = vrot.lane.b32.xlu0 %v4763, 16
  %v5157 = vpop.permute.xlu0 %5156
  %5158 = vrot.lane.b32.xlu0 %v4766, 16
  %v5159 = vpop.permute.xlu0 %5158
  %5160 = vrot.lane.b32.xlu0 %v4768, 16
  %v5161 = vpop.permute.xlu0 %5160
  %5162 = vrot.lane.b32.xlu0 %v4771, 16
  %v5163 = vpop.permute.xlu0 %5162
  %5164 = vrot.lane.b32.xlu0 %v4773, 16
  %v5165 = vpop.permute.xlu0 %5164
  %5166 = vrot.lane.b32.xlu0 %v4776, 16
  %v5167 = vpop.permute.xlu0 %5166
  %5168 = vrot.lane.b32.xlu0 %v4778, 16
  %v5169 = vpop.permute.xlu0 %5168
  %5170 = vrot.lane.b32.xlu0 %v4781, 16
  %v5171 = vpop.permute.xlu0 %5170
  %5172 = vrot.lane.b32.xlu0 %v4783, 16
  %v5173 = vpop.permute.xlu0 %5172
  %5174 = vrot.lane.b32.xlu0 %v4786, 16
  %v5175 = vpop.permute.xlu0 %5174
  %5176 = vrot.lane.b32.xlu0 %v4788, 16
  %v5177 = vpop.permute.xlu0 %5176
  %5178 = vrot.lane.b32.xlu0 %v4791, 16
  %v5179 = vpop.permute.xlu0 %5178
  %5180 = vrot.lane.b32.xlu0 %v4793, 16
  %v5181 = vpop.permute.xlu0 %5180
  %5182 = vrot.lane.b32.xlu0 %v4796, 16
  %v5183 = vpop.permute.xlu0 %5182
  %5184 = vrot.lane.b32.xlu0 %v4798, 16
  %v5185 = vpop.permute.xlu0 %5184
  %5186 = vrot.lane.b32.xlu0 %v4801, 16
  %v5187 = vpop.permute.xlu0 %5186
  %5188 = vrot.lane.b32.xlu0 %v4803, 16
  %v5189 = vpop.permute.xlu0 %5188
  %5190 = vrot.lane.b32.xlu0 %v4806, 16
  %v5191 = vpop.permute.xlu0 %5190
  %5192 = vrot.lane.b32.xlu0 %v4808, 16
  %v5193 = vpop.permute.xlu0 %5192
  %5194 = vrot.lane.b32.xlu0 %v4811, 16
  %v5195 = vpop.permute.xlu0 %5194
  %5196 = vrot.lane.b32.xlu0 %v4813, 16
  %v5197 = vpop.permute.xlu0 %5196
  %5198 = vrot.lane.b32.xlu0 %v4816, 16
  %v5199 = vpop.permute.xlu0 %5198
  %5200 = vrot.lane.b32.xlu0 %v4818, 16
  %v5201 = vpop.permute.xlu0 %5200
  %5202 = vrot.lane.b32.xlu0 %v4821, 16
  %v5203 = vpop.permute.xlu0 %5202
  %5204 = vrot.lane.b32.xlu0 %v4823, 16
  %v5205 = vpop.permute.xlu0 %5204
  %5206 = vrot.lane.b32.xlu0 %v4826, 16
  %v5207 = vpop.permute.xlu0 %5206
  %5208 = vrot.lane.b32.xlu0 %v4828, 16
  %v5209 = vpop.permute.xlu0 %5208
  %5210 = vrot.lane.b32.xlu0 %v4831, 16
  %v5211 = vpop.permute.xlu0 %5210
  %5212 = vrot.lane.b32.xlu0 %v4833, 16
  %v5213 = vpop.permute.xlu0 %5212
  %5214 = vrot.lane.b32.xlu0 %v4836, 16
  %v5215 = vpop.permute.xlu0 %5214
  %5216 = vrot.lane.b32.xlu0 %v4838, 16
  %v5217 = vpop.permute.xlu0 %5216
  %5218 = vrot.lane.b32.xlu0 %v4841, 16
  %v5219 = vpop.permute.xlu0 %5218
  %5220 = vrot.lane.b32.xlu0 %v4843, 16
  %v5221 = vpop.permute.xlu0 %5220
  %5222 = vrot.lane.b32.xlu0 %v4846, 16
  %v5223 = vpop.permute.xlu0 %5222
  %5224 = vrot.lane.b32.xlu0 %v4848, 16
  %v5225 = vpop.permute.xlu0 %5224
  %5226 = vrot.lane.b32.xlu0 %v4851, 16
  %v5227 = vpop.permute.xlu0 %5226
  %5228 = vrot.lane.b32.xlu0 %v4853, 16
  %v5229 = vpop.permute.xlu0 %5228
  %5230 = vrot.lane.b32.xlu0 %v4856, 16
  %v5231 = vpop.permute.xlu0 %5230
  %5232 = vrot.lane.b32.xlu0 %v4858, 16
  %v5233 = vpop.permute.xlu0 %5232
  %5234 = vrot.lane.b32.xlu0 %v4861, 16
  %v5235 = vpop.permute.xlu0 %5234
  %5236 = vrot.lane.b32.xlu0 %v4863, 16
  %v5237 = vpop.permute.xlu0 %5236
  %5238 = vrot.lane.b32.xlu0 %v4866, 16
  %v5239 = vpop.permute.xlu0 %5238
  %5240 = vrot.lane.b32.xlu0 %v4868, 16
  %v5241 = vpop.permute.xlu0 %5240
  %5242 = vrot.lane.b32.xlu0 %v4871, 16
  %v5243 = vpop.permute.xlu0 %5242
  %5244 = vrot.lane.b32.xlu0 %v4873, 16
  %v5245 = vpop.permute.xlu0 %5244
  %5310 = vrot.lane.b32.xlu0 %v4353, 24
  %v5311 = vpop.permute.xlu0 %5310
  %5312 = vrot.lane.b32.xlu0 %v4354, 24
  %v5313 = vpop.permute.xlu0 %5312
  %5314 = vrot.lane.b32.xlu0 %v4356, 24
  %v5315 = vpop.permute.xlu0 %5314
  %5316 = vrot.lane.b32.xlu0 %v4357, 24
  %v5317 = vpop.permute.xlu0 %5316
  %5318 = vrot.lane.b32.xlu0 %v4359, 24
  %v5319 = vpop.permute.xlu0 %5318
  %5320 = vrot.lane.b32.xlu0 %v4360, 24
  %v5321 = vpop.permute.xlu0 %5320
  %5322 = vrot.lane.b32.xlu0 %v4362, 24
  %v5323 = vpop.permute.xlu0 %5322
  %5324 = vrot.lane.b32.xlu0 %v4363, 24
  %v5325 = vpop.permute.xlu0 %5324
  %5326 = vrot.lane.b32.xlu0 %v4365, 24
  %v5327 = vpop.permute.xlu0 %5326
  %5328 = vrot.lane.b32.xlu0 %v4366, 24
  %v5329 = vpop.permute.xlu0 %5328
  %5330 = vrot.lane.b32.xlu0 %v4368, 24
  %v5331 = vpop.permute.xlu0 %5330
  %5332 = vrot.lane.b32.xlu0 %v4369, 24
  %v5333 = vpop.permute.xlu0 %5332
  %5334 = vrot.lane.b32.xlu0 %v4371, 24
  %v5335 = vpop.permute.xlu0 %5334
  %5336 = vrot.lane.b32.xlu0 %v4372, 24
  %v5337 = vpop.permute.xlu0 %5336
  %5338 = vrot.lane.b32.xlu0 %v4374, 24
  %v5339 = vpop.permute.xlu0 %5338
  %5340 = vrot.lane.b32.xlu0 %v4375, 24
  %v5341 = vpop.permute.xlu0 %5340
  %5342 = vrot.lane.b32.xlu0 %v4377, 24
  %v5343 = vpop.permute.xlu0 %5342
  %5344 = vrot.lane.b32.xlu0 %v4378, 24
  %v5345 = vpop.permute.xlu0 %5344
  %5346 = vrot.lane.b32.xlu0 %v4380, 24
  %v5347 = vpop.permute.xlu0 %5346
  %5348 = vrot.lane.b32.xlu0 %v4381, 24
  %v5349 = vpop.permute.xlu0 %5348
  %5350 = vrot.lane.b32.xlu0 %v4383, 24
  %v5351 = vpop.permute.xlu0 %5350
  %5352 = vrot.lane.b32.xlu0 %v4384, 24
  %v5353 = vpop.permute.xlu0 %5352
  %5354 = vrot.lane.b32.xlu0 %v4386, 24
  %v5355 = vpop.permute.xlu0 %5354
  %5356 = vrot.lane.b32.xlu0 %v4387, 24
  %v5357 = vpop.permute.xlu0 %5356
  %5358 = vrot.lane.b32.xlu0 %v4389, 24
  %v5359 = vpop.permute.xlu0 %5358
  %5360 = vrot.lane.b32.xlu0 %v4390, 24
  %v5361 = vpop.permute.xlu0 %5360
  %5362 = vrot.lane.b32.xlu0 %v4392, 24
  %v5363 = vpop.permute.xlu0 %5362
  %5364 = vrot.lane.b32.xlu0 %v4393, 24
  %v5365 = vpop.permute.xlu0 %5364
  %5366 = vrot.lane.b32.xlu0 %v4395, 24
  %v5367 = vpop.permute.xlu0 %5366
  %5368 = vrot.lane.b32.xlu0 %v4396, 24
  %v5369 = vpop.permute.xlu0 %5368
  %5370 = vrot.lane.b32.xlu0 %v4398, 24
  %v5371 = vpop.permute.xlu0 %5370
  %5372 = vrot.lane.b32.xlu0 %v4399, 24
  %v5373 = vpop.permute.xlu0 %5372
  %5374 = vrot.lane.b32.xlu0 %v4407, 24
  %v5375 = vpop.permute.xlu0 %5374
  %5376 = vrot.lane.b32.xlu0 %v4408, 24
  %v5377 = vpop.permute.xlu0 %5376
  %5378 = vrot.lane.b32.xlu0 %v4410, 24
  %v5379 = vpop.permute.xlu0 %5378
  %5380 = vrot.lane.b32.xlu0 %v4411, 24
  %v5381 = vpop.permute.xlu0 %5380
  %5382 = vrot.lane.b32.xlu0 %v4413, 24
  %v5383 = vpop.permute.xlu0 %5382
  %5384 = vrot.lane.b32.xlu0 %v4414, 24
  %v5385 = vpop.permute.xlu0 %5384
  %5386 = vrot.lane.b32.xlu0 %v4416, 24
  %v5387 = vpop.permute.xlu0 %5386
  %5388 = vrot.lane.b32.xlu0 %v4417, 24
  %v5389 = vpop.permute.xlu0 %5388
  %5390 = vrot.lane.b32.xlu0 %v4419, 24
  %v5391 = vpop.permute.xlu0 %5390
  %5392 = vrot.lane.b32.xlu0 %v4420, 24
  %v5393 = vpop.permute.xlu0 %5392
  %5394 = vrot.lane.b32.xlu0 %v4422, 24
  %v5395 = vpop.permute.xlu0 %5394
  %5396 = vrot.lane.b32.xlu0 %v4423, 24
  %v5397 = vpop.permute.xlu0 %5396
  %5398 = vrot.lane.b32.xlu0 %v4425, 24
  %v5399 = vpop.permute.xlu0 %5398
  %5400 = vrot.lane.b32.xlu0 %v4426, 24
  %v5401 = vpop.permute.xlu0 %5400
  %5402 = vrot.lane.b32.xlu0 %v4428, 24
  %v5403 = vpop.permute.xlu0 %5402
  %5404 = vrot.lane.b32.xlu0 %v4429, 24
  %v5405 = vpop.permute.xlu0 %5404
  %5406 = vrot.lane.b32.xlu0 %v4431, 24
  %v5407 = vpop.permute.xlu0 %5406
  %5408 = vrot.lane.b32.xlu0 %v4432, 24
  %v5409 = vpop.permute.xlu0 %5408
  %5410 = vrot.lane.b32.xlu0 %v4434, 24
  %v5411 = vpop.permute.xlu0 %5410
  %5412 = vrot.lane.b32.xlu0 %v4435, 24
  %v5413 = vpop.permute.xlu0 %5412
  %5414 = vrot.lane.b32.xlu0 %v4437, 24
  %v5415 = vpop.permute.xlu0 %5414
  %5416 = vrot.lane.b32.xlu0 %v4438, 24
  %v5417 = vpop.permute.xlu0 %5416
  %5418 = vrot.lane.b32.xlu0 %v4440, 24
  %v5419 = vpop.permute.xlu0 %5418
  %5420 = vrot.lane.b32.xlu0 %v4441, 24
  %v5421 = vpop.permute.xlu0 %5420
  %5422 = vrot.lane.b32.xlu0 %v4443, 24
  %v5423 = vpop.permute.xlu0 %5422
  %5424 = vrot.lane.b32.xlu0 %v4444, 24
  %v5425 = vpop.permute.xlu0 %5424
  %5426 = vrot.lane.b32.xlu0 %v4446, 24
  %v5427 = vpop.permute.xlu0 %5426
  %5428 = vrot.lane.b32.xlu0 %v4447, 24
  %v5429 = vpop.permute.xlu0 %5428
  %5430 = vrot.lane.b32.xlu0 %v4449, 24
  %v5431 = vpop.permute.xlu0 %5430
  %5432 = vrot.lane.b32.xlu0 %v4450, 24
  %v5433 = vpop.permute.xlu0 %5432
  %5434 = vrot.lane.b32.xlu0 %v4452, 24
  %v5435 = vpop.permute.xlu0 %5434
  %5436 = vrot.lane.b32.xlu0 %v4453, 24
  %v5437 = vpop.permute.xlu0 %5436
  %5502 = vrot.lane.b32.xlu0 %v4561, 32
  %v5503 = vpop.permute.xlu0 %5502
  %5504 = vrot.lane.b32.xlu0 %v4563, 32
  %v5505 = vpop.permute.xlu0 %5504
  %5506 = vrot.lane.b32.xlu0 %v4566, 32
  %v5507 = vpop.permute.xlu0 %5506
  %5508 = vrot.lane.b32.xlu0 %v4568, 32
  %v5509 = vpop.permute.xlu0 %5508
  %5510 = vrot.lane.b32.xlu0 %v4571, 32
  %v5511 = vpop.permute.xlu0 %5510
  %5512 = vrot.lane.b32.xlu0 %v4573, 32
  %v5513 = vpop.permute.xlu0 %5512
  %5514 = vrot.lane.b32.xlu0 %v4576, 32
  %v5515 = vpop.permute.xlu0 %5514
  %5516 = vrot.lane.b32.xlu0 %v4578, 32
  %v5517 = vpop.permute.xlu0 %5516
  %5518 = vrot.lane.b32.xlu0 %v4581, 32
  %v5519 = vpop.permute.xlu0 %5518
  %5520 = vrot.lane.b32.xlu0 %v4583, 32
  %v5521 = vpop.permute.xlu0 %5520
  %5522 = vrot.lane.b32.xlu0 %v4586, 32
  %v5523 = vpop.permute.xlu0 %5522
  %5524 = vrot.lane.b32.xlu0 %v4588, 32
  %v5525 = vpop.permute.xlu0 %5524
  %5526 = vrot.lane.b32.xlu0 %v4591, 32
  %v5527 = vpop.permute.xlu0 %5526
  %5528 = vrot.lane.b32.xlu0 %v4593, 32
  %v5529 = vpop.permute.xlu0 %5528
  %5530 = vrot.lane.b32.xlu0 %v4596, 32
  %v5531 = vpop.permute.xlu0 %5530
  %5532 = vrot.lane.b32.xlu0 %v4598, 32
  %v5533 = vpop.permute.xlu0 %5532
  %5534 = vrot.lane.b32.xlu0 %v4601, 32
  %v5535 = vpop.permute.xlu0 %5534
  %5536 = vrot.lane.b32.xlu0 %v4603, 32
  %v5537 = vpop.permute.xlu0 %5536
  %5538 = vrot.lane.b32.xlu0 %v4606, 32
  %v5539 = vpop.permute.xlu0 %5538
  %5540 = vrot.lane.b32.xlu0 %v4608, 32
  %v5541 = vpop.permute.xlu0 %5540
  %5542 = vrot.lane.b32.xlu0 %v4611, 32
  %v5543 = vpop.permute.xlu0 %5542
  %5544 = vrot.lane.b32.xlu0 %v4613, 32
  %v5545 = vpop.permute.xlu0 %5544
  %5546 = vrot.lane.b32.xlu0 %v4616, 32
  %v5547 = vpop.permute.xlu0 %5546
  %5548 = vrot.lane.b32.xlu0 %v4618, 32
  %v5549 = vpop.permute.xlu0 %5548
  %5550 = vrot.lane.b32.xlu0 %v4621, 32
  %v5551 = vpop.permute.xlu0 %5550
  %5552 = vrot.lane.b32.xlu0 %v4623, 32
  %v5553 = vpop.permute.xlu0 %5552
  %5554 = vrot.lane.b32.xlu0 %v4626, 32
  %v5555 = vpop.permute.xlu0 %5554
  %5556 = vrot.lane.b32.xlu0 %v4628, 32
  %v5557 = vpop.permute.xlu0 %5556
  %5558 = vrot.lane.b32.xlu0 %v4631, 32
  %v5559 = vpop.permute.xlu0 %5558
  %5560 = vrot.lane.b32.xlu0 %v4633, 32
  %v5561 = vpop.permute.xlu0 %5560
  %5562 = vrot.lane.b32.xlu0 %v4882, 32
  %v5563 = vpop.permute.xlu0 %5562
  %5564 = vrot.lane.b32.xlu0 %v4884, 32
  %v5565 = vpop.permute.xlu0 %5564
  %5566 = vrot.lane.b32.xlu0 %v4641, 32
  %v5567 = vpop.permute.xlu0 %5566
  %5568 = vrot.lane.b32.xlu0 %v4643, 32
  %v5569 = vpop.permute.xlu0 %5568
  %5570 = vrot.lane.b32.xlu0 %v4646, 32
  %v5571 = vpop.permute.xlu0 %5570
  %5572 = vrot.lane.b32.xlu0 %v4648, 32
  %v5573 = vpop.permute.xlu0 %5572
  %5574 = vrot.lane.b32.xlu0 %v4651, 32
  %v5575 = vpop.permute.xlu0 %5574
  %5576 = vrot.lane.b32.xlu0 %v4653, 32
  %v5577 = vpop.permute.xlu0 %5576
  %5578 = vrot.lane.b32.xlu0 %v4656, 32
  %v5579 = vpop.permute.xlu0 %5578
  %5580 = vrot.lane.b32.xlu0 %v4658, 32
  %v5581 = vpop.permute.xlu0 %5580
  %5582 = vrot.lane.b32.xlu0 %v4661, 32
  %v5583 = vpop.permute.xlu0 %5582
  %5584 = vrot.lane.b32.xlu0 %v4663, 32
  %v5585 = vpop.permute.xlu0 %5584
  %5586 = vrot.lane.b32.xlu0 %v4666, 32
  %v5587 = vpop.permute.xlu0 %5586
  %5588 = vrot.lane.b32.xlu0 %v4668, 32
  %v5589 = vpop.permute.xlu0 %5588
  %5590 = vrot.lane.b32.xlu0 %v4671, 32
  %v5591 = vpop.permute.xlu0 %5590
  %5592 = vrot.lane.b32.xlu0 %v4673, 32
  %v5593 = vpop.permute.xlu0 %5592
  %5594 = vrot.lane.b32.xlu0 %v4676, 32
  %v5595 = vpop.permute.xlu0 %5594
  %5596 = vrot.lane.b32.xlu0 %v4678, 32
  %v5597 = vpop.permute.xlu0 %5596
  %5598 = vrot.lane.b32.xlu0 %v4681, 32
  %v5599 = vpop.permute.xlu0 %5598
  %5600 = vrot.lane.b32.xlu0 %v4683, 32
  %v5601 = vpop.permute.xlu0 %5600
  %5602 = vrot.lane.b32.xlu0 %v4686, 32
  %v5603 = vpop.permute.xlu0 %5602
  %5604 = vrot.lane.b32.xlu0 %v4688, 32
  %v5605 = vpop.permute.xlu0 %5604
  %5606 = vrot.lane.b32.xlu0 %v4691, 32
  %v5607 = vpop.permute.xlu0 %5606
  %5608 = vrot.lane.b32.xlu0 %v4693, 32
  %v5609 = vpop.permute.xlu0 %5608
  %5610 = vrot.lane.b32.xlu0 %v4696, 32
  %v5611 = vpop.permute.xlu0 %5610
  %5612 = vrot.lane.b32.xlu0 %v4698, 32
  %v5613 = vpop.permute.xlu0 %5612
  %5614 = vrot.lane.b32.xlu0 %v4701, 32
  %v5615 = vpop.permute.xlu0 %5614
  %5616 = vrot.lane.b32.xlu0 %v4703, 32
  %v5617 = vpop.permute.xlu0 %5616
  %5618 = vrot.lane.b32.xlu0 %v4706, 32
  %v5619 = vpop.permute.xlu0 %5618
  %5620 = vrot.lane.b32.xlu0 %v4708, 32
  %v5621 = vpop.permute.xlu0 %5620
  %5622 = vrot.lane.b32.xlu0 %v4711, 32
  %v5623 = vpop.permute.xlu0 %5622
  %5624 = vrot.lane.b32.xlu0 %v4713, 32
  %v5625 = vpop.permute.xlu0 %5624
  %5626 = vrot.lane.b32.xlu0 %v4887, 32
  %v5627 = vpop.permute.xlu0 %5626
  %5628 = vrot.lane.b32.xlu0 %v4889, 32
  %v5629 = vpop.permute.xlu0 %5628
  %5694 = vrot.lane.b32.xlu0 %v4721, 40
  %v5695 = vpop.permute.xlu0 %5694
  %5696 = vrot.lane.b32.xlu0 %v4723, 40
  %v5697 = vpop.permute.xlu0 %5696
  %5698 = vrot.lane.b32.xlu0 %v4726, 40
  %v5699 = vpop.permute.xlu0 %5698
  %5700 = vrot.lane.b32.xlu0 %v4728, 40
  %v5701 = vpop.permute.xlu0 %5700
  %5702 = vrot.lane.b32.xlu0 %v4731, 40
  %v5703 = vpop.permute.xlu0 %5702
  %5704 = vrot.lane.b32.xlu0 %v4733, 40
  %v5705 = vpop.permute.xlu0 %5704
  %5706 = vrot.lane.b32.xlu0 %v4736, 40
  %v5707 = vpop.permute.xlu0 %5706
  %5708 = vrot.lane.b32.xlu0 %v4738, 40
  %v5709 = vpop.permute.xlu0 %5708
  %5710 = vrot.lane.b32.xlu0 %v4741, 40
  %v5711 = vpop.permute.xlu0 %5710
  %5712 = vrot.lane.b32.xlu0 %v4743, 40
  %v5713 = vpop.permute.xlu0 %5712
  %5714 = vrot.lane.b32.xlu0 %v4746, 40
  %v5715 = vpop.permute.xlu0 %5714
  %5716 = vrot.lane.b32.xlu0 %v4748, 40
  %v5717 = vpop.permute.xlu0 %5716
  %5718 = vrot.lane.b32.xlu0 %v4751, 40
  %v5719 = vpop.permute.xlu0 %5718
  %5720 = vrot.lane.b32.xlu0 %v4753, 40
  %v5721 = vpop.permute.xlu0 %5720
  %5722 = vrot.lane.b32.xlu0 %v4756, 40
  %v5723 = vpop.permute.xlu0 %5722
  %5724 = vrot.lane.b32.xlu0 %v4758, 40
  %v5725 = vpop.permute.xlu0 %5724
  %5726 = vrot.lane.b32.xlu0 %v4761, 40
  %v5727 = vpop.permute.xlu0 %5726
  %5728 = vrot.lane.b32.xlu0 %v4763, 40
  %v5729 = vpop.permute.xlu0 %5728
  %5730 = vrot.lane.b32.xlu0 %v4766, 40
  %v5731 = vpop.permute.xlu0 %5730
  %5732 = vrot.lane.b32.xlu0 %v4768, 40
  %v5733 = vpop.permute.xlu0 %5732
  %5734 = vrot.lane.b32.xlu0 %v4771, 40
  %v5735 = vpop.permute.xlu0 %5734
  %5736 = vrot.lane.b32.xlu0 %v4773, 40
  %v5737 = vpop.permute.xlu0 %5736
  %5738 = vrot.lane.b32.xlu0 %v4776, 40
  %v5739 = vpop.permute.xlu0 %5738
  %5740 = vrot.lane.b32.xlu0 %v4778, 40
  %v5741 = vpop.permute.xlu0 %5740
  %5742 = vrot.lane.b32.xlu0 %v4781, 40
  %v5743 = vpop.permute.xlu0 %5742
  %5744 = vrot.lane.b32.xlu0 %v4783, 40
  %v5745 = vpop.permute.xlu0 %5744
  %5746 = vrot.lane.b32.xlu0 %v4786, 40
  %v5747 = vpop.permute.xlu0 %5746
  %5748 = vrot.lane.b32.xlu0 %v4788, 40
  %v5749 = vpop.permute.xlu0 %5748
  %5750 = vrot.lane.b32.xlu0 %v4791, 40
  %v5751 = vpop.permute.xlu0 %5750
  %5752 = vrot.lane.b32.xlu0 %v4793, 40
  %v5753 = vpop.permute.xlu0 %5752
  %5754 = vrot.lane.b32.xlu0 %v4892, 40
  %v5755 = vpop.permute.xlu0 %5754
  %5756 = vrot.lane.b32.xlu0 %v4894, 40
  %v5757 = vpop.permute.xlu0 %5756
  %5758 = vrot.lane.b32.xlu0 %v4801, 40
  %v5759 = vpop.permute.xlu0 %5758
  %5760 = vrot.lane.b32.xlu0 %v4803, 40
  %v5761 = vpop.permute.xlu0 %5760
  %5762 = vrot.lane.b32.xlu0 %v4806, 40
  %v5763 = vpop.permute.xlu0 %5762
  %5764 = vrot.lane.b32.xlu0 %v4808, 40
  %v5765 = vpop.permute.xlu0 %5764
  %5766 = vrot.lane.b32.xlu0 %v4811, 40
  %v5767 = vpop.permute.xlu0 %5766
  %5768 = vrot.lane.b32.xlu0 %v4813, 40
  %v5769 = vpop.permute.xlu0 %5768
  %5770 = vrot.lane.b32.xlu0 %v4816, 40
  %v5771 = vpop.permute.xlu0 %5770
  %5772 = vrot.lane.b32.xlu0 %v4818, 40
  %v5773 = vpop.permute.xlu0 %5772
  %5774 = vrot.lane.b32.xlu0 %v4821, 40
  %v5775 = vpop.permute.xlu0 %5774
  %5776 = vrot.lane.b32.xlu0 %v4823, 40
  %v5777 = vpop.permute.xlu0 %5776
  %5778 = vrot.lane.b32.xlu0 %v4826, 40
  %v5779 = vpop.permute.xlu0 %5778
  %5780 = vrot.lane.b32.xlu0 %v4828, 40
  %v5781 = vpop.permute.xlu0 %5780
  %5782 = vrot.lane.b32.xlu0 %v4831, 40
  %v5783 = vpop.permute.xlu0 %5782
  %5784 = vrot.lane.b32.xlu0 %v4833, 40
  %v5785 = vpop.permute.xlu0 %5784
  %5786 = vrot.lane.b32.xlu0 %v4836, 40
  %v5787 = vpop.permute.xlu0 %5786
  %5788 = vrot.lane.b32.xlu0 %v4838, 40
  %v5789 = vpop.permute.xlu0 %5788
  %5790 = vrot.lane.b32.xlu0 %v4841, 40
  %v5791 = vpop.permute.xlu0 %5790
  %5792 = vrot.lane.b32.xlu0 %v4843, 40
  %v5793 = vpop.permute.xlu0 %5792
  %5794 = vrot.lane.b32.xlu0 %v4846, 40
  %v5795 = vpop.permute.xlu0 %5794
  %5796 = vrot.lane.b32.xlu0 %v4848, 40
  %v5797 = vpop.permute.xlu0 %5796
  %5798 = vrot.lane.b32.xlu0 %v4851, 40
  %v5799 = vpop.permute.xlu0 %5798
  %5800 = vrot.lane.b32.xlu0 %v4853, 40
  %v5801 = vpop.permute.xlu0 %5800
  %5802 = vrot.lane.b32.xlu0 %v4856, 40
  %v5803 = vpop.permute.xlu0 %5802
  %5804 = vrot.lane.b32.xlu0 %v4858, 40
  %v5805 = vpop.permute.xlu0 %5804
  %5806 = vrot.lane.b32.xlu0 %v4861, 40
  %v5807 = vpop.permute.xlu0 %5806
  %5808 = vrot.lane.b32.xlu0 %v4863, 40
  %v5809 = vpop.permute.xlu0 %5808
  %5810 = vrot.lane.b32.xlu0 %v4866, 40
  %v5811 = vpop.permute.xlu0 %5810
  %5812 = vrot.lane.b32.xlu0 %v4868, 40
  %v5813 = vpop.permute.xlu0 %5812
  %5814 = vrot.lane.b32.xlu0 %v4871, 40
  %v5815 = vpop.permute.xlu0 %5814
  %5816 = vrot.lane.b32.xlu0 %v4873, 40
  %v5817 = vpop.permute.xlu0 %5816
  %5818 = vrot.lane.b32.xlu0 %v4897, 40
  %v5819 = vpop.permute.xlu0 %5818
  %5820 = vrot.lane.b32.xlu0 %v4899, 40
  %v5821 = vpop.permute.xlu0 %5820
  %5886 = vrot.lane.b32.xlu0 %v4356, 48
  %v5887 = vpop.permute.xlu0 %5886
  %5888 = vrot.lane.b32.xlu0 %v4357, 48
  %v5889 = vpop.permute.xlu0 %5888
  %5890 = vrot.lane.b32.xlu0 %v4359, 48
  %v5891 = vpop.permute.xlu0 %5890
  %5892 = vrot.lane.b32.xlu0 %v4360, 48
  %v5893 = vpop.permute.xlu0 %5892
  %5894 = vrot.lane.b32.xlu0 %v4362, 48
  %v5895 = vpop.permute.xlu0 %5894
  %5896 = vrot.lane.b32.xlu0 %v4363, 48
  %v5897 = vpop.permute.xlu0 %5896
  %5898 = vrot.lane.b32.xlu0 %v4365, 48
  %v5899 = vpop.permute.xlu0 %5898
  %5900 = vrot.lane.b32.xlu0 %v4366, 48
  %v5901 = vpop.permute.xlu0 %5900
  %5902 = vrot.lane.b32.xlu0 %v4368, 48
  %v5903 = vpop.permute.xlu0 %5902
  %5904 = vrot.lane.b32.xlu0 %v4369, 48
  %v5905 = vpop.permute.xlu0 %5904
  %5906 = vrot.lane.b32.xlu0 %v4371, 48
  %v5907 = vpop.permute.xlu0 %5906
  %5908 = vrot.lane.b32.xlu0 %v4372, 48
  %v5909 = vpop.permute.xlu0 %5908
  %5910 = vrot.lane.b32.xlu0 %v4374, 48
  %v5911 = vpop.permute.xlu0 %5910
  %5912 = vrot.lane.b32.xlu0 %v4375, 48
  %v5913 = vpop.permute.xlu0 %5912
  %5914 = vrot.lane.b32.xlu0 %v4377, 48
  %v5915 = vpop.permute.xlu0 %5914
  %5916 = vrot.lane.b32.xlu0 %v4378, 48
  %v5917 = vpop.permute.xlu0 %5916
  %5918 = vrot.lane.b32.xlu0 %v4380, 48
  %v5919 = vpop.permute.xlu0 %5918
  %5920 = vrot.lane.b32.xlu0 %v4381, 48
  %v5921 = vpop.permute.xlu0 %5920
  %5922 = vrot.lane.b32.xlu0 %v4383, 48
  %v5923 = vpop.permute.xlu0 %5922
  %5924 = vrot.lane.b32.xlu0 %v4384, 48
  %v5925 = vpop.permute.xlu0 %5924
  %5926 = vrot.lane.b32.xlu0 %v4386, 48
  %v5927 = vpop.permute.xlu0 %5926
  %5928 = vrot.lane.b32.xlu0 %v4387, 48
  %v5929 = vpop.permute.xlu0 %5928
  %5930 = vrot.lane.b32.xlu0 %v4389, 48
  %v5931 = vpop.permute.xlu0 %5930
  %5932 = vrot.lane.b32.xlu0 %v4390, 48
  %v5933 = vpop.permute.xlu0 %5932
  %5934 = vrot.lane.b32.xlu0 %v4392, 48
  %v5935 = vpop.permute.xlu0 %5934
  %5936 = vrot.lane.b32.xlu0 %v4393, 48
  %v5937 = vpop.permute.xlu0 %5936
  %5938 = vrot.lane.b32.xlu0 %v4395, 48
  %v5939 = vpop.permute.xlu0 %5938
  %5940 = vrot.lane.b32.xlu0 %v4396, 48
  %v5941 = vpop.permute.xlu0 %5940
  %5942 = vrot.lane.b32.xlu0 %v4398, 48
  %v5943 = vpop.permute.xlu0 %5942
  %5944 = vrot.lane.b32.xlu0 %v4399, 48
  %v5945 = vpop.permute.xlu0 %5944
  %5946 = vrot.lane.b32.xlu0 %v4401, 48
  %v5947 = vpop.permute.xlu0 %5946
  %5948 = vrot.lane.b32.xlu0 %v4402, 48
  %v5949 = vpop.permute.xlu0 %5948
  %5950 = vrot.lane.b32.xlu0 %v4410, 48
  %v5951 = vpop.permute.xlu0 %5950
  %5952 = vrot.lane.b32.xlu0 %v4411, 48
  %v5953 = vpop.permute.xlu0 %5952
  %5954 = vrot.lane.b32.xlu0 %v4413, 48
  %v5955 = vpop.permute.xlu0 %5954
  %5956 = vrot.lane.b32.xlu0 %v4414, 48
  %v5957 = vpop.permute.xlu0 %5956
  %5958 = vrot.lane.b32.xlu0 %v4416, 48
  %v5959 = vpop.permute.xlu0 %5958
  %5960 = vrot.lane.b32.xlu0 %v4417, 48
  %v5961 = vpop.permute.xlu0 %5960
  %5962 = vrot.lane.b32.xlu0 %v4419, 48
  %v5963 = vpop.permute.xlu0 %5962
  %5964 = vrot.lane.b32.xlu0 %v4420, 48
  %v5965 = vpop.permute.xlu0 %5964
  %5966 = vrot.lane.b32.xlu0 %v4422, 48
  %v5967 = vpop.permute.xlu0 %5966
  %5968 = vrot.lane.b32.xlu0 %v4423, 48
  %v5969 = vpop.permute.xlu0 %5968
  %5970 = vrot.lane.b32.xlu0 %v4425, 48
  %v5971 = vpop.permute.xlu0 %5970
  %5972 = vrot.lane.b32.xlu0 %v4426, 48
  %v5973 = vpop.permute.xlu0 %5972
  %5974 = vrot.lane.b32.xlu0 %v4428, 48
  %v5975 = vpop.permute.xlu0 %5974
  %5976 = vrot.lane.b32.xlu0 %v4429, 48
  %v5977 = vpop.permute.xlu0 %5976
  %5978 = vrot.lane.b32.xlu0 %v4431, 48
  %v5979 = vpop.permute.xlu0 %5978
  %5980 = vrot.lane.b32.xlu0 %v4432, 48
  %v5981 = vpop.permute.xlu0 %5980
  %5982 = vrot.lane.b32.xlu0 %v4434, 48
  %v5983 = vpop.permute.xlu0 %5982
  %5984 = vrot.lane.b32.xlu0 %v4435, 48
  %v5985 = vpop.permute.xlu0 %5984
  %5986 = vrot.lane.b32.xlu0 %v4437, 48
  %v5987 = vpop.permute.xlu0 %5986
  %5988 = vrot.lane.b32.xlu0 %v4438, 48
  %v5989 = vpop.permute.xlu0 %5988
  %5990 = vrot.lane.b32.xlu0 %v4440, 48
  %v5991 = vpop.permute.xlu0 %5990
  %5992 = vrot.lane.b32.xlu0 %v4441, 48
  %v5993 = vpop.permute.xlu0 %5992
  %5994 = vrot.lane.b32.xlu0 %v4443, 48
  %v5995 = vpop.permute.xlu0 %5994
  %5996 = vrot.lane.b32.xlu0 %v4444, 48
  %v5997 = vpop.permute.xlu0 %5996
  %5998 = vrot.lane.b32.xlu0 %v4446, 48
  %v5999 = vpop.permute.xlu0 %5998
  %6000 = vrot.lane.b32.xlu0 %v4447, 48
  %v6001 = vpop.permute.xlu0 %6000
  %6002 = vrot.lane.b32.xlu0 %v4449, 48
  %v6003 = vpop.permute.xlu0 %6002
  %6004 = vrot.lane.b32.xlu0 %v4450, 48
  %v6005 = vpop.permute.xlu0 %6004
  %6006 = vrot.lane.b32.xlu0 %v4452, 48
  %v6007 = vpop.permute.xlu0 %6006
  %6008 = vrot.lane.b32.xlu0 %v4453, 48
  %v6009 = vpop.permute.xlu0 %6008
  %6010 = vrot.lane.b32.xlu0 %v4455, 48
  %v6011 = vpop.permute.xlu0 %6010
  %6012 = vrot.lane.b32.xlu0 %v4456, 48
  %v6013 = vpop.permute.xlu0 %6012
  %6078 = vrot.lane.b32.xlu0 %v4566, 56
  %v6079 = vpop.permute.xlu0 %6078
  %6080 = vrot.lane.b32.xlu0 %v4568, 56
  %v6081 = vpop.permute.xlu0 %6080
  %6082 = vrot.lane.b32.xlu0 %v4571, 56
  %v6083 = vpop.permute.xlu0 %6082
  %6084 = vrot.lane.b32.xlu0 %v4573, 56
  %v6085 = vpop.permute.xlu0 %6084
  %6086 = vrot.lane.b32.xlu0 %v4576, 56
  %v6087 = vpop.permute.xlu0 %6086
  %6088 = vrot.lane.b32.xlu0 %v4578, 56
  %v6089 = vpop.permute.xlu0 %6088
  %6090 = vrot.lane.b32.xlu0 %v4581, 56
  %v6091 = vpop.permute.xlu0 %6090
  %6092 = vrot.lane.b32.xlu0 %v4583, 56
  %v6093 = vpop.permute.xlu0 %6092
  %6094 = vrot.lane.b32.xlu0 %v4586, 56
  %v6095 = vpop.permute.xlu0 %6094
  %6096 = vrot.lane.b32.xlu0 %v4588, 56
  %v6097 = vpop.permute.xlu0 %6096
  %6098 = vrot.lane.b32.xlu0 %v4591, 56
  %v6099 = vpop.permute.xlu0 %6098
  %6100 = vrot.lane.b32.xlu0 %v4593, 56
  %v6101 = vpop.permute.xlu0 %6100
  %6102 = vrot.lane.b32.xlu0 %v4596, 56
  %v6103 = vpop.permute.xlu0 %6102
  %6104 = vrot.lane.b32.xlu0 %v4598, 56
  %v6105 = vpop.permute.xlu0 %6104
  %6106 = vrot.lane.b32.xlu0 %v4601, 56
  %v6107 = vpop.permute.xlu0 %6106
  %6108 = vrot.lane.b32.xlu0 %v4603, 56
  %v6109 = vpop.permute.xlu0 %6108
  %6110 = vrot.lane.b32.xlu0 %v4606, 56
  %v6111 = vpop.permute.xlu0 %6110
  %6112 = vrot.lane.b32.xlu0 %v4608, 56
  %v6113 = vpop.permute.xlu0 %6112
  %6114 = vrot.lane.b32.xlu0 %v4611, 56
  %v6115 = vpop.permute.xlu0 %6114
  %6116 = vrot.lane.b32.xlu0 %v4613, 56
  %v6117 = vpop.permute.xlu0 %6116
  %6118 = vrot.lane.b32.xlu0 %v4616, 56
  %v6119 = vpop.permute.xlu0 %6118
  %6120 = vrot.lane.b32.xlu0 %v4618, 56
  %v6121 = vpop.permute.xlu0 %6120
  %6122 = vrot.lane.b32.xlu0 %v4621, 56
  %v6123 = vpop.permute.xlu0 %6122
  %6124 = vrot.lane.b32.xlu0 %v4623, 56
  %v6125 = vpop.permute.xlu0 %6124
  %6126 = vrot.lane.b32.xlu0 %v4626, 56
  %v6127 = vpop.permute.xlu0 %6126
  %6128 = vrot.lane.b32.xlu0 %v4628, 56
  %v6129 = vpop.permute.xlu0 %6128
  %6130 = vrot.lane.b32.xlu0 %v4631, 56
  %v6131 = vpop.permute.xlu0 %6130
  %6132 = vrot.lane.b32.xlu0 %v4633, 56
  %v6133 = vpop.permute.xlu0 %6132
  %6134 = vrot.lane.b32.xlu0 %v4882, 56
  %v6135 = vpop.permute.xlu0 %6134
  %6136 = vrot.lane.b32.xlu0 %v4884, 56
  %v6137 = vpop.permute.xlu0 %6136
  %6138 = vrot.lane.b32.xlu0 %v4908, 56
  %v6139 = vpop.permute.xlu0 %6138
  %6140 = vrot.lane.b32.xlu0 %v4910, 56
  %v6141 = vpop.permute.xlu0 %6140
  %6142 = vrot.lane.b32.xlu0 %v4646, 56
  %v6143 = vpop.permute.xlu0 %6142
  %6144 = vrot.lane.b32.xlu0 %v4648, 56
  %v6145 = vpop.permute.xlu0 %6144
  %6146 = vrot.lane.b32.xlu0 %v4651, 56
  %v6147 = vpop.permute.xlu0 %6146
  %6148 = vrot.lane.b32.xlu0 %v4653, 56
  %v6149 = vpop.permute.xlu0 %6148
  %6150 = vrot.lane.b32.xlu0 %v4656, 56
  %v6151 = vpop.permute.xlu0 %6150
  %6152 = vrot.lane.b32.xlu0 %v4658, 56
  %v6153 = vpop.permute.xlu0 %6152
  %6154 = vrot.lane.b32.xlu0 %v4661, 56
  %v6155 = vpop.permute.xlu0 %6154
  %6156 = vrot.lane.b32.xlu0 %v4663, 56
  %v6157 = vpop.permute.xlu0 %6156
  %6158 = vrot.lane.b32.xlu0 %v4666, 56
  %v6159 = vpop.permute.xlu0 %6158
  %6160 = vrot.lane.b32.xlu0 %v4668, 56
  %v6161 = vpop.permute.xlu0 %6160
  %6162 = vrot.lane.b32.xlu0 %v4671, 56
  %v6163 = vpop.permute.xlu0 %6162
  %6164 = vrot.lane.b32.xlu0 %v4673, 56
  %v6165 = vpop.permute.xlu0 %6164
  %6166 = vrot.lane.b32.xlu0 %v4676, 56
  %v6167 = vpop.permute.xlu0 %6166
  %6168 = vrot.lane.b32.xlu0 %v4678, 56
  %v6169 = vpop.permute.xlu0 %6168
  %6170 = vrot.lane.b32.xlu0 %v4681, 56
  %v6171 = vpop.permute.xlu0 %6170
  %6172 = vrot.lane.b32.xlu0 %v4683, 56
  %v6173 = vpop.permute.xlu0 %6172
  %6174 = vrot.lane.b32.xlu0 %v4686, 56
  %v6175 = vpop.permute.xlu0 %6174
  %6176 = vrot.lane.b32.xlu0 %v4688, 56
  %v6177 = vpop.permute.xlu0 %6176
  %6178 = vrot.lane.b32.xlu0 %v4691, 56
  %v6179 = vpop.permute.xlu0 %6178
  %6180 = vrot.lane.b32.xlu0 %v4693, 56
  %v6181 = vpop.permute.xlu0 %6180
  %6182 = vrot.lane.b32.xlu0 %v4696, 56
  %v6183 = vpop.permute.xlu0 %6182
  %6184 = vrot.lane.b32.xlu0 %v4698, 56
  %v6185 = vpop.permute.xlu0 %6184
  %6186 = vrot.lane.b32.xlu0 %v4701, 56
  %v6187 = vpop.permute.xlu0 %6186
  %6188 = vrot.lane.b32.xlu0 %v4703, 56
  %v6189 = vpop.permute.xlu0 %6188
  %6190 = vrot.lane.b32.xlu0 %v4706, 56
  %v6191 = vpop.permute.xlu0 %6190
  %6192 = vrot.lane.b32.xlu0 %v4708, 56
  %v6193 = vpop.permute.xlu0 %6192
  %6194 = vrot.lane.b32.xlu0 %v4711, 56
  %v6195 = vpop.permute.xlu0 %6194
  %6196 = vrot.lane.b32.xlu0 %v4713, 56
  %v6197 = vpop.permute.xlu0 %6196
  %6198 = vrot.lane.b32.xlu0 %v4887, 56
  %v6199 = vpop.permute.xlu0 %6198
  %6200 = vrot.lane.b32.xlu0 %v4889, 56
  %v6201 = vpop.permute.xlu0 %6200
  %6202 = vrot.lane.b32.xlu0 %v4913, 56
  %v6203 = vpop.permute.xlu0 %6202
  %6204 = vrot.lane.b32.xlu0 %v4915, 56
  %v6205 = vpop.permute.xlu0 %6204
  %6270 = vrot.lane.b32.xlu0 %v4726, 64
  %v6271 = vpop.permute.xlu0 %6270
  %6272 = vrot.lane.b32.xlu0 %v4728, 64
  %v6273 = vpop.permute.xlu0 %6272
  %6274 = vrot.lane.b32.xlu0 %v4731, 64
  %v6275 = vpop.permute.xlu0 %6274
  %6276 = vrot.lane.b32.xlu0 %v4733, 64
  %v6277 = vpop.permute.xlu0 %6276
  %6278 = vrot.lane.b32.xlu0 %v4736, 64
  %v6279 = vpop.permute.xlu0 %6278
  %6280 = vrot.lane.b32.xlu0 %v4738, 64
  %v6281 = vpop.permute.xlu0 %6280
  %6282 = vrot.lane.b32.xlu0 %v4741, 64
  %v6283 = vpop.permute.xlu0 %6282
  %6284 = vrot.lane.b32.xlu0 %v4743, 64
  %v6285 = vpop.permute.xlu0 %6284
  %6286 = vrot.lane.b32.xlu0 %v4746, 64
  %v6287 = vpop.permute.xlu0 %6286
  %6288 = vrot.lane.b32.xlu0 %v4748, 64
  %v6289 = vpop.permute.xlu0 %6288
  %6290 = vrot.lane.b32.xlu0 %v4751, 64
  %v6291 = vpop.permute.xlu0 %6290
  %6292 = vrot.lane.b32.xlu0 %v4753, 64
  %v6293 = vpop.permute.xlu0 %6292
  %6294 = vrot.lane.b32.xlu0 %v4756, 64
  %v6295 = vpop.permute.xlu0 %6294
  %6296 = vrot.lane.b32.xlu0 %v4758, 64
  %v6297 = vpop.permute.xlu0 %6296
  %6298 = vrot.lane.b32.xlu0 %v4761, 64
  %v6299 = vpop.permute.xlu0 %6298
  %6300 = vrot.lane.b32.xlu0 %v4763, 64
  %v6301 = vpop.permute.xlu0 %6300
  %6302 = vrot.lane.b32.xlu0 %v4766, 64
  %v6303 = vpop.permute.xlu0 %6302
  %6304 = vrot.lane.b32.xlu0 %v4768, 64
  %v6305 = vpop.permute.xlu0 %6304
  %6306 = vrot.lane.b32.xlu0 %v4771, 64
  %v6307 = vpop.permute.xlu0 %6306
  %6308 = vrot.lane.b32.xlu0 %v4773, 64
  %v6309 = vpop.permute.xlu0 %6308
  %6310 = vrot.lane.b32.xlu0 %v4776, 64
  %v6311 = vpop.permute.xlu0 %6310
  %6312 = vrot.lane.b32.xlu0 %v4778, 64
  %v6313 = vpop.permute.xlu0 %6312
  %6314 = vrot.lane.b32.xlu0 %v4781, 64
  %v6315 = vpop.permute.xlu0 %6314
  %6316 = vrot.lane.b32.xlu0 %v4783, 64
  %v6317 = vpop.permute.xlu0 %6316
  %6318 = vrot.lane.b32.xlu0 %v4786, 64
  %v6319 = vpop.permute.xlu0 %6318
  %6320 = vrot.lane.b32.xlu0 %v4788, 64
  %v6321 = vpop.permute.xlu0 %6320
  %6322 = vrot.lane.b32.xlu0 %v4791, 64
  %v6323 = vpop.permute.xlu0 %6322
  %6324 = vrot.lane.b32.xlu0 %v4793, 64
  %v6325 = vpop.permute.xlu0 %6324
  %6326 = vrot.lane.b32.xlu0 %v4892, 64
  %v6327 = vpop.permute.xlu0 %6326
  %6328 = vrot.lane.b32.xlu0 %v4894, 64
  %v6329 = vpop.permute.xlu0 %6328
  %6330 = vrot.lane.b32.xlu0 %v4918, 64
  %v6331 = vpop.permute.xlu0 %6330
  %6332 = vrot.lane.b32.xlu0 %v4920, 64
  %v6333 = vpop.permute.xlu0 %6332
  %6334 = vrot.lane.b32.xlu0 %v4806, 64
  %v6335 = vpop.permute.xlu0 %6334
  %6336 = vrot.lane.b32.xlu0 %v4808, 64
  %v6337 = vpop.permute.xlu0 %6336
  %6338 = vrot.lane.b32.xlu0 %v4811, 64
  %v6339 = vpop.permute.xlu0 %6338
  %6340 = vrot.lane.b32.xlu0 %v4813, 64
  %v6341 = vpop.permute.xlu0 %6340
  %6342 = vrot.lane.b32.xlu0 %v4816, 64
  %v6343 = vpop.permute.xlu0 %6342
  %6344 = vrot.lane.b32.xlu0 %v4818, 64
  %v6345 = vpop.permute.xlu0 %6344
  %6346 = vrot.lane.b32.xlu0 %v4821, 64
  %v6347 = vpop.permute.xlu0 %6346
  %6348 = vrot.lane.b32.xlu0 %v4823, 64
  %v6349 = vpop.permute.xlu0 %6348
  %6350 = vrot.lane.b32.xlu0 %v4826, 64
  %v6351 = vpop.permute.xlu0 %6350
  %6352 = vrot.lane.b32.xlu0 %v4828, 64
  %v6353 = vpop.permute.xlu0 %6352
  %6354 = vrot.lane.b32.xlu0 %v4831, 64
  %v6355 = vpop.permute.xlu0 %6354
  %6356 = vrot.lane.b32.xlu0 %v4833, 64
  %v6357 = vpop.permute.xlu0 %6356
  %6358 = vrot.lane.b32.xlu0 %v4836, 64
  %v6359 = vpop.permute.xlu0 %6358
  %6360 = vrot.lane.b32.xlu0 %v4838, 64
  %v6361 = vpop.permute.xlu0 %6360
  %6362 = vrot.lane.b32.xlu0 %v4841, 64
  %v6363 = vpop.permute.xlu0 %6362
  %6364 = vrot.lane.b32.xlu0 %v4843, 64
  %v6365 = vpop.permute.xlu0 %6364
  %6366 = vrot.lane.b32.xlu0 %v4846, 64
  %v6367 = vpop.permute.xlu0 %6366
  %6368 = vrot.lane.b32.xlu0 %v4848, 64
  %v6369 = vpop.permute.xlu0 %6368
  %6370 = vrot.lane.b32.xlu0 %v4851, 64
  %v6371 = vpop.permute.xlu0 %6370
  %6372 = vrot.lane.b32.xlu0 %v4853, 64
  %v6373 = vpop.permute.xlu0 %6372
  %6374 = vrot.lane.b32.xlu0 %v4856, 64
  %v6375 = vpop.permute.xlu0 %6374
  %6376 = vrot.lane.b32.xlu0 %v4858, 64
  %v6377 = vpop.permute.xlu0 %6376
  %6378 = vrot.lane.b32.xlu0 %v4861, 64
  %v6379 = vpop.permute.xlu0 %6378
  %6380 = vrot.lane.b32.xlu0 %v4863, 64
  %v6381 = vpop.permute.xlu0 %6380
  %6382 = vrot.lane.b32.xlu0 %v4866, 64
  %v6383 = vpop.permute.xlu0 %6382
  %6384 = vrot.lane.b32.xlu0 %v4868, 64
  %v6385 = vpop.permute.xlu0 %6384
  %6386 = vrot.lane.b32.xlu0 %v4871, 64
  %v6387 = vpop.permute.xlu0 %6386
  %6388 = vrot.lane.b32.xlu0 %v4873, 64
  %v6389 = vpop.permute.xlu0 %6388
  %6390 = vrot.lane.b32.xlu0 %v4897, 64
  %v6391 = vpop.permute.xlu0 %6390
  %6392 = vrot.lane.b32.xlu0 %v4899, 64
  %v6393 = vpop.permute.xlu0 %6392
  %6394 = vrot.lane.b32.xlu0 %v4923, 64
  %v6395 = vpop.permute.xlu0 %6394
  %6396 = vrot.lane.b32.xlu0 %v4925, 64
  %v6397 = vpop.permute.xlu0 %6396
  %v6462 = vsel %vm2448, %v4350, %v4927
  %v6463 = vsel %vm2448, %v4351, %v4929
  %v6464 = vsel %vm2448, %v4353, %v4931
  %v6465 = vsel %vm2448, %v4354, %v4933
  %v6466 = vsel %vm2448, %v4356, %v4935
  %v6467 = vsel %vm2448, %v4357, %v4937
  %v6468 = vsel %vm2448, %v4359, %v4939
  %v6469 = vsel %vm2448, %v4360, %v4941
  %v6470 = vsel %vm2448, %v4362, %v4943
  %v6471 = vsel %vm2448, %v4363, %v4945
  %v6472 = vsel %vm2448, %v4365, %v4947
  %v6473 = vsel %vm2448, %v4366, %v4949
  %v6474 = vsel %vm2448, %v4368, %v4951
  %v6475 = vsel %vm2448, %v4369, %v4953
  %v6476 = vsel %vm2448, %v4371, %v4955
  %v6477 = vsel %vm2448, %v4372, %v4957
  %v6478 = vsel %vm2448, %v4374, %v4959
  %v6479 = vsel %vm2448, %v4375, %v4961
  %v6480 = vsel %vm2448, %v4377, %v4963
  %v6481 = vsel %vm2448, %v4378, %v4965
  %v6482 = vsel %vm2448, %v4380, %v4967
  %v6483 = vsel %vm2448, %v4381, %v4969
  %v6484 = vsel %vm2448, %v4383, %v4971
  %v6485 = vsel %vm2448, %v4384, %v4973
  %v6486 = vsel %vm2448, %v4386, %v4975
  %v6487 = vsel %vm2448, %v4387, %v4977
  %v6488 = vsel %vm2448, %v4389, %v4979
  %v6489 = vsel %vm2448, %v4390, %v4981
  %v6490 = vsel %vm2448, %v4392, %v4983
  %v6491 = vsel %vm2448, %v4393, %v4985
  %v6492 = vsel %vm2448, %v4395, %v4987
  %v6493 = vsel %vm2448, %v4396, %v4989
  %v6494 = vsel %vm2448, %v4404, %v4991
  %v6495 = vsel %vm2448, %v4405, %v4993
  %v6496 = vsel %vm2448, %v4407, %v4995
  %v6497 = vsel %vm2448, %v4408, %v4997
  %v6498 = vsel %vm2448, %v4410, %v4999
  %v6499 = vsel %vm2448, %v4411, %v5001
  %v6500 = vsel %vm2448, %v4413, %v5003
  %v6501 = vsel %vm2448, %v4414, %v5005
  %v6502 = vsel %vm2448, %v4416, %v5007
  %v6503 = vsel %vm2448, %v4417, %v5009
  %v6504 = vsel %vm2448, %v4419, %v5011
  %v6505 = vsel %vm2448, %v4420, %v5013
  %v6506 = vsel %vm2448, %v4422, %v5015
  %v6507 = vsel %vm2448, %v4423, %v5017
  %v6508 = vsel %vm2448, %v4425, %v5019
  %v6509 = vsel %vm2448, %v4426, %v5021
  %v6510 = vsel %vm2448, %v4428, %v5023
  %v6511 = vsel %vm2448, %v4429, %v5025
  %v6512 = vsel %vm2448, %v4431, %v5027
  %v6513 = vsel %vm2448, %v4432, %v5029
  %v6514 = vsel %vm2448, %v4434, %v5031
  %v6515 = vsel %vm2448, %v4435, %v5033
  %v6516 = vsel %vm2448, %v4437, %v5035
  %v6517 = vsel %vm2448, %v4438, %v5037
  %v6518 = vsel %vm2448, %v4440, %v5039
  %v6519 = vsel %vm2448, %v4441, %v5041
  %v6520 = vsel %vm2448, %v4443, %v5043
  %v6521 = vsel %vm2448, %v4444, %v5045
  %v6522 = vsel %vm2448, %v4446, %v5047
  %v6523 = vsel %vm2448, %v4447, %v5049
  %v6524 = vsel %vm2448, %v4449, %v5051
  %v6525 = vsel %vm2448, %v4450, %v5053
  %v6526 = vsel %vm2578, %v6462, %v5119
  %v6527 = vsel %vm2578, %v6463, %v5121
  %v6528 = vsel %vm2578, %v6464, %v5123
  %v6529 = vsel %vm2578, %v6465, %v5125
  %v6530 = vsel %vm2578, %v6466, %v5127
  %v6531 = vsel %vm2578, %v6467, %v5129
  %v6532 = vsel %vm2578, %v6468, %v5131
  %v6533 = vsel %vm2578, %v6469, %v5133
  %v6534 = vsel %vm2578, %v6470, %v5135
  %v6535 = vsel %vm2578, %v6471, %v5137
  %v6536 = vsel %vm2578, %v6472, %v5139
  %v6537 = vsel %vm2578, %v6473, %v5141
  %v6538 = vsel %vm2578, %v6474, %v5143
  %v6539 = vsel %vm2578, %v6475, %v5145
  %v6540 = vsel %vm2578, %v6476, %v5147
  %v6541 = vsel %vm2578, %v6477, %v5149
  %v6542 = vsel %vm2578, %v6478, %v5151
  %v6543 = vsel %vm2578, %v6479, %v5153
  %v6544 = vsel %vm2578, %v6480, %v5155
  %v6545 = vsel %vm2578, %v6481, %v5157
  %v6546 = vsel %vm2578, %v6482, %v5159
  %v6547 = vsel %vm2578, %v6483, %v5161
  %v6548 = vsel %vm2578, %v6484, %v5163
  %v6549 = vsel %vm2578, %v6485, %v5165
  %v6550 = vsel %vm2578, %v6486, %v5167
  %v6551 = vsel %vm2578, %v6487, %v5169
  %v6552 = vsel %vm2578, %v6488, %v5171
  %v6553 = vsel %vm2578, %v6489, %v5173
  %v6554 = vsel %vm2578, %v6490, %v5175
  %v6555 = vsel %vm2578, %v6491, %v5177
  %v6556 = vsel %vm2578, %v6492, %v5179
  %v6557 = vsel %vm2578, %v6493, %v5181
  %v6558 = vsel %vm2578, %v6494, %v5183
  %v6559 = vsel %vm2578, %v6495, %v5185
  %v6560 = vsel %vm2578, %v6496, %v5187
  %v6561 = vsel %vm2578, %v6497, %v5189
  %v6562 = vsel %vm2578, %v6498, %v5191
  %v6563 = vsel %vm2578, %v6499, %v5193
  %v6564 = vsel %vm2578, %v6500, %v5195
  %v6565 = vsel %vm2578, %v6501, %v5197
  %v6566 = vsel %vm2578, %v6502, %v5199
  %v6567 = vsel %vm2578, %v6503, %v5201
  %v6568 = vsel %vm2578, %v6504, %v5203
  %v6569 = vsel %vm2578, %v6505, %v5205
  %v6570 = vsel %vm2578, %v6506, %v5207
  %v6571 = vsel %vm2578, %v6507, %v5209
  %v6572 = vsel %vm2578, %v6508, %v5211
  %v6573 = vsel %vm2578, %v6509, %v5213
  %v6574 = vsel %vm2578, %v6510, %v5215
  %v6575 = vsel %vm2578, %v6511, %v5217
  %v6576 = vsel %vm2578, %v6512, %v5219
  %v6577 = vsel %vm2578, %v6513, %v5221
  %v6578 = vsel %vm2578, %v6514, %v5223
  %v6579 = vsel %vm2578, %v6515, %v5225
  %v6580 = vsel %vm2578, %v6516, %v5227
  %v6581 = vsel %vm2578, %v6517, %v5229
  %v6582 = vsel %vm2578, %v6518, %v5231
  %v6583 = vsel %vm2578, %v6519, %v5233
  %v6584 = vsel %vm2578, %v6520, %v5235
  %v6585 = vsel %vm2578, %v6521, %v5237
  %v6586 = vsel %vm2578, %v6522, %v5239
  %v6587 = vsel %vm2578, %v6523, %v5241
  %v6588 = vsel %vm2578, %v6524, %v5243
  %v6589 = vsel %vm2578, %v6525, %v5245
  %v6590 = vsel %vm2708, %v6526, %v5311
  %v6591 = vsel %vm2708, %v6527, %v5313
  %v6592 = vsel %vm2708, %v6528, %v5315
  %v6593 = vsel %vm2708, %v6529, %v5317
  %v6594 = vsel %vm2708, %v6530, %v5319
  %v6595 = vsel %vm2708, %v6531, %v5321
  %v6596 = vsel %vm2708, %v6532, %v5323
  %v6597 = vsel %vm2708, %v6533, %v5325
  %v6598 = vsel %vm2708, %v6534, %v5327
  %v6599 = vsel %vm2708, %v6535, %v5329
  %v6600 = vsel %vm2708, %v6536, %v5331
  %v6601 = vsel %vm2708, %v6537, %v5333
  %v6602 = vsel %vm2708, %v6538, %v5335
  %v6603 = vsel %vm2708, %v6539, %v5337
  %v6604 = vsel %vm2708, %v6540, %v5339
  %v6605 = vsel %vm2708, %v6541, %v5341
  %v6606 = vsel %vm2708, %v6542, %v5343
  %v6607 = vsel %vm2708, %v6543, %v5345
  %v6608 = vsel %vm2708, %v6544, %v5347
  %v6609 = vsel %vm2708, %v6545, %v5349
  %v6610 = vsel %vm2708, %v6546, %v5351
  %v6611 = vsel %vm2708, %v6547, %v5353
  %v6612 = vsel %vm2708, %v6548, %v5355
  %v6613 = vsel %vm2708, %v6549, %v5357
  %v6614 = vsel %vm2708, %v6550, %v5359
  %v6615 = vsel %vm2708, %v6551, %v5361
  %v6616 = vsel %vm2708, %v6552, %v5363
  %v6617 = vsel %vm2708, %v6553, %v5365
  %v6618 = vsel %vm2708, %v6554, %v5367
  %v6619 = vsel %vm2708, %v6555, %v5369
  %v6620 = vsel %vm2708, %v6556, %v5371
  %v6621 = vsel %vm2708, %v6557, %v5373
  %v6622 = vsel %vm2708, %v6558, %v5375
  %v6623 = vsel %vm2708, %v6559, %v5377
  %v6624 = vsel %vm2708, %v6560, %v5379
  %v6625 = vsel %vm2708, %v6561, %v5381
  %v6626 = vsel %vm2708, %v6562, %v5383
  %v6627 = vsel %vm2708, %v6563, %v5385
  %v6628 = vsel %vm2708, %v6564, %v5387
  %v6629 = vsel %vm2708, %v6565, %v5389
  %v6630 = vsel %vm2708, %v6566, %v5391
  %v6631 = vsel %vm2708, %v6567, %v5393
  %v6632 = vsel %vm2708, %v6568, %v5395
  %v6633 = vsel %vm2708, %v6569, %v5397
  %v6634 = vsel %vm2708, %v6570, %v5399
  %v6635 = vsel %vm2708, %v6571, %v5401
  %v6636 = vsel %vm2708, %v6572, %v5403
  %v6637 = vsel %vm2708, %v6573, %v5405
  %v6638 = vsel %vm2708, %v6574, %v5407
  %v6639 = vsel %vm2708, %v6575, %v5409
  %v6640 = vsel %vm2708, %v6576, %v5411
  %v6641 = vsel %vm2708, %v6577, %v5413
  %v6642 = vsel %vm2708, %v6578, %v5415
  %v6643 = vsel %vm2708, %v6579, %v5417
  %v6644 = vsel %vm2708, %v6580, %v5419
  %v6645 = vsel %vm2708, %v6581, %v5421
  %v6646 = vsel %vm2708, %v6582, %v5423
  %v6647 = vsel %vm2708, %v6583, %v5425
  %v6648 = vsel %vm2708, %v6584, %v5427
  %v6649 = vsel %vm2708, %v6585, %v5429
  %v6650 = vsel %vm2708, %v6586, %v5431
  %v6651 = vsel %vm2708, %v6587, %v5433
  %v6652 = vsel %vm2708, %v6588, %v5435
  %v6653 = vsel %vm2708, %v6589, %v5437
  %v6654 = vsel %vm2838, %v6590, %v5503
  %v6655 = vsel %vm2838, %v6591, %v5505
  %v6656 = vsel %vm2838, %v6592, %v5507
  %v6657 = vsel %vm2838, %v6593, %v5509
  %v6658 = vsel %vm2838, %v6594, %v5511
  %v6659 = vsel %vm2838, %v6595, %v5513
  %v6660 = vsel %vm2838, %v6596, %v5515
  %v6661 = vsel %vm2838, %v6597, %v5517
  %v6662 = vsel %vm2838, %v6598, %v5519
  %v6663 = vsel %vm2838, %v6599, %v5521
  %v6664 = vsel %vm2838, %v6600, %v5523
  %v6665 = vsel %vm2838, %v6601, %v5525
  %v6666 = vsel %vm2838, %v6602, %v5527
  %v6667 = vsel %vm2838, %v6603, %v5529
  %v6668 = vsel %vm2838, %v6604, %v5531
  %v6669 = vsel %vm2838, %v6605, %v5533
  %v6670 = vsel %vm2838, %v6606, %v5535
  %v6671 = vsel %vm2838, %v6607, %v5537
  %v6672 = vsel %vm2838, %v6608, %v5539
  %v6673 = vsel %vm2838, %v6609, %v5541
  %v6674 = vsel %vm2838, %v6610, %v5543
  %v6675 = vsel %vm2838, %v6611, %v5545
  %v6676 = vsel %vm2838, %v6612, %v5547
  %v6677 = vsel %vm2838, %v6613, %v5549
  %v6678 = vsel %vm2838, %v6614, %v5551
  %v6679 = vsel %vm2838, %v6615, %v5553
  %v6680 = vsel %vm2838, %v6616, %v5555
  %v6681 = vsel %vm2838, %v6617, %v5557
  %v6682 = vsel %vm2838, %v6618, %v5559
  %v6683 = vsel %vm2838, %v6619, %v5561
  %v6684 = vsel %vm2838, %v6620, %v5563
  %v6685 = vsel %vm2838, %v6621, %v5565
  %v6686 = vsel %vm2838, %v6622, %v5567
  %v6687 = vsel %vm2838, %v6623, %v5569
  %v6688 = vsel %vm2838, %v6624, %v5571
  %v6689 = vsel %vm2838, %v6625, %v5573
  %v6690 = vsel %vm2838, %v6626, %v5575
  %v6691 = vsel %vm2838, %v6627, %v5577
  %v6692 = vsel %vm2838, %v6628, %v5579
  %v6693 = vsel %vm2838, %v6629, %v5581
  %v6694 = vsel %vm2838, %v6630, %v5583
  %v6695 = vsel %vm2838, %v6631, %v5585
  %v6696 = vsel %vm2838, %v6632, %v5587
  %v6697 = vsel %vm2838, %v6633, %v5589
  %v6698 = vsel %vm2838, %v6634, %v5591
  %v6699 = vsel %vm2838, %v6635, %v5593
  %v6700 = vsel %vm2838, %v6636, %v5595
  %v6701 = vsel %vm2838, %v6637, %v5597
  %v6702 = vsel %vm2838, %v6638, %v5599
  %v6703 = vsel %vm2838, %v6639, %v5601
  %v6704 = vsel %vm2838, %v6640, %v5603
  %v6705 = vsel %vm2838, %v6641, %v5605
  %v6706 = vsel %vm2838, %v6642, %v5607
  %v6707 = vsel %vm2838, %v6643, %v5609
  %v6708 = vsel %vm2838, %v6644, %v5611
  %v6709 = vsel %vm2838, %v6645, %v5613
  %v6710 = vsel %vm2838, %v6646, %v5615
  %v6711 = vsel %vm2838, %v6647, %v5617
  %v6712 = vsel %vm2838, %v6648, %v5619
  %v6713 = vsel %vm2838, %v6649, %v5621
  %v6714 = vsel %vm2838, %v6650, %v5623
  %v6715 = vsel %vm2838, %v6651, %v5625
  %v6716 = vsel %vm2838, %v6652, %v5627
  %v6717 = vsel %vm2838, %v6653, %v5629
  %vm6718 = vcmask 326656
  %v6719 = vsel %vm6718, %v6654, %v5695
  %v6720 = vsel %vm6718, %v6655, %v5697
  %v6721 = vsel %vm6718, %v6656, %v5699
  %v6722 = vsel %vm6718, %v6657, %v5701
  %v6723 = vsel %vm6718, %v6658, %v5703
  %v6724 = vsel %vm6718, %v6659, %v5705
  %v6725 = vsel %vm6718, %v6660, %v5707
  %v6726 = vsel %vm6718, %v6661, %v5709
  %v6727 = vsel %vm6718, %v6662, %v5711
  %v6728 = vsel %vm6718, %v6663, %v5713
  %v6729 = vsel %vm6718, %v6664, %v5715
  %v6730 = vsel %vm6718, %v6665, %v5717
  %v6731 = vsel %vm6718, %v6666, %v5719
  %v6732 = vsel %vm6718, %v6667, %v5721
  %v6733 = vsel %vm6718, %v6668, %v5723
  %v6734 = vsel %vm6718, %v6669, %v5725
  %v6735 = vsel %vm6718, %v6670, %v5727
  %v6736 = vsel %vm6718, %v6671, %v5729
  %v6737 = vsel %vm6718, %v6672, %v5731
  %v6738 = vsel %vm6718, %v6673, %v5733
  %v6739 = vsel %vm6718, %v6674, %v5735
  %v6740 = vsel %vm6718, %v6675, %v5737
  %v6741 = vsel %vm6718, %v6676, %v5739
  %v6742 = vsel %vm6718, %v6677, %v5741
  %v6743 = vsel %vm6718, %v6678, %v5743
  %v6744 = vsel %vm6718, %v6679, %v5745
  %v6745 = vsel %vm6718, %v6680, %v5747
  %v6746 = vsel %vm6718, %v6681, %v5749
  %v6747 = vsel %vm6718, %v6682, %v5751
  %v6748 = vsel %vm6718, %v6683, %v5753
  %v6749 = vsel %vm6718, %v6684, %v5755
  %v6750 = vsel %vm6718, %v6685, %v5757
  %v6751 = vsel %vm6718, %v6686, %v5759
  %v6752 = vsel %vm6718, %v6687, %v5761
  %v6753 = vsel %vm6718, %v6688, %v5763
  %v6754 = vsel %vm6718, %v6689, %v5765
  %v6755 = vsel %vm6718, %v6690, %v5767
  %v6756 = vsel %vm6718, %v6691, %v5769
  %v6757 = vsel %vm6718, %v6692, %v5771
  %v6758 = vsel %vm6718, %v6693, %v5773
  %v6759 = vsel %vm6718, %v6694, %v5775
  %v6760 = vsel %vm6718, %v6695, %v5777
  %v6761 = vsel %vm6718, %v6696, %v5779
  %v6762 = vsel %vm6718, %v6697, %v5781
  %v6763 = vsel %vm6718, %v6698, %v5783
  %v6764 = vsel %vm6718, %v6699, %v5785
  %v6765 = vsel %vm6718, %v6700, %v5787
  %v6766 = vsel %vm6718, %v6701, %v5789
  %v6767 = vsel %vm6718, %v6702, %v5791
  %v6768 = vsel %vm6718, %v6703, %v5793
  %v6769 = vsel %vm6718, %v6704, %v5795
  %v6770 = vsel %vm6718, %v6705, %v5797
  %v6771 = vsel %vm6718, %v6706, %v5799
  %v6772 = vsel %vm6718, %v6707, %v5801
  %v6773 = vsel %vm6718, %v6708, %v5803
  %v6774 = vsel %vm6718, %v6709, %v5805
  %v6775 = vsel %vm6718, %v6710, %v5807
  %v6776 = vsel %vm6718, %v6711, %v5809
  %v6777 = vsel %vm6718, %v6712, %v5811
  %v6778 = vsel %vm6718, %v6713, %v5813
  %v6779 = vsel %vm6718, %v6714, %v5815
  %v6780 = vsel %vm6718, %v6715, %v5817
  %v6781 = vsel %vm6718, %v6716, %v5819
  %v6782 = vsel %vm6718, %v6717, %v5821
  %vm6783 = vcmask 392192
  %v6784 = vsel %vm6783, %v6719, %v5887
  %v6785 = vsel %vm6783, %v6720, %v5889
  %v6786 = vsel %vm6783, %v6721, %v5891
  %v6787 = vsel %vm6783, %v6722, %v5893
  %v6788 = vsel %vm6783, %v6723, %v5895
  %v6789 = vsel %vm6783, %v6724, %v5897
  %v6790 = vsel %vm6783, %v6725, %v5899
  %v6791 = vsel %vm6783, %v6726, %v5901
  %v6792 = vsel %vm6783, %v6727, %v5903
  %v6793 = vsel %vm6783, %v6728, %v5905
  %v6794 = vsel %vm6783, %v6729, %v5907
  %v6795 = vsel %vm6783, %v6730, %v5909
  %v6796 = vsel %vm6783, %v6731, %v5911
  %v6797 = vsel %vm6783, %v6732, %v5913
  %v6798 = vsel %vm6783, %v6733, %v5915
  %v6799 = vsel %vm6783, %v6734, %v5917
  %v6800 = vsel %vm6783, %v6735, %v5919
  %v6801 = vsel %vm6783, %v6736, %v5921
  %v6802 = vsel %vm6783, %v6737, %v5923
  %v6803 = vsel %vm6783, %v6738, %v5925
  %v6804 = vsel %vm6783, %v6739, %v5927
  %v6805 = vsel %vm6783, %v6740, %v5929
  %v6806 = vsel %vm6783, %v6741, %v5931
  %v6807 = vsel %vm6783, %v6742, %v5933
  %v6808 = vsel %vm6783, %v6743, %v5935
  %v6809 = vsel %vm6783, %v6744, %v5937
  %v6810 = vsel %vm6783, %v6745, %v5939
  %v6811 = vsel %vm6783, %v6746, %v5941
  %v6812 = vsel %vm6783, %v6747, %v5943
  %v6813 = vsel %vm6783, %v6748, %v5945
  %v6814 = vsel %vm6783, %v6749, %v5947
  %v6815 = vsel %vm6783, %v6750, %v5949
  %v6816 = vsel %vm6783, %v6751, %v5951
  %v6817 = vsel %vm6783, %v6752, %v5953
  %v6818 = vsel %vm6783, %v6753, %v5955
  %v6819 = vsel %vm6783, %v6754, %v5957
  %v6820 = vsel %vm6783, %v6755, %v5959
  %v6821 = vsel %vm6783, %v6756, %v5961
  %v6822 = vsel %vm6783, %v6757, %v5963
  %v6823 = vsel %vm6783, %v6758, %v5965
  %v6824 = vsel %vm6783, %v6759, %v5967
  %v6825 = vsel %vm6783, %v6760, %v5969
  %v6826 = vsel %vm6783, %v6761, %v5971
  %v6827 = vsel %vm6783, %v6762, %v5973
  %v6828 = vsel %vm6783, %v6763, %v5975
  %v6829 = vsel %vm6783, %v6764, %v5977
  %v6830 = vsel %vm6783, %v6765, %v5979
  %v6831 = vsel %vm6783, %v6766, %v5981
  %v6832 = vsel %vm6783, %v6767, %v5983
  %v6833 = vsel %vm6783, %v6768, %v5985
  %v6834 = vsel %vm6783, %v6769, %v5987
  %v6835 = vsel %vm6783, %v6770, %v5989
  %v6836 = vsel %vm6783, %v6771, %v5991
  %v6837 = vsel %vm6783, %v6772, %v5993
  %v6838 = vsel %vm6783, %v6773, %v5995
  %v6839 = vsel %vm6783, %v6774, %v5997
  %v6840 = vsel %vm6783, %v6775, %v5999
  %v6841 = vsel %vm6783, %v6776, %v6001
  %v6842 = vsel %vm6783, %v6777, %v6003
  %v6843 = vsel %vm6783, %v6778, %v6005
  %v6844 = vsel %vm6783, %v6779, %v6007
  %v6845 = vsel %vm6783, %v6780, %v6009
  %v6846 = vsel %vm6783, %v6781, %v6011
  %v6847 = vsel %vm6783, %v6782, %v6013
  %vm6848 = vcmask 457728
  %v6849 = vsel %vm6848, %v6784, %v6079
  %v6850 = vsel %vm6848, %v6785, %v6081
  %v6851 = vsel %vm6848, %v6786, %v6083
  %v6852 = vsel %vm6848, %v6787, %v6085
  %v6853 = vsel %vm6848, %v6788, %v6087
  %v6854 = vsel %vm6848, %v6789, %v6089
  %v6855 = vsel %vm6848, %v6790, %v6091
  %v6856 = vsel %vm6848, %v6791, %v6093
  %v6857 = vsel %vm6848, %v6792, %v6095
  %v6858 = vsel %vm6848, %v6793, %v6097
  %v6859 = vsel %vm6848, %v6794, %v6099
  %v6860 = vsel %vm6848, %v6795, %v6101
  %v6861 = vsel %vm6848, %v6796, %v6103
  %v6862 = vsel %vm6848, %v6797, %v6105
  %v6863 = vsel %vm6848, %v6798, %v6107
  %v6864 = vsel %vm6848, %v6799, %v6109
  %v6865 = vsel %vm6848, %v6800, %v6111
  %v6866 = vsel %vm6848, %v6801, %v6113
  %v6867 = vsel %vm6848, %v6802, %v6115
  %v6868 = vsel %vm6848, %v6803, %v6117
  %v6869 = vsel %vm6848, %v6804, %v6119
  %v6870 = vsel %vm6848, %v6805, %v6121
  %v6871 = vsel %vm6848, %v6806, %v6123
  %v6872 = vsel %vm6848, %v6807, %v6125
  %v6873 = vsel %vm6848, %v6808, %v6127
  %v6874 = vsel %vm6848, %v6809, %v6129
  %v6875 = vsel %vm6848, %v6810, %v6131
  %v6876 = vsel %vm6848, %v6811, %v6133
  %v6877 = vsel %vm6848, %v6812, %v6135
  %v6878 = vsel %vm6848, %v6813, %v6137
  %v6879 = vsel %vm6848, %v6814, %v6139
  %v6880 = vsel %vm6848, %v6815, %v6141
  %v6881 = vsel %vm6848, %v6816, %v6143
  %v6882 = vsel %vm6848, %v6817, %v6145
  %v6883 = vsel %vm6848, %v6818, %v6147
  %v6884 = vsel %vm6848, %v6819, %v6149
  %v6885 = vsel %vm6848, %v6820, %v6151
  %v6886 = vsel %vm6848, %v6821, %v6153
  %v6887 = vsel %vm6848, %v6822, %v6155
  %v6888 = vsel %vm6848, %v6823, %v6157
  %v6889 = vsel %vm6848, %v6824, %v6159
  %v6890 = vsel %vm6848, %v6825, %v6161
  %v6891 = vsel %vm6848, %v6826, %v6163
  %v6892 = vsel %vm6848, %v6827, %v6165
  %v6893 = vsel %vm6848, %v6828, %v6167
  %v6894 = vsel %vm6848, %v6829, %v6169
  %v6895 = vsel %vm6848, %v6830, %v6171
  %v6896 = vsel %vm6848, %v6831, %v6173
  %v6897 = vsel %vm6848, %v6832, %v6175
  %v6898 = vsel %vm6848, %v6833, %v6177
  %v6899 = vsel %vm6848, %v6834, %v6179
  %v6900 = vsel %vm6848, %v6835, %v6181
  %v6901 = vsel %vm6848, %v6836, %v6183
  %v6902 = vsel %vm6848, %v6837, %v6185
  %v6903 = vsel %vm6848, %v6838, %v6187
  %v6904 = vsel %vm6848, %v6839, %v6189
  %v6905 = vsel %vm6848, %v6840, %v6191
  %v6906 = vsel %vm6848, %v6841, %v6193
  %v6907 = vsel %vm6848, %v6842, %v6195
  %v6908 = vsel %vm6848, %v6843, %v6197
  %v6909 = vsel %vm6848, %v6844, %v6199
  %v6910 = vsel %vm6848, %v6845, %v6201
  %v6911 = vsel %vm6848, %v6846, %v6203
  %v6912 = vsel %vm6848, %v6847, %v6205
  %vm6913 = vcmask 523264
  %v6914 = vsel %vm6913, %v6849, %v6271
  %v6915 = vsel %vm6913, %v6850, %v6273
  %v6916 = vsel %vm6913, %v6851, %v6275
  %v6917 = vsel %vm6913, %v6852, %v6277
  %v6918 = vsel %vm6913, %v6853, %v6279
  %v6919 = vsel %vm6913, %v6854, %v6281
  %v6920 = vsel %vm6913, %v6855, %v6283
  %v6921 = vsel %vm6913, %v6856, %v6285
  %v6922 = vsel %vm6913, %v6857, %v6287
  %v6923 = vsel %vm6913, %v6858, %v6289
  %v6924 = vsel %vm6913, %v6859, %v6291
  %v6925 = vsel %vm6913, %v6860, %v6293
  %v6926 = vsel %vm6913, %v6861, %v6295
  %v6927 = vsel %vm6913, %v6862, %v6297
  %v6928 = vsel %vm6913, %v6863, %v6299
  %v6929 = vsel %vm6913, %v6864, %v6301
  %v6930 = vsel %vm6913, %v6865, %v6303
  %v6931 = vsel %vm6913, %v6866, %v6305
  %v6932 = vsel %vm6913, %v6867, %v6307
  %v6933 = vsel %vm6913, %v6868, %v6309
  %v6934 = vsel %vm6913, %v6869, %v6311
  %v6935 = vsel %vm6913, %v6870, %v6313
  %v6936 = vsel %vm6913, %v6871, %v6315
  %v6937 = vsel %vm6913, %v6872, %v6317
  %v6938 = vsel %vm6913, %v6873, %v6319
  %v6939 = vsel %vm6913, %v6874, %v6321
  %v6940 = vsel %vm6913, %v6875, %v6323
  %v6941 = vsel %vm6913, %v6876, %v6325
  %v6942 = vsel %vm6913, %v6877, %v6327
  %v6943 = vsel %vm6913, %v6878, %v6329
  %v6944 = vsel %vm6913, %v6879, %v6331
  %v6945 = vsel %vm6913, %v6880, %v6333
  %v6946 = vsel %vm6913, %v6881, %v6335
  %v6947 = vsel %vm6913, %v6882, %v6337
  %v6948 = vsel %vm6913, %v6883, %v6339
  %v6949 = vsel %vm6913, %v6884, %v6341
  %v6950 = vsel %vm6913, %v6885, %v6343
  %v6951 = vsel %vm6913, %v6886, %v6345
  %v6952 = vsel %vm6913, %v6887, %v6347
  %v6953 = vsel %vm6913, %v6888, %v6349
  %v6954 = vsel %vm6913, %v6889, %v6351
  %v6955 = vsel %vm6913, %v6890, %v6353
  %v6956 = vsel %vm6913, %v6891, %v6355
  %v6957 = vsel %vm6913, %v6892, %v6357
  %v6958 = vsel %vm6913, %v6893, %v6359
  %v6959 = vsel %vm6913, %v6894, %v6361
  %v6960 = vsel %vm6913, %v6895, %v6363
  %v6961 = vsel %vm6913, %v6896, %v6365
  %v6962 = vsel %vm6913, %v6897, %v6367
  %v6963 = vsel %vm6913, %v6898, %v6369
  %v6964 = vsel %vm6913, %v6899, %v6371
  %v6965 = vsel %vm6913, %v6900, %v6373
  %v6966 = vsel %vm6913, %v6901, %v6375
  %v6967 = vsel %vm6913, %v6902, %v6377
  %v6968 = vsel %vm6913, %v6903, %v6379
  %v6969 = vsel %vm6913, %v6904, %v6381
  %v6970 = vsel %vm6913, %v6905, %v6383
  %v6971 = vsel %vm6913, %v6906, %v6385
  %v6972 = vsel %vm6913, %v6907, %v6387
  %v6973 = vsel %vm6913, %v6908, %v6389
  %v6974 = vsel %vm6913, %v6909, %v6391
  %v6975 = vsel %vm6913, %v6910, %v6393
  %v6976 = vsel %vm6913, %v6911, %v6395
  %v6977 = vsel %vm6913, %v6912, %v6397
  %v6978 = vpack.c.bf16 %v6915, %v6914
  %v6979 = vpack.c.bf16 %v6917, %v6916
  %v6980 = vpack.c.bf16 %v6919, %v6918
  %v6981 = vpack.c.bf16 %v6921, %v6920
  %v6982 = vpack.c.bf16 %v6923, %v6922
  %v6983 = vpack.c.bf16 %v6925, %v6924
  %v6984 = vpack.c.bf16 %v6927, %v6926
  %v6985 = vpack.c.bf16 %v6929, %v6928
  %v6986 = vpack.c.bf16 %v6931, %v6930
  %v6987 = vpack.c.bf16 %v6933, %v6932
  %v6988 = vpack.c.bf16 %v6935, %v6934
  %v6989 = vpack.c.bf16 %v6937, %v6936
  %v6990 = vpack.c.bf16 %v6939, %v6938
  %v6991 = vpack.c.bf16 %v6941, %v6940
  %v6992 = vpack.c.bf16 %v6943, %v6942
  %v6993 = vpack.c.bf16 %v6945, %v6944
  %v6994 = vpack.c.bf16 %v6947, %v6946
  %v6995 = vpack.c.bf16 %v6949, %v6948
  %v6996 = vpack.c.bf16 %v6951, %v6950
  %v6997 = vpack.c.bf16 %v6953, %v6952
  %v6998 = vpack.c.bf16 %v6955, %v6954
  %v6999 = vpack.c.bf16 %v6957, %v6956
  %v7000 = vpack.c.bf16 %v6959, %v6958
  %v7001 = vpack.c.bf16 %v6961, %v6960
  %v7002 = vpack.c.bf16 %v6963, %v6962
  %v7003 = vpack.c.bf16 %v6965, %v6964
  %v7004 = vpack.c.bf16 %v6967, %v6966
  %v7005 = vpack.c.bf16 %v6969, %v6968
  %v7006 = vpack.c.bf16 %v6971, %v6970
  %v7007 = vpack.c.bf16 %v6973, %v6972
  %v7008 = vpack.c.bf16 %v6975, %v6974
  %v7009 = vpack.c.bf16 %v6977, %v6976
  %v7010 = vld [vmem:[%s4] sm:$0xf]
  %v7011 = vld [vmem:[%s4 + $0x4] sm:$0xf]
  %v7012 = vld [vmem:[%s4 + $0x8] sm:$0xf]
  %v7013 = vld [vmem:[%s4 + $0xc] sm:$0xf]
  %v7014 = vld [vmem:[%s4 + $0x10] sm:$0xf]
  %v7015 = vld [vmem:[%s4 + $0x14] sm:$0xf]
  %v7016 = vld [vmem:[%s4 + $0x18] sm:$0xf]
  %v7017 = vld [vmem:[%s4 + $0x1c] sm:$0xf]
  %v7018 = vld [vmem:[%s4 + $0x20] sm:$0xf]
  %v7019 = vlaneseq
  %v7020 = vshrl.u32 %v7019, 7
  %v7021 = vsub.s32 0, %v7020
  %v7022 = vrot.slane %v28, %v7021
  %v7032 = vunpack.c.l.b16 %v7010
  %v7033 = vunpack.c.l.b16 %v7011
  %v7034 = vunpack.c.l.b16 %v7012
  %v7035 = vunpack.c.l.b16 %v7013
  %v7036 = vunpack.c.l.b16 %v7014
  %v7037 = vunpack.c.l.b16 %v7015
  %v7038 = vunpack.c.l.b16 %v7016
  %v7039 = vunpack.c.l.b16 %v7017
  %v7040 = vunpack.c.l.b16 %v7018
  %v7041 = vpack.c.b16 %v7033, %v7032
  %v7042 = vpack.c.b16 %v7035, %v7034
  %v7043 = vpack.c.b16 %v7037, %v7036
  %v7044 = vpack.c.b16 %v7039, %v7038
  %v7045 = vpack.c.b16 %v7040, %v7040
  %vm7050 = vcmask 588800
  %v7052 = vsel %vm7050, %v6978, 0
  %v7055 = vsel %vm7050, %v6979, 0
  %v7058 = vsel %vm7050, %v6980, 0
  %v7061 = vsel %vm7050, %v6981, 0
  %v7064 = vsel %vm7050, %v6982, 0
  %v7067 = vsel %vm7050, %v6983, 0
  %v7070 = vsel %vm7050, %v6984, 0
  %v7073 = vsel %vm7050, %v6985, 0
  %v7076 = vsel %vm7050, %v6986, 0
  %v7079 = vsel %vm7050, %v6987, 0
  %v7082 = vsel %vm7050, %v6988, 0
  %v7085 = vsel %vm7050, %v6989, 0
  %v7088 = vsel %vm7050, %v6990, 0
  %v7091 = vsel %vm7050, %v6991, 0
  %v7094 = vsel %vm7050, %v6992, 0
  %v7097 = vsel %vm7050, %v6993, 0
  %v7100 = vsel %vm7050, %v6994, 0
  %v7103 = vsel %vm7050, %v6995, 0
  %v7106 = vsel %vm7050, %v6996, 0
  %v7109 = vsel %vm7050, %v6997, 0
  %v7112 = vsel %vm7050, %v6998, 0
  %v7115 = vsel %vm7050, %v6999, 0
  %v7118 = vsel %vm7050, %v7000, 0
  %v7121 = vsel %vm7050, %v7001, 0
  %v7124 = vsel %vm7050, %v7002, 0
  %v7127 = vsel %vm7050, %v7003, 0
  %v7130 = vsel %vm7050, %v7004, 0
  %v7133 = vsel %vm7050, %v7005, 0
  %v7136 = vsel %vm7050, %v7006, 0
  %v7139 = vsel %vm7050, %v7007, 0
  %v7142 = vsel %vm7050, %v7008, 0
  %v7145 = vsel %vm7050, %v7009, 0
  %vm7147 = vcmask 1043456
  %v7149 = vsel %vm7147, %v7045, 0
  %7151 = vmatprep.subr.bf16.mxu0 0
  %7152 = vmatpush1.bf16.msra.mxu0 %v7041
  %7153 = vmatprep.subr.bf16.mxu0 0
  %7154 = vmatpush1.bf16.msra.mxu0 %v7042
  %7155 = vmatprep.subr.bf16.mxu0 0
  %7156 = vmatpush1.bf16.msra.mxu0 %v7043
  %7157 = vmatprep.subr.bf16.mxu0 0
  %7158 = vmatpush1.bf16.msra.mxu0 %v7044
  %7159 = vmatprep.subr.bf16.mxu0 0
  %7160 = vmatpush1.bf16.msra.mxu0 %v7149
  %7161 = vmatprep.subr.bf16.mxu0 0
  %7162 = vmatpush1.bf16.msra.mxu0 0
  %7163 = vmatprep.subr.bf16.mxu0 0
  %7164 = vmatpush1.bf16.msra.mxu0 0
  %7165 = vmatprep.subr.bf16.mxu0 0
  %7166 = vmatpush1.bf16.msra.mxu0 0
  %7167 = vmatprep.subr.bf16.mxu0 0
  %7168 = vmatpush1.bf16.msra.mxu0 0
  %7169 = vmatprep.subr.bf16.mxu0 0
  %7170 = vmatpush1.bf16.msra.mxu0 0
  %7171 = vmatprep.subr.bf16.mxu0 0
  %7172 = vmatpush1.bf16.msra.mxu0 0
  %7173 = vmatprep.subr.bf16.mxu0 0
  %7174 = vmatpush1.bf16.msra.mxu0 0
  %7175 = vmatprep.subr.bf16.mxu0 0
  %7176 = vmatpush1.bf16.msra.mxu0 0
  %7177 = vmatprep.subr.bf16.mxu0 0
  %7178 = vmatpush1.bf16.msra.mxu0 0
  %7179 = vmatprep.subr.bf16.mxu0 0
  %7180 = vmatpush1.bf16.msra.mxu0 0
  %7181 = vmatprep.subr.bf16.mxu0 0
  %7182 = vmatpush1.bf16.msra.mxu0 0
  %7183 = vmatprep.mubr.bf16.mxu0 0
  %7184 = vmatmul.mubr.bf16.gmra.mrb[0].mxu0 %v7052
  %v7185 = vpop.f32.mrb[0].mxu0
  %v7186 = vadd.f32 %v7022, %v7185
  %v7187 = vpop.f32.mrb[0].mxu0
  %v7188 = vpop.f32.mrb[0].mxu0
  %v7189 = vadd.f32 %v7022, %v7188
  %v7190 = vpop.f32.mrb[0].mxu0
  %7191 = vmatprep.mubr.bf16.mxu0 0
  %7192 = vmatmul.mubr.bf16.gmra.mrb[0].mxu0 %v7055
  %v7193 = vpop.f32.mrb[0].mxu0
  %v7194 = vadd.f32 %v7022, %v7193
  %v7195 = vpop.f32.mrb[0].mxu0
  %v7196 = vpop.f32.mrb[0].mxu0
  %v7197 = vadd.f32 %v7022, %v7196
  %v7198 = vpop.f32.mrb[0].mxu0
  %7199 = vmatprep.mubr.bf16.mxu0 0
  %7200 = vmatmul.mubr.bf16.gmra.mrb[0].mxu0 %v7058
  %v7201 = vpop.f32.mrb[0].mxu0
  %v7202 = vadd.f32 %v7022, %v7201
  %v7203 = vpop.f32.mrb[0].mxu0
  %v7204 = vpop.f32.mrb[0].mxu0
  %v7205 = vadd.f32 %v7022, %v7204
  %v7206 = vpop.f32.mrb[0].mxu0
  %7207 = vmatprep.mubr.bf16.mxu0 0
  %7208 = vmatmul.mubr.bf16.gmra.mrb[0].mxu0 %v7061
  %v7209 = vpop.f32.mrb[0].mxu0
  %v7210 = vadd.f32 %v7022, %v7209
  %v7211 = vpop.f32.mrb[0].mxu0
  %v7212 = vpop.f32.mrb[0].mxu0
  %v7213 = vadd.f32 %v7022, %v7212
  %v7214 = vpop.f32.mrb[0].mxu0
  %7215 = vmatprep.mubr.bf16.mxu0 0
  %7216 = vmatmul.mubr.bf16.gmra.mrb[0].mxu0 %v7064
  %v7217 = vpop.f32.mrb[0].mxu0
  %v7218 = vadd.f32 %v7022, %v7217
  %v7219 = vpop.f32.mrb[0].mxu0
  %v7220 = vpop.f32.mrb[0].mxu0
  %v7221 = vadd.f32 %v7022, %v7220
  %v7222 = vpop.f32.mrb[0].mxu0
  %7223 = vmatprep.mubr.bf16.mxu0 0
  %7224 = vmatmul.mubr.bf16.gmra.mrb[0].mxu0 %v7067
  %v7225 = vpop.f32.mrb[0].mxu0
  %v7226 = vadd.f32 %v7022, %v7225
  %v7227 = vpop.f32.mrb[0].mxu0
  %v7228 = vpop.f32.mrb[0].mxu0
  %v7229 = vadd.f32 %v7022, %v7228
  %v7230 = vpop.f32.mrb[0].mxu0
  %7231 = vmatprep.mubr.bf16.mxu0 0
  %7232 = vmatmul.mubr.bf16.gmra.mrb[0].mxu0 %v7070
  %v7233 = vpop.f32.mrb[0].mxu0
  %v7234 = vadd.f32 %v7022, %v7233
  %v7235 = vpop.f32.mrb[0].mxu0
  %v7236 = vpop.f32.mrb[0].mxu0
  %v7237 = vadd.f32 %v7022, %v7236
  %v7238 = vpop.f32.mrb[0].mxu0
  %7239 = vmatprep.mubr.bf16.mxu0 0
  %7240 = vmatmul.mubr.bf16.gmra.mrb[0].mxu0 %v7073
  %v7241 = vpop.f32.mrb[0].mxu0
  %v7242 = vadd.f32 %v7022, %v7241
  %v7243 = vpop.f32.mrb[0].mxu0
  %v7244 = vpop.f32.mrb[0].mxu0
  %v7245 = vadd.f32 %v7022, %v7244
  %v7246 = vpop.f32.mrb[0].mxu0
  %7247 = vmatprep.mubr.bf16.mxu0 0
  %7248 = vmatmul.mubr.bf16.gmra.mrb[0].mxu0 %v7076
  %v7249 = vpop.f32.mrb[0].mxu0
  %v7250 = vadd.f32 %v7022, %v7249
  %v7251 = vpop.f32.mrb[0].mxu0
  %v7252 = vpop.f32.mrb[0].mxu0
  %v7253 = vadd.f32 %v7022, %v7252
  %v7254 = vpop.f32.mrb[0].mxu0
  %7255 = vmatprep.mubr.bf16.mxu0 0
  %7256 = vmatmul.mubr.bf16.gmra.mrb[0].mxu0 %v7079
  %v7257 = vpop.f32.mrb[0].mxu0
  %v7258 = vadd.f32 %v7022, %v7257
  %v7259 = vpop.f32.mrb[0].mxu0
  %v7260 = vpop.f32.mrb[0].mxu0
  %v7261 = vadd.f32 %v7022, %v7260
  %v7262 = vpop.f32.mrb[0].mxu0
  %7263 = vmatprep.mubr.bf16.mxu0 0
  %7264 = vmatmul.mubr.bf16.gmra.mrb[0].mxu0 %v7082
  %v7265 = vpop.f32.mrb[0].mxu0
  %v7266 = vadd.f32 %v7022, %v7265
  %v7267 = vpop.f32.mrb[0].mxu0
  %v7268 = vpop.f32.mrb[0].mxu0
  %v7269 = vadd.f32 %v7022, %v7268
  %v7270 = vpop.f32.mrb[0].mxu0
  %7271 = vmatprep.mubr.bf16.mxu0 0
  %7272 = vmatmul.mubr.bf16.gmra.mrb[0].mxu0 %v7085
  %v7273 = vpop.f32.mrb[0].mxu0
  %v7274 = vadd.f32 %v7022, %v7273
  %v7275 = vpop.f32.mrb[0].mxu0
  %v7276 = vpop.f32.mrb[0].mxu0
  %v7277 = vadd.f32 %v7022, %v7276
  %v7278 = vpop.f32.mrb[0].mxu0
  %7279 = vmatprep.mubr.bf16.mxu0 0
  %7280 = vmatmul.mubr.bf16.gmra.mrb[0].mxu0 %v7088
  %v7281 = vpop.f32.mrb[0].mxu0
  %v7282 = vadd.f32 %v7022, %v7281
  %v7283 = vpop.f32.mrb[0].mxu0
  %v7284 = vpop.f32.mrb[0].mxu0
  %v7285 = vadd.f32 %v7022, %v7284
  %v7286 = vpop.f32.mrb[0].mxu0
  %7287 = vmatprep.mubr.bf16.mxu0 0
  %7288 = vmatmul.mubr.bf16.gmra.mrb[0].mxu0 %v7091
  %v7289 = vpop.f32.mrb[0].mxu0
  %v7290 = vadd.f32 %v7022, %v7289
  %v7291 = vpop.f32.mrb[0].mxu0
  %v7292 = vpop.f32.mrb[0].mxu0
  %v7293 = vadd.f32 %v7022, %v7292
  %v7294 = vpop.f32.mrb[0].mxu0
  %7295 = vmatprep.mubr.bf16.mxu0 0
  %7296 = vmatmul.mubr.bf16.gmra.mrb[0].mxu0 %v7094
  %v7297 = vpop.f32.mrb[0].mxu0
  %v7298 = vadd.f32 %v7022, %v7297
  %v7299 = vpop.f32.mrb[0].mxu0
  %v7300 = vpop.f32.mrb[0].mxu0
  %v7301 = vadd.f32 %v7022, %v7300
  %v7302 = vpop.f32.mrb[0].mxu0
  %7303 = vmatprep.mubr.bf16.mxu0 0
  %7304 = vmatmul.mubr.bf16.gmra.mrb[0].mxu0 %v7097
  %v7305 = vpop.f32.mrb[0].mxu0
  %v7306 = vadd.f32 %v7022, %v7305
  %v7307 = vpop.f32.mrb[0].mxu0
  %v7308 = vpop.f32.mrb[0].mxu0
  %v7309 = vadd.f32 %v7022, %v7308
  %v7310 = vpop.f32.mrb[0].mxu0
  %7311 = vmatprep.mubr.bf16.mxu0 0
  %7312 = vmatmul.mubr.bf16.gmra.mrb[0].mxu0 %v7100
  %v7313 = vpop.f32.mrb[0].mxu0
  %v7314 = vadd.f32 %v7022, %v7313
  %v7315 = vpop.f32.mrb[0].mxu0
  %v7316 = vpop.f32.mrb[0].mxu0
  %v7317 = vadd.f32 %v7022, %v7316
  %v7318 = vpop.f32.mrb[0].mxu0
  %7319 = vmatprep.mubr.bf16.mxu0 0
  %7320 = vmatmul.mubr.bf16.gmra.mrb[0].mxu0 %v7103
  %v7321 = vpop.f32.mrb[0].mxu0
  %v7322 = vadd.f32 %v7022, %v7321
  %v7323 = vpop.f32.mrb[0].mxu0
  %v7324 = vpop.f32.mrb[0].mxu0
  %v7325 = vadd.f32 %v7022, %v7324
  %v7326 = vpop.f32.mrb[0].mxu0
  %7327 = vmatprep.mubr.bf16.mxu0 0
  %7328 = vmatmul.mubr.bf16.gmra.mrb[0].mxu0 %v7106
  %v7329 = vpop.f32.mrb[0].mxu0
  %v7330 = vadd.f32 %v7022, %v7329
  %v7331 = vpop.f32.mrb[0].mxu0
  %v7332 = vpop.f32.mrb[0].mxu0
  %v7333 = vadd.f32 %v7022, %v7332
  %v7334 = vpop.f32.mrb[0].mxu0
  %7335 = vmatprep.mubr.bf16.mxu0 0
  %7336 = vmatmul.mubr.bf16.gmra.mrb[0].mxu0 %v7109
  %v7337 = vpop.f32.mrb[0].mxu0
  %v7338 = vadd.f32 %v7022, %v7337
  %v7339 = vpop.f32.mrb[0].mxu0
  %v7340 = vpop.f32.mrb[0].mxu0
  %v7341 = vadd.f32 %v7022, %v7340
  %v7342 = vpop.f32.mrb[0].mxu0
  %7343 = vmatprep.mubr.bf16.mxu0 0
  %7344 = vmatmul.mubr.bf16.gmra.mrb[0].mxu0 %v7112
  %v7345 = vpop.f32.mrb[0].mxu0
  %v7346 = vadd.f32 %v7022, %v7345
  %v7347 = vpop.f32.mrb[0].mxu0
  %v7348 = vpop.f32.mrb[0].mxu0
  %v7349 = vadd.f32 %v7022, %v7348
  %v7350 = vpop.f32.mrb[0].mxu0
  %7351 = vmatprep.mubr.bf16.mxu0 0
  %7352 = vmatmul.mubr.bf16.gmra.mrb[0].mxu0 %v7115
  %v7353 = vpop.f32.mrb[0].mxu0
  %v7354 = vadd.f32 %v7022, %v7353
  %v7355 = vpop.f32.mrb[0].mxu0
  %v7356 = vpop.f32.mrb[0].mxu0
  %v7357 = vadd.f32 %v7022, %v7356
  %v7358 = vpop.f32.mrb[0].mxu0
  %7359 = vmatprep.mubr.bf16.mxu0 0
  %7360 = vmatmul.mubr.bf16.gmra.mrb[0].mxu0 %v7118
  %v7361 = vpop.f32.mrb[0].mxu0
  %v7362 = vadd.f32 %v7022, %v7361
  %v7363 = vpop.f32.mrb[0].mxu0
  %v7364 = vpop.f32.mrb[0].mxu0
  %v7365 = vadd.f32 %v7022, %v7364
  %v7366 = vpop.f32.mrb[0].mxu0
  %7367 = vmatprep.mubr.bf16.mxu0 0
  %7368 = vmatmul.mubr.bf16.gmra.mrb[0].mxu0 %v7121
  %v7369 = vpop.f32.mrb[0].mxu0
  %v7370 = vadd.f32 %v7022, %v7369
  %v7371 = vpop.f32.mrb[0].mxu0
  %v7372 = vpop.f32.mrb[0].mxu0
  %v7373 = vadd.f32 %v7022, %v7372
  %v7374 = vpop.f32.mrb[0].mxu0
  %7375 = vmatprep.mubr.bf16.mxu0 0
  %7376 = vmatmul.mubr.bf16.gmra.mrb[0].mxu0 %v7124
  %v7377 = vpop.f32.mrb[0].mxu0
  %v7378 = vadd.f32 %v7022, %v7377
  %v7379 = vpop.f32.mrb[0].mxu0
  %v7380 = vpop.f32.mrb[0].mxu0
  %v7381 = vadd.f32 %v7022, %v7380
  %v7382 = vpop.f32.mrb[0].mxu0
  %7383 = vmatprep.mubr.bf16.mxu0 0
  %7384 = vmatmul.mubr.bf16.gmra.mrb[0].mxu0 %v7127
  %v7385 = vpop.f32.mrb[0].mxu0
  %v7386 = vadd.f32 %v7022, %v7385
  %v7387 = vpop.f32.mrb[0].mxu0
  %v7388 = vpop.f32.mrb[0].mxu0
  %v7389 = vadd.f32 %v7022, %v7388
  %v7390 = vpop.f32.mrb[0].mxu0
  %7391 = vmatprep.mubr.bf16.mxu0 0
  %7392 = vmatmul.mubr.bf16.gmra.mrb[0].mxu0 %v7130
  %v7393 = vpop.f32.mrb[0].mxu0
  %v7394 = vadd.f32 %v7022, %v7393
  %v7395 = vpop.f32.mrb[0].mxu0
  %v7396 = vpop.f32.mrb[0].mxu0
  %v7397 = vadd.f32 %v7022, %v7396
  %v7398 = vpop.f32.mrb[0].mxu0
  %7399 = vmatprep.mubr.bf16.mxu0 0
  %7400 = vmatmul.mubr.bf16.gmra.mrb[0].mxu0 %v7133
  %v7401 = vpop.f32.mrb[0].mxu0
  %v7402 = vadd.f32 %v7022, %v7401
  %v7403 = vpop.f32.mrb[0].mxu0
  %v7404 = vpop.f32.mrb[0].mxu0
  %v7405 = vadd.f32 %v7022, %v7404
  %v7406 = vpop.f32.mrb[0].mxu0
  %7407 = vmatprep.mubr.bf16.mxu0 0
  %7408 = vmatmul.mubr.bf16.gmra.mrb[0].mxu0 %v7136
  %v7409 = vpop.f32.mrb[0].mxu0
  %v7410 = vadd.f32 %v7022, %v7409
  %v7411 = vpop.f32.mrb[0].mxu0
  %v7412 = vpop.f32.mrb[0].mxu0
  %v7413 = vadd.f32 %v7022, %v7412
  %v7414 = vpop.f32.mrb[0].mxu0
  %7415 = vmatprep.mubr.bf16.mxu0 0
  %7416 = vmatmul.mubr.bf16.gmra.mrb[0].mxu0 %v7139
  %v7417 = vpop.f32.mrb[0].mxu0
  %v7418 = vadd.f32 %v7022, %v7417
  %v7419 = vpop.f32.mrb[0].mxu0
  %v7420 = vpop.f32.mrb[0].mxu0
  %v7421 = vadd.f32 %v7022, %v7420
  %v7422 = vpop.f32.mrb[0].mxu0
  %7423 = vmatprep.mubr.bf16.mxu0 0
  %7424 = vmatmul.mubr.bf16.gmra.mrb[0].mxu0 %v7142
  %v7425 = vpop.f32.mrb[0].mxu0
  %v7426 = vadd.f32 %v7022, %v7425
  %v7427 = vpop.f32.mrb[0].mxu0
  %v7428 = vpop.f32.mrb[0].mxu0
  %v7429 = vadd.f32 %v7022, %v7428
  %v7430 = vpop.f32.mrb[0].mxu0
  %7431 = vmatprep.mubr.bf16.mxu0 0
  %7432 = vmatmul.mubr.bf16.gmra.mrb[0].mxu0 %v7145
  %v7433 = vpop.f32.mrb[0].mxu0
  %v7434 = vadd.f32 %v7022, %v7433
  %v7435 = vpop.f32.mrb[0].mxu0
  %v7436 = vpop.f32.mrb[0].mxu0
  %v7437 = vadd.f32 %v7022, %v7436
  %v7438 = vpop.f32.mrb[0].mxu0
  %7439 = vdwg.mxu0
  %v7440 = vmax.f32 %v7186, 0.0
  %v7441 = vmax.f32 %v7189, 0.0
  %v7442 = vmax.f32 %v7194, 0.0
  %v7443 = vmax.f32 %v7197, 0.0
  %v7444 = vmax.f32 %v7202, 0.0
  %v7445 = vmax.f32 %v7205, 0.0
  %v7446 = vmax.f32 %v7210, 0.0
  %v7447 = vmax.f32 %v7213, 0.0
  %v7448 = vmax.f32 %v7218, 0.0
  %v7449 = vmax.f32 %v7221, 0.0
  %v7450 = vmax.f32 %v7226, 0.0
  %v7451 = vmax.f32 %v7229, 0.0
  %v7452 = vmax.f32 %v7234, 0.0
  %v7453 = vmax.f32 %v7237, 0.0
  %v7454 = vmax.f32 %v7242, 0.0
  %v7455 = vmax.f32 %v7245, 0.0
  %v7456 = vmax.f32 %v7250, 0.0
  %v7457 = vmax.f32 %v7253, 0.0
  %v7458 = vmax.f32 %v7258, 0.0
  %v7459 = vmax.f32 %v7261, 0.0
  %v7460 = vmax.f32 %v7266, 0.0
  %v7461 = vmax.f32 %v7269, 0.0
  %v7462 = vmax.f32 %v7274, 0.0
  %v7463 = vmax.f32 %v7277, 0.0
  %v7464 = vmax.f32 %v7282, 0.0
  %v7465 = vmax.f32 %v7285, 0.0
  %v7466 = vmax.f32 %v7290, 0.0
  %v7467 = vmax.f32 %v7293, 0.0
  %v7468 = vmax.f32 %v7298, 0.0
  %v7469 = vmax.f32 %v7301, 0.0
  %v7470 = vmax.f32 %v7306, 0.0
  %v7471 = vmax.f32 %v7309, 0.0
  %v7472 = vmax.f32 %v7314, 0.0
  %v7473 = vmax.f32 %v7317, 0.0
  %v7474 = vmax.f32 %v7322, 0.0
  %v7475 = vmax.f32 %v7325, 0.0
  %v7476 = vmax.f32 %v7330, 0.0
  %v7477 = vmax.f32 %v7333, 0.0
  %v7478 = vmax.f32 %v7338, 0.0
  %v7479 = vmax.f32 %v7341, 0.0
  %v7480 = vmax.f32 %v7346, 0.0
  %v7481 = vmax.f32 %v7349, 0.0
  %v7482 = vmax.f32 %v7354, 0.0
  %v7483 = vmax.f32 %v7357, 0.0
  %v7484 = vmax.f32 %v7362, 0.0
  %v7485 = vmax.f32 %v7365, 0.0
  %v7486 = vmax.f32 %v7370, 0.0
  %v7487 = vmax.f32 %v7373, 0.0
  %v7488 = vmax.f32 %v7378, 0.0
  %v7489 = vmax.f32 %v7381, 0.0
  %v7490 = vmax.f32 %v7386, 0.0
  %v7491 = vmax.f32 %v7389, 0.0
  %v7492 = vmax.f32 %v7394, 0.0
  %v7493 = vmax.f32 %v7397, 0.0
  %v7494 = vmax.f32 %v7402, 0.0
  %v7495 = vmax.f32 %v7405, 0.0
  %v7496 = vmax.f32 %v7410, 0.0
  %v7497 = vmax.f32 %v7413, 0.0
  %v7498 = vmax.f32 %v7418, 0.0
  %v7499 = vmax.f32 %v7421, 0.0
  %v7500 = vmax.f32 %v7426, 0.0
  %v7501 = vmax.f32 %v7429, 0.0
  %v7502 = vmax.f32 %v7434, 0.0
  %v7503 = vmax.f32 %v7437, 0.0
  %v7504 = vsel %vm2448, %v7440, 0.0
  %v7505 = vsel %vm2448, %v7441, 0.0
  %v7506 = vadd.f32 %v7504, %v7505
  %v7507 = vsel %vm2448, %v7442, 0.0
  %v7508 = vadd.f32 %v7506, %v7507
  %v7509 = vsel %vm2448, %v7443, 0.0
  %v7510 = vadd.f32 %v7508, %v7509
  %v7511 = vsel %vm2448, %v7444, 0.0
  %v7512 = vadd.f32 %v7510, %v7511
  %v7513 = vsel %vm2448, %v7445, 0.0
  %v7514 = vadd.f32 %v7512, %v7513
  %v7515 = vsel %vm2448, %v7446, 0.0
  %v7516 = vadd.f32 %v7514, %v7515
  %v7517 = vsel %vm2448, %v7447, 0.0
  %v7518 = vadd.f32 %v7516, %v7517
  %v7519 = vsel %vm2448, %v7448, 0.0
  %v7520 = vadd.f32 %v7518, %v7519
  %v7521 = vsel %vm2448, %v7449, 0.0
  %v7522 = vadd.f32 %v7520, %v7521
  %v7523 = vsel %vm2448, %v7450, 0.0
  %v7524 = vadd.f32 %v7522, %v7523
  %v7525 = vsel %vm2448, %v7451, 0.0
  %v7526 = vadd.f32 %v7524, %v7525
  %v7527 = vsel %vm2448, %v7452, 0.0
  %v7528 = vadd.f32 %v7526, %v7527
  %v7529 = vsel %vm2448, %v7453, 0.0
  %v7530 = vadd.f32 %v7528, %v7529
  %v7531 = vsel %vm2448, %v7454, 0.0
  %v7532 = vadd.f32 %v7530, %v7531
  %v7533 = vsel %vm2448, %v7455, 0.0
  %v7534 = vadd.f32 %v7532, %v7533
  %v7535 = vsel %vm2448, %v7456, 0.0
  %v7536 = vadd.f32 %v7534, %v7535
  %v7537 = vsel %vm2448, %v7457, 0.0
  %v7538 = vadd.f32 %v7536, %v7537
  %v7539 = vsel %vm2448, %v7458, 0.0
  %v7540 = vadd.f32 %v7538, %v7539
  %v7541 = vsel %vm2448, %v7459, 0.0
  %v7542 = vadd.f32 %v7540, %v7541
  %v7543 = vsel %vm2448, %v7460, 0.0
  %v7544 = vadd.f32 %v7542, %v7543
  %v7545 = vsel %vm2448, %v7461, 0.0
  %v7546 = vadd.f32 %v7544, %v7545
  %v7547 = vsel %vm2448, %v7462, 0.0
  %v7548 = vadd.f32 %v7546, %v7547
  %v7549 = vsel %vm2448, %v7463, 0.0
  %v7550 = vadd.f32 %v7548, %v7549
  %v7551 = vsel %vm2448, %v7464, 0.0
  %v7552 = vadd.f32 %v7550, %v7551
  %v7553 = vsel %vm2448, %v7465, 0.0
  %v7554 = vadd.f32 %v7552, %v7553
  %v7555 = vsel %vm2448, %v7466, 0.0
  %v7556 = vadd.f32 %v7554, %v7555
  %v7557 = vsel %vm2448, %v7467, 0.0
  %v7558 = vadd.f32 %v7556, %v7557
  %v7559 = vsel %vm2448, %v7468, 0.0
  %v7560 = vadd.f32 %v7558, %v7559
  %v7561 = vsel %vm2448, %v7469, 0.0
  %v7562 = vadd.f32 %v7560, %v7561
  %v7563 = vsel %vm2448, %v7470, 0.0
  %v7564 = vadd.f32 %v7562, %v7563
  %v7565 = vsel %vm2448, %v7471, 0.0
  %v7566 = vadd.f32 %v7564, %v7565
  %v7567 = vsel %vm2448, %v7472, 0.0
  %v7568 = vadd.f32 %v7566, %v7567
  %v7569 = vsel %vm2448, %v7473, 0.0
  %v7570 = vadd.f32 %v7568, %v7569
  %v7571 = vsel %vm2448, %v7474, 0.0
  %v7572 = vadd.f32 %v7570, %v7571
  %v7573 = vsel %vm2448, %v7475, 0.0
  %v7574 = vadd.f32 %v7572, %v7573
  %v7575 = vsel %vm2448, %v7476, 0.0
  %v7576 = vadd.f32 %v7574, %v7575
  %v7577 = vsel %vm2448, %v7477, 0.0
  %v7578 = vadd.f32 %v7576, %v7577
  %v7579 = vsel %vm2448, %v7478, 0.0
  %v7580 = vadd.f32 %v7578, %v7579
  %v7581 = vsel %vm2448, %v7479, 0.0
  %v7582 = vadd.f32 %v7580, %v7581
  %v7583 = vsel %vm2448, %v7480, 0.0
  %v7584 = vadd.f32 %v7582, %v7583
  %v7585 = vsel %vm2448, %v7481, 0.0
  %v7586 = vadd.f32 %v7584, %v7585
  %v7587 = vsel %vm2448, %v7482, 0.0
  %v7588 = vadd.f32 %v7586, %v7587
  %v7589 = vsel %vm2448, %v7483, 0.0
  %v7590 = vadd.f32 %v7588, %v7589
  %v7591 = vsel %vm2448, %v7484, 0.0
  %v7592 = vadd.f32 %v7590, %v7591
  %v7593 = vsel %vm2448, %v7485, 0.0
  %v7594 = vadd.f32 %v7592, %v7593
  %v7595 = vsel %vm2448, %v7486, 0.0
  %v7596 = vadd.f32 %v7594, %v7595
  %v7597 = vsel %vm2448, %v7487, 0.0
  %v7598 = vadd.f32 %v7596, %v7597
  %v7599 = vsel %vm2448, %v7488, 0.0
  %v7600 = vadd.f32 %v7598, %v7599
  %v7601 = vsel %vm2448, %v7489, 0.0
  %v7602 = vadd.f32 %v7600, %v7601
  %v7603 = vsel %vm2448, %v7490, 0.0
  %v7604 = vadd.f32 %v7602, %v7603
  %v7605 = vsel %vm2448, %v7491, 0.0
  %v7606 = vadd.f32 %v7604, %v7605
  %v7607 = vsel %vm2448, %v7492, 0.0
  %v7608 = vadd.f32 %v7606, %v7607
  %v7609 = vsel %vm2448, %v7493, 0.0
  %v7610 = vadd.f32 %v7608, %v7609
  %v7611 = vsel %vm2448, %v7494, 0.0
  %v7612 = vadd.f32 %v7610, %v7611
  %v7613 = vsel %vm2448, %v7495, 0.0
  %v7614 = vadd.f32 %v7612, %v7613
  %v7615 = vsel %vm2448, %v7496, 0.0
  %v7616 = vadd.f32 %v7614, %v7615
  %v7617 = vsel %vm2448, %v7497, 0.0
  %v7618 = vadd.f32 %v7616, %v7617
  %v7619 = vsel %vm2448, %v7498, 0.0
  %v7620 = vadd.f32 %v7618, %v7619
  %v7621 = vsel %vm2448, %v7499, 0.0
  %v7622 = vadd.f32 %v7620, %v7621
  %v7623 = vsel %vm2448, %v7500, 0.0
  %v7624 = vadd.f32 %v7622, %v7623
  %v7625 = vsel %vm2448, %v7501, 0.0
  %v7626 = vadd.f32 %v7624, %v7625
  %v7627 = vsel %vm2448, %v7502, 0.0
  %v7628 = vadd.f32 %v7626, %v7627
  %v7629 = vsel %vm2448, %v7503, 0.0
  %v7630 = vadd.f32 %v7628, %v7629
  %v7631 = vrot.slane %v7630, 4
  %v7632 = vadd.f32 %v7630, %v7631
  %v7633 = vrot.slane %v7632, 2
  %v7634 = vadd.f32 %v7632, %v7633
  %v7635 = vrot.slane %v7634, 1
  %v7636 = vadd.f32 %v7634, %v7635
  %v7637 = vmul.f32 %v7636, 0.001953125
  %v7638 = vmul.f32 %v7440, %v7440
  %v7639 = vmul.f32 %v7441, %v7441
  %v7640 = vmul.f32 %v7442, %v7442
  %v7641 = vmul.f32 %v7443, %v7443
  %v7642 = vmul.f32 %v7444, %v7444
  %v7643 = vmul.f32 %v7445, %v7445
  %v7644 = vmul.f32 %v7446, %v7446
  %v7645 = vmul.f32 %v7447, %v7447
  %v7646 = vmul.f32 %v7448, %v7448
  %v7647 = vmul.f32 %v7449, %v7449
  %v7648 = vmul.f32 %v7450, %v7450
  %v7649 = vmul.f32 %v7451, %v7451
  %v7650 = vmul.f32 %v7452, %v7452
  %v7651 = vmul.f32 %v7453, %v7453
  %v7652 = vmul.f32 %v7454, %v7454
  %v7653 = vmul.f32 %v7455, %v7455
  %v7654 = vmul.f32 %v7456, %v7456
  %v7655 = vmul.f32 %v7457, %v7457
  %v7656 = vmul.f32 %v7458, %v7458
  %v7657 = vmul.f32 %v7459, %v7459
  %v7658 = vmul.f32 %v7460, %v7460
  %v7659 = vmul.f32 %v7461, %v7461
  %v7660 = vmul.f32 %v7462, %v7462
  %v7661 = vmul.f32 %v7463, %v7463
  %v7662 = vmul.f32 %v7464, %v7464
  %v7663 = vmul.f32 %v7465, %v7465
  %v7664 = vmul.f32 %v7466, %v7466
  %v7665 = vmul.f32 %v7467, %v7467
  %v7666 = vmul.f32 %v7468, %v7468
  %v7667 = vmul.f32 %v7469, %v7469
  %v7668 = vmul.f32 %v7470, %v7470
  %v7669 = vmul.f32 %v7471, %v7471
  %v7670 = vmul.f32 %v7472, %v7472
  %v7671 = vmul.f32 %v7473, %v7473
  %v7672 = vmul.f32 %v7474, %v7474
  %v7673 = vmul.f32 %v7475, %v7475
  %v7674 = vmul.f32 %v7476, %v7476
  %v7675 = vmul.f32 %v7477, %v7477
  %v7676 = vmul.f32 %v7478, %v7478
  %v7677 = vmul.f32 %v7479, %v7479
  %v7678 = vmul.f32 %v7480, %v7480
  %v7679 = vmul.f32 %v7481, %v7481
  %v7680 = vmul.f32 %v7482, %v7482
  %v7681 = vmul.f32 %v7483, %v7483
  %v7682 = vmul.f32 %v7484, %v7484
  %v7683 = vmul.f32 %v7485, %v7485
  %v7684 = vmul.f32 %v7486, %v7486
  %v7685 = vmul.f32 %v7487, %v7487
  %v7686 = vmul.f32 %v7488, %v7488
  %v7687 = vmul.f32 %v7489, %v7489
  %v7688 = vmul.f32 %v7490, %v7490
  %v7689 = vmul.f32 %v7491, %v7491
  %v7690 = vmul.f32 %v7492, %v7492
  %v7691 = vmul.f32 %v7493, %v7493
  %v7692 = vmul.f32 %v7494, %v7494
  %v7693 = vmul.f32 %v7495, %v7495
  %v7694 = vmul.f32 %v7496, %v7496
  %v7695 = vmul.f32 %v7497, %v7497
  %v7696 = vmul.f32 %v7498, %v7498
  %v7697 = vmul.f32 %v7499, %v7499
  %v7698 = vmul.f32 %v7500, %v7500
  %v7699 = vmul.f32 %v7501, %v7501
  %v7700 = vmul.f32 %v7502, %v7502
  %v7701 = vmul.f32 %v7503, %v7503
  %v7702 = vsel %vm2448, %v7638, 0.0
  %v7703 = vsel %vm2448, %v7639, 0.0
  %v7704 = vadd.f32 %v7702, %v7703
  %v7705 = vsel %vm2448, %v7640, 0.0
  %v7706 = vadd.f32 %v7704, %v7705
  %v7707 = vsel %vm2448, %v7641, 0.0
  %v7708 = vadd.f32 %v7706, %v7707
  %v7709 = vsel %vm2448, %v7642, 0.0
  %v7710 = vadd.f32 %v7708, %v7709
  %v7711 = vsel %vm2448, %v7643, 0.0
  %v7712 = vadd.f32 %v7710, %v7711
  %v7713 = vsel %vm2448, %v7644, 0.0
  %v7714 = vadd.f32 %v7712, %v7713
  %v7715 = vsel %vm2448, %v7645, 0.0
  %v7716 = vadd.f32 %v7714, %v7715
  %v7717 = vsel %vm2448, %v7646, 0.0
  %v7718 = vadd.f32 %v7716, %v7717
  %v7719 = vsel %vm2448, %v7647, 0.0
  %v7720 = vadd.f32 %v7718, %v7719
  %v7721 = vsel %vm2448, %v7648, 0.0
  %v7722 = vadd.f32 %v7720, %v7721
  %v7723 = vsel %vm2448, %v7649, 0.0
  %v7724 = vadd.f32 %v7722, %v7723
  %v7725 = vsel %vm2448, %v7650, 0.0
  %v7726 = vadd.f32 %v7724, %v7725
  %v7727 = vsel %vm2448, %v7651, 0.0
  %v7728 = vadd.f32 %v7726, %v7727
  %v7729 = vsel %vm2448, %v7652, 0.0
  %v7730 = vadd.f32 %v7728, %v7729
  %v7731 = vsel %vm2448, %v7653, 0.0
  %v7732 = vadd.f32 %v7730, %v7731
  %v7733 = vsel %vm2448, %v7654, 0.0
  %v7734 = vadd.f32 %v7732, %v7733
  %v7735 = vsel %vm2448, %v7655, 0.0
  %v7736 = vadd.f32 %v7734, %v7735
  %v7737 = vsel %vm2448, %v7656, 0.0
  %v7738 = vadd.f32 %v7736, %v7737
  %v7739 = vsel %vm2448, %v7657, 0.0
  %v7740 = vadd.f32 %v7738, %v7739
  %v7741 = vsel %vm2448, %v7658, 0.0
  %v7742 = vadd.f32 %v7740, %v7741
  %v7743 = vsel %vm2448, %v7659, 0.0
  %v7744 = vadd.f32 %v7742, %v7743
  %v7745 = vsel %vm2448, %v7660, 0.0
  %v7746 = vadd.f32 %v7744, %v7745
  %v7747 = vsel %vm2448, %v7661, 0.0
  %v7748 = vadd.f32 %v7746, %v7747
  %v7749 = vsel %vm2448, %v7662, 0.0
  %v7750 = vadd.f32 %v7748, %v7749
  %v7751 = vsel %vm2448, %v7663, 0.0
  %v7752 = vadd.f32 %v7750, %v7751
  %v7753 = vsel %vm2448, %v7664, 0.0
  %v7754 = vadd.f32 %v7752, %v7753
  %v7755 = vsel %vm2448, %v7665, 0.0
  %v7756 = vadd.f32 %v7754, %v7755
  %v7757 = vsel %vm2448, %v7666, 0.0
  %v7758 = vadd.f32 %v7756, %v7757
  %v7759 = vsel %vm2448, %v7667, 0.0
  %v7760 = vadd.f32 %v7758, %v7759
  %v7761 = vsel %vm2448, %v7668, 0.0
  %v7762 = vadd.f32 %v7760, %v7761
  %v7763 = vsel %vm2448, %v7669, 0.0
  %v7764 = vadd.f32 %v7762, %v7763
  %v7765 = vsel %vm2448, %v7670, 0.0
  %v7766 = vadd.f32 %v7764, %v7765
  %v7767 = vsel %vm2448, %v7671, 0.0
  %v7768 = vadd.f32 %v7766, %v7767
  %v7769 = vsel %vm2448, %v7672, 0.0
  %v7770 = vadd.f32 %v7768, %v7769
  %v7771 = vsel %vm2448, %v7673, 0.0
  %v7772 = vadd.f32 %v7770, %v7771
  %v7773 = vsel %vm2448, %v7674, 0.0
  %v7774 = vadd.f32 %v7772, %v7773
  %v7775 = vsel %vm2448, %v7675, 0.0
  %v7776 = vadd.f32 %v7774, %v7775
  %v7777 = vsel %vm2448, %v7676, 0.0
  %v7778 = vadd.f32 %v7776, %v7777
  %v7779 = vsel %vm2448, %v7677, 0.0
  %v7780 = vadd.f32 %v7778, %v7779
  %v7781 = vsel %vm2448, %v7678, 0.0
  %v7782 = vadd.f32 %v7780, %v7781
  %v7783 = vsel %vm2448, %v7679, 0.0
  %v7784 = vadd.f32 %v7782, %v7783
  %v7785 = vsel %vm2448, %v7680, 0.0
  %v7786 = vadd.f32 %v7784, %v7785
  %v7787 = vsel %vm2448, %v7681, 0.0
  %v7788 = vadd.f32 %v7786, %v7787
  %v7789 = vsel %vm2448, %v7682, 0.0
  %v7790 = vadd.f32 %v7788, %v7789
  %v7791 = vsel %vm2448, %v7683, 0.0
  %v7792 = vadd.f32 %v7790, %v7791
  %v7793 = vsel %vm2448, %v7684, 0.0
  %v7794 = vadd.f32 %v7792, %v7793
  %v7795 = vsel %vm2448, %v7685, 0.0
  %v7796 = vadd.f32 %v7794, %v7795
  %v7797 = vsel %vm2448, %v7686, 0.0
  %v7798 = vadd.f32 %v7796, %v7797
  %v7799 = vsel %vm2448, %v7687, 0.0
  %v7800 = vadd.f32 %v7798, %v7799
  %v7801 = vsel %vm2448, %v7688, 0.0
  %v7802 = vadd.f32 %v7800, %v7801
  %v7803 = vsel %vm2448, %v7689, 0.0
  %v7804 = vadd.f32 %v7802, %v7803
  %v7805 = vsel %vm2448, %v7690, 0.0
  %v7806 = vadd.f32 %v7804, %v7805
  %v7807 = vsel %vm2448, %v7691, 0.0
  %v7808 = vadd.f32 %v7806, %v7807
  %v7809 = vsel %vm2448, %v7692, 0.0
  %v7810 = vadd.f32 %v7808, %v7809
  %v7811 = vsel %vm2448, %v7693, 0.0
  %v7812 = vadd.f32 %v7810, %v7811
  %v7813 = vsel %vm2448, %v7694, 0.0
  %v7814 = vadd.f32 %v7812, %v7813
  %v7815 = vsel %vm2448, %v7695, 0.0
  %v7816 = vadd.f32 %v7814, %v7815
  %v7817 = vsel %vm2448, %v7696, 0.0
  %v7818 = vadd.f32 %v7816, %v7817
  %v7819 = vsel %vm2448, %v7697, 0.0
  %v7820 = vadd.f32 %v7818, %v7819
  %v7821 = vsel %vm2448, %v7698, 0.0
  %v7822 = vadd.f32 %v7820, %v7821
  %v7823 = vsel %vm2448, %v7699, 0.0
  %v7824 = vadd.f32 %v7822, %v7823
  %v7825 = vsel %vm2448, %v7700, 0.0
  %v7826 = vadd.f32 %v7824, %v7825
  %v7827 = vsel %vm2448, %v7701, 0.0
  %v7828 = vadd.f32 %v7826, %v7827
  %v7829 = vrot.slane %v7828, 4
  %v7830 = vadd.f32 %v7828, %v7829
  %v7831 = vrot.slane %v7830, 2
  %v7832 = vadd.f32 %v7830, %v7831
  %v7833 = vrot.slane %v7832, 1
  %v7834 = vadd.f32 %v7832, %v7833
  %v7835 = vmul.f32 %v7834, 0.001953125
  %v7836 = vmul.f32 %v7637, %v7637
  %v7837 = vsub.f32 %v7835, %v7836
  %v7838 = vsub.f32 %v7440, %v7637
  %v7839 = vsub.f32 %v7441, %v7637
  %v7840 = vsub.f32 %v7442, %v7637
  %v7841 = vsub.f32 %v7443, %v7637
  %v7842 = vsub.f32 %v7444, %v7637
  %v7843 = vsub.f32 %v7445, %v7637
  %v7844 = vsub.f32 %v7446, %v7637
  %v7845 = vsub.f32 %v7447, %v7637
  %v7846 = vsub.f32 %v7448, %v7637
  %v7847 = vsub.f32 %v7449, %v7637
  %v7848 = vsub.f32 %v7450, %v7637
  %v7849 = vsub.f32 %v7451, %v7637
  %v7850 = vsub.f32 %v7452, %v7637
  %v7851 = vsub.f32 %v7453, %v7637
  %v7852 = vsub.f32 %v7454, %v7637
  %v7853 = vsub.f32 %v7455, %v7637
  %v7854 = vsub.f32 %v7456, %v7637
  %v7855 = vsub.f32 %v7457, %v7637
  %v7856 = vsub.f32 %v7458, %v7637
  %v7857 = vsub.f32 %v7459, %v7637
  %v7858 = vsub.f32 %v7460, %v7637
  %v7859 = vsub.f32 %v7461, %v7637
  %v7860 = vsub.f32 %v7462, %v7637
  %v7861 = vsub.f32 %v7463, %v7637
  %v7862 = vsub.f32 %v7464, %v7637
  %v7863 = vsub.f32 %v7465, %v7637
  %v7864 = vsub.f32 %v7466, %v7637
  %v7865 = vsub.f32 %v7467, %v7637
  %v7866 = vsub.f32 %v7468, %v7637
  %v7867 = vsub.f32 %v7469, %v7637
  %v7868 = vsub.f32 %v7470, %v7637
  %v7869 = vsub.f32 %v7471, %v7637
  %v7870 = vsub.f32 %v7472, %v7637
  %v7871 = vsub.f32 %v7473, %v7637
  %v7872 = vsub.f32 %v7474, %v7637
  %v7873 = vsub.f32 %v7475, %v7637
  %v7874 = vsub.f32 %v7476, %v7637
  %v7875 = vsub.f32 %v7477, %v7637
  %v7876 = vsub.f32 %v7478, %v7637
  %v7877 = vsub.f32 %v7479, %v7637
  %v7878 = vsub.f32 %v7480, %v7637
  %v7879 = vsub.f32 %v7481, %v7637
  %v7880 = vsub.f32 %v7482, %v7637
  %v7881 = vsub.f32 %v7483, %v7637
  %v7882 = vsub.f32 %v7484, %v7637
  %v7883 = vsub.f32 %v7485, %v7637
  %v7884 = vsub.f32 %v7486, %v7637
  %v7885 = vsub.f32 %v7487, %v7637
  %v7886 = vsub.f32 %v7488, %v7637
  %v7887 = vsub.f32 %v7489, %v7637
  %v7888 = vsub.f32 %v7490, %v7637
  %v7889 = vsub.f32 %v7491, %v7637
  %v7890 = vsub.f32 %v7492, %v7637
  %v7891 = vsub.f32 %v7493, %v7637
  %v7892 = vsub.f32 %v7494, %v7637
  %v7893 = vsub.f32 %v7495, %v7637
  %v7894 = vsub.f32 %v7496, %v7637
  %v7895 = vsub.f32 %v7497, %v7637
  %v7896 = vsub.f32 %v7498, %v7637
  %v7897 = vsub.f32 %v7499, %v7637
  %v7898 = vsub.f32 %v7500, %v7637
  %v7899 = vsub.f32 %v7501, %v7637
  %v7900 = vsub.f32 %v7502, %v7637
  %v7901 = vsub.f32 %v7503, %v7637
  %v7902 = vadd.f32 %v7837, 1e-05
  %v7903 = vrsqrt.pop %v7902
  %v7904 = vmul.f32 %v7838, %v7903
  %v7905 = vmul.f32 %v7839, %v7903
  %v7906 = vmul.f32 %v7840, %v7903
  %v7907 = vmul.f32 %v7841, %v7903
  %v7908 = vmul.f32 %v7842, %v7903
  %v7909 = vmul.f32 %v7843, %v7903
  %v7910 = vmul.f32 %v7844, %v7903
  %v7911 = vmul.f32 %v7845, %v7903
  %v7912 = vmul.f32 %v7846, %v7903
  %v7913 = vmul.f32 %v7847, %v7903
  %v7914 = vmul.f32 %v7848, %v7903
  %v7915 = vmul.f32 %v7849, %v7903
  %v7916 = vmul.f32 %v7850, %v7903
  %v7917 = vmul.f32 %v7851, %v7903
  %v7918 = vmul.f32 %v7852, %v7903
  %v7919 = vmul.f32 %v7853, %v7903
  %v7920 = vmul.f32 %v7854, %v7903
  %v7921 = vmul.f32 %v7855, %v7903
  %v7922 = vmul.f32 %v7856, %v7903
  %v7923 = vmul.f32 %v7857, %v7903
  %v7924 = vmul.f32 %v7858, %v7903
  %v7925 = vmul.f32 %v7859, %v7903
  %v7926 = vmul.f32 %v7860, %v7903
  %v7927 = vmul.f32 %v7861, %v7903
  %v7928 = vmul.f32 %v7862, %v7903
  %v7929 = vmul.f32 %v7863, %v7903
  %v7930 = vmul.f32 %v7864, %v7903
  %v7931 = vmul.f32 %v7865, %v7903
  %v7932 = vmul.f32 %v7866, %v7903
  %v7933 = vmul.f32 %v7867, %v7903
  %v7934 = vmul.f32 %v7868, %v7903
  %v7935 = vmul.f32 %v7869, %v7903
  %v7936 = vmul.f32 %v7870, %v7903
  %v7937 = vmul.f32 %v7871, %v7903
  %v7938 = vmul.f32 %v7872, %v7903
  %v7939 = vmul.f32 %v7873, %v7903
  %v7940 = vmul.f32 %v7874, %v7903
  %v7941 = vmul.f32 %v7875, %v7903
  %v7942 = vmul.f32 %v7876, %v7903
  %v7943 = vmul.f32 %v7877, %v7903
  %v7944 = vmul.f32 %v7878, %v7903
  %v7945 = vmul.f32 %v7879, %v7903
  %v7946 = vmul.f32 %v7880, %v7903
  %v7947 = vmul.f32 %v7881, %v7903
  %v7948 = vmul.f32 %v7882, %v7903
  %v7949 = vmul.f32 %v7883, %v7903
  %v7950 = vmul.f32 %v7884, %v7903
  %v7951 = vmul.f32 %v7885, %v7903
  %v7952 = vmul.f32 %v7886, %v7903
  %v7953 = vmul.f32 %v7887, %v7903
  %v7954 = vmul.f32 %v7888, %v7903
  %v7955 = vmul.f32 %v7889, %v7903
  %v7956 = vmul.f32 %v7890, %v7903
  %v7957 = vmul.f32 %v7891, %v7903
  %v7958 = vmul.f32 %v7892, %v7903
  %v7959 = vmul.f32 %v7893, %v7903
  %v7960 = vmul.f32 %v7894, %v7903
  %v7961 = vmul.f32 %v7895, %v7903
  %v7962 = vmul.f32 %v7896, %v7903
  %v7963 = vmul.f32 %v7897, %v7903
  %v7964 = vmul.f32 %v7898, %v7903
  %v7965 = vmul.f32 %v7899, %v7903
  %v7966 = vmul.f32 %v7900, %v7903
  %v7967 = vmul.f32 %v7901, %v7903
  %v7968 = vlaneseq
  %v7969 = vshrl.u32 %v7968, 7
  %v7970 = vsub.s32 0, %v7969
  %v7971 = vrot.slane %v29, %v7970
  %v7972 = vmul.f32 %v7904, %v7971
  %v7973 = vmul.f32 %v7905, %v7971
  %v7974 = vmul.f32 %v7906, %v7971
  %v7975 = vmul.f32 %v7907, %v7971
  %v7976 = vmul.f32 %v7908, %v7971
  %v7977 = vmul.f32 %v7909, %v7971
  %v7978 = vmul.f32 %v7910, %v7971
  %v7979 = vmul.f32 %v7911, %v7971
  %v7980 = vmul.f32 %v7912, %v7971
  %v7981 = vmul.f32 %v7913, %v7971
  %v7982 = vmul.f32 %v7914, %v7971
  %v7983 = vmul.f32 %v7915, %v7971
  %v7984 = vmul.f32 %v7916, %v7971
  %v7985 = vmul.f32 %v7917, %v7971
  %v7986 = vmul.f32 %v7918, %v7971
  %v7987 = vmul.f32 %v7919, %v7971
  %v7988 = vmul.f32 %v7920, %v7971
  %v7989 = vmul.f32 %v7921, %v7971
  %v7990 = vmul.f32 %v7922, %v7971
  %v7991 = vmul.f32 %v7923, %v7971
  %v7992 = vmul.f32 %v7924, %v7971
  %v7993 = vmul.f32 %v7925, %v7971
  %v7994 = vmul.f32 %v7926, %v7971
  %v7995 = vmul.f32 %v7927, %v7971
  %v7996 = vmul.f32 %v7928, %v7971
  %v7997 = vmul.f32 %v7929, %v7971
  %v7998 = vmul.f32 %v7930, %v7971
  %v7999 = vmul.f32 %v7931, %v7971
  %v8000 = vmul.f32 %v7932, %v7971
  %v8001 = vmul.f32 %v7933, %v7971
  %v8002 = vmul.f32 %v7934, %v7971
  %v8003 = vmul.f32 %v7935, %v7971
  %v8004 = vmul.f32 %v7936, %v7971
  %v8005 = vmul.f32 %v7937, %v7971
  %v8006 = vmul.f32 %v7938, %v7971
  %v8007 = vmul.f32 %v7939, %v7971
  %v8008 = vmul.f32 %v7940, %v7971
  %v8009 = vmul.f32 %v7941, %v7971
  %v8010 = vmul.f32 %v7942, %v7971
  %v8011 = vmul.f32 %v7943, %v7971
  %v8012 = vmul.f32 %v7944, %v7971
  %v8013 = vmul.f32 %v7945, %v7971
  %v8014 = vmul.f32 %v7946, %v7971
  %v8015 = vmul.f32 %v7947, %v7971
  %v8016 = vmul.f32 %v7948, %v7971
  %v8017 = vmul.f32 %v7949, %v7971
  %v8018 = vmul.f32 %v7950, %v7971
  %v8019 = vmul.f32 %v7951, %v7971
  %v8020 = vmul.f32 %v7952, %v7971
  %v8021 = vmul.f32 %v7953, %v7971
  %v8022 = vmul.f32 %v7954, %v7971
  %v8023 = vmul.f32 %v7955, %v7971
  %v8024 = vmul.f32 %v7956, %v7971
  %v8025 = vmul.f32 %v7957, %v7971
  %v8026 = vmul.f32 %v7958, %v7971
  %v8027 = vmul.f32 %v7959, %v7971
  %v8028 = vmul.f32 %v7960, %v7971
  %v8029 = vmul.f32 %v7961, %v7971
  %v8030 = vmul.f32 %v7962, %v7971
  %v8031 = vmul.f32 %v7963, %v7971
  %v8032 = vmul.f32 %v7964, %v7971
  %v8033 = vmul.f32 %v7965, %v7971
  %v8034 = vmul.f32 %v7966, %v7971
  %v8035 = vmul.f32 %v7967, %v7971
  %v8036 = vlaneseq
  %v8037 = vshrl.u32 %v8036, 7
  %v8038 = vsub.s32 0, %v8037
  %v8039 = vrot.slane %v30, %v8038
  %v8040 = vadd.f32 %v7972, %v8039
  %v8041 = vadd.f32 %v7973, %v8039
  %v8042 = vadd.f32 %v7974, %v8039
  %v8043 = vadd.f32 %v7975, %v8039
  %v8044 = vadd.f32 %v7976, %v8039
  %v8045 = vadd.f32 %v7977, %v8039
  %v8046 = vadd.f32 %v7978, %v8039
  %v8047 = vadd.f32 %v7979, %v8039
  %v8048 = vadd.f32 %v7980, %v8039
  %v8049 = vadd.f32 %v7981, %v8039
  %v8050 = vadd.f32 %v7982, %v8039
  %v8051 = vadd.f32 %v7983, %v8039
  %v8052 = vadd.f32 %v7984, %v8039
  %v8053 = vadd.f32 %v7985, %v8039
  %v8054 = vadd.f32 %v7986, %v8039
  %v8055 = vadd.f32 %v7987, %v8039
  %v8056 = vadd.f32 %v7988, %v8039
  %v8057 = vadd.f32 %v7989, %v8039
  %v8058 = vadd.f32 %v7990, %v8039
  %v8059 = vadd.f32 %v7991, %v8039
  %v8060 = vadd.f32 %v7992, %v8039
  %v8061 = vadd.f32 %v7993, %v8039
  %v8062 = vadd.f32 %v7994, %v8039
  %v8063 = vadd.f32 %v7995, %v8039
  %v8064 = vadd.f32 %v7996, %v8039
  %v8065 = vadd.f32 %v7997, %v8039
  %v8066 = vadd.f32 %v7998, %v8039
  %v8067 = vadd.f32 %v7999, %v8039
  %v8068 = vadd.f32 %v8000, %v8039
  %v8069 = vadd.f32 %v8001, %v8039
  %v8070 = vadd.f32 %v8002, %v8039
  %v8071 = vadd.f32 %v8003, %v8039
  %v8072 = vadd.f32 %v8004, %v8039
  %v8073 = vadd.f32 %v8005, %v8039
  %v8074 = vadd.f32 %v8006, %v8039
  %v8075 = vadd.f32 %v8007, %v8039
  %v8076 = vadd.f32 %v8008, %v8039
  %v8077 = vadd.f32 %v8009, %v8039
  %v8078 = vadd.f32 %v8010, %v8039
  %v8079 = vadd.f32 %v8011, %v8039
  %v8080 = vadd.f32 %v8012, %v8039
  %v8081 = vadd.f32 %v8013, %v8039
  %v8082 = vadd.f32 %v8014, %v8039
  %v8083 = vadd.f32 %v8015, %v8039
  %v8084 = vadd.f32 %v8016, %v8039
  %v8085 = vadd.f32 %v8017, %v8039
  %v8086 = vadd.f32 %v8018, %v8039
  %v8087 = vadd.f32 %v8019, %v8039
  %v8088 = vadd.f32 %v8020, %v8039
  %v8089 = vadd.f32 %v8021, %v8039
  %v8090 = vadd.f32 %v8022, %v8039
  %v8091 = vadd.f32 %v8023, %v8039
  %v8092 = vadd.f32 %v8024, %v8039
  %v8093 = vadd.f32 %v8025, %v8039
  %v8094 = vadd.f32 %v8026, %v8039
  %v8095 = vadd.f32 %v8027, %v8039
  %v8096 = vadd.f32 %v8028, %v8039
  %v8097 = vadd.f32 %v8029, %v8039
  %v8098 = vadd.f32 %v8030, %v8039
  %v8099 = vadd.f32 %v8031, %v8039
  %v8100 = vadd.f32 %v8032, %v8039
  %v8101 = vadd.f32 %v8033, %v8039
  %v8102 = vadd.f32 %v8034, %v8039
  %v8103 = vadd.f32 %v8035, %v8039
  %8104 = vst.msk [vmem:[%s6] sm:$0xff] %vm2448, 0.0
  %8105 = vst.msk [vmem:[%s6 + $0x8] sm:$0xff] %vm2448, 0.0
  %8106 = vst.msk [vmem:[%s6 + $0x10] sm:$0x3] %vm4178, 0.0
  %8107 = vst.msk [vmem:[%s6 + $0x18] sm:$0xff] %vm2448, 0.0
  %8108 = vst.msk [vmem:[%s6 + $0x20] sm:$0xff] %vm2448, 0.0
  %8109 = vst.msk [vmem:[%s6 + $0x28] sm:$0x3] %vm4178, 0.0
  %8110 = vst.msk [vmem:[%s6 + $0x30] sm:$0xff] %vm2448, 0.0
  %8111 = vst.msk [vmem:[%s6 + $0x38] sm:$0xff] %vm2448, 0.0
  %8112 = vst.msk [vmem:[%s6 + $0x40] sm:$0x3] %vm4178, 0.0
  %8113 = vst.msk [vmem:[%s6 + $0x48] sm:$0xff] %vm2448, 0.0
  %8114 = vst.msk [vmem:[%s6 + $0x50] sm:$0xff] %vm2448, 0.0
  %8115 = vst.msk [vmem:[%s6 + $0x58] sm:$0x3] %vm4178, 0.0
  %8116 = vst.msk [vmem:[%s6 + $0x60] sm:$0xff] %vm2448, 0.0
  %8117 = vst.msk [vmem:[%s6 + $0x68] sm:$0xff] %vm2448, 0.0
  %8118 = vst.msk [vmem:[%s6 + $0x70] sm:$0x3] %vm4178, 0.0
  %8119 = vst.msk [vmem:[%s6 + $0x78] sm:$0xff] %vm2448, 0.0
  %8120 = vst.msk [vmem:[%s6 + $0x80] sm:$0xff] %vm2448, 0.0
  %8121 = vst.msk [vmem:[%s6 + $0x88] sm:$0x3] %vm4178, 0.0
  %8122 = vst.msk [vmem:[%s6 + $0x90] sm:$0xff] %vm2448, 0.0
  %8123 = vst.msk [vmem:[%s6 + $0x98] sm:$0xff] %vm2448, 0.0
  %8124 = vst.msk [vmem:[%s6 + $0xa0] sm:$0x3] %vm4178, 0.0
  %8125 = vst.msk [vmem:[%s6 + $0xa8] sm:$0xff] %vm2448, 0.0
  %8126 = vst.msk [vmem:[%s6 + $0xb0] sm:$0xff] %vm2448, 0.0
  %8127 = vst.msk [vmem:[%s6 + $0xb8] sm:$0x3] %vm4178, 0.0
  %8128 = vst.msk [vmem:[%s6 + $0xc0] sm:$0xff] %vm2448, 0.0
  %8129 = vst.msk [vmem:[%s6 + $0xc8] sm:$0xff] %vm2448, 0.0
  %8130 = vst.msk [vmem:[%s6 + $0xd0] sm:$0x3] %vm4178, 0.0
  %8131 = vst.msk [vmem:[%s6 + $0xd8] sm:$0xff] %vm2448, 0.0
  %8132 = vst.msk [vmem:[%s6 + $0xe0] sm:$0xff] %vm2448, 0.0
  %8133 = vst.msk [vmem:[%s6 + $0xe8] sm:$0x3] %vm4178, 0.0
  %8134 = vst.msk [vmem:[%s6 + $0xf0] sm:$0xff] %vm2448, 0.0
  %8135 = vst.msk [vmem:[%s6 + $0xf8] sm:$0xff] %vm2448, 0.0
  %8136 = vst.msk [vmem:[%s6 + $0x100] sm:$0x3] %vm4178, 0.0
  %8137 = vst.msk [vmem:[%s6 + $0x108] sm:$0xff] %vm2448, 0.0
  %8138 = vst.msk [vmem:[%s6 + $0x110] sm:$0xff] %vm2448, 0.0
  %8139 = vst.msk [vmem:[%s6 + $0x118] sm:$0x3] %vm4178, 0.0
  %8140 = vst.msk [vmem:[%s6 + $0x120] sm:$0xff] %vm2448, 0.0
  %8141 = vst.msk [vmem:[%s6 + $0x128] sm:$0xff] %vm2448, 0.0
  %8142 = vst.msk [vmem:[%s6 + $0x130] sm:$0x3] %vm4178, 0.0
  %8143 = vst.msk [vmem:[%s6 + $0x138] sm:$0xff] %vm2448, 0.0
  %8144 = vst.msk [vmem:[%s6 + $0x140] sm:$0xff] %vm2448, 0.0
  %8145 = vst.msk [vmem:[%s6 + $0x148] sm:$0x3] %vm4178, 0.0
  %8146 = vst.msk [vmem:[%s6 + $0x150] sm:$0xff] %vm2448, 0.0
  %8147 = vst.msk [vmem:[%s6 + $0x158] sm:$0xff] %vm2448, 0.0
  %8148 = vst.msk [vmem:[%s6 + $0x160] sm:$0x3] %vm4178, 0.0
  %8149 = vst.msk [vmem:[%s6 + $0x168] sm:$0xff] %vm2448, 0.0
  %8150 = vst.msk [vmem:[%s6 + $0x170] sm:$0xff] %vm2448, 0.0
  %8151 = vst.msk [vmem:[%s6 + $0x178] sm:$0x3] %vm4178, 0.0
  %8152 = vst.msk [vmem:[%s6 + $0x180] sm:$0xff] %vm2448, 0.0
  %8153 = vst.msk [vmem:[%s6 + $0x188] sm:$0xff] %vm2448, 0.0
  %8154 = vst.msk [vmem:[%s6 + $0x190] sm:$0x3] %vm4178, 0.0
  %8155 = vst.msk [vmem:[%s6 + $0x198] sm:$0xff] %vm2448, 0.0
  %8156 = vst.msk [vmem:[%s6 + $0x1a0] sm:$0xff] %vm2448, 0.0
  %8157 = vst.msk [vmem:[%s6 + $0x1a8] sm:$0x3] %vm4178, 0.0
  %8158 = vst.msk [vmem:[%s6 + $0x1b0] sm:$0xff] %vm2448, 0.0
  %8159 = vst.msk [vmem:[%s6 + $0x1b8] sm:$0xff] %vm2448, 0.0
  %8160 = vst.msk [vmem:[%s6 + $0x1c0] sm:$0x3] %vm4178, 0.0
  %8161 = vst.msk [vmem:[%s6 + $0x1c8] sm:$0xff] %vm2448, 0.0
  %8162 = vst.msk [vmem:[%s6 + $0x1d0] sm:$0xff] %vm2448, 0.0
  %8163 = vst.msk [vmem:[%s6 + $0x1d8] sm:$0x3] %vm4178, 0.0
  %8164 = vst.msk [vmem:[%s6 + $0x1e0] sm:$0xff] %vm2448, 0.0
  %8165 = vst.msk [vmem:[%s6 + $0x1e8] sm:$0xff] %vm2448, 0.0
  %8166 = vst.msk [vmem:[%s6 + $0x1f0] sm:$0x3] %vm4178, 0.0
  %8167 = vst.msk [vmem:[%s6 + $0x1f8] sm:$0xff] %vm2448, 0.0
  %8168 = vst.msk [vmem:[%s6 + $0x200] sm:$0xff] %vm2448, 0.0
  %8169 = vst.msk [vmem:[%s6 + $0x208] sm:$0x3] %vm4178, 0.0
  %8170 = vst.msk [vmem:[%s6 + $0x210] sm:$0xff] %vm2448, 0.0
  %8171 = vst.msk [vmem:[%s6 + $0x218] sm:$0xff] %vm2448, 0.0
  %8172 = vst.msk [vmem:[%s6 + $0x220] sm:$0x3] %vm4178, 0.0
  %8173 = vst.msk [vmem:[%s6 + $0x228] sm:$0xff] %vm2448, 0.0
  %8174 = vst.msk [vmem:[%s6 + $0x230] sm:$0xff] %vm2448, 0.0
  %8175 = vst.msk [vmem:[%s6 + $0x238] sm:$0x3] %vm4178, 0.0
  %8176 = vst.msk [vmem:[%s6 + $0x240] sm:$0xff] %vm2448, 0.0
  %8177 = vst.msk [vmem:[%s6 + $0x248] sm:$0xff] %vm2448, 0.0
  %8178 = vst.msk [vmem:[%s6 + $0x250] sm:$0x3] %vm4178, 0.0
  %8179 = vst.msk [vmem:[%s6 + $0x258] sm:$0xff] %vm2448, 0.0
  %8180 = vst.msk [vmem:[%s6 + $0x260] sm:$0xff] %vm2448, 0.0
  %8181 = vst.msk [vmem:[%s6 + $0x268] sm:$0x3] %vm4178, 0.0
  %8182 = vst.msk [vmem:[%s6 + $0x270] sm:$0xff] %vm2448, 0.0
  %8183 = vst.msk [vmem:[%s6 + $0x278] sm:$0xff] %vm2448, 0.0
  %8184 = vst.msk [vmem:[%s6 + $0x280] sm:$0x3] %vm4178, 0.0
  %8185 = vst.msk [vmem:[%s6 + $0x288] sm:$0xff] %vm2448, 0.0
  %8186 = vst.msk [vmem:[%s6 + $0x290] sm:$0xff] %vm2448, 0.0
  %8187 = vst.msk [vmem:[%s6 + $0x298] sm:$0x3] %vm4178, 0.0
  %8188 = vst.msk [vmem:[%s6 + $0x2a0] sm:$0xff] %vm2448, 0.0
  %8189 = vst.msk [vmem:[%s6 + $0x2a8] sm:$0xff] %vm2448, 0.0
  %8190 = vst.msk [vmem:[%s6 + $0x2b0] sm:$0x3] %vm4178, 0.0
  %8191 = vst.msk [vmem:[%s6 + $0x2b8] sm:$0xff] %vm2448, 0.0
  %8192 = vst.msk [vmem:[%s6 + $0x2c0] sm:$0xff] %vm2448, 0.0
  %8193 = vst.msk [vmem:[%s6 + $0x2c8] sm:$0x3] %vm4178, 0.0
  %8194 = vst.msk [vmem:[%s6 + $0x2d0] sm:$0xff] %vm2448, 0.0
  %8195 = vst.msk [vmem:[%s6 + $0x2d8] sm:$0xff] %vm2448, 0.0
  %8196 = vst.msk [vmem:[%s6 + $0x2e0] sm:$0x3] %vm4178, 0.0
  %8197 = vst.msk [vmem:[%s6 + $0x2e8] sm:$0xff] %vm2448, 0.0
  %8198 = vst.msk [vmem:[%s6 + $0x2f0] sm:$0xff] %vm2448, 0.0
  %8199 = vst.msk [vmem:[%s6 + $0x2f8] sm:$0x3] %vm4178, 0.0
  %8200 = vst.msk [vmem:[%s6 + $0x300] sm:$0xff] %vm2448, 0.0
  %8201 = vst.msk [vmem:[%s6 + $0x308] sm:$0xff] %vm2448, 0.0
  %8202 = vst.msk [vmem:[%s6 + $0x310] sm:$0x3] %vm4178, 0.0
  %8203 = vst.msk [vmem:[%s6 + $0x318] sm:$0xff] %vm2448, 0.0
  %8204 = vst.msk [vmem:[%s6 + $0x320] sm:$0xff] %vm2448, 0.0
  %8205 = vst.msk [vmem:[%s6 + $0x328] sm:$0x3] %vm4178, 0.0
  %8206 = vst.msk [vmem:[%s6 + $0x330] sm:$0xff] %vm2448, 0.0
  %8207 = vst.msk [vmem:[%s6 + $0x338] sm:$0xff] %vm2448, 0.0
  %8208 = vst.msk [vmem:[%s6 + $0x340] sm:$0x3] %vm4178, 0.0
  %8209 = vst.msk [vmem:[%s6 + $0x348] sm:$0xff] %vm2448, 0.0
  %8210 = vst.msk [vmem:[%s6 + $0x350] sm:$0xff] %vm2448, 0.0
  %8211 = vst.msk [vmem:[%s6 + $0x358] sm:$0x3] %vm4178, 0.0
  %s8212 = scalar_lea.vmem %s6, 24
  %8213 = vst.msk [vmem:[%s8212 + $0x1] sm:$0xff] %vm2448, %v8040
  %8214 = vst.msk [vmem:[%s8212 + $0x9] sm:$0xff] %vm2448, %v8041
  %8215 = vst.msk [vmem:[%s8212 + $0x19] sm:$0xff] %vm2448, %v8042
  %8216 = vst.msk [vmem:[%s8212 + $0x21] sm:$0xff] %vm2448, %v8043
  %8217 = vst.msk [vmem:[%s8212 + $0x31] sm:$0xff] %vm2448, %v8044
  %8218 = vst.msk [vmem:[%s8212 + $0x39] sm:$0xff] %vm2448, %v8045
  %8219 = vst.msk [vmem:[%s8212 + $0x49] sm:$0xff] %vm2448, %v8046
  %8220 = vst.msk [vmem:[%s8212 + $0x51] sm:$0xff] %vm2448, %v8047
  %8221 = vst.msk [vmem:[%s8212 + $0x61] sm:$0xff] %vm2448, %v8048
  %8222 = vst.msk [vmem:[%s8212 + $0x69] sm:$0xff] %vm2448, %v8049
  %8223 = vst.msk [vmem:[%s8212 + $0x79] sm:$0xff] %vm2448, %v8050
  %8224 = vst.msk [vmem:[%s8212 + $0x81] sm:$0xff] %vm2448, %v8051
  %8225 = vst.msk [vmem:[%s8212 + $0x91] sm:$0xff] %vm2448, %v8052
  %8226 = vst.msk [vmem:[%s8212 + $0x99] sm:$0xff] %vm2448, %v8053
  %8227 = vst.msk [vmem:[%s8212 + $0xa9] sm:$0xff] %vm2448, %v8054
  %8228 = vst.msk [vmem:[%s8212 + $0xb1] sm:$0xff] %vm2448, %v8055
  %8229 = vst.msk [vmem:[%s8212 + $0xc1] sm:$0xff] %vm2448, %v8056
  %8230 = vst.msk [vmem:[%s8212 + $0xc9] sm:$0xff] %vm2448, %v8057
  %8231 = vst.msk [vmem:[%s8212 + $0xd9] sm:$0xff] %vm2448, %v8058
  %8232 = vst.msk [vmem:[%s8212 + $0xe1] sm:$0xff] %vm2448, %v8059
  %8233 = vst.msk [vmem:[%s8212 + $0xf1] sm:$0xff] %vm2448, %v8060
  %8234 = vst.msk [vmem:[%s8212 + $0xf9] sm:$0xff] %vm2448, %v8061
  %8235 = vst.msk [vmem:[%s8212 + $0x109] sm:$0xff] %vm2448, %v8062
  %8236 = vst.msk [vmem:[%s8212 + $0x111] sm:$0xff] %vm2448, %v8063
  %8237 = vst.msk [vmem:[%s8212 + $0x121] sm:$0xff] %vm2448, %v8064
  %8238 = vst.msk [vmem:[%s8212 + $0x129] sm:$0xff] %vm2448, %v8065
  %8239 = vst.msk [vmem:[%s8212 + $0x139] sm:$0xff] %vm2448, %v8066
  %8240 = vst.msk [vmem:[%s8212 + $0x141] sm:$0xff] %vm2448, %v8067
  %8241 = vst.msk [vmem:[%s8212 + $0x151] sm:$0xff] %vm2448, %v8068
  %8242 = vst.msk [vmem:[%s8212 + $0x159] sm:$0xff] %vm2448, %v8069
  %8243 = vst.msk [vmem:[%s8212 + $0x169] sm:$0xff] %vm2448, %v8070
  %8244 = vst.msk [vmem:[%s8212 + $0x171] sm:$0xff] %vm2448, %v8071
  %8245 = vst.msk [vmem:[%s8212 + $0x1b1] sm:$0xff] %vm2448, %v8072
  %8246 = vst.msk [vmem:[%s8212 + $0x1b9] sm:$0xff] %vm2448, %v8073
  %8247 = vst.msk [vmem:[%s8212 + $0x1c9] sm:$0xff] %vm2448, %v8074
  %8248 = vst.msk [vmem:[%s8212 + $0x1d1] sm:$0xff] %vm2448, %v8075
  %8249 = vst.msk [vmem:[%s8212 + $0x1e1] sm:$0xff] %vm2448, %v8076
  %8250 = vst.msk [vmem:[%s8212 + $0x1e9] sm:$0xff] %vm2448, %v8077
  %8251 = vst.msk [vmem:[%s8212 + $0x1f9] sm:$0xff] %vm2448, %v8078
  %8252 = vst.msk [vmem:[%s8212 + $0x201] sm:$0xff] %vm2448, %v8079
  %8253 = vst.msk [vmem:[%s8212 + $0x211] sm:$0xff] %vm2448, %v8080
  %8254 = vst.msk [vmem:[%s8212 + $0x219] sm:$0xff] %vm2448, %v8081
  %8255 = vst.msk [vmem:[%s8212 + $0x229] sm:$0xff] %vm2448, %v8082
  %8256 = vst.msk [vmem:[%s8212 + $0x231] sm:$0xff] %vm2448, %v8083
  %8257 = vst.msk [vmem:[%s8212 + $0x241] sm:$0xff] %vm2448, %v8084
  %8258 = vst.msk [vmem:[%s8212 + $0x249] sm:$0xff] %vm2448, %v8085
  %8259 = vst.msk [vmem:[%s8212 + $0x259] sm:$0xff] %vm2448, %v8086
  %8260 = vst.msk [vmem:[%s8212 + $0x261] sm:$0xff] %vm2448, %v8087
  %8261 = vst.msk [vmem:[%s8212 + $0x271] sm:$0xff] %vm2448, %v8088
  %8262 = vst.msk [vmem:[%s8212 + $0x279] sm:$0xff] %vm2448, %v8089
  %8263 = vst.msk [vmem:[%s8212 + $0x289] sm:$0xff] %vm2448, %v8090
  %8264 = vst.msk [vmem:[%s8212 + $0x291] sm:$0xff] %vm2448, %v8091
  %8265 = vst.msk [vmem:[%s8212 + $0x2a1] sm:$0xff] %vm2448, %v8092
  %8266 = vst.msk [vmem:[%s8212 + $0x2a9] sm:$0xff] %vm2448, %v8093
  %8267 = vst.msk [vmem:[%s8212 + $0x2b9] sm:$0xff] %vm2448, %v8094
  %8268 = vst.msk [vmem:[%s8212 + $0x2c1] sm:$0xff] %vm2448, %v8095
  %8269 = vst.msk [vmem:[%s8212 + $0x2d1] sm:$0xff] %vm2448, %v8096
  %8270 = vst.msk [vmem:[%s8212 + $0x2d9] sm:$0xff] %vm2448, %v8097
  %8271 = vst.msk [vmem:[%s8212 + $0x2e9] sm:$0xff] %vm2448, %v8098
  %8272 = vst.msk [vmem:[%s8212 + $0x2f1] sm:$0xff] %vm2448, %v8099
  %8273 = vst.msk [vmem:[%s8212 + $0x301] sm:$0xff] %vm2448, %v8100
  %8274 = vst.msk [vmem:[%s8212 + $0x309] sm:$0xff] %vm2448, %v8101
  %8275 = vst.msk [vmem:[%s8212 + $0x319] sm:$0xff] %vm2448, %v8102
  %8276 = vst.msk [vmem:[%s8212 + $0x321] sm:$0xff] %vm2448, %v8103
  // Predicated region
  $region26: #{block_forward.2} parent=0 // pred_check
    _
  $region27: #{block_forward.2} parent=0 // pred_check_branch
    %8278 = sbr.rel (0) target = $region29
  $region28: #{block_forward.2} parent=0 // pred_region
    _
  $region29: #{block_forward.2} parent=0 // pred_fallthru
    _
  // Predicated region
  $region30: #{block_forward.2} parent=0 // pred_check
    _
  $region31: #{block_forward.2} parent=0 // pred_check_branch
    %8280 = sbr.rel (0) target = $region33
  $region32: #{block_forward.2} parent=0 // pred_region
    _
  $region33: #{block_forward.2} parent=0 // pred_fallthru
    _

</llo_original>
